<compile_context>
chip_gen: v6e
topology: v6e:2x2x1
jax: 0.10.0
libtpu: 0.0.40
codegen_flags: <defaults>
</compile_context>

<pallas_src>
import jax
import jax.numpy as jnp
from jax.experimental import pallas as pl
from jax.experimental.pallas import tpu as pltpu

BN_EPS = 1e-5
LANES = 128
ROW_TILE_CAP = 512                      # 512-1024 rows ≈ HBM roofline per review
VMEM_LIMIT_BYTES = 32 * 1024 * 1024     # safe on v5e/v6e and within v7x's 64 MiB

# Flip True on v6e/v7x: streams `msg` in bf16 (halves the dominant re-stream in the
# scatter stage, full-rate bf16 MXU).  Off by default for exact-f32 parity.
AGG_BF16 = False
MSG_DTYPE = jnp.bfloat16 if AGG_BF16 else jnp.float32

_SMEM_SPEC = pl.BlockSpec(memory_space=pltpu.MemorySpace.SMEM)


def _cparams(*sem):
    return pltpu.CompilerParams(dimension_semantics=sem,
                                vmem_limit_bytes=VMEM_LIMIT_BYTES)


def _rup(a, b):
    return ((a + b - 1) // b) * b


def _tile_rows(m, cap=ROW_TILE_CAP):
    """Row tile (multiple of 8, <= cap) and the padded row count it implies."""
    t = min(cap, _rup(m, 8))
    return t, _rup(m, t)


def _pad_cols(a, cols):
    return a if a.shape[-1] == cols else jnp.pad(a, ((0, 0), (0, cols - a.shape[-1])))


def _pad2(a, rows, cols):
    return jnp.pad(a, ((0, rows - a.shape[0]), (0, cols - a.shape[1])))


def _tile_stats(h, m_real, m_padded, tile, tile_id):
    """Per-tile (sum, sum_sq) over the valid (non-padded) rows -> two (1,1,Hp)."""
    if m_real != m_padded:
        rows = tile_id * tile + jax.lax.broadcasted_iota(jnp.int32, (tile, 1), 0)
        h = jnp.where(rows < m_real, h, 0.0)
    s = jnp.sum(h, axis=0).reshape(1, 1, -1)
    ss = jnp.sum(h * h, axis=0).reshape(1, 1, -1)
    return s, ss


def _bn_affine(s_parts, ss_parts, rows, gamma, beta):
    """Fold exact batch-norm (biased batch stats) into one scale/shift vector."""
    s = jnp.sum(s_parts, axis=(0, 1))
    ss = jnp.sum(ss_parts, axis=(0, 1))
    mean = s / rows
    var = jnp.maximum(ss / rows - mean * mean, 0.0)
    scale = gamma * jax.lax.rsqrt(var + BN_EPS)
    shift = beta - mean * scale
    return scale, shift


# ---------------------------------------------------------------------------
# Stage 1: edge kernel — msg = ReLU([x_j,e] @ W_msg + b)  and fused
#          h1_e = (x_i + x_j + (1+eps2)*e) @ ew1 + eb1  (+ per-tile BN stats)
# ---------------------------------------------------------------------------
def edge_stage(xje, w_msg_p, b_msg_p, we1_f, eb1_p, te, e_real):
    ep, din = xje.shape
    dm = w_msg_p.shape[1]
    hp = we1_f.shape[1]
    nt = ep // te
    row = lambda i: (i, 0)
    full = lambda i: (0, 0)

    def kernel(xje_ref, wm_ref, bm_ref, we1_ref, eb1_ref,
               msg_ref, h1_ref, s_ref, ss_ref):
        p = xje_ref[...]
        msg = jnp.dot(p, wm_ref[...], preferred_element_type=jnp.float32) + bm_ref[...]
        msg_ref[...] = jnp.maximum(msg, 0.0).astype(msg_ref.dtype)
        h1 = jnp.dot(p, we1_ref[...], preferred_element_type=jnp.float32) + eb1_ref[...]
        h1_ref[...] = h1
        s, ss = _tile_stats(h1, e_real, ep, te, pl.program_id(0))
        s_ref[...] = s
        ss_ref[...] = ss

    return pl.pallas_call(
        kernel,
        grid=(nt,),
        in_specs=[pl.BlockSpec((te, din), row),
                  pl.BlockSpec((din, dm), full),
                  pl.BlockSpec((1, dm), full),
                  pl.BlockSpec((din, hp), full),
                  pl.BlockSpec((1, hp), full)],
        out_specs=[pl.BlockSpec((te, dm), row),
                   pl.BlockSpec((te, hp), row),
                   pl.BlockSpec((1, 1, hp), lambda i: (i, 0, 0)),
                   pl.BlockSpec((1, 1, hp), lambda i: (i, 0, 0))],
        out_shape=[jax.ShapeDtypeStruct((ep, dm), MSG_DTYPE),
                   jax.ShapeDtypeStruct((ep, hp), jnp.float32),
                   jax.ShapeDtypeStruct((nt, 1, hp), jnp.float32),
                   jax.ShapeDtypeStruct((nt, 1, hp), jnp.float32)],
        compiler_params=_cparams("parallel"),
    )(xje, w_msg_p, b_msg_p, we1_f, eb1_p)


# ---------------------------------------------------------------------------
# Stage 2: tiled one-hot scatter-add of msg onto target nodes (MXU matmul),
#          residual (1+eps1)*x, then fused h1_n = z_n @ nw1 + nb1 (+ stats).
# ---------------------------------------------------------------------------
def scatter_stage(dst_row, msg, x_p, w1_p, b1_p, eps1, tn, te, n_real):
    np_, dm = x_p.shape
    ep = msg.shape[0]
    hp = w1_p.shape[1]
    n_nt = np_ // tn
    n_et = ep // te

    def kernel(dst_ref, msg_ref, x_ref, w1_ref, b1_ref, eps1_ref,
               h1_ref, s_ref, ss_ref, zn_sc):
        n = pl.program_id(0)
        eb = pl.program_id(1)

        @pl.when(eb == 0)
        def _():
            zn_sc[...] = (1.0 + eps1_ref[0, 0]) * x_ref[...]

        row_ids = n * tn + jax.lax.broadcasted_iota(jnp.int32, (tn, te), 0)
        onehot = (row_ids == dst_ref[...]).astype(msg_ref.dtype)
        zn_sc[...] += jnp.dot(onehot, msg_ref[...],
                              preferred_element_type=jnp.float32)

        @pl.when(eb == pl.num_programs(1) - 1)
        def _():
            h1 = jnp.dot(zn_sc[...], w1_ref[...],
                         preferred_element_type=jnp.float32) + b1_ref[...]
            h1_ref[...] = h1
            s, ss = _tile_stats(h1, n_real, np_, tn, n)
            s_ref[...] = s
            ss_ref[...] = ss

    return pl.pallas_call(
        kernel,
        grid=(n_nt, n_et),                       # edge (reduction) axis innermost
        in_specs=[pl.BlockSpec((1, te), lambda n, eb: (0, eb)),
                  pl.BlockSpec((te, dm), lambda n, eb: (eb, 0)),
                  pl.BlockSpec((tn, dm), lambda n, eb: (n, 0)),
                  pl.BlockSpec((dm, hp), lambda n, eb: (0, 0)),
                  pl.BlockSpec((1, hp), lambda n, eb: (0, 0)),
                  _SMEM_SPEC],
        out_specs=[pl.BlockSpec((tn, hp), lambda n, eb: (n, 0)),
                   pl.BlockSpec((1, 1, hp), lambda n, eb: (n, 0, 0)),
                   pl.BlockSpec((1, 1, hp), lambda n, eb: (n, 0, 0))],
        out_shape=[jax.ShapeDtypeStruct((np_, hp), jnp.float32),
                   jax.ShapeDtypeStruct((n_nt, 1, hp), jnp.float32),
                   jax.ShapeDtypeStruct((n_nt, 1, hp), jnp.float32)],
        scratch_shapes=[pltpu.VMEM((tn, dm), jnp.float32)],
        compiler_params=_cparams("parallel", "arbitrary"),
    )(dst_row, msg, x_p, w1_p, b1_p, eps1)


# ---------------------------------------------------------------------------
# Stage 3: BN(scale,shift) -> ReLU -> Linear, with per-tile partial stats.
# Stage 4: final BN(scale,shift) -> ReLU.
# ---------------------------------------------------------------------------
def bn_relu_lin_stage(h, sc, sh, w, b, tm, m_real):
    mp, hin = h.shape
    hp = w.shape[1]
    nt = mp // tm
    row = lambda i: (i, 0)
    full = lambda i: (0, 0)

    def kernel(h_ref, sc_ref, sh_ref, w_ref, b_ref, h2_ref, s_ref, ss_ref):
        a = jnp.maximum(h_ref[...] * sc_ref[...] + sh_ref[...], 0.0)
        h2 = jnp.dot(a, w_ref[...], preferred_element_type=jnp.float32) + b_ref[...]
        h2_ref[...] = h2
        s, ss = _tile_stats(h2, m_real, mp, tm, pl.program_id(0))
        s_ref[...] = s
        ss_ref[...] = ss

    return pl.pallas_call(
        kernel,
        grid=(nt,),
        in_specs=[pl.BlockSpec((tm, hin), row),
                  pl.BlockSpec((1, hin), full),
                  pl.BlockSpec((1, hin), full),
                  pl.BlockSpec((hin, hp), full),
                  pl.BlockSpec((1, hp), full)],
        out_specs=[pl.BlockSpec((tm, hp), row),
                   pl.BlockSpec((1, 1, hp), lambda i: (i, 0, 0)),
                   pl.BlockSpec((1, 1, hp), lambda i: (i, 0, 0))],
        out_shape=[jax.ShapeDtypeStruct((mp, hp), jnp.float32),
                   jax.ShapeDtypeStruct((nt, 1, hp), jnp.float32),
                   jax.ShapeDtypeStruct((nt, 1, hp), jnp.float32)],
        compiler_params=_cparams("parallel"),
    )(h, sc, sh, w, b)


def bn_relu_stage(h, sc, sh, tm):
    mp, hp = h.shape
    nt = mp // tm
    row = lambda i: (i, 0)
    full = lambda i: (0, 0)

    def kernel(h_ref, sc_ref, sh_ref, o_ref):
        o_ref[...] = jnp.maximum(h_ref[...] * sc_ref[...] + sh_ref[...], 0.0)

    return pl.pallas_call(
        kernel,
        grid=(nt,),
        in_specs=[pl.BlockSpec((tm, hp), row),
                  pl.BlockSpec((1, hp), full),
                  pl.BlockSpec((1, hp), full)],
        out_specs=pl.BlockSpec((tm, hp), row),
        out_shape=jax.ShapeDtypeStruct((mp, hp), jnp.float32),
        compiler_params=_cparams("parallel"),
    )(h, sc, sh)


# ---------------------------------------------------------------------------
# Forward
# ---------------------------------------------------------------------------
def mpnn_conv_forward(x, e, edge_index, params):
    """Pallas implementation of MPNNConv.forward -> [n_out, e_out]."""
    n_real, d = x.shape
    e_real = e.shape[0]
    h_dim = params["nw2"].shape[1]

    din = _rup(3 * d, LANES)        # packed [x_i | x_j | e] lanes
    dm = _rup(d, LANES)             # msg / node-feature lanes
    hp = _rup(h_dim, LANES)

    tn, n_pad = _tile_rows(n_real)
    te, e_pad = _tile_rows(e_real)

    src = edge_index[0].astype(jnp.int32)   # j
    dst = edge_index[1].astype(jnp.int32)   # i

    # Packed edge input [x_i | x_j | e]; padded edge rows are zero and get dst=-1
    # so their phantom messages never land on a real node.
    # TODO(synk): replace this XLA gather+concat with a manual DMA gather fused
    #             into edge_stage (scalar-prefetched src/dst).
    xje = jnp.concatenate([x[dst], x[src], e], axis=-1)            # [E, 3D]
    xje = jnp.pad(xje, ((0, e_pad - e_real), (0, din - 3 * d)))
    dst_row = jnp.pad(dst, (0, e_pad - e_real), constant_values=-1).reshape(1, e_pad)

    # Message weight packed: rows [D:2D] hit x_j, rows [2D:3D] hit e.
    w_msg = params["w_msg"]                                        # (2D, D)
    w_msg_p = jnp.zeros((din, dm), jnp.float32)
    w_msg_p = w_msg_p.at[d:2 * d, :d].set(w_msg[:d])
    w_msg_p = w_msg_p.at[2 * d:3 * d, :d].set(w_msg[d:])
    b_msg_p = _pad_cols(params["b_msg"], dm)

    # Fused first Linear of e_update_nn: z_e @ ew1 = (x_i + x_j + (1+eps2)e) @ ew1.
    ew1 = params["ew1"]
    eps2 = params["eps2"].reshape(())
    we1_f = jnp.zeros((din, hp), jnp.float32)
    we1_f = we1_f.at[:d, :h_dim].set(ew1)
    we1_f = we1_f.at[d:2 * d, :h_dim].set(ew1)
    we1_f = we1_f.at[2 * d:3 * d, :h_dim].set((1.0 + eps2) * ew1)
    eb1_p = _pad_cols(params["eb1"], hp)

    msg, h1_e, es1, ess1 = edge_stage(xje, w_msg_p, b_msg_p, we1_f, eb1_p, te, e_real)

    # Node path: scatter-add msg onto dst, residual (1+eps1)x, fused first Linear.
    x_p = jnp.pad(x, ((0, n_pad - n_real), (0, dm - d)))
    nw1_p = _pad2(params["nw1"], dm, hp)
    nb1_p = _pad_cols(params["nb1"], hp)
    h1_n, ns1, nss1 = scatter_stage(dst_row, msg, x_p, nw1_p, nb1_p,
                                    params["eps1"], tn, te, n_real)

    def update_tail(h1, s1, ss1, rows, tm, pfx):
        sc1, sh1 = _bn_affine(s1, ss1, rows,
                              _pad_cols(params[pfx + "g1"], hp),
                              _pad_cols(params[pfx + "be1"], hp))
        h2, s2, ss2 = bn_relu_lin_stage(h1, sc1, sh1,
                                        _pad2(params[pfx + "w2"], hp, hp),
                                        _pad_cols(params[pfx + "b2"], hp), tm, rows)
        sc2, sh2 = _bn_affine(s2, ss2, rows,
                              _pad_cols(params[pfx + "g2"], hp),
                              _pad_cols(params[pfx + "be2"], hp))
        return bn_relu_stage(h2, sc2, sh2, tm)

    n_out = update_tail(h1_n, ns1, nss1, n_real, tn, "n")[:n_real, :h_dim]
    e_out = update_tail(h1_e, es1, ess1, e_real, te, "e")[:e_real, :h_dim]
    return [n_out, e_out]


# ---------------------------------------------------------------------------
# Pure-JAX reference (for correctness check)
# ---------------------------------------------------------------------------
def reference_forward(x, e, edge_index, params):
    src, dst = edge_index[0], edge_index[1]
    x_i, x_j = x[dst], x[src]

    n_msg = jax.nn.relu(jnp.concatenate([x_j, e], -1) @ params["w_msg"]
                        + params["b_msg"])
    n_agg = jnp.zeros_like(x).at[dst].add(n_msg)
    z_n = n_agg + (1.0 + params["eps1"][0, 0]) * x

    def mlp(z, w1, b1, g1, be1, w2, b2, g2, be2):
        def bn(h, g, b):
            mu = h.mean(0, keepdims=True)
            var = ((h - mu) ** 2).mean(0, keepdims=True)
            return (h - mu) / jnp.sqrt(var + BN_EPS) * g + b
        h = jax.nn.relu(bn(z @ w1 + b1, g1, be1))
        return jax.nn.relu(bn(h @ w2 + b2, g2, be2))

    n_out = mlp(z_n, params["nw1"], params["nb1"], params["ng1"], params["nbe1"],
                params["nw2"], params["nb2"], params["ng2"], params["nbe2"])
    z_e = x_i + x_j + (1.0 + params["eps2"][0, 0]) * e
    e_out = mlp(z_e, params["ew1"], params["eb1"], params["eg1"], params["ebe1"],
                params["ew2"], params["eb2"], params["eg2"], params["ebe2"])
    return [n_out, e_out]


# ---------------------------------------------------------------------------
# Main
# ---------------------------------------------------------------------------
if __name__ == "__main__":
    # Sizes chosen to exercise multi-tile scatter accumulation AND the row-padding
    # / stats-masking path (N, E are not tile multiples) while staying small.
    N, E, D, H = 640, 1280, 32, 32
    EPS = 0.0                       # MPNNConv default eps (buffer, not trained)

    key = jax.random.PRNGKey(0)
    keys = jax.random.split(key, 8)

    x = jax.random.normal(keys[0], (N, D), jnp.float32)
    e = jax.random.normal(keys[1], (E, D), jnp.float32)
    src = jnp.arange(E, dtype=jnp.int32) % N
    dst = (jnp.arange(E, dtype=jnp.int32) * 5 + 2) % N
    edge_index = jnp.stack([src, dst], axis=0)           # [2, E]

    def lin(k, fan_in, fan_out):
        return jax.random.normal(k, (fan_in, fan_out), jnp.float32) * 0.1

    params = {
        # n_msg_nn: Linear(2D -> D)
        "w_msg": lin(keys[2], 2 * D, D),
        "b_msg": jnp.zeros((1, D), jnp.float32),
        "eps1": jnp.full((1, 1), EPS, jnp.float32),
        "eps2": jnp.full((1, 1), EPS, jnp.float32),
        # n_update_nn: Linear(D->H) BN ReLU Linear(H->H) BN ReLU
        "nw1": lin(keys[3], D, H), "nb1": jnp.zeros((1, H), jnp.float32),
        "ng1": jnp.ones((1, H), jnp.float32), "nbe1": jnp.zeros((1, H), jnp.float32),
        "nw2": lin(keys[4], H, H), "nb2": jnp.zeros((1, H), jnp.float32),
        "ng2": jnp.ones((1, H), jnp.float32), "nbe2": jnp.zeros((1, H), jnp.float32),
        # e_update_nn: same structure, independent weights
        "ew1": lin(keys[5], D, H), "eb1": jnp.zeros((1, H), jnp.float32),
        "eg1": jnp.ones((1, H), jnp.float32), "ebe1": jnp.zeros((1, H), jnp.float32),
        "ew2": lin(keys[6], H, H), "eb2": jnp.zeros((1, H), jnp.float32),
        "eg2": jnp.ones((1, H), jnp.float32), "ebe2": jnp.zeros((1, H), jnp.float32),
    }

    fwd = jax.jit(mpnn_conv_forward)
    n_out, e_out = fwd(x, e, edge_index, params)
    jax.block_until_ready(n_out)
    jax.block_until_ready(e_out)

    n_ref, e_ref = reference_forward(x, e, edge_index, params)
    assert n_out.shape == (N, H) and e_out.shape == (E, H)
    assert jnp.allclose(n_out, n_ref, atol=1e-3, rtol=1e-3)
    assert jnp.allclose(e_out, e_ref, atol=1e-3, rtol=1e-3)

    print("KERNEL_OK")
</pallas_src>

<mosaic_0001>
module attributes {stable_mosaic.version = 11 : i64} {
  func.func @kernel(%arg0: i32, %arg1: memref<512x128xf32, #tpu.memory_space<vmem>>, %arg2: memref<128x128xf32, #tpu.memory_space<vmem>>, %arg3: memref<1x128xf32, #tpu.memory_space<vmem>>, %arg4: memref<128x128xf32, #tpu.memory_space<vmem>>, %arg5: memref<1x128xf32, #tpu.memory_space<vmem>>, %arg6: memref<512x128xf32, #tpu.memory_space<vmem>>, %arg7: memref<512x128xf32, #tpu.memory_space<vmem>>, %arg8: memref<1x1x128xf32, #tpu.memory_space<vmem>>, %arg9: memref<1x1x128xf32, #tpu.memory_space<vmem>>) attributes {dimension_semantics = [#tpu.dimension_semantics<parallel>], iteration_bounds = array<i64: 3>, scalar_prefetch = 0 : i64, scratch_operands = 0 : i64, tpu.core_type = #tpu.core_type<tc>, window_params = [{transform_indices = @transform_0, window_bounds = array<i64: 512, 128>}, {pipeline_mode = #tpu.pipeline_mode<synchronous>, transform_indices = @transform_1, window_bounds = array<i64: 128, 128>}, {pipeline_mode = #tpu.pipeline_mode<synchronous>, transform_indices = @transform_2, window_bounds = array<i64: 1, 128>}, {pipeline_mode = #tpu.pipeline_mode<synchronous>, transform_indices = @transform_3, window_bounds = array<i64: 128, 128>}, {pipeline_mode = #tpu.pipeline_mode<synchronous>, transform_indices = @transform_4, window_bounds = array<i64: 1, 128>}, {transform_indices = @transform_5, window_bounds = array<i64: 512, 128>}, {transform_indices = @transform_6, window_bounds = array<i64: 512, 128>}, {transform_indices = @transform_7, window_bounds = array<i64: 1, 1, 128>}, {transform_indices = @transform_8, window_bounds = array<i64: 1, 1, 128>}]} {
    %c0 = arith.constant 0 : index
    %c0_0 = arith.constant 0 : index
    %0 = vector.load %arg1[%c0, %c0_0] : memref<512x128xf32, #tpu.memory_space<vmem>>, vector<512x128xf32>
    %c0_1 = arith.constant 0 : index
    %c0_2 = arith.constant 0 : index
    %1 = vector.load %arg2[%c0_1, %c0_2] : memref<128x128xf32, #tpu.memory_space<vmem>>, vector<128x128xf32>
    %cst = arith.constant dense<0.000000e+00> : vector<512x128xf32>
    %2 = tpu.matmul %0, %1, %cst {dimension_numbers = #tpu.dot_dimension_numbers<[1], [0], [0], [1], [0, 0, 1, 1], [], []>} : vector<512x128xf32>, vector<128x128xf32>, vector<512x128xf32> -> vector<512x128xf32>
    %c0_3 = arith.constant 0 : index
    %c0_4 = arith.constant 0 : index
    %3 = vector.load %arg3[%c0_3, %c0_4] : memref<1x128xf32, #tpu.memory_space<vmem>>, vector<1x128xf32>
    %4 = vector.broadcast %3 : vector<1x128xf32> to vector<512x128xf32>
    %5 = arith.addf %2, %4 : vector<512x128xf32>
    %cst_5 = arith.constant 0.000000e+00 : f32
    %6 = vector.broadcast %cst_5 : f32 to vector<512x128xf32>
    %7 = arith.maximumf %5, %6 : vector<512x128xf32>
    %c0_6 = arith.constant 0 : index
    %c0_7 = arith.constant 0 : index
    %8 = vector.load %arg6[%c0_6, %c0_7] : memref<512x128xf32, #tpu.memory_space<vmem>>, vector<512x128xf32>
    tpu.vector_store %arg6[%c0_6, %c0_7], %7 {strides = array<i32>} : memref<512x128xf32, #tpu.memory_space<vmem>>, vector<512x128xf32>,
    %c0_8 = arith.constant 0 : index
    %c0_9 = arith.constant 0 : index
    %9 = vector.load %arg4[%c0_8, %c0_9] : memref<128x128xf32, #tpu.memory_space<vmem>>, vector<128x128xf32>
    %cst_10 = arith.constant dense<0.000000e+00> : vector<512x128xf32>
    %10 = tpu.matmul %0, %9, %cst_10 {dimension_numbers = #tpu.dot_dimension_numbers<[1], [0], [0], [1], [0, 0, 1, 1], [], []>} : vector<512x128xf32>, vector<128x128xf32>, vector<512x128xf32> -> vector<512x128xf32>
    %c0_11 = arith.constant 0 : index
    %c0_12 = arith.constant 0 : index
    %11 = vector.load %arg5[%c0_11, %c0_12] : memref<1x128xf32, #tpu.memory_space<vmem>>, vector<1x128xf32>
    %12 = vector.broadcast %11 : vector<1x128xf32> to vector<512x128xf32>
    %13 = arith.addf %10, %12 : vector<512x128xf32>
    %c0_13 = arith.constant 0 : index
    %c0_14 = arith.constant 0 : index
    %14 = vector.load %arg7[%c0_13, %c0_14] : memref<512x128xf32, #tpu.memory_space<vmem>>, vector<512x128xf32>
    tpu.vector_store %arg7[%c0_13, %c0_14], %13 {strides = array<i32>} : memref<512x128xf32, #tpu.memory_space<vmem>>, vector<512x128xf32>,
    %c512_i32 = arith.constant 512 : i32
    %15 = arith.muli %arg0, %c512_i32 : i32
    %16 = tpu.iota {dimensions = array<i32: 0>} : vector<512x1xi32>
    %17 = vector.broadcast %15 : i32 to vector<512x1xi32>
    %18 = arith.addi %17, %16 : vector<512x1xi32>
    %c1280_i32 = arith.constant 1280 : i32
    %19 = vector.broadcast %c1280_i32 : i32 to vector<512x1xi32>
    %20 = arith.cmpi slt, %18, %19 : vector<512x1xi32>
    %cst_15 = arith.constant 0.000000e+00 : f32
    %21 = vector.shape_cast %20 : vector<512x1xi1> to vector<512x1xi1>
    %22 = vector.broadcast %21 : vector<512x1xi1> to vector<512x128xi1>
    %23 = vector.broadcast %cst_15 : f32 to vector<512x128xf32>
    %24 = arith.select %22, %13, %23 : vector<512x128xi1>, vector<512x128xf32>
    %cst_16 = arith.constant dense<0.000000e+00> : vector<128xf32>
    %25 = vector.multi_reduction <add>, %24, %cst_16 [0] : vector<512x128xf32> to vector<128xf32>
    %26 = vector.shape_cast %25 : vector<128xf32> to vector<1x1x128xf32>
    %27 = arith.mulf %24, %24 : vector<512x128xf32>
    %cst_17 = arith.constant dense<0.000000e+00> : vector<128xf32>
    %28 = vector.multi_reduction <add>, %27, %cst_17 [0] : vector<512x128xf32> to vector<128xf32>
    %29 = vector.shape_cast %28 : vector<128xf32> to vector<1x1x128xf32>
    %c0_18 = arith.constant 0 : index
    %c0_19 = arith.constant 0 : index
    %c0_20 = arith.constant 0 : index
    %30 = vector.load %arg8[%c0_18, %c0_19, %c0_20] : memref<1x1x128xf32, #tpu.memory_space<vmem>>, vector<1x1x128xf32>
    tpu.vector_store %arg8[%c0_18, %c0_19, %c0_20], %26 {strides = array<i32>} : memref<1x1x128xf32, #tpu.memory_space<vmem>>, vector<1x1x128xf32>,
    %c0_21 = arith.constant 0 : index
    %c0_22 = arith.constant 0 : index
    %c0_23 = arith.constant 0 : index
    %31 = vector.load %arg9[%c0_21, %c0_22, %c0_23] : memref<1x1x128xf32, #tpu.memory_space<vmem>>, vector<1x1x128xf32>
    tpu.vector_store %arg9[%c0_21, %c0_22, %c0_23], %29 {strides = array<i32>} : memref<1x1x128xf32, #tpu.memory_space<vmem>>, vector<1x1x128xf32>,
    return
  }
  func.func @transform_0(%arg0: i32) -> (i32, i32) {
    %c0_i32 = arith.constant 0 : i32
    %c0_i32_0 = arith.constant 0 : i32
    return %arg0, %c0_i32 : i32, i32
  }
  func.func @transform_1(%arg0: i32) -> (i32, i32) {
    %c0_i32 = arith.constant 0 : i32
    %c0_i32_0 = arith.constant 0 : i32
    %c0_i32_1 = arith.constant 0 : i32
    return %c0_i32, %c0_i32_0 : i32, i32
  }
  func.func @transform_2(%arg0: i32) -> (i32, i32) {
    %c0_i32 = arith.constant 0 : i32
    %c0_i32_0 = arith.constant 0 : i32
    %c0_i32_1 = arith.constant 0 : i32
    return %c0_i32, %c0_i32_0 : i32, i32
  }
  func.func @transform_3(%arg0: i32) -> (i32, i32) {
    %c0_i32 = arith.constant 0 : i32
    %c0_i32_0 = arith.constant 0 : i32
    %c0_i32_1 = arith.constant 0 : i32
    return %c0_i32, %c0_i32_0 : i32, i32
  }
  func.func @transform_4(%arg0: i32) -> (i32, i32) {
    %c0_i32 = arith.constant 0 : i32
    %c0_i32_0 = arith.constant 0 : i32
    %c0_i32_1 = arith.constant 0 : i32
    return %c0_i32, %c0_i32_0 : i32, i32
  }
  func.func @transform_5(%arg0: i32) -> (i32, i32) {
    %c0_i32 = arith.constant 0 : i32
    %c0_i32_0 = arith.constant 0 : i32
    return %arg0, %c0_i32 : i32, i32
  }
  func.func @transform_6(%arg0: i32) -> (i32, i32) {
    %c0_i32 = arith.constant 0 : i32
    %c0_i32_0 = arith.constant 0 : i32
    return %arg0, %c0_i32 : i32, i32
  }
  func.func @transform_7(%arg0: i32) -> (i32, i32, i32) {
    %c0_i32 = arith.constant 0 : i32
    %c0_i32_0 = arith.constant 0 : i32
    %c0_i32_1 = arith.constant 0 : i32
    return %arg0, %c0_i32, %c0_i32_0 : i32, i32, i32
  }
  func.func @transform_8(%arg0: i32) -> (i32, i32, i32) {
    %c0_i32 = arith.constant 0 : i32
    %c0_i32_0 = arith.constant 0 : i32
    %c0_i32_1 = arith.constant 0 : i32
    return %arg0, %c0_i32, %c0_i32_0 : i32, i32, i32
  }
}

module attributes {stable_mosaic.version = 11 : i64} {
  func.func @kernel(%arg0: i32, %arg1: memref<512x128xf32, #tpu.memory_space<vmem>>, %arg2: memref<1x128xf32, #tpu.memory_space<vmem>>, %arg3: memref<1x128xf32, #tpu.memory_space<vmem>>, %arg4: memref<128x128xf32, #tpu.memory_space<vmem>>, %arg5: memref<1x128xf32, #tpu.memory_space<vmem>>, %arg6: memref<512x128xf32, #tpu.memory_space<vmem>>, %arg7: memref<1x1x128xf32, #tpu.memory_space<vmem>>, %arg8: memref<1x1x128xf32, #tpu.memory_space<vmem>>) attributes {dimension_semantics = [#tpu.dimension_semantics<parallel>], iteration_bounds = array<i64: 3>, scalar_prefetch = 0 : i64, scratch_operands = 0 : i64, tpu.core_type = #tpu.core_type<tc>, window_params = [{transform_indices = @transform_0, window_bounds = array<i64: 512, 128>}, {pipeline_mode = #tpu.pipeline_mode<synchronous>, transform_indices = @transform_1, window_bounds = array<i64: 1, 128>}, {pipeline_mode = #tpu.pipeline_mode<synchronous>, transform_indices = @transform_2, window_bounds = array<i64: 1, 128>}, {pipeline_mode = #tpu.pipeline_mode<synchronous>, transform_indices = @transform_3, window_bounds = array<i64: 128, 128>}, {pipeline_mode = #tpu.pipeline_mode<synchronous>, transform_indices = @transform_4, window_bounds = array<i64: 1, 128>}, {transform_indices = @transform_5, window_bounds = array<i64: 512, 128>}, {transform_indices = @transform_6, window_bounds = array<i64: 1, 1, 128>}, {transform_indices = @transform_7, window_bounds = array<i64: 1, 1, 128>}]} {
    %c0 = arith.constant 0 : index
    %c0_0 = arith.constant 0 : index
    %0 = vector.load %arg1[%c0, %c0_0] : memref<512x128xf32, #tpu.memory_space<vmem>>, vector<512x128xf32>
    %c0_1 = arith.constant 0 : index
    %c0_2 = arith.constant 0 : index
    %1 = vector.load %arg2[%c0_1, %c0_2] : memref<1x128xf32, #tpu.memory_space<vmem>>, vector<1x128xf32>
    %2 = vector.broadcast %1 : vector<1x128xf32> to vector<512x128xf32>
    %3 = arith.mulf %0, %2 : vector<512x128xf32>
    %c0_3 = arith.constant 0 : index
    %c0_4 = arith.constant 0 : index
    %4 = vector.load %arg3[%c0_3, %c0_4] : memref<1x128xf32, #tpu.memory_space<vmem>>, vector<1x128xf32>
    %5 = vector.broadcast %4 : vector<1x128xf32> to vector<512x128xf32>
    %6 = arith.addf %3, %5 : vector<512x128xf32>
    %cst = arith.constant 0.000000e+00 : f32
    %7 = vector.broadcast %cst : f32 to vector<512x128xf32>
    %8 = arith.maximumf %6, %7 : vector<512x128xf32>
    %c0_5 = arith.constant 0 : index
    %c0_6 = arith.constant 0 : index
    %9 = vector.load %arg4[%c0_5, %c0_6] : memref<128x128xf32, #tpu.memory_space<vmem>>, vector<128x128xf32>
    %cst_7 = arith.constant dense<0.000000e+00> : vector<512x128xf32>
    %10 = tpu.matmul %8, %9, %cst_7 {dimension_numbers = #tpu.dot_dimension_numbers<[1], [0], [0], [1], [0, 0, 1, 1], [], []>} : vector<512x128xf32>, vector<128x128xf32>, vector<512x128xf32> -> vector<512x128xf32>
    %c0_8 = arith.constant 0 : index
    %c0_9 = arith.constant 0 : index
    %11 = vector.load %arg5[%c0_8, %c0_9] : memref<1x128xf32, #tpu.memory_space<vmem>>, vector<1x128xf32>
    %12 = vector.broadcast %11 : vector<1x128xf32> to vector<512x128xf32>
    %13 = arith.addf %10, %12 : vector<512x128xf32>
    %c0_10 = arith.constant 0 : index
    %c0_11 = arith.constant 0 : index
    %14 = vector.load %arg6[%c0_10, %c0_11] : memref<512x128xf32, #tpu.memory_space<vmem>>, vector<512x128xf32>
    tpu.vector_store %arg6[%c0_10, %c0_11], %13 {strides = array<i32>} : memref<512x128xf32, #tpu.memory_space<vmem>>, vector<512x128xf32>,
    %c512_i32 = arith.constant 512 : i32
    %15 = arith.muli %arg0, %c512_i32 : i32
    %16 = tpu.iota {dimensions = array<i32: 0>} : vector<512x1xi32>
    %17 = vector.broadcast %15 : i32 to vector<512x1xi32>
    %18 = arith.addi %17, %16 : vector<512x1xi32>
    %c1280_i32 = arith.constant 1280 : i32
    %19 = vector.broadcast %c1280_i32 : i32 to vector<512x1xi32>
    %20 = arith.cmpi slt, %18, %19 : vector<512x1xi32>
    %cst_12 = arith.constant 0.000000e+00 : f32
    %21 = vector.shape_cast %20 : vector<512x1xi1> to vector<512x1xi1>
    %22 = vector.broadcast %21 : vector<512x1xi1> to vector<512x128xi1>
    %23 = vector.broadcast %cst_12 : f32 to vector<512x128xf32>
    %24 = arith.select %22, %13, %23 : vector<512x128xi1>, vector<512x128xf32>
    %cst_13 = arith.constant dense<0.000000e+00> : vector<128xf32>
    %25 = vector.multi_reduction <add>, %24, %cst_13 [0] : vector<512x128xf32> to vector<128xf32>
    %26 = vector.shape_cast %25 : vector<128xf32> to vector<1x1x128xf32>
    %27 = arith.mulf %24, %24 : vector<512x128xf32>
    %cst_14 = arith.constant dense<0.000000e+00> : vector<128xf32>
    %28 = vector.multi_reduction <add>, %27, %cst_14 [0] : vector<512x128xf32> to vector<128xf32>
    %29 = vector.shape_cast %28 : vector<128xf32> to vector<1x1x128xf32>
    %c0_15 = arith.constant 0 : index
    %c0_16 = arith.constant 0 : index
    %c0_17 = arith.constant 0 : index
    %30 = vector.load %arg7[%c0_15, %c0_16, %c0_17] : memref<1x1x128xf32, #tpu.memory_space<vmem>>, vector<1x1x128xf32>
    tpu.vector_store %arg7[%c0_15, %c0_16, %c0_17], %26 {strides = array<i32>} : memref<1x1x128xf32, #tpu.memory_space<vmem>>, vector<1x1x128xf32>,
    %c0_18 = arith.constant 0 : index
    %c0_19 = arith.constant 0 : index
    %c0_20 = arith.constant 0 : index
    %31 = vector.load %arg8[%c0_18, %c0_19, %c0_20] : memref<1x1x128xf32, #tpu.memory_space<vmem>>, vector<1x1x128xf32>
    tpu.vector_store %arg8[%c0_18, %c0_19, %c0_20], %29 {strides = array<i32>} : memref<1x1x128xf32, #tpu.memory_space<vmem>>, vector<1x1x128xf32>,
    return
  }
  func.func @transform_0(%arg0: i32) -> (i32, i32) {
    %c0_i32 = arith.constant 0 : i32
    %c0_i32_0 = arith.constant 0 : i32
    return %arg0, %c0_i32 : i32, i32
  }
  func.func @transform_1(%arg0: i32) -> (i32, i32) {
    %c0_i32 = arith.constant 0 : i32
    %c0_i32_0 = arith.constant 0 : i32
    %c0_i32_1 = arith.constant 0 : i32
    return %c0_i32, %c0_i32_0 : i32, i32
  }
  func.func @transform_2(%arg0: i32) -> (i32, i32) {
    %c0_i32 = arith.constant 0 : i32
    %c0_i32_0 = arith.constant 0 : i32
    %c0_i32_1 = arith.constant 0 : i32
    return %c0_i32, %c0_i32_0 : i32, i32
  }
  func.func @transform_3(%arg0: i32) -> (i32, i32) {
    %c0_i32 = arith.constant 0 : i32
    %c0_i32_0 = arith.constant 0 : i32
    %c0_i32_1 = arith.constant 0 : i32
    return %c0_i32, %c0_i32_0 : i32, i32
  }
  func.func @transform_4(%arg0: i32) -> (i32, i32) {
    %c0_i32 = arith.constant 0 : i32
    %c0_i32_0 = arith.constant 0 : i32
    %c0_i32_1 = arith.constant 0 : i32
    return %c0_i32, %c0_i32_0 : i32, i32
  }
  func.func @transform_5(%arg0: i32) -> (i32, i32) {
    %c0_i32 = arith.constant 0 : i32
    %c0_i32_0 = arith.constant 0 : i32
    return %arg0, %c0_i32 : i32, i32
  }
  func.func @transform_6(%arg0: i32) -> (i32, i32, i32) {
    %c0_i32 = arith.constant 0 : i32
    %c0_i32_0 = arith.constant 0 : i32
    %c0_i32_1 = arith.constant 0 : i32
    return %arg0, %c0_i32, %c0_i32_0 : i32, i32, i32
  }
  func.func @transform_7(%arg0: i32) -> (i32, i32, i32) {
    %c0_i32 = arith.constant 0 : i32
    %c0_i32_0 = arith.constant 0 : i32
    %c0_i32_1 = arith.constant 0 : i32
    return %arg0, %c0_i32, %c0_i32_0 : i32, i32, i32
  }
}

module attributes {stable_mosaic.version = 11 : i64} {
  func.func @kernel(%arg0: i32, %arg1: memref<512x128xf32, #tpu.memory_space<vmem>>, %arg2: memref<1x128xf32, #tpu.memory_space<vmem>>, %arg3: memref<1x128xf32, #tpu.memory_space<vmem>>, %arg4: memref<512x128xf32, #tpu.memory_space<vmem>>) attributes {dimension_semantics = [#tpu.dimension_semantics<parallel>], iteration_bounds = array<i64: 3>, scalar_prefetch = 0 : i64, scratch_operands = 0 : i64, tpu.core_type = #tpu.core_type<tc>, window_params = [{transform_indices = @transform_0, window_bounds = array<i64: 512, 128>}, {pipeline_mode = #tpu.pipeline_mode<synchronous>, transform_indices = @transform_1, window_bounds = array<i64: 1, 128>}, {pipeline_mode = #tpu.pipeline_mode<synchronous>, transform_indices = @transform_2, window_bounds = array<i64: 1, 128>}, {transform_indices = @transform_3, window_bounds = array<i64: 512, 128>}]} {
    %c0 = arith.constant 0 : index
    %c0_0 = arith.constant 0 : index
    %0 = vector.load %arg1[%c0, %c0_0] : memref<512x128xf32, #tpu.memory_space<vmem>>, vector<512x128xf32>
    %c0_1 = arith.constant 0 : index
    %c0_2 = arith.constant 0 : index
    %1 = vector.load %arg2[%c0_1, %c0_2] : memref<1x128xf32, #tpu.memory_space<vmem>>, vector<1x128xf32>
    %2 = vector.broadcast %1 : vector<1x128xf32> to vector<512x128xf32>
    %3 = arith.mulf %0, %2 : vector<512x128xf32>
    %c0_3 = arith.constant 0 : index
    %c0_4 = arith.constant 0 : index
    %4 = vector.load %arg3[%c0_3, %c0_4] : memref<1x128xf32, #tpu.memory_space<vmem>>, vector<1x128xf32>
    %5 = vector.broadcast %4 : vector<1x128xf32> to vector<512x128xf32>
    %6 = arith.addf %3, %5 : vector<512x128xf32>
    %cst = arith.constant 0.000000e+00 : f32
    %7 = vector.broadcast %cst : f32 to vector<512x128xf32>
    %8 = arith.maximumf %6, %7 : vector<512x128xf32>
    %c0_5 = arith.constant 0 : index
    %c0_6 = arith.constant 0 : index
    %9 = vector.load %arg4[%c0_5, %c0_6] : memref<512x128xf32, #tpu.memory_space<vmem>>, vector<512x128xf32>
    tpu.vector_store %arg4[%c0_5, %c0_6], %8 {strides = array<i32>} : memref<512x128xf32, #tpu.memory_space<vmem>>, vector<512x128xf32>,
    return
  }
  func.func @transform_0(%arg0: i32) -> (i32, i32) {
    %c0_i32 = arith.constant 0 : i32
    %c0_i32_0 = arith.constant 0 : i32
    return %arg0, %c0_i32 : i32, i32
  }
  func.func @transform_1(%arg0: i32) -> (i32, i32) {
    %c0_i32 = arith.constant 0 : i32
    %c0_i32_0 = arith.constant 0 : i32
    %c0_i32_1 = arith.constant 0 : i32
    return %c0_i32, %c0_i32_0 : i32, i32
  }
  func.func @transform_2(%arg0: i32) -> (i32, i32) {
    %c0_i32 = arith.constant 0 : i32
    %c0_i32_0 = arith.constant 0 : i32
    %c0_i32_1 = arith.constant 0 : i32
    return %c0_i32, %c0_i32_0 : i32, i32
  }
  func.func @transform_3(%arg0: i32) -> (i32, i32) {
    %c0_i32 = arith.constant 0 : i32
    %c0_i32_0 = arith.constant 0 : i32
    return %arg0, %c0_i32 : i32, i32
  }
}

module attributes {stable_mosaic.version = 11 : i64} {
  func.func @kernel(%arg0: i32, %arg1: i32, %arg2: memref<1x512xi32, #tpu.memory_space<vmem>>, %arg3: memref<512x128xf32, #tpu.memory_space<vmem>>, %arg4: memref<512x128xf32, #tpu.memory_space<vmem>>, %arg5: memref<128x128xf32, #tpu.memory_space<vmem>>, %arg6: memref<1x128xf32, #tpu.memory_space<vmem>>, %arg7: memref<1x1xf32, #tpu.memory_space<smem>>, %arg8: memref<512x128xf32, #tpu.memory_space<vmem>>, %arg9: memref<1x1x128xf32, #tpu.memory_space<vmem>>, %arg10: memref<1x1x128xf32, #tpu.memory_space<vmem>>, %arg11: memref<512x128xf32, #tpu.memory_space<vmem>>) attributes {dimension_semantics = [#tpu.dimension_semantics<parallel>, #tpu.dimension_semantics<arbitrary>], iteration_bounds = array<i64: 2, 3>, scalar_prefetch = 0 : i64, scratch_operands = 1 : i64, tpu.core_type = #tpu.core_type<tc>, window_params = [{transform_indices = @transform_0, window_bounds = array<i64: 1, 512>}, {transform_indices = @transform_1, window_bounds = array<i64: 512, 128>}, {transform_indices = @transform_2, window_bounds = array<i64: 512, 128>}, {pipeline_mode = #tpu.pipeline_mode<synchronous>, transform_indices = @transform_3, window_bounds = array<i64: 128, 128>}, {pipeline_mode = #tpu.pipeline_mode<synchronous>, transform_indices = @transform_4, window_bounds = array<i64: 1, 128>}, {transform_indices = @transform_5, window_bounds = array<i64: 1, 1>}, {transform_indices = @transform_6, window_bounds = array<i64: 512, 128>}, {transform_indices = @transform_7, window_bounds = array<i64: 1, 1, 128>}, {transform_indices = @transform_8, window_bounds = array<i64: 1, 1, 128>}]} {
    %c0_i32 = arith.constant 0 : i32
    %0 = arith.cmpi eq, %arg1, %c0_i32 : i32
    %1 = arith.extui %0 : i1 to i32
    %c0_i32_0 = arith.constant 0 : i32
    %2 = arith.cmpi ne, %1, %c0_i32_0 : i32
    scf.if %2 {
      %c0_9 = arith.constant 0 : index
      %c0_10 = arith.constant 0 : index
      %20 = memref.load %arg7[%c0_9, %c0_10] : memref<1x1xf32, #tpu.memory_space<smem>>
      %cst_11 = arith.constant 1.000000e+00 : f32
      %21 = arith.addf %cst_11, %20 : f32
      %c0_12 = arith.constant 0 : index
      %c0_13 = arith.constant 0 : index
      %22 = vector.load %arg4[%c0_12, %c0_13] : memref<512x128xf32, #tpu.memory_space<vmem>>, vector<512x128xf32>
      %23 = vector.broadcast %21 : f32 to vector<512x128xf32>
      %24 = arith.mulf %23, %22 : vector<512x128xf32>
      %c0_14 = arith.constant 0 : index
      %c0_15 = arith.constant 0 : index
      %25 = vector.load %arg11[%c0_14, %c0_15] : memref<512x128xf32, #tpu.memory_space<vmem>>, vector<512x128xf32>
      tpu.vector_store %arg11[%c0_14, %c0_15], %24 {strides = array<i32>} : memref<512x128xf32, #tpu.memory_space<vmem>>, vector<512x128xf32>,
    } else {
    }
    %c512_i32 = arith.constant 512 : i32
    %3 = arith.muli %arg0, %c512_i32 : i32
    %4 = tpu.iota {dimensions = array<i32: 0>} : vector<512x512xi32>
    %5 = vector.broadcast %3 : i32 to vector<512x512xi32>
    %6 = arith.addi %5, %4 : vector<512x512xi32>
    %c0 = arith.constant 0 : index
    %c0_1 = arith.constant 0 : index
    %7 = vector.load %arg2[%c0, %c0_1] : memref<1x512xi32, #tpu.memory_space<vmem>>, vector<1x512xi32>
    %8 = vector.broadcast %7 : vector<1x512xi32> to vector<512x512xi32>
    %9 = arith.cmpi eq, %6, %8 : vector<512x512xi32>
    %10 = arith.extui %9 : vector<512x512xi1> to vector<512x512xi32>
    %11 = arith.sitofp %10 : vector<512x512xi32> to vector<512x512xf32>
    %c0_2 = arith.constant 0 : index
    %c0_3 = arith.constant 0 : index
    %12 = vector.load %arg11[%c0_2, %c0_3] : memref<512x128xf32, #tpu.memory_space<vmem>>, vector<512x128xf32>
    %c0_4 = arith.constant 0 : index
    %c0_5 = arith.constant 0 : index
    %13 = vector.load %arg3[%c0_4, %c0_5] : memref<512x128xf32, #tpu.memory_space<vmem>>, vector<512x128xf32>
    %cst = arith.constant dense<0.000000e+00> : vector<512x128xf32>
    %14 = tpu.matmul %11, %13, %cst {dimension_numbers = #tpu.dot_dimension_numbers<[1], [0], [0], [1], [0, 0, 1, 1], [], []>} : vector<512x512xf32>, vector<512x128xf32>, vector<512x128xf32> -> vector<512x128xf32>
    %15 = arith.addf %12, %14 : vector<512x128xf32>
    %c0_6 = arith.constant 0 : index
    %c0_7 = arith.constant 0 : index
    %16 = vector.load %arg11[%c0_6, %c0_7] : memref<512x128xf32, #tpu.memory_space<vmem>>, vector<512x128xf32>
    tpu.vector_store %arg11[%c0_6, %c0_7], %15 {strides = array<i32>} : memref<512x128xf32, #tpu.memory_space<vmem>>, vector<512x128xf32>,
    %c2_i32 = arith.constant 2 : i32
    %17 = arith.cmpi eq, %arg1, %c2_i32 : i32
    %18 = arith.extui %17 : i1 to i32
    %c0_i32_8 = arith.constant 0 : i32
    %19 = arith.cmpi ne, %18, %c0_i32_8 : i32
    scf.if %19 {
      %c0_9 = arith.constant 0 : index
      %c0_10 = arith.constant 0 : index
      %20 = vector.load %arg11[%c0_9, %c0_10] : memref<512x128xf32, #tpu.memory_space<vmem>>, vector<512x128xf32>
      %c0_11 = arith.constant 0 : index
      %c0_12 = arith.constant 0 : index
      %21 = vector.load %arg5[%c0_11, %c0_12] : memref<128x128xf32, #tpu.memory_space<vmem>>, vector<128x128xf32>
      %cst_13 = arith.constant dense<0.000000e+00> : vector<512x128xf32>
      %22 = tpu.matmul %20, %21, %cst_13 {dimension_numbers = #tpu.dot_dimension_numbers<[1], [0], [0], [1], [0, 0, 1, 1], [], []>} : vector<512x128xf32>, vector<128x128xf32>, vector<512x128xf32> -> vector<512x128xf32>
      %c0_14 = arith.constant 0 : index
      %c0_15 = arith.constant 0 : index
      %23 = vector.load %arg6[%c0_14, %c0_15] : memref<1x128xf32, #tpu.memory_space<vmem>>, vector<1x128xf32>
      %24 = vector.broadcast %23 : vector<1x128xf32> to vector<512x128xf32>
      %25 = arith.addf %22, %24 : vector<512x128xf32>
      %c0_16 = arith.constant 0 : index
      %c0_17 = arith.constant 0 : index
      %26 = vector.load %arg8[%c0_16, %c0_17] : memref<512x128xf32, #tpu.memory_space<vmem>>, vector<512x128xf32>
      tpu.vector_store %arg8[%c0_16, %c0_17], %25 {strides = array<i32>} : memref<512x128xf32, #tpu.memory_space<vmem>>, vector<512x128xf32>,
      %c512_i32_18 = arith.constant 512 : i32
      %27 = arith.muli %arg0, %c512_i32_18 : i32
      %28 = tpu.iota {dimensions = array<i32: 0>} : vector<512x1xi32>
      %29 = vector.broadcast %27 : i32 to vector<512x1xi32>
      %30 = arith.addi %29, %28 : vector<512x1xi32>
      %c640_i32 = arith.constant 640 : i32
      %31 = vector.broadcast %c640_i32 : i32 to vector<512x1xi32>
      %32 = arith.cmpi slt, %30, %31 : vector<512x1xi32>
      %cst_19 = arith.constant 0.000000e+00 : f32
      %33 = vector.shape_cast %32 : vector<512x1xi1> to vector<512x1xi1>
      %34 = vector.broadcast %33 : vector<512x1xi1> to vector<512x128xi1>
      %35 = vector.broadcast %cst_19 : f32 to vector<512x128xf32>
      %36 = arith.select %34, %25, %35 : vector<512x128xi1>, vector<512x128xf32>
      %cst_20 = arith.constant dense<0.000000e+00> : vector<128xf32>
      %37 = vector.multi_reduction <add>, %36, %cst_20 [0] : vector<512x128xf32> to vector<128xf32>
      %38 = vector.shape_cast %37 : vector<128xf32> to vector<1x1x128xf32>
      %39 = arith.mulf %36, %36 : vector<512x128xf32>
      %cst_21 = arith.constant dense<0.000000e+00> : vector<128xf32>
      %40 = vector.multi_reduction <add>, %39, %cst_21 [0] : vector<512x128xf32> to vector<128xf32>
      %41 = vector.shape_cast %40 : vector<128xf32> to vector<1x1x128xf32>
      %c0_22 = arith.constant 0 : index
      %c0_23 = arith.constant 0 : index
      %c0_24 = arith.constant 0 : index
      %42 = vector.load %arg9[%c0_22, %c0_23, %c0_24] : memref<1x1x128xf32, #tpu.memory_space<vmem>>, vector<1x1x128xf32>
      tpu.vector_store %arg9[%c0_22, %c0_23, %c0_24], %38 {strides = array<i32>} : memref<1x1x128xf32, #tpu.memory_space<vmem>>, vector<1x1x128xf32>,
      %c0_25 = arith.constant 0 : index
      %c0_26 = arith.constant 0 : index
      %c0_27 = arith.constant 0 : index
      %43 = vector.load %arg10[%c0_25, %c0_26, %c0_27] : memref<1x1x128xf32, #tpu.memory_space<vmem>>, vector<1x1x128xf32>
      tpu.vector_store %arg10[%c0_25, %c0_26, %c0_27], %41 {strides = array<i32>} : memref<1x1x128xf32, #tpu.memory_space<vmem>>, vector<1x1x128xf32>,
    } else {
    }
    return
  }
  func.func @transform_0(%arg0: i32, %arg1: i32) -> (i32, i32) {
    %c0_i32 = arith.constant 0 : i32
    %c0_i32_0 = arith.constant 0 : i32
    return %c0_i32, %arg1 : i32, i32
  }
  func.func @transform_1(%arg0: i32, %arg1: i32) -> (i32, i32) {
    %c0_i32 = arith.constant 0 : i32
    %c0_i32_0 = arith.constant 0 : i32
    return %arg1, %c0_i32 : i32, i32
  }
  func.func @transform_2(%arg0: i32, %arg1: i32) -> (i32, i32) {
    %c0_i32 = arith.constant 0 : i32
    %c0_i32_0 = arith.constant 0 : i32
    return %arg0, %c0_i32 : i32, i32
  }
  func.func @transform_3(%arg0: i32, %arg1: i32) -> (i32, i32) {
    %c0_i32 = arith.constant 0 : i32
    %c0_i32_0 = arith.constant 0 : i32
    %c0_i32_1 = arith.constant 0 : i32
    return %c0_i32, %c0_i32_0 : i32, i32
  }
  func.func @transform_4(%arg0: i32, %arg1: i32) -> (i32, i32) {
    %c0_i32 = arith.constant 0 : i32
    %c0_i32_0 = arith.constant 0 : i32
    %c0_i32_1 = arith.constant 0 : i32
    return %c0_i32, %c0_i32_0 : i32, i32
  }
  func.func @transform_5(%arg0: i32, %arg1: i32) -> (i32, i32) {
    %c0_i32 = arith.constant 0 : i32
    %c0_i32_0 = arith.constant 0 : i32
    %c0_i32_1 = arith.constant 0 : i32
    return %c0_i32, %c0_i32_0 : i32, i32
  }
  func.func @transform_6(%arg0: i32, %arg1: i32) -> (i32, i32) {
    %c0_i32 = arith.constant 0 : i32
    %c0_i32_0 = arith.constant 0 : i32
    return %arg0, %c0_i32 : i32, i32
  }
  func.func @transform_7(%arg0: i32, %arg1: i32) -> (i32, i32, i32) {
    %c0_i32 = arith.constant 0 : i32
    %c0_i32_0 = arith.constant 0 : i32
    %c0_i32_1 = arith.constant 0 : i32
    return %arg0, %c0_i32, %c0_i32_0 : i32, i32, i32
  }
  func.func @transform_8(%arg0: i32, %arg1: i32) -> (i32, i32, i32) {
    %c0_i32 = arith.constant 0 : i32
    %c0_i32_0 = arith.constant 0 : i32
    %c0_i32_1 = arith.constant 0 : i32
    return %arg0, %c0_i32, %c0_i32_0 : i32, i32, i32
  }
}

module attributes {stable_mosaic.version = 11 : i64} {
  func.func @kernel(%arg0: i32, %arg1: memref<512x128xf32, #tpu.memory_space<vmem>>, %arg2: memref<1x128xf32, #tpu.memory_space<vmem>>, %arg3: memref<1x128xf32, #tpu.memory_space<vmem>>, %arg4: memref<128x128xf32, #tpu.memory_space<vmem>>, %arg5: memref<1x128xf32, #tpu.memory_space<vmem>>, %arg6: memref<512x128xf32, #tpu.memory_space<vmem>>, %arg7: memref<1x1x128xf32, #tpu.memory_space<vmem>>, %arg8: memref<1x1x128xf32, #tpu.memory_space<vmem>>) attributes {dimension_semantics = [#tpu.dimension_semantics<parallel>], iteration_bounds = array<i64: 2>, scalar_prefetch = 0 : i64, scratch_operands = 0 : i64, tpu.core_type = #tpu.core_type<tc>, window_params = [{transform_indices = @transform_0, window_bounds = array<i64: 512, 128>}, {pipeline_mode = #tpu.pipeline_mode<synchronous>, transform_indices = @transform_1, window_bounds = array<i64: 1, 128>}, {pipeline_mode = #tpu.pipeline_mode<synchronous>, transform_indices = @transform_2, window_bounds = array<i64: 1, 128>}, {pipeline_mode = #tpu.pipeline_mode<synchronous>, transform_indices = @transform_3, window_bounds = array<i64: 128, 128>}, {pipeline_mode = #tpu.pipeline_mode<synchronous>, transform_indices = @transform_4, window_bounds = array<i64: 1, 128>}, {transform_indices = @transform_5, window_bounds = array<i64: 512, 128>}, {transform_indices = @transform_6, window_bounds = array<i64: 1, 1, 128>}, {transform_indices = @transform_7, window_bounds = array<i64: 1, 1, 128>}]} {
    %c0 = arith.constant 0 : index
    %c0_0 = arith.constant 0 : index
    %0 = vector.load %arg1[%c0, %c0_0] : memref<512x128xf32, #tpu.memory_space<vmem>>, vector<512x128xf32>
    %c0_1 = arith.constant 0 : index
    %c0_2 = arith.constant 0 : index
    %1 = vector.load %arg2[%c0_1, %c0_2] : memref<1x128xf32, #tpu.memory_space<vmem>>, vector<1x128xf32>
    %2 = vector.broadcast %1 : vector<1x128xf32> to vector<512x128xf32>
    %3 = arith.mulf %0, %2 : vector<512x128xf32>
    %c0_3 = arith.constant 0 : index
    %c0_4 = arith.constant 0 : index
    %4 = vector.load %arg3[%c0_3, %c0_4] : memref<1x128xf32, #tpu.memory_space<vmem>>, vector<1x128xf32>
    %5 = vector.broadcast %4 : vector<1x128xf32> to vector<512x128xf32>
    %6 = arith.addf %3, %5 : vector<512x128xf32>
    %cst = arith.constant 0.000000e+00 : f32
    %7 = vector.broadcast %cst : f32 to vector<512x128xf32>
    %8 = arith.maximumf %6, %7 : vector<512x128xf32>
    %c0_5 = arith.constant 0 : index
    %c0_6 = arith.constant 0 : index
    %9 = vector.load %arg4[%c0_5, %c0_6] : memref<128x128xf32, #tpu.memory_space<vmem>>, vector<128x128xf32>
    %cst_7 = arith.constant dense<0.000000e+00> : vector<512x128xf32>
    %10 = tpu.matmul %8, %9, %cst_7 {dimension_numbers = #tpu.dot_dimension_numbers<[1], [0], [0], [1], [0, 0, 1, 1], [], []>} : vector<512x128xf32>, vector<128x128xf32>, vector<512x128xf32> -> vector<512x128xf32>
    %c0_8 = arith.constant 0 : index
    %c0_9 = arith.constant 0 : index
    %11 = vector.load %arg5[%c0_8, %c0_9] : memref<1x128xf32, #tpu.memory_space<vmem>>, vector<1x128xf32>
    %12 = vector.broadcast %11 : vector<1x128xf32> to vector<512x128xf32>
    %13 = arith.addf %10, %12 : vector<512x128xf32>
    %c0_10 = arith.constant 0 : index
    %c0_11 = arith.constant 0 : index
    %14 = vector.load %arg6[%c0_10, %c0_11] : memref<512x128xf32, #tpu.memory_space<vmem>>, vector<512x128xf32>
    tpu.vector_store %arg6[%c0_10, %c0_11], %13 {strides = array<i32>} : memref<512x128xf32, #tpu.memory_space<vmem>>, vector<512x128xf32>,
    %c512_i32 = arith.constant 512 : i32
    %15 = arith.muli %arg0, %c512_i32 : i32
    %16 = tpu.iota {dimensions = array<i32: 0>} : vector<512x1xi32>
    %17 = vector.broadcast %15 : i32 to vector<512x1xi32>
    %18 = arith.addi %17, %16 : vector<512x1xi32>
    %c640_i32 = arith.constant 640 : i32
    %19 = vector.broadcast %c640_i32 : i32 to vector<512x1xi32>
    %20 = arith.cmpi slt, %18, %19 : vector<512x1xi32>
    %cst_12 = arith.constant 0.000000e+00 : f32
    %21 = vector.shape_cast %20 : vector<512x1xi1> to vector<512x1xi1>
    %22 = vector.broadcast %21 : vector<512x1xi1> to vector<512x128xi1>
    %23 = vector.broadcast %cst_12 : f32 to vector<512x128xf32>
    %24 = arith.select %22, %13, %23 : vector<512x128xi1>, vector<512x128xf32>
    %cst_13 = arith.constant dense<0.000000e+00> : vector<128xf32>
    %25 = vector.multi_reduction <add>, %24, %cst_13 [0] : vector<512x128xf32> to vector<128xf32>
    %26 = vector.shape_cast %25 : vector<128xf32> to vector<1x1x128xf32>
    %27 = arith.mulf %24, %24 : vector<512x128xf32>
    %cst_14 = arith.constant dense<0.000000e+00> : vector<128xf32>
    %28 = vector.multi_reduction <add>, %27, %cst_14 [0] : vector<512x128xf32> to vector<128xf32>
    %29 = vector.shape_cast %28 : vector<128xf32> to vector<1x1x128xf32>
    %c0_15 = arith.constant 0 : index
    %c0_16 = arith.constant 0 : index
    %c0_17 = arith.constant 0 : index
    %30 = vector.load %arg7[%c0_15, %c0_16, %c0_17] : memref<1x1x128xf32, #tpu.memory_space<vmem>>, vector<1x1x128xf32>
    tpu.vector_store %arg7[%c0_15, %c0_16, %c0_17], %26 {strides = array<i32>} : memref<1x1x128xf32, #tpu.memory_space<vmem>>, vector<1x1x128xf32>,
    %c0_18 = arith.constant 0 : index
    %c0_19 = arith.constant 0 : index
    %c0_20 = arith.constant 0 : index
    %31 = vector.load %arg8[%c0_18, %c0_19, %c0_20] : memref<1x1x128xf32, #tpu.memory_space<vmem>>, vector<1x1x128xf32>
    tpu.vector_store %arg8[%c0_18, %c0_19, %c0_20], %29 {strides = array<i32>} : memref<1x1x128xf32, #tpu.memory_space<vmem>>, vector<1x1x128xf32>,
    return
  }
  func.func @transform_0(%arg0: i32) -> (i32, i32) {
    %c0_i32 = arith.constant 0 : i32
    %c0_i32_0 = arith.constant 0 : i32
    return %arg0, %c0_i32 : i32, i32
  }
  func.func @transform_1(%arg0: i32) -> (i32, i32) {
    %c0_i32 = arith.constant 0 : i32
    %c0_i32_0 = arith.constant 0 : i32
    %c0_i32_1 = arith.constant 0 : i32
    return %c0_i32, %c0_i32_0 : i32, i32
  }
  func.func @transform_2(%arg0: i32) -> (i32, i32) {
    %c0_i32 = arith.constant 0 : i32
    %c0_i32_0 = arith.constant 0 : i32
    %c0_i32_1 = arith.constant 0 : i32
    return %c0_i32, %c0_i32_0 : i32, i32
  }
  func.func @transform_3(%arg0: i32) -> (i32, i32) {
    %c0_i32 = arith.constant 0 : i32
    %c0_i32_0 = arith.constant 0 : i32
    %c0_i32_1 = arith.constant 0 : i32
    return %c0_i32, %c0_i32_0 : i32, i32
  }
  func.func @transform_4(%arg0: i32) -> (i32, i32) {
    %c0_i32 = arith.constant 0 : i32
    %c0_i32_0 = arith.constant 0 : i32
    %c0_i32_1 = arith.constant 0 : i32
    return %c0_i32, %c0_i32_0 : i32, i32
  }
  func.func @transform_5(%arg0: i32) -> (i32, i32) {
    %c0_i32 = arith.constant 0 : i32
    %c0_i32_0 = arith.constant 0 : i32
    return %arg0, %c0_i32 : i32, i32
  }
  func.func @transform_6(%arg0: i32) -> (i32, i32, i32) {
    %c0_i32 = arith.constant 0 : i32
    %c0_i32_0 = arith.constant 0 : i32
    %c0_i32_1 = arith.constant 0 : i32
    return %arg0, %c0_i32, %c0_i32_0 : i32, i32, i32
  }
  func.func @transform_7(%arg0: i32) -> (i32, i32, i32) {
    %c0_i32 = arith.constant 0 : i32
    %c0_i32_0 = arith.constant 0 : i32
    %c0_i32_1 = arith.constant 0 : i32
    return %arg0, %c0_i32, %c0_i32_0 : i32, i32, i32
  }
}

module attributes {stable_mosaic.version = 11 : i64} {
  func.func @kernel(%arg0: i32, %arg1: memref<512x128xf32, #tpu.memory_space<vmem>>, %arg2: memref<1x128xf32, #tpu.memory_space<vmem>>, %arg3: memref<1x128xf32, #tpu.memory_space<vmem>>, %arg4: memref<512x128xf32, #tpu.memory_space<vmem>>) attributes {dimension_semantics = [#tpu.dimension_semantics<parallel>], iteration_bounds = array<i64: 2>, scalar_prefetch = 0 : i64, scratch_operands = 0 : i64, tpu.core_type = #tpu.core_type<tc>, window_params = [{transform_indices = @transform_0, window_bounds = array<i64: 512, 128>}, {pipeline_mode = #tpu.pipeline_mode<synchronous>, transform_indices = @transform_1, window_bounds = array<i64: 1, 128>}, {pipeline_mode = #tpu.pipeline_mode<synchronous>, transform_indices = @transform_2, window_bounds = array<i64: 1, 128>}, {transform_indices = @transform_3, window_bounds = array<i64: 512, 128>}]} {
    %c0 = arith.constant 0 : index
    %c0_0 = arith.constant 0 : index
    %0 = vector.load %arg1[%c0, %c0_0] : memref<512x128xf32, #tpu.memory_space<vmem>>, vector<512x128xf32>
    %c0_1 = arith.constant 0 : index
    %c0_2 = arith.constant 0 : index
    %1 = vector.load %arg2[%c0_1, %c0_2] : memref<1x128xf32, #tpu.memory_space<vmem>>, vector<1x128xf32>
    %2 = vector.broadcast %1 : vector<1x128xf32> to vector<512x128xf32>
    %3 = arith.mulf %0, %2 : vector<512x128xf32>
    %c0_3 = arith.constant 0 : index
    %c0_4 = arith.constant 0 : index
    %4 = vector.load %arg3[%c0_3, %c0_4] : memref<1x128xf32, #tpu.memory_space<vmem>>, vector<1x128xf32>
    %5 = vector.broadcast %4 : vector<1x128xf32> to vector<512x128xf32>
    %6 = arith.addf %3, %5 : vector<512x128xf32>
    %cst = arith.constant 0.000000e+00 : f32
    %7 = vector.broadcast %cst : f32 to vector<512x128xf32>
    %8 = arith.maximumf %6, %7 : vector<512x128xf32>
    %c0_5 = arith.constant 0 : index
    %c0_6 = arith.constant 0 : index
    %9 = vector.load %arg4[%c0_5, %c0_6] : memref<512x128xf32, #tpu.memory_space<vmem>>, vector<512x128xf32>
    tpu.vector_store %arg4[%c0_5, %c0_6], %8 {strides = array<i32>} : memref<512x128xf32, #tpu.memory_space<vmem>>, vector<512x128xf32>,
    return
  }
  func.func @transform_0(%arg0: i32) -> (i32, i32) {
    %c0_i32 = arith.constant 0 : i32
    %c0_i32_0 = arith.constant 0 : i32
    return %arg0, %c0_i32 : i32, i32
  }
  func.func @transform_1(%arg0: i32) -> (i32, i32) {
    %c0_i32 = arith.constant 0 : i32
    %c0_i32_0 = arith.constant 0 : i32
    %c0_i32_1 = arith.constant 0 : i32
    return %c0_i32, %c0_i32_0 : i32, i32
  }
  func.func @transform_2(%arg0: i32) -> (i32, i32) {
    %c0_i32 = arith.constant 0 : i32
    %c0_i32_0 = arith.constant 0 : i32
    %c0_i32_1 = arith.constant 0 : i32
    return %c0_i32, %c0_i32_0 : i32, i32
  }
  func.func @transform_3(%arg0: i32) -> (i32, i32) {
    %c0_i32 = arith.constant 0 : i32
    %c0_i32_0 = arith.constant 0 : i32
    return %arg0, %c0_i32 : i32, i32
  }
}

</mosaic_0001>

<llo_original>
// kernel: mpnn_conv_forward.6
$region0: #{mpnn_conv_forward.6}
  #allocation0 [shape = 'u32[]', space=smem, size = 0x4, offset = 0x4, fixed_abs, tag = 'smem constant byte address 0x4 - core index']
  #allocation1 [shape = 'u32[144,128]{1,0:T(1,128)}', space=vmem, size = 0x12000, scoped, tag = 'internal scratch']
  %s0 = inlined_call_operand.vmem [shape: f32[1536,128], index: 0, kind: input, shape index: {}]
  %s1 = inlined_call_operand.vmem [shape: f32[128,128], index: 1, kind: input, shape index: {}]
  %s2 = inlined_call_operand.vmem [shape: f32[1,128], index: 2, kind: input, shape index: {}]
  %s3 = inlined_call_operand.vmem [shape: f32[128,128], index: 3, kind: input, shape index: {}]
  %s4 = inlined_call_operand.vmem [shape: f32[1,128], index: 4, kind: input, shape index: {}]
  %s5 = inlined_call_operand.vmem [shape: f32[1536,128], index: 5, kind: output, shape index: {0}]
  %s6 = inlined_call_operand.vmem [shape: f32[1536,128], index: 6, kind: output, shape index: {1}]
  %s7 = inlined_call_operand.vmem [shape: f32[3,1,128], index: 7, kind: output, shape index: {2}]
  %s8 = inlined_call_operand.vmem [shape: f32[3,1,128], index: 8, kind: output, shape index: {3}]
  %9 = xla_tuple %s5, %s6, %s7, %s8
  %s10 = sld [smem:[#allocation0]]
  $region77: #{mpnn_conv_forward.6} parent=0
    _
  %s12 = ssub.s32 1, %s10
  %s13 = scalar_select 0, %s12, %s10
  loop: start=0, step=1, limit=5
  $region2: #{mpnn_conv_forward.6} parent=0 // loop_pre_header
    _
  $region3: #{mpnn_conv_forward.6} parent=0 // loop_header
    %s15 = sphi 0, %s19
    %p16 = scmp.ge.s32.totalorder %s15, 5
    %s25 = sphi 0, %s27
    %s28 = sphi 0, %s25
    %s29 = sphi 0, %s28
    %s45 = sphi 0, %s29
    %s49 = sphi 0, %s49
    %s51 = sphi 0, %s49
    %s52 = sphi 0, %s51
    %s66 = sphi 0, %s52
    %s70 = sphi 0, %s70
    %s72 = sphi 0, %s70
    %s73 = sphi 0, %s72
    %s87 = sphi 0, %s73
    %s91 = sphi 0, %s91
    %s93 = sphi 0, %s91
    %s94 = sphi 0, %s93
    %s108 = sphi 0, %s94
    %s112 = sphi 0, %s112
    %s114 = sphi 0, %s112
    %s115 = sphi 0, %s114
    %s129 = sphi 0, %s115
    %s135 = sphi 0, %s137
    %s138 = sphi 0, %s135
    %s139 = sphi 0, %s138
    %s155 = sphi 0, %s139
    %s161 = sphi 0, %s163
    %s164 = sphi 0, %s161
    %s165 = sphi 0, %s164
    %s181 = sphi 0, %s165
    %s187 = sphi 0, %s189
    %s190 = sphi 0, %s187
    %s191 = sphi 0, %s190
    %s207 = sphi 0, %s191
    %s213 = sphi 0, %s215
    %s216 = sphi 0, %s213
    %s217 = sphi 0, %s216
    %s233 = sphi 0, %s217
  $region4: #{mpnn_conv_forward.6} parent=0 // loop_header_branch
    %18 = sbr.rel (%p16) target = $region8
  $region5: #{mpnn_conv_forward.6} parent=0 // loop_body
    %s20 = ssub.s32 %s15, 1
    %s21 = ssub.s32 %s15, 2
    %s22 = sadd.s32 %s15, 1
    %s23 = ssub.s32 %s15, %s22
    %p24 = scmp.eq.s32.totalorder %s23, 0
    %s26 = sadd.s32 %s25, 1
    %s27 = scalar_select %p24, %s25, %s26
    %p30 = pneg %p24
    %p31 = scmp.eq.s32.totalorder %s15, 2
    %p32 = por %p30, %p31
    %p33 = scmp.ne.s32.totalorder %s25, %s28
    %p34 = scmp.eq.s32.totalorder %s15, 0
    %p35 = por %p33, %p34
    %p36 = scmp.ne.s32.totalorder %s25, %s28
    %p37 = scmp.eq.s32.totalorder %s20, 2
    %p38 = por %p36, %p37
    %p39 = scmp.ne.s32.totalorder %s28, %s29
    %p40 = scmp.eq.s32.totalorder %s20, 0
    %p41 = por %p39, %p40
    %p42 = scmp.ne.s32.totalorder %s28, %s29
    %p43 = scmp.eq.s32.totalorder %s21, 2
    %p44 = por %p42, %p43
    %p46 = scmp.ne.s32.totalorder %s29, %s45
    %p47 = scmp.eq.s32.totalorder %s21, 0
    %p48 = por %p46, %p47
    %s50 = sadd.s32 %s49, 1
    %p53 = scmp.eq.s32.totalorder %s15, 2
    %p54 = scmp.ne.s32.totalorder %s49, %s51
    %p55 = scmp.eq.s32.totalorder %s15, 0
    %p56 = por %p54, %p55
    %p57 = scmp.ne.s32.totalorder %s49, %s51
    %p58 = scmp.eq.s32.totalorder %s20, 2
    %p59 = por %p57, %p58
    %p60 = scmp.ne.s32.totalorder %s51, %s52
    %p61 = scmp.eq.s32.totalorder %s20, 0
    %p62 = por %p60, %p61
    %p63 = scmp.ne.s32.totalorder %s51, %s52
    %p64 = scmp.eq.s32.totalorder %s21, 2
    %p65 = por %p63, %p64
    %p67 = scmp.ne.s32.totalorder %s52, %s66
    %p68 = scmp.eq.s32.totalorder %s21, 0
    %p69 = por %p67, %p68
    %s71 = sadd.s32 %s70, 1
    %p74 = scmp.eq.s32.totalorder %s15, 2
    %p75 = scmp.ne.s32.totalorder %s70, %s72
    %p76 = scmp.eq.s32.totalorder %s15, 0
    %p77 = por %p75, %p76
    %p78 = scmp.ne.s32.totalorder %s70, %s72
    %p79 = scmp.eq.s32.totalorder %s20, 2
    %p80 = por %p78, %p79
    %p81 = scmp.ne.s32.totalorder %s72, %s73
    %p82 = scmp.eq.s32.totalorder %s20, 0
    %p83 = por %p81, %p82
    %p84 = scmp.ne.s32.totalorder %s72, %s73
    %p85 = scmp.eq.s32.totalorder %s21, 2
    %p86 = por %p84, %p85
    %p88 = scmp.ne.s32.totalorder %s73, %s87
    %p89 = scmp.eq.s32.totalorder %s21, 0
    %p90 = por %p88, %p89
    %s92 = sadd.s32 %s91, 1
    %p95 = scmp.eq.s32.totalorder %s15, 2
    %p96 = scmp.ne.s32.totalorder %s91, %s93
    %p97 = scmp.eq.s32.totalorder %s15, 0
    %p98 = por %p96, %p97
    %p99 = scmp.ne.s32.totalorder %s91, %s93
    %p100 = scmp.eq.s32.totalorder %s20, 2
    %p101 = por %p99, %p100
    %p102 = scmp.ne.s32.totalorder %s93, %s94
    %p103 = scmp.eq.s32.totalorder %s20, 0
    %p104 = por %p102, %p103
    %p105 = scmp.ne.s32.totalorder %s93, %s94
    %p106 = scmp.eq.s32.totalorder %s21, 2
    %p107 = por %p105, %p106
    %p109 = scmp.ne.s32.totalorder %s94, %s108
    %p110 = scmp.eq.s32.totalorder %s21, 0
    %p111 = por %p109, %p110
    %s113 = sadd.s32 %s112, 1
    %p116 = scmp.eq.s32.totalorder %s15, 2
    %p117 = scmp.ne.s32.totalorder %s112, %s114
    %p118 = scmp.eq.s32.totalorder %s15, 0
    %p119 = por %p117, %p118
    %p120 = scmp.ne.s32.totalorder %s112, %s114
    %p121 = scmp.eq.s32.totalorder %s20, 2
    %p122 = por %p120, %p121
    %p123 = scmp.ne.s32.totalorder %s114, %s115
    %p124 = scmp.eq.s32.totalorder %s20, 0
    %p125 = por %p123, %p124
    %p126 = scmp.ne.s32.totalorder %s114, %s115
    %p127 = scmp.eq.s32.totalorder %s21, 2
    %p128 = por %p126, %p127
    %p130 = scmp.ne.s32.totalorder %s115, %s129
    %p131 = scmp.eq.s32.totalorder %s21, 0
    %p132 = por %p130, %p131
    %s133 = ssub.s32 %s15, %s22
    %p134 = scmp.eq.s32.totalorder %s133, 0
    %s136 = sadd.s32 %s135, 1
    %s137 = scalar_select %p134, %s135, %s136
    %p140 = pneg %p134
    %p141 = scmp.eq.s32.totalorder %s15, 2
    %p142 = por %p140, %p141
    %p143 = scmp.ne.s32.totalorder %s135, %s138
    %p144 = scmp.eq.s32.totalorder %s15, 0
    %p145 = por %p143, %p144
    %p146 = scmp.ne.s32.totalorder %s135, %s138
    %p147 = scmp.eq.s32.totalorder %s20, 2
    %p148 = por %p146, %p147
    %p149 = scmp.ne.s32.totalorder %s138, %s139
    %p150 = scmp.eq.s32.totalorder %s20, 0
    %p151 = por %p149, %p150
    %p152 = scmp.ne.s32.totalorder %s138, %s139
    %p153 = scmp.eq.s32.totalorder %s21, 2
    %p154 = por %p152, %p153
    %p156 = scmp.ne.s32.totalorder %s139, %s155
    %p157 = scmp.eq.s32.totalorder %s21, 0
    %p158 = por %p156, %p157
    %s159 = ssub.s32 %s15, %s22
    %p160 = scmp.eq.s32.totalorder %s159, 0
    %s162 = sadd.s32 %s161, 1
    %s163 = scalar_select %p160, %s161, %s162
    %p166 = pneg %p160
    %p167 = scmp.eq.s32.totalorder %s15, 2
    %p168 = por %p166, %p167
    %p169 = scmp.ne.s32.totalorder %s161, %s164
    %p170 = scmp.eq.s32.totalorder %s15, 0
    %p171 = por %p169, %p170
    %p172 = scmp.ne.s32.totalorder %s161, %s164
    %p173 = scmp.eq.s32.totalorder %s20, 2
    %p174 = por %p172, %p173
    %p175 = scmp.ne.s32.totalorder %s164, %s165
    %p176 = scmp.eq.s32.totalorder %s20, 0
    %p177 = por %p175, %p176
    %p178 = scmp.ne.s32.totalorder %s164, %s165
    %p179 = scmp.eq.s32.totalorder %s21, 2
    %p180 = por %p178, %p179
    %p182 = scmp.ne.s32.totalorder %s165, %s181
    %p183 = scmp.eq.s32.totalorder %s21, 0
    %p184 = por %p182, %p183
    %s185 = ssub.s32 %s15, %s22
    %p186 = scmp.eq.s32.totalorder %s185, 0
    %s188 = sadd.s32 %s187, 1
    %s189 = scalar_select %p186, %s187, %s188
    %p192 = pneg %p186
    %p193 = scmp.eq.s32.totalorder %s15, 2
    %p194 = por %p192, %p193
    %p195 = scmp.ne.s32.totalorder %s187, %s190
    %p196 = scmp.eq.s32.totalorder %s15, 0
    %p197 = por %p195, %p196
    %p198 = scmp.ne.s32.totalorder %s187, %s190
    %p199 = scmp.eq.s32.totalorder %s20, 2
    %p200 = por %p198, %p199
    %p201 = scmp.ne.s32.totalorder %s190, %s191
    %p202 = scmp.eq.s32.totalorder %s20, 0
    %p203 = por %p201, %p202
    %p204 = scmp.ne.s32.totalorder %s190, %s191
    %p205 = scmp.eq.s32.totalorder %s21, 2
    %p206 = por %p204, %p205
    %p208 = scmp.ne.s32.totalorder %s191, %s207
    %p209 = scmp.eq.s32.totalorder %s21, 0
    %p210 = por %p208, %p209
    %s211 = ssub.s32 %s15, %s22
    %p212 = scmp.eq.s32.totalorder %s211, 0
    %s214 = sadd.s32 %s213, 1
    %s215 = scalar_select %p212, %s213, %s214
    %p218 = pneg %p212
    %p219 = scmp.eq.s32.totalorder %s15, 2
    %p220 = por %p218, %p219
    %p221 = scmp.ne.s32.totalorder %s213, %s216
    %p222 = scmp.eq.s32.totalorder %s15, 0
    %p223 = por %p221, %p222
    %p224 = scmp.ne.s32.totalorder %s213, %s216
    %p225 = scmp.eq.s32.totalorder %s20, 2
    %p226 = por %p224, %p225
    %p227 = scmp.ne.s32.totalorder %s216, %s217
    %p228 = scmp.eq.s32.totalorder %s20, 0
    %p229 = por %p227, %p228
    %p230 = scmp.ne.s32.totalorder %s216, %s217
    %p231 = scmp.eq.s32.totalorder %s21, 2
    %p232 = por %p230, %p231
    %p234 = scmp.ne.s32.totalorder %s217, %s233
    %p235 = scmp.eq.s32.totalorder %s21, 0
    %p236 = por %p234, %p235
    %p237 = scmp.le.s32.totalorder 1, %s15
    %p238 = scmp.lt.s32.totalorder %s15, 4
    %p239 = pnand %p237, %p238
    %p240 = pneg %p239
    // Predicated region
    $region9: #{mpnn_conv_forward.6} parent=5 // pred_check
      _
    $region10: #{mpnn_conv_forward.6} parent=5 // pred_check_branch
      %242 = sbr.rel (%p239) target = $region12
    $region11: #{mpnn_conv_forward.6} parent=5 // pred_region
      %s243 = ssub.s32 %s15, 1
      // Predicated region
      $region13: #{mpnn_conv_forward.6} parent=11 // pred_check
        %p244 = pneg %p62
      $region14: #{mpnn_conv_forward.6} parent=11 // pred_check_branch
        %246 = sbr.rel (%p244) target = $region16
      $region15: #{mpnn_conv_forward.6} parent=11 // pred_region
        _
      $region16: #{mpnn_conv_forward.6} parent=11 // pred_fallthru
        _
      // Predicated region
      $region17: #{mpnn_conv_forward.6} parent=11 // pred_check
        %p247 = pneg %p83
      $region18: #{mpnn_conv_forward.6} parent=11 // pred_check_branch
        %249 = sbr.rel (%p247) target = $region20
      $region19: #{mpnn_conv_forward.6} parent=11 // pred_region
        _
      $region20: #{mpnn_conv_forward.6} parent=11 // pred_fallthru
        _
      // Predicated region
      $region21: #{mpnn_conv_forward.6} parent=11 // pred_check
        %p250 = pneg %p104
      $region22: #{mpnn_conv_forward.6} parent=11 // pred_check_branch
        %252 = sbr.rel (%p250) target = $region24
      $region23: #{mpnn_conv_forward.6} parent=11 // pred_region
        _
      $region24: #{mpnn_conv_forward.6} parent=11 // pred_fallthru
        _
      // Predicated region
      $region25: #{mpnn_conv_forward.6} parent=11 // pred_check
        %p253 = pneg %p125
      $region26: #{mpnn_conv_forward.6} parent=11 // pred_check_branch
        %255 = sbr.rel (%p253) target = $region28
      $region27: #{mpnn_conv_forward.6} parent=11 // pred_region
        _
      $region28: #{mpnn_conv_forward.6} parent=11 // pred_fallthru
        _
    $region12: #{mpnn_conv_forward.6} parent=5 // pred_fallthru
      _
    %p256 = scmp.lt.s32.totalorder %s15, 3
    // Predicated region
    $region29: #{mpnn_conv_forward.6} parent=5 // pred_check
      %p257 = pneg %p256
    $region30: #{mpnn_conv_forward.6} parent=5 // pred_check_branch
      %259 = sbr.rel (%p257) target = $region32
    $region31: #{mpnn_conv_forward.6} parent=5 // pred_region
      // Predicated region
      $region33: #{mpnn_conv_forward.6} parent=31 // pred_check
        %p260 = pneg %p35
      $region34: #{mpnn_conv_forward.6} parent=31 // pred_check_branch
        %262 = sbr.rel (%p260) target = $region36
      $region35: #{mpnn_conv_forward.6} parent=31 // pred_region
        %s263 = smul.u32 64, %s15
        %p264 = scmp.lt.s32.totalorder %s263, 191
        %s265 = scalar_select %p264, %s263, 191
        %s266 = smul.addr %s265, 8
        %s267 = scalar_lea.vmem %s0, %s266
        %s268 = smul.u32 64, %s15
      $region36: #{mpnn_conv_forward.6} parent=31 // pred_fallthru
        _
    $region32: #{mpnn_conv_forward.6} parent=5 // pred_fallthru
      _
    %p269 = scmp.le.s32.totalorder 1, %s15
    %p270 = scmp.lt.s32.totalorder %s15, 4
    %p271 = pnand %p269, %p270
    %p272 = pneg %p271
    // Predicated region
    $region37: #{mpnn_conv_forward.6} parent=5 // pred_check
      _
    $region38: #{mpnn_conv_forward.6} parent=5 // pred_check_branch
      %274 = sbr.rel (%p271) target = $region40
    $region39: #{mpnn_conv_forward.6} parent=5 // pred_region
      %s275 = ssub.s32 %s15, 1
      %s276 = smul.u32 64, %s20
      %p277 = scmp.lt.s32.totalorder %s276, 191
      %s278 = scalar_select %p277, %s276, 191
      %s279 = smul.addr %s278, 8
      %s280 = scalar_lea.vmem %s0, %s279
      %p281 = pneg %p41
      %p282 = pneg %p38
      %p283 = pneg %p62
      %p284 = pneg %p59
      %p285 = pneg %p83
      %p286 = pneg %p80
      %p287 = pneg %p104
      %p288 = pneg %p101
      %p289 = pneg %p125
      %p290 = pneg %p122
      %p291 = pneg %p151
      %p292 = pneg %p148
      %s293 = smul.u32 64, %s20
      %p294 = scmp.lt.s32.totalorder %s293, 191
      %s295 = scalar_select %p294, %s293, 191
      %s296 = smul.addr %s295, 8
      %s297 = scalar_lea.vmem %s5, %s296
      %p298 = pneg %p177
      %p299 = pneg %p174
      %s300 = smul.u32 64, %s20
      %p301 = scmp.lt.s32.totalorder %s300, 191
      %s302 = scalar_select %p301, %s300, 191
      %s303 = smul.addr %s302, 8
      %s304 = scalar_lea.vmem %s6, %s303
      %p305 = pneg %p203
      %p306 = pneg %p200
      %p307 = scmp.lt.s32.totalorder %s20, 2
      %s308 = scalar_select %p307, %s20, 2
      %s309 = scalar_lea.vmem %s7, %s308
      %p310 = pneg %p229
      %p311 = pneg %p226
      %p312 = scmp.lt.s32.totalorder %s20, 2
      %s313 = scalar_select %p312, %s20, 2
      %s314 = scalar_lea.vmem %s8, %s313
      %s315 = smul.u32 64, %s20
      %p316 = scmp.lt.s32.totalorder %s315, 191
      %s317 = scalar_select %p316, %s315, 191
      %s318 = smul.addr %s317, 8
      %s319 = scalar_lea.vmem %s0, %s318
      %s320 = smul.u32 64, %s20
      %s321 = smul.u32 64, %s20
      %p322 = scmp.lt.s32.totalorder %s321, 191
      %s323 = scalar_select %p322, %s321, 191
      %s324 = smul.addr %s323, 8
      %s325 = scalar_lea.vmem %s5, %s324
      %s326 = smul.u32 64, %s20
      %s327 = smul.u32 64, %s20
      %p328 = scmp.lt.s32.totalorder %s327, 191
      %s329 = scalar_select %p328, %s327, 191
      %s330 = smul.addr %s329, 8
      %s331 = scalar_lea.vmem %s6, %s330
      %s332 = smul.u32 64, %s20
      %p333 = scmp.lt.s32.totalorder %s20, 2
      %s334 = scalar_select %p333, %s20, 2
      %s335 = scalar_lea.vmem %s7, %s334
      %p336 = scmp.lt.s32.totalorder %s20, 2
      %s337 = scalar_select %p336, %s20, 2
      %s338 = scalar_lea.vmem %s8, %s337
      %v339 = vld [vmem:[%s319] sm:$0xff]
      %v340 = vld [vmem:[%s319 + $0x8] sm:$0xff]
      %v341 = vld [vmem:[%s319 + $0x10] sm:$0xff]
      %v342 = vld [vmem:[%s319 + $0x18] sm:$0xff]
      %v343 = vld [vmem:[%s319 + $0x20] sm:$0xff]
      %v344 = vld [vmem:[%s319 + $0x28] sm:$0xff]
      %v345 = vld [vmem:[%s319 + $0x30] sm:$0xff]
      %v346 = vld [vmem:[%s319 + $0x38] sm:$0xff]
      %v347 = vld [vmem:[%s319 + $0x40] sm:$0xff]
      %v348 = vld [vmem:[%s319 + $0x48] sm:$0xff]
      %v349 = vld [vmem:[%s319 + $0x50] sm:$0xff]
      %v350 = vld [vmem:[%s319 + $0x58] sm:$0xff]
      %v351 = vld [vmem:[%s319 + $0x60] sm:$0xff]
      %v352 = vld [vmem:[%s319 + $0x68] sm:$0xff]
      %v353 = vld [vmem:[%s319 + $0x70] sm:$0xff]
      %v354 = vld [vmem:[%s319 + $0x78] sm:$0xff]
      %v355 = vld [vmem:[%s319 + $0x80] sm:$0xff]
      %v356 = vld [vmem:[%s319 + $0x88] sm:$0xff]
      %v357 = vld [vmem:[%s319 + $0x90] sm:$0xff]
      %v358 = vld [vmem:[%s319 + $0x98] sm:$0xff]
      %v359 = vld [vmem:[%s319 + $0xa0] sm:$0xff]
      %v360 = vld [vmem:[%s319 + $0xa8] sm:$0xff]
      %v361 = vld [vmem:[%s319 + $0xb0] sm:$0xff]
      %v362 = vld [vmem:[%s319 + $0xb8] sm:$0xff]
      %v363 = vld [vmem:[%s319 + $0xc0] sm:$0xff]
      %v364 = vld [vmem:[%s319 + $0xc8] sm:$0xff]
      %v365 = vld [vmem:[%s319 + $0xd0] sm:$0xff]
      %v366 = vld [vmem:[%s319 + $0xd8] sm:$0xff]
      %v367 = vld [vmem:[%s319 + $0xe0] sm:$0xff]
      %v368 = vld [vmem:[%s319 + $0xe8] sm:$0xff]
      %v369 = vld [vmem:[%s319 + $0xf0] sm:$0xff]
      %v370 = vld [vmem:[%s319 + $0xf8] sm:$0xff]
      %v371 = vld [vmem:[%s319 + $0x100] sm:$0xff]
      %v372 = vld [vmem:[%s319 + $0x108] sm:$0xff]
      %v373 = vld [vmem:[%s319 + $0x110] sm:$0xff]
      %v374 = vld [vmem:[%s319 + $0x118] sm:$0xff]
      %v375 = vld [vmem:[%s319 + $0x120] sm:$0xff]
      %v376 = vld [vmem:[%s319 + $0x128] sm:$0xff]
      %v377 = vld [vmem:[%s319 + $0x130] sm:$0xff]
      %v378 = vld [vmem:[%s319 + $0x138] sm:$0xff]
      %v379 = vld [vmem:[%s319 + $0x140] sm:$0xff]
      %v380 = vld [vmem:[%s319 + $0x148] sm:$0xff]
      %v381 = vld [vmem:[%s319 + $0x150] sm:$0xff]
      %v382 = vld [vmem:[%s319 + $0x158] sm:$0xff]
      %v383 = vld [vmem:[%s319 + $0x160] sm:$0xff]
      %v384 = vld [vmem:[%s319 + $0x168] sm:$0xff]
      %v385 = vld [vmem:[%s319 + $0x170] sm:$0xff]
      %v386 = vld [vmem:[%s319 + $0x178] sm:$0xff]
      %v387 = vld [vmem:[%s319 + $0x180] sm:$0xff]
      %v388 = vld [vmem:[%s319 + $0x188] sm:$0xff]
      %v389 = vld [vmem:[%s319 + $0x190] sm:$0xff]
      %v390 = vld [vmem:[%s319 + $0x198] sm:$0xff]
      %v391 = vld [vmem:[%s319 + $0x1a0] sm:$0xff]
      %v392 = vld [vmem:[%s319 + $0x1a8] sm:$0xff]
      %v393 = vld [vmem:[%s319 + $0x1b0] sm:$0xff]
      %v394 = vld [vmem:[%s319 + $0x1b8] sm:$0xff]
      %v395 = vld [vmem:[%s319 + $0x1c0] sm:$0xff]
      %v396 = vld [vmem:[%s319 + $0x1c8] sm:$0xff]
      %v397 = vld [vmem:[%s319 + $0x1d0] sm:$0xff]
      %v398 = vld [vmem:[%s319 + $0x1d8] sm:$0xff]
      %v399 = vld [vmem:[%s319 + $0x1e0] sm:$0xff]
      %v400 = vld [vmem:[%s319 + $0x1e8] sm:$0xff]
      %v401 = vld [vmem:[%s319 + $0x1f0] sm:$0xff]
      %v402 = vld [vmem:[%s319 + $0x1f8] sm:$0xff]
      %v403 = vld [vmem:[%s1] sm:$0xff]
      %v404 = vld [vmem:[%s1 + $0x8] sm:$0xff]
      %v405 = vld [vmem:[%s1 + $0x10] sm:$0xff]
      %v406 = vld [vmem:[%s1 + $0x18] sm:$0xff]
      %v407 = vld [vmem:[%s1 + $0x20] sm:$0xff]
      %v408 = vld [vmem:[%s1 + $0x28] sm:$0xff]
      %v409 = vld [vmem:[%s1 + $0x30] sm:$0xff]
      %v410 = vld [vmem:[%s1 + $0x38] sm:$0xff]
      %v411 = vld [vmem:[%s1 + $0x40] sm:$0xff]
      %v412 = vld [vmem:[%s1 + $0x48] sm:$0xff]
      %v413 = vld [vmem:[%s1 + $0x50] sm:$0xff]
      %v414 = vld [vmem:[%s1 + $0x58] sm:$0xff]
      %v415 = vld [vmem:[%s1 + $0x60] sm:$0xff]
      %v416 = vld [vmem:[%s1 + $0x68] sm:$0xff]
      %v417 = vld [vmem:[%s1 + $0x70] sm:$0xff]
      %v418 = vld [vmem:[%s1 + $0x78] sm:$0xff]
      %v419 = vld [vmem:[%s2] sm:$0x1]
      %v421 = vlaneseq
      %v422 = vshrl.u32 %v421, 7
      %v423 = vsub.s32 0, %v422
      %v424 = vrot.slane %v419, %v423
      %426 = vmatprep.subr.mxu0 0.0
      %427 = vmatpush1.msra.mxu0 %v418
      %428 = vmatprep.subr.mxu0 0.0
      %429 = vmatpush1.msra.mxu0 %v417
      %430 = vmatprep.subr.mxu0 0.0
      %431 = vmatpush1.msra.mxu0 %v416
      %432 = vmatprep.subr.mxu0 0.0
      %433 = vmatpush1.msra.mxu0 %v415
      %434 = vmatprep.subr.mxu0 0.0
      %435 = vmatpush1.msra.mxu0 %v414
      %436 = vmatprep.subr.mxu0 0.0
      %437 = vmatpush1.msra.mxu0 %v413
      %438 = vmatprep.subr.mxu0 0.0
      %439 = vmatpush1.msra.mxu0 %v412
      %440 = vmatprep.subr.mxu0 0.0
      %441 = vmatpush1.msra.mxu0 %v411
      %442 = vmatprep.subr.mxu0 0.0
      %443 = vmatpush1.msra.mxu0 %v410
      %444 = vmatprep.subr.mxu0 0.0
      %445 = vmatpush1.msra.mxu0 %v409
      %446 = vmatprep.subr.mxu0 0.0
      %447 = vmatpush1.msra.mxu0 %v408
      %448 = vmatprep.subr.mxu0 0.0
      %449 = vmatpush1.msra.mxu0 %v407
      %450 = vmatprep.subr.mxu0 0.0
      %451 = vmatpush1.msra.mxu0 %v406
      %452 = vmatprep.subr.mxu0 0.0
      %453 = vmatpush1.msra.mxu0 %v405
      %454 = vmatprep.subr.mxu0 0.0
      %455 = vmatpush1.msra.mxu0 %v404
      %456 = vmatprep.subr.mxu0 0.0
      %457 = vmatpush1.msra.mxu0 %v403
      %458 = vmatprep.subr.mxu0 0.0
      %459 = vmatpush2.msra.mxu0 0.0
      %460 = vmatprep.subr.mxu0 0.0
      %461 = vmatpush2.msra.mxu0 0.0
      %462 = vmatprep.subr.mxu0 0.0
      %463 = vmatpush2.msra.mxu0 0.0
      %464 = vmatprep.subr.mxu0 0.0
      %465 = vmatpush2.msra.mxu0 0.0
      %466 = vmatprep.subr.mxu0 0.0
      %467 = vmatpush2.msra.mxu0 0.0
      %468 = vmatprep.subr.mxu0 0.0
      %469 = vmatpush2.msra.mxu0 0.0
      %470 = vmatprep.subr.mxu0 0.0
      %471 = vmatpush2.msra.mxu0 0.0
      %472 = vmatprep.subr.mxu0 0.0
      %473 = vmatpush2.msra.mxu0 0.0
      %474 = vmatprep.subr.mxu0 0.0
      %475 = vmatpush2.msra.mxu0 0.0
      %476 = vmatprep.subr.mxu0 0.0
      %477 = vmatpush2.msra.mxu0 0.0
      %478 = vmatprep.subr.mxu0 0.0
      %479 = vmatpush2.msra.mxu0 0.0
      %480 = vmatprep.subr.mxu0 0.0
      %481 = vmatpush2.msra.mxu0 0.0
      %482 = vmatprep.subr.mxu0 0.0
      %483 = vmatpush2.msra.mxu0 0.0
      %484 = vmatprep.subr.mxu0 0.0
      %485 = vmatpush2.msra.mxu0 0.0
      %486 = vmatprep.subr.mxu0 0.0
      %487 = vmatpush2.msra.mxu0 0.0
      %488 = vmatprep.subr.mxu0 0.0
      %489 = vmatpush2.msra.mxu0 0.0
      %490 = vmatprep.mubr.f32.mxu0 0.0
      %491 = vmatmul.mubr.f32.gmra.mxu0 %v339
      %v492 = vpop.f32.mrf.mxu0
      %v493 = vadd.f32 %v424, %v492
      %v494 = vpop.f32.mrf.mxu0
      %495 = vmatprep.mubr.f32.mxu0 0.0
      %496 = vmatmul.mubr.f32.gmra.mxu0 %v340
      %v497 = vpop.f32.mrf.mxu0
      %v498 = vadd.f32 %v424, %v497
      %v499 = vpop.f32.mrf.mxu0
      %500 = vmatprep.mubr.f32.mxu0 0.0
      %501 = vmatmul.mubr.f32.gmra.mxu0 %v341
      %v502 = vpop.f32.mrf.mxu0
      %v503 = vadd.f32 %v424, %v502
      %v504 = vpop.f32.mrf.mxu0
      %505 = vmatprep.mubr.f32.mxu0 0.0
      %506 = vmatmul.mubr.f32.gmra.mxu0 %v342
      %v507 = vpop.f32.mrf.mxu0
      %v508 = vadd.f32 %v424, %v507
      %v509 = vpop.f32.mrf.mxu0
      %510 = vmatprep.mubr.f32.mxu0 0.0
      %511 = vmatmul.mubr.f32.gmra.mxu0 %v343
      %v512 = vpop.f32.mrf.mxu0
      %v513 = vadd.f32 %v424, %v512
      %v514 = vpop.f32.mrf.mxu0
      %515 = vmatprep.mubr.f32.mxu0 0.0
      %516 = vmatmul.mubr.f32.gmra.mxu0 %v344
      %v517 = vpop.f32.mrf.mxu0
      %v518 = vadd.f32 %v424, %v517
      %v519 = vpop.f32.mrf.mxu0
      %520 = vmatprep.mubr.f32.mxu0 0.0
      %521 = vmatmul.mubr.f32.gmra.mxu0 %v345
      %v522 = vpop.f32.mrf.mxu0
      %v523 = vadd.f32 %v424, %v522
      %v524 = vpop.f32.mrf.mxu0
      %525 = vmatprep.mubr.f32.mxu0 0.0
      %526 = vmatmul.mubr.f32.gmra.mxu0 %v346
      %v527 = vpop.f32.mrf.mxu0
      %v528 = vadd.f32 %v424, %v527
      %v529 = vpop.f32.mrf.mxu0
      %530 = vmatprep.mubr.f32.mxu0 0.0
      %531 = vmatmul.mubr.f32.gmra.mxu0 %v347
      %v532 = vpop.f32.mrf.mxu0
      %v533 = vadd.f32 %v424, %v532
      %v534 = vpop.f32.mrf.mxu0
      %535 = vmatprep.mubr.f32.mxu0 0.0
      %536 = vmatmul.mubr.f32.gmra.mxu0 %v348
      %v537 = vpop.f32.mrf.mxu0
      %v538 = vadd.f32 %v424, %v537
      %v539 = vpop.f32.mrf.mxu0
      %540 = vmatprep.mubr.f32.mxu0 0.0
      %541 = vmatmul.mubr.f32.gmra.mxu0 %v349
      %v542 = vpop.f32.mrf.mxu0
      %v543 = vadd.f32 %v424, %v542
      %v544 = vpop.f32.mrf.mxu0
      %545 = vmatprep.mubr.f32.mxu0 0.0
      %546 = vmatmul.mubr.f32.gmra.mxu0 %v350
      %v547 = vpop.f32.mrf.mxu0
      %v548 = vadd.f32 %v424, %v547
      %v549 = vpop.f32.mrf.mxu0
      %550 = vmatprep.mubr.f32.mxu0 0.0
      %551 = vmatmul.mubr.f32.gmra.mxu0 %v351
      %v552 = vpop.f32.mrf.mxu0
      %v553 = vadd.f32 %v424, %v552
      %v554 = vpop.f32.mrf.mxu0
      %555 = vmatprep.mubr.f32.mxu0 0.0
      %556 = vmatmul.mubr.f32.gmra.mxu0 %v352
      %v557 = vpop.f32.mrf.mxu0
      %v558 = vadd.f32 %v424, %v557
      %v559 = vpop.f32.mrf.mxu0
      %560 = vmatprep.mubr.f32.mxu0 0.0
      %561 = vmatmul.mubr.f32.gmra.mxu0 %v353
      %v562 = vpop.f32.mrf.mxu0
      %v563 = vadd.f32 %v424, %v562
      %v564 = vpop.f32.mrf.mxu0
      %565 = vmatprep.mubr.f32.mxu0 0.0
      %566 = vmatmul.mubr.f32.gmra.mxu0 %v354
      %v567 = vpop.f32.mrf.mxu0
      %v568 = vadd.f32 %v424, %v567
      %v569 = vpop.f32.mrf.mxu0
      %570 = vmatprep.mubr.f32.mxu0 0.0
      %571 = vmatmul.mubr.f32.gmra.mxu0 %v355
      %v572 = vpop.f32.mrf.mxu0
      %v573 = vadd.f32 %v424, %v572
      %v574 = vpop.f32.mrf.mxu0
      %575 = vmatprep.mubr.f32.mxu0 0.0
      %576 = vmatmul.mubr.f32.gmra.mxu0 %v356
      %v577 = vpop.f32.mrf.mxu0
      %v578 = vadd.f32 %v424, %v577
      %v579 = vpop.f32.mrf.mxu0
      %580 = vmatprep.mubr.f32.mxu0 0.0
      %581 = vmatmul.mubr.f32.gmra.mxu0 %v357
      %v582 = vpop.f32.mrf.mxu0
      %v583 = vadd.f32 %v424, %v582
      %v584 = vpop.f32.mrf.mxu0
      %585 = vmatprep.mubr.f32.mxu0 0.0
      %586 = vmatmul.mubr.f32.gmra.mxu0 %v358
      %v587 = vpop.f32.mrf.mxu0
      %v588 = vadd.f32 %v424, %v587
      %v589 = vpop.f32.mrf.mxu0
      %590 = vmatprep.mubr.f32.mxu0 0.0
      %591 = vmatmul.mubr.f32.gmra.mxu0 %v359
      %v592 = vpop.f32.mrf.mxu0
      %v593 = vadd.f32 %v424, %v592
      %v594 = vpop.f32.mrf.mxu0
      %595 = vmatprep.mubr.f32.mxu0 0.0
      %596 = vmatmul.mubr.f32.gmra.mxu0 %v360
      %v597 = vpop.f32.mrf.mxu0
      %v598 = vadd.f32 %v424, %v597
      %v599 = vpop.f32.mrf.mxu0
      %600 = vmatprep.mubr.f32.mxu0 0.0
      %601 = vmatmul.mubr.f32.gmra.mxu0 %v361
      %v602 = vpop.f32.mrf.mxu0
      %v603 = vadd.f32 %v424, %v602
      %v604 = vpop.f32.mrf.mxu0
      %605 = vmatprep.mubr.f32.mxu0 0.0
      %606 = vmatmul.mubr.f32.gmra.mxu0 %v362
      %v607 = vpop.f32.mrf.mxu0
      %v608 = vadd.f32 %v424, %v607
      %v609 = vpop.f32.mrf.mxu0
      %610 = vmatprep.mubr.f32.mxu0 0.0
      %611 = vmatmul.mubr.f32.gmra.mxu0 %v363
      %v612 = vpop.f32.mrf.mxu0
      %v613 = vadd.f32 %v424, %v612
      %v614 = vpop.f32.mrf.mxu0
      %615 = vmatprep.mubr.f32.mxu0 0.0
      %616 = vmatmul.mubr.f32.gmra.mxu0 %v364
      %v617 = vpop.f32.mrf.mxu0
      %v618 = vadd.f32 %v424, %v617
      %v619 = vpop.f32.mrf.mxu0
      %620 = vmatprep.mubr.f32.mxu0 0.0
      %621 = vmatmul.mubr.f32.gmra.mxu0 %v365
      %v622 = vpop.f32.mrf.mxu0
      %v623 = vadd.f32 %v424, %v622
      %v624 = vpop.f32.mrf.mxu0
      %625 = vmatprep.mubr.f32.mxu0 0.0
      %626 = vmatmul.mubr.f32.gmra.mxu0 %v366
      %v627 = vpop.f32.mrf.mxu0
      %v628 = vadd.f32 %v424, %v627
      %v629 = vpop.f32.mrf.mxu0
      %630 = vmatprep.mubr.f32.mxu0 0.0
      %631 = vmatmul.mubr.f32.gmra.mxu0 %v367
      %v632 = vpop.f32.mrf.mxu0
      %v633 = vadd.f32 %v424, %v632
      %v634 = vpop.f32.mrf.mxu0
      %635 = vmatprep.mubr.f32.mxu0 0.0
      %636 = vmatmul.mubr.f32.gmra.mxu0 %v368
      %v637 = vpop.f32.mrf.mxu0
      %v638 = vadd.f32 %v424, %v637
      %v639 = vpop.f32.mrf.mxu0
      %640 = vmatprep.mubr.f32.mxu0 0.0
      %641 = vmatmul.mubr.f32.gmra.mxu0 %v369
      %v642 = vpop.f32.mrf.mxu0
      %v643 = vadd.f32 %v424, %v642
      %v644 = vpop.f32.mrf.mxu0
      %645 = vmatprep.mubr.f32.mxu0 0.0
      %646 = vmatmul.mubr.f32.gmra.mxu0 %v370
      %v647 = vpop.f32.mrf.mxu0
      %v648 = vadd.f32 %v424, %v647
      %v649 = vpop.f32.mrf.mxu0
      %650 = vmatprep.mubr.f32.mxu0 0.0
      %651 = vmatmul.mubr.f32.gmra.mxu0 %v371
      %v652 = vpop.f32.mrf.mxu0
      %v653 = vadd.f32 %v424, %v652
      %v654 = vpop.f32.mrf.mxu0
      %655 = vmatprep.mubr.f32.mxu0 0.0
      %656 = vmatmul.mubr.f32.gmra.mxu0 %v372
      %v657 = vpop.f32.mrf.mxu0
      %v658 = vadd.f32 %v424, %v657
      %v659 = vpop.f32.mrf.mxu0
      %660 = vmatprep.mubr.f32.mxu0 0.0
      %661 = vmatmul.mubr.f32.gmra.mxu0 %v373
      %v662 = vpop.f32.mrf.mxu0
      %v663 = vadd.f32 %v424, %v662
      %v664 = vpop.f32.mrf.mxu0
      %665 = vmatprep.mubr.f32.mxu0 0.0
      %666 = vmatmul.mubr.f32.gmra.mxu0 %v374
      %v667 = vpop.f32.mrf.mxu0
      %v668 = vadd.f32 %v424, %v667
      %v669 = vpop.f32.mrf.mxu0
      %670 = vmatprep.mubr.f32.mxu0 0.0
      %671 = vmatmul.mubr.f32.gmra.mxu0 %v375
      %v672 = vpop.f32.mrf.mxu0
      %v673 = vadd.f32 %v424, %v672
      %v674 = vpop.f32.mrf.mxu0
      %675 = vmatprep.mubr.f32.mxu0 0.0
      %676 = vmatmul.mubr.f32.gmra.mxu0 %v376
      %v677 = vpop.f32.mrf.mxu0
      %v678 = vadd.f32 %v424, %v677
      %v679 = vpop.f32.mrf.mxu0
      %680 = vmatprep.mubr.f32.mxu0 0.0
      %681 = vmatmul.mubr.f32.gmra.mxu0 %v377
      %v682 = vpop.f32.mrf.mxu0
      %v683 = vadd.f32 %v424, %v682
      %v684 = vpop.f32.mrf.mxu0
      %685 = vmatprep.mubr.f32.mxu0 0.0
      %686 = vmatmul.mubr.f32.gmra.mxu0 %v378
      %v687 = vpop.f32.mrf.mxu0
      %v688 = vadd.f32 %v424, %v687
      %v689 = vpop.f32.mrf.mxu0
      %690 = vmatprep.mubr.f32.mxu0 0.0
      %691 = vmatmul.mubr.f32.gmra.mxu0 %v379
      %v692 = vpop.f32.mrf.mxu0
      %v693 = vadd.f32 %v424, %v692
      %v694 = vpop.f32.mrf.mxu0
      %695 = vmatprep.mubr.f32.mxu0 0.0
      %696 = vmatmul.mubr.f32.gmra.mxu0 %v380
      %v697 = vpop.f32.mrf.mxu0
      %v698 = vadd.f32 %v424, %v697
      %v699 = vpop.f32.mrf.mxu0
      %700 = vmatprep.mubr.f32.mxu0 0.0
      %701 = vmatmul.mubr.f32.gmra.mxu0 %v381
      %v702 = vpop.f32.mrf.mxu0
      %v703 = vadd.f32 %v424, %v702
      %v704 = vpop.f32.mrf.mxu0
      %705 = vmatprep.mubr.f32.mxu0 0.0
      %706 = vmatmul.mubr.f32.gmra.mxu0 %v382
      %v707 = vpop.f32.mrf.mxu0
      %v708 = vadd.f32 %v424, %v707
      %v709 = vpop.f32.mrf.mxu0
      %710 = vmatprep.mubr.f32.mxu0 0.0
      %711 = vmatmul.mubr.f32.gmra.mxu0 %v383
      %v712 = vpop.f32.mrf.mxu0
      %v713 = vadd.f32 %v424, %v712
      %v714 = vpop.f32.mrf.mxu0
      %715 = vmatprep.mubr.f32.mxu0 0.0
      %716 = vmatmul.mubr.f32.gmra.mxu0 %v384
      %v717 = vpop.f32.mrf.mxu0
      %v718 = vadd.f32 %v424, %v717
      %v719 = vpop.f32.mrf.mxu0
      %720 = vmatprep.mubr.f32.mxu0 0.0
      %721 = vmatmul.mubr.f32.gmra.mxu0 %v385
      %v722 = vpop.f32.mrf.mxu0
      %v723 = vadd.f32 %v424, %v722
      %v724 = vpop.f32.mrf.mxu0
      %725 = vmatprep.mubr.f32.mxu0 0.0
      %726 = vmatmul.mubr.f32.gmra.mxu0 %v386
      %v727 = vpop.f32.mrf.mxu0
      %v728 = vadd.f32 %v424, %v727
      %v729 = vpop.f32.mrf.mxu0
      %730 = vmatprep.mubr.f32.mxu0 0.0
      %731 = vmatmul.mubr.f32.gmra.mxu0 %v387
      %v732 = vpop.f32.mrf.mxu0
      %v733 = vadd.f32 %v424, %v732
      %v734 = vpop.f32.mrf.mxu0
      %735 = vmatprep.mubr.f32.mxu0 0.0
      %736 = vmatmul.mubr.f32.gmra.mxu0 %v388
      %v737 = vpop.f32.mrf.mxu0
      %v738 = vadd.f32 %v424, %v737
      %v739 = vpop.f32.mrf.mxu0
      %740 = vmatprep.mubr.f32.mxu0 0.0
      %741 = vmatmul.mubr.f32.gmra.mxu0 %v389
      %v742 = vpop.f32.mrf.mxu0
      %v743 = vadd.f32 %v424, %v742
      %v744 = vpop.f32.mrf.mxu0
      %745 = vmatprep.mubr.f32.mxu0 0.0
      %746 = vmatmul.mubr.f32.gmra.mxu0 %v390
      %v747 = vpop.f32.mrf.mxu0
      %v748 = vadd.f32 %v424, %v747
      %v749 = vpop.f32.mrf.mxu0
      %750 = vmatprep.mubr.f32.mxu0 0.0
      %751 = vmatmul.mubr.f32.gmra.mxu0 %v391
      %v752 = vpop.f32.mrf.mxu0
      %v753 = vadd.f32 %v424, %v752
      %v754 = vpop.f32.mrf.mxu0
      %755 = vmatprep.mubr.f32.mxu0 0.0
      %756 = vmatmul.mubr.f32.gmra.mxu0 %v392
      %v757 = vpop.f32.mrf.mxu0
      %v758 = vadd.f32 %v424, %v757
      %v759 = vpop.f32.mrf.mxu0
      %760 = vmatprep.mubr.f32.mxu0 0.0
      %761 = vmatmul.mubr.f32.gmra.mxu0 %v393
      %v762 = vpop.f32.mrf.mxu0
      %v763 = vadd.f32 %v424, %v762
      %v764 = vpop.f32.mrf.mxu0
      %765 = vmatprep.mubr.f32.mxu0 0.0
      %766 = vmatmul.mubr.f32.gmra.mxu0 %v394
      %v767 = vpop.f32.mrf.mxu0
      %v768 = vadd.f32 %v424, %v767
      %v769 = vpop.f32.mrf.mxu0
      %770 = vmatprep.mubr.f32.mxu0 0.0
      %771 = vmatmul.mubr.f32.gmra.mxu0 %v395
      %v772 = vpop.f32.mrf.mxu0
      %v773 = vadd.f32 %v424, %v772
      %v774 = vpop.f32.mrf.mxu0
      %775 = vmatprep.mubr.f32.mxu0 0.0
      %776 = vmatmul.mubr.f32.gmra.mxu0 %v396
      %v777 = vpop.f32.mrf.mxu0
      %v778 = vadd.f32 %v424, %v777
      %v779 = vpop.f32.mrf.mxu0
      %780 = vmatprep.mubr.f32.mxu0 0.0
      %781 = vmatmul.mubr.f32.gmra.mxu0 %v397
      %v782 = vpop.f32.mrf.mxu0
      %v783 = vadd.f32 %v424, %v782
      %v784 = vpop.f32.mrf.mxu0
      %785 = vmatprep.mubr.f32.mxu0 0.0
      %786 = vmatmul.mubr.f32.gmra.mxu0 %v398
      %v787 = vpop.f32.mrf.mxu0
      %v788 = vadd.f32 %v424, %v787
      %v789 = vpop.f32.mrf.mxu0
      %790 = vmatprep.mubr.f32.mxu0 0.0
      %791 = vmatmul.mubr.f32.gmra.mxu0 %v399
      %v792 = vpop.f32.mrf.mxu0
      %v793 = vadd.f32 %v424, %v792
      %v794 = vpop.f32.mrf.mxu0
      %795 = vmatprep.mubr.f32.mxu0 0.0
      %796 = vmatmul.mubr.f32.gmra.mxu0 %v400
      %v797 = vpop.f32.mrf.mxu0
      %v798 = vadd.f32 %v424, %v797
      %v799 = vpop.f32.mrf.mxu0
      %800 = vmatprep.mubr.f32.mxu0 0.0
      %801 = vmatmul.mubr.f32.gmra.mxu0 %v401
      %v802 = vpop.f32.mrf.mxu0
      %v803 = vadd.f32 %v424, %v802
      %v804 = vpop.f32.mrf.mxu0
      %805 = vmatprep.mubr.f32.mxu0 0.0
      %806 = vmatmul.mubr.f32.gmra.mxu0 %v402
      %v807 = vpop.f32.mrf.mxu0
      %v808 = vadd.f32 %v424, %v807
      %v809 = vpop.f32.mrf.mxu0
      %810 = vdwg.mxu0
      %v811 = vmax.f32 %v493, 0.0
      %v812 = vmax.f32 %v498, 0.0
      %v813 = vmax.f32 %v503, 0.0
      %v814 = vmax.f32 %v508, 0.0
      %v815 = vmax.f32 %v513, 0.0
      %v816 = vmax.f32 %v518, 0.0
      %v817 = vmax.f32 %v523, 0.0
      %v818 = vmax.f32 %v528, 0.0
      %v819 = vmax.f32 %v533, 0.0
      %v820 = vmax.f32 %v538, 0.0
      %v821 = vmax.f32 %v543, 0.0
      %v822 = vmax.f32 %v548, 0.0
      %v823 = vmax.f32 %v553, 0.0
      %v824 = vmax.f32 %v558, 0.0
      %v825 = vmax.f32 %v563, 0.0
      %v826 = vmax.f32 %v568, 0.0
      %v827 = vmax.f32 %v573, 0.0
      %v828 = vmax.f32 %v578, 0.0
      %v829 = vmax.f32 %v583, 0.0
      %v830 = vmax.f32 %v588, 0.0
      %v831 = vmax.f32 %v593, 0.0
      %v832 = vmax.f32 %v598, 0.0
      %v833 = vmax.f32 %v603, 0.0
      %v834 = vmax.f32 %v608, 0.0
      %v835 = vmax.f32 %v613, 0.0
      %v836 = vmax.f32 %v618, 0.0
      %v837 = vmax.f32 %v623, 0.0
      %v838 = vmax.f32 %v628, 0.0
      %v839 = vmax.f32 %v633, 0.0
      %v840 = vmax.f32 %v638, 0.0
      %v841 = vmax.f32 %v643, 0.0
      %v842 = vmax.f32 %v648, 0.0
      %v843 = vmax.f32 %v653, 0.0
      %v844 = vmax.f32 %v658, 0.0
      %v845 = vmax.f32 %v663, 0.0
      %v846 = vmax.f32 %v668, 0.0
      %v847 = vmax.f32 %v673, 0.0
      %v848 = vmax.f32 %v678, 0.0
      %v849 = vmax.f32 %v683, 0.0
      %v850 = vmax.f32 %v688, 0.0
      %v851 = vmax.f32 %v693, 0.0
      %v852 = vmax.f32 %v698, 0.0
      %v853 = vmax.f32 %v703, 0.0
      %v854 = vmax.f32 %v708, 0.0
      %v855 = vmax.f32 %v713, 0.0
      %v856 = vmax.f32 %v718, 0.0
      %v857 = vmax.f32 %v723, 0.0
      %v858 = vmax.f32 %v728, 0.0
      %v859 = vmax.f32 %v733, 0.0
      %v860 = vmax.f32 %v738, 0.0
      %v861 = vmax.f32 %v743, 0.0
      %v862 = vmax.f32 %v748, 0.0
      %v863 = vmax.f32 %v753, 0.0
      %v864 = vmax.f32 %v758, 0.0
      %v865 = vmax.f32 %v763, 0.0
      %v866 = vmax.f32 %v768, 0.0
      %v867 = vmax.f32 %v773, 0.0
      %v868 = vmax.f32 %v778, 0.0
      %v869 = vmax.f32 %v783, 0.0
      %v870 = vmax.f32 %v788, 0.0
      %v871 = vmax.f32 %v793, 0.0
      %v872 = vmax.f32 %v798, 0.0
      %v873 = vmax.f32 %v803, 0.0
      %v874 = vmax.f32 %v808, 0.0
      %875 = vst [vmem:[%s325] sm:$0xff] %v811
      %876 = vst [vmem:[%s325 + $0x8] sm:$0xff] %v812
      %877 = vst [vmem:[%s325 + $0x10] sm:$0xff] %v813
      %878 = vst [vmem:[%s325 + $0x18] sm:$0xff] %v814
      %879 = vst [vmem:[%s325 + $0x20] sm:$0xff] %v815
      %880 = vst [vmem:[%s325 + $0x28] sm:$0xff] %v816
      %881 = vst [vmem:[%s325 + $0x30] sm:$0xff] %v817
      %882 = vst [vmem:[%s325 + $0x38] sm:$0xff] %v818
      %883 = vst [vmem:[%s325 + $0x40] sm:$0xff] %v819
      %884 = vst [vmem:[%s325 + $0x48] sm:$0xff] %v820
      %885 = vst [vmem:[%s325 + $0x50] sm:$0xff] %v821
      %886 = vst [vmem:[%s325 + $0x58] sm:$0xff] %v822
      %887 = vst [vmem:[%s325 + $0x60] sm:$0xff] %v823
      %888 = vst [vmem:[%s325 + $0x68] sm:$0xff] %v824
      %889 = vst [vmem:[%s325 + $0x70] sm:$0xff] %v825
      %890 = vst [vmem:[%s325 + $0x78] sm:$0xff] %v826
      %891 = vst [vmem:[%s325 + $0x80] sm:$0xff] %v827
      %892 = vst [vmem:[%s325 + $0x88] sm:$0xff] %v828
      %893 = vst [vmem:[%s325 + $0x90] sm:$0xff] %v829
      %894 = vst [vmem:[%s325 + $0x98] sm:$0xff] %v830
      %895 = vst [vmem:[%s325 + $0xa0] sm:$0xff] %v831
      %896 = vst [vmem:[%s325 + $0xa8] sm:$0xff] %v832
      %897 = vst [vmem:[%s325 + $0xb0] sm:$0xff] %v833
      %898 = vst [vmem:[%s325 + $0xb8] sm:$0xff] %v834
      %899 = vst [vmem:[%s325 + $0xc0] sm:$0xff] %v835
      %900 = vst [vmem:[%s325 + $0xc8] sm:$0xff] %v836
      %901 = vst [vmem:[%s325 + $0xd0] sm:$0xff] %v837
      %902 = vst [vmem:[%s325 + $0xd8] sm:$0xff] %v838
      %903 = vst [vmem:[%s325 + $0xe0] sm:$0xff] %v839
      %904 = vst [vmem:[%s325 + $0xe8] sm:$0xff] %v840
      %905 = vst [vmem:[%s325 + $0xf0] sm:$0xff] %v841
      %906 = vst [vmem:[%s325 + $0xf8] sm:$0xff] %v842
      %907 = vst [vmem:[%s325 + $0x100] sm:$0xff] %v843
      %908 = vst [vmem:[%s325 + $0x108] sm:$0xff] %v844
      %909 = vst [vmem:[%s325 + $0x110] sm:$0xff] %v845
      %910 = vst [vmem:[%s325 + $0x118] sm:$0xff] %v846
      %911 = vst [vmem:[%s325 + $0x120] sm:$0xff] %v847
      %912 = vst [vmem:[%s325 + $0x128] sm:$0xff] %v848
      %913 = vst [vmem:[%s325 + $0x130] sm:$0xff] %v849
      %914 = vst [vmem:[%s325 + $0x138] sm:$0xff] %v850
      %915 = vst [vmem:[%s325 + $0x140] sm:$0xff] %v851
      %916 = vst [vmem:[%s325 + $0x148] sm:$0xff] %v852
      %917 = vst [vmem:[%s325 + $0x150] sm:$0xff] %v853
      %918 = vst [vmem:[%s325 + $0x158] sm:$0xff] %v854
      %919 = vst [vmem:[%s325 + $0x160] sm:$0xff] %v855
      %920 = vst [vmem:[%s325 + $0x168] sm:$0xff] %v856
      %921 = vst [vmem:[%s325 + $0x170] sm:$0xff] %v857
      %922 = vst [vmem:[%s325 + $0x178] sm:$0xff] %v858
      %923 = vst [vmem:[%s325 + $0x180] sm:$0xff] %v859
      %924 = vst [vmem:[%s325 + $0x188] sm:$0xff] %v860
      %925 = vst [vmem:[%s325 + $0x190] sm:$0xff] %v861
      %926 = vst [vmem:[%s325 + $0x198] sm:$0xff] %v862
      %927 = vst [vmem:[%s325 + $0x1a0] sm:$0xff] %v863
      %928 = vst [vmem:[%s325 + $0x1a8] sm:$0xff] %v864
      %929 = vst [vmem:[%s325 + $0x1b0] sm:$0xff] %v865
      %930 = vst [vmem:[%s325 + $0x1b8] sm:$0xff] %v866
      %931 = vst [vmem:[%s325 + $0x1c0] sm:$0xff] %v867
      %932 = vst [vmem:[%s325 + $0x1c8] sm:$0xff] %v868
      %933 = vst [vmem:[%s325 + $0x1d0] sm:$0xff] %v869
      %934 = vst [vmem:[%s325 + $0x1d8] sm:$0xff] %v870
      %935 = vst [vmem:[%s325 + $0x1e0] sm:$0xff] %v871
      %936 = vst [vmem:[%s325 + $0x1e8] sm:$0xff] %v872
      %937 = vst [vmem:[%s325 + $0x1f0] sm:$0xff] %v873
      %938 = vst [vmem:[%s325 + $0x1f8] sm:$0xff] %v874
      %v939 = vld [vmem:[%s3] sm:$0xff]
      %v940 = vld [vmem:[%s3 + $0x8] sm:$0xff]
      %v941 = vld [vmem:[%s3 + $0x10] sm:$0xff]
      %v942 = vld [vmem:[%s3 + $0x18] sm:$0xff]
      %v943 = vld [vmem:[%s3 + $0x20] sm:$0xff]
      %v944 = vld [vmem:[%s3 + $0x28] sm:$0xff]
      %v945 = vld [vmem:[%s3 + $0x30] sm:$0xff]
      %v946 = vld [vmem:[%s3 + $0x38] sm:$0xff]
      %v947 = vld [vmem:[%s3 + $0x40] sm:$0xff]
      %v948 = vld [vmem:[%s3 + $0x48] sm:$0xff]
      %v949 = vld [vmem:[%s3 + $0x50] sm:$0xff]
      %v950 = vld [vmem:[%s3 + $0x58] sm:$0xff]
      %v951 = vld [vmem:[%s3 + $0x60] sm:$0xff]
      %v952 = vld [vmem:[%s3 + $0x68] sm:$0xff]
      %v953 = vld [vmem:[%s3 + $0x70] sm:$0xff]
      %v954 = vld [vmem:[%s3 + $0x78] sm:$0xff]
      %v955 = vld [vmem:[%s4] sm:$0x1]
      %v957 = vlaneseq
      %v958 = vshrl.u32 %v957, 7
      %v959 = vsub.s32 0, %v958
      %v960 = vrot.slane %v955, %v959
      %962 = vmatprep.subr.mxu0 0.0
      %963 = vmatpush1.msra.mxu0 %v954
      %964 = vmatprep.subr.mxu0 0.0
      %965 = vmatpush1.msra.mxu0 %v953
      %966 = vmatprep.subr.mxu0 0.0
      %967 = vmatpush1.msra.mxu0 %v952
      %968 = vmatprep.subr.mxu0 0.0
      %969 = vmatpush1.msra.mxu0 %v951
      %970 = vmatprep.subr.mxu0 0.0
      %971 = vmatpush1.msra.mxu0 %v950
      %972 = vmatprep.subr.mxu0 0.0
      %973 = vmatpush1.msra.mxu0 %v949
      %974 = vmatprep.subr.mxu0 0.0
      %975 = vmatpush1.msra.mxu0 %v948
      %976 = vmatprep.subr.mxu0 0.0
      %977 = vmatpush1.msra.mxu0 %v947
      %978 = vmatprep.subr.mxu0 0.0
      %979 = vmatpush1.msra.mxu0 %v946
      %980 = vmatprep.subr.mxu0 0.0
      %981 = vmatpush1.msra.mxu0 %v945
      %982 = vmatprep.subr.mxu0 0.0
      %983 = vmatpush1.msra.mxu0 %v944
      %984 = vmatprep.subr.mxu0 0.0
      %985 = vmatpush1.msra.mxu0 %v943
      %986 = vmatprep.subr.mxu0 0.0
      %987 = vmatpush1.msra.mxu0 %v942
      %988 = vmatprep.subr.mxu0 0.0
      %989 = vmatpush1.msra.mxu0 %v941
      %990 = vmatprep.subr.mxu0 0.0
      %991 = vmatpush1.msra.mxu0 %v940
      %992 = vmatprep.subr.mxu0 0.0
      %993 = vmatpush1.msra.mxu0 %v939
      %994 = vmatprep.subr.mxu0 0.0
      %995 = vmatpush2.msra.mxu0 0.0
      %996 = vmatprep.subr.mxu0 0.0
      %997 = vmatpush2.msra.mxu0 0.0
      %998 = vmatprep.subr.mxu0 0.0
      %999 = vmatpush2.msra.mxu0 0.0
      %1000 = vmatprep.subr.mxu0 0.0
      %1001 = vmatpush2.msra.mxu0 0.0
      %1002 = vmatprep.subr.mxu0 0.0
      %1003 = vmatpush2.msra.mxu0 0.0
      %1004 = vmatprep.subr.mxu0 0.0
      %1005 = vmatpush2.msra.mxu0 0.0
      %1006 = vmatprep.subr.mxu0 0.0
      %1007 = vmatpush2.msra.mxu0 0.0
      %1008 = vmatprep.subr.mxu0 0.0
      %1009 = vmatpush2.msra.mxu0 0.0
      %1010 = vmatprep.subr.mxu0 0.0
      %1011 = vmatpush2.msra.mxu0 0.0
      %1012 = vmatprep.subr.mxu0 0.0
      %1013 = vmatpush2.msra.mxu0 0.0
      %1014 = vmatprep.subr.mxu0 0.0
      %1015 = vmatpush2.msra.mxu0 0.0
      %1016 = vmatprep.subr.mxu0 0.0
      %1017 = vmatpush2.msra.mxu0 0.0
      %1018 = vmatprep.subr.mxu0 0.0
      %1019 = vmatpush2.msra.mxu0 0.0
      %1020 = vmatprep.subr.mxu0 0.0
      %1021 = vmatpush2.msra.mxu0 0.0
      %1022 = vmatprep.subr.mxu0 0.0
      %1023 = vmatpush2.msra.mxu0 0.0
      %1024 = vmatprep.subr.mxu0 0.0
      %1025 = vmatpush2.msra.mxu0 0.0
      %1026 = vmatprep.mubr.f32.mxu0 0.0
      %1027 = vmatmul.mubr.f32.gmra.mxu0 %v339
      %v1028 = vpop.f32.mrf.mxu0
      %v1029 = vadd.f32 %v960, %v1028
      %v1030 = vpop.f32.mrf.mxu0
      %1031 = vmatprep.mubr.f32.mxu0 0.0
      %1032 = vmatmul.mubr.f32.gmra.mxu0 %v340
      %v1033 = vpop.f32.mrf.mxu0
      %v1034 = vadd.f32 %v960, %v1033
      %v1035 = vpop.f32.mrf.mxu0
      %1036 = vmatprep.mubr.f32.mxu0 0.0
      %1037 = vmatmul.mubr.f32.gmra.mxu0 %v341
      %v1038 = vpop.f32.mrf.mxu0
      %v1039 = vadd.f32 %v960, %v1038
      %v1040 = vpop.f32.mrf.mxu0
      %1041 = vmatprep.mubr.f32.mxu0 0.0
      %1042 = vmatmul.mubr.f32.gmra.mxu0 %v342
      %v1043 = vpop.f32.mrf.mxu0
      %v1044 = vadd.f32 %v960, %v1043
      %v1045 = vpop.f32.mrf.mxu0
      %1046 = vmatprep.mubr.f32.mxu0 0.0
      %1047 = vmatmul.mubr.f32.gmra.mxu0 %v343
      %v1048 = vpop.f32.mrf.mxu0
      %v1049 = vadd.f32 %v960, %v1048
      %v1050 = vpop.f32.mrf.mxu0
      %1051 = vmatprep.mubr.f32.mxu0 0.0
      %1052 = vmatmul.mubr.f32.gmra.mxu0 %v344
      %v1053 = vpop.f32.mrf.mxu0
      %v1054 = vadd.f32 %v960, %v1053
      %v1055 = vpop.f32.mrf.mxu0
      %1056 = vmatprep.mubr.f32.mxu0 0.0
      %1057 = vmatmul.mubr.f32.gmra.mxu0 %v345
      %v1058 = vpop.f32.mrf.mxu0
      %v1059 = vadd.f32 %v960, %v1058
      %v1060 = vpop.f32.mrf.mxu0
      %1061 = vmatprep.mubr.f32.mxu0 0.0
      %1062 = vmatmul.mubr.f32.gmra.mxu0 %v346
      %v1063 = vpop.f32.mrf.mxu0
      %v1064 = vadd.f32 %v960, %v1063
      %v1065 = vpop.f32.mrf.mxu0
      %1066 = vmatprep.mubr.f32.mxu0 0.0
      %1067 = vmatmul.mubr.f32.gmra.mxu0 %v347
      %v1068 = vpop.f32.mrf.mxu0
      %v1069 = vadd.f32 %v960, %v1068
      %v1070 = vpop.f32.mrf.mxu0
      %1071 = vmatprep.mubr.f32.mxu0 0.0
      %1072 = vmatmul.mubr.f32.gmra.mxu0 %v348
      %v1073 = vpop.f32.mrf.mxu0
      %v1074 = vadd.f32 %v960, %v1073
      %v1075 = vpop.f32.mrf.mxu0
      %1076 = vmatprep.mubr.f32.mxu0 0.0
      %1077 = vmatmul.mubr.f32.gmra.mxu0 %v349
      %v1078 = vpop.f32.mrf.mxu0
      %v1079 = vadd.f32 %v960, %v1078
      %v1080 = vpop.f32.mrf.mxu0
      %1081 = vmatprep.mubr.f32.mxu0 0.0
      %1082 = vmatmul.mubr.f32.gmra.mxu0 %v350
      %v1083 = vpop.f32.mrf.mxu0
      %v1084 = vadd.f32 %v960, %v1083
      %v1085 = vpop.f32.mrf.mxu0
      %1086 = vmatprep.mubr.f32.mxu0 0.0
      %1087 = vmatmul.mubr.f32.gmra.mxu0 %v351
      %v1088 = vpop.f32.mrf.mxu0
      %v1089 = vadd.f32 %v960, %v1088
      %v1090 = vpop.f32.mrf.mxu0
      %1091 = vmatprep.mubr.f32.mxu0 0.0
      %1092 = vmatmul.mubr.f32.gmra.mxu0 %v352
      %v1093 = vpop.f32.mrf.mxu0
      %v1094 = vadd.f32 %v960, %v1093
      %v1095 = vpop.f32.mrf.mxu0
      %1096 = vmatprep.mubr.f32.mxu0 0.0
      %1097 = vmatmul.mubr.f32.gmra.mxu0 %v353
      %v1098 = vpop.f32.mrf.mxu0
      %v1099 = vadd.f32 %v960, %v1098
      %v1100 = vpop.f32.mrf.mxu0
      %1101 = vmatprep.mubr.f32.mxu0 0.0
      %1102 = vmatmul.mubr.f32.gmra.mxu0 %v354
      %v1103 = vpop.f32.mrf.mxu0
      %v1104 = vadd.f32 %v960, %v1103
      %v1105 = vpop.f32.mrf.mxu0
      %1106 = vmatprep.mubr.f32.mxu0 0.0
      %1107 = vmatmul.mubr.f32.gmra.mxu0 %v355
      %v1108 = vpop.f32.mrf.mxu0
      %v1109 = vadd.f32 %v960, %v1108
      %v1110 = vpop.f32.mrf.mxu0
      %1111 = vmatprep.mubr.f32.mxu0 0.0
      %1112 = vmatmul.mubr.f32.gmra.mxu0 %v356
      %v1113 = vpop.f32.mrf.mxu0
      %v1114 = vadd.f32 %v960, %v1113
      %v1115 = vpop.f32.mrf.mxu0
      %1116 = vmatprep.mubr.f32.mxu0 0.0
      %1117 = vmatmul.mubr.f32.gmra.mxu0 %v357
      %v1118 = vpop.f32.mrf.mxu0
      %v1119 = vadd.f32 %v960, %v1118
      %v1120 = vpop.f32.mrf.mxu0
      %1121 = vmatprep.mubr.f32.mxu0 0.0
      %1122 = vmatmul.mubr.f32.gmra.mxu0 %v358
      %v1123 = vpop.f32.mrf.mxu0
      %v1124 = vadd.f32 %v960, %v1123
      %v1125 = vpop.f32.mrf.mxu0
      %1126 = vmatprep.mubr.f32.mxu0 0.0
      %1127 = vmatmul.mubr.f32.gmra.mxu0 %v359
      %v1128 = vpop.f32.mrf.mxu0
      %v1129 = vadd.f32 %v960, %v1128
      %v1130 = vpop.f32.mrf.mxu0
      %1131 = vmatprep.mubr.f32.mxu0 0.0
      %1132 = vmatmul.mubr.f32.gmra.mxu0 %v360
      %v1133 = vpop.f32.mrf.mxu0
      %v1134 = vadd.f32 %v960, %v1133
      %v1135 = vpop.f32.mrf.mxu0
      %1136 = vmatprep.mubr.f32.mxu0 0.0
      %1137 = vmatmul.mubr.f32.gmra.mxu0 %v361
      %v1138 = vpop.f32.mrf.mxu0
      %v1139 = vadd.f32 %v960, %v1138
      %v1140 = vpop.f32.mrf.mxu0
      %1141 = vmatprep.mubr.f32.mxu0 0.0
      %1142 = vmatmul.mubr.f32.gmra.mxu0 %v362
      %v1143 = vpop.f32.mrf.mxu0
      %v1144 = vadd.f32 %v960, %v1143
      %v1145 = vpop.f32.mrf.mxu0
      %1146 = vmatprep.mubr.f32.mxu0 0.0
      %1147 = vmatmul.mubr.f32.gmra.mxu0 %v363
      %v1148 = vpop.f32.mrf.mxu0
      %v1149 = vadd.f32 %v960, %v1148
      %v1150 = vpop.f32.mrf.mxu0
      %1151 = vmatprep.mubr.f32.mxu0 0.0
      %1152 = vmatmul.mubr.f32.gmra.mxu0 %v364
      %v1153 = vpop.f32.mrf.mxu0
      %v1154 = vadd.f32 %v960, %v1153
      %v1155 = vpop.f32.mrf.mxu0
      %1156 = vmatprep.mubr.f32.mxu0 0.0
      %1157 = vmatmul.mubr.f32.gmra.mxu0 %v365
      %v1158 = vpop.f32.mrf.mxu0
      %v1159 = vadd.f32 %v960, %v1158
      %v1160 = vpop.f32.mrf.mxu0
      %1161 = vmatprep.mubr.f32.mxu0 0.0
      %1162 = vmatmul.mubr.f32.gmra.mxu0 %v366
      %v1163 = vpop.f32.mrf.mxu0
      %v1164 = vadd.f32 %v960, %v1163
      %v1165 = vpop.f32.mrf.mxu0
      %1166 = vmatprep.mubr.f32.mxu0 0.0
      %1167 = vmatmul.mubr.f32.gmra.mxu0 %v367
      %v1168 = vpop.f32.mrf.mxu0
      %v1169 = vadd.f32 %v960, %v1168
      %v1170 = vpop.f32.mrf.mxu0
      %1171 = vmatprep.mubr.f32.mxu0 0.0
      %1172 = vmatmul.mubr.f32.gmra.mxu0 %v368
      %v1173 = vpop.f32.mrf.mxu0
      %v1174 = vadd.f32 %v960, %v1173
      %v1175 = vpop.f32.mrf.mxu0
      %1176 = vmatprep.mubr.f32.mxu0 0.0
      %1177 = vmatmul.mubr.f32.gmra.mxu0 %v369
      %v1178 = vpop.f32.mrf.mxu0
      %v1179 = vadd.f32 %v960, %v1178
      %v1180 = vpop.f32.mrf.mxu0
      %1181 = vmatprep.mubr.f32.mxu0 0.0
      %1182 = vmatmul.mubr.f32.gmra.mxu0 %v370
      %v1183 = vpop.f32.mrf.mxu0
      %v1184 = vadd.f32 %v960, %v1183
      %v1185 = vpop.f32.mrf.mxu0
      %1186 = vmatprep.mubr.f32.mxu0 0.0
      %1187 = vmatmul.mubr.f32.gmra.mxu0 %v371
      %v1188 = vpop.f32.mrf.mxu0
      %v1189 = vadd.f32 %v960, %v1188
      %v1190 = vpop.f32.mrf.mxu0
      %1191 = vmatprep.mubr.f32.mxu0 0.0
      %1192 = vmatmul.mubr.f32.gmra.mxu0 %v372
      %v1193 = vpop.f32.mrf.mxu0
      %v1194 = vadd.f32 %v960, %v1193
      %v1195 = vpop.f32.mrf.mxu0
      %1196 = vmatprep.mubr.f32.mxu0 0.0
      %1197 = vmatmul.mubr.f32.gmra.mxu0 %v373
      %v1198 = vpop.f32.mrf.mxu0
      %v1199 = vadd.f32 %v960, %v1198
      %v1200 = vpop.f32.mrf.mxu0
      %1201 = vmatprep.mubr.f32.mxu0 0.0
      %1202 = vmatmul.mubr.f32.gmra.mxu0 %v374
      %v1203 = vpop.f32.mrf.mxu0
      %v1204 = vadd.f32 %v960, %v1203
      %v1205 = vpop.f32.mrf.mxu0
      %1206 = vmatprep.mubr.f32.mxu0 0.0
      %1207 = vmatmul.mubr.f32.gmra.mxu0 %v375
      %v1208 = vpop.f32.mrf.mxu0
      %v1209 = vadd.f32 %v960, %v1208
      %v1210 = vpop.f32.mrf.mxu0
      %1211 = vmatprep.mubr.f32.mxu0 0.0
      %1212 = vmatmul.mubr.f32.gmra.mxu0 %v376
      %v1213 = vpop.f32.mrf.mxu0
      %v1214 = vadd.f32 %v960, %v1213
      %v1215 = vpop.f32.mrf.mxu0
      %1216 = vmatprep.mubr.f32.mxu0 0.0
      %1217 = vmatmul.mubr.f32.gmra.mxu0 %v377
      %v1218 = vpop.f32.mrf.mxu0
      %v1219 = vadd.f32 %v960, %v1218
      %v1220 = vpop.f32.mrf.mxu0
      %1221 = vmatprep.mubr.f32.mxu0 0.0
      %1222 = vmatmul.mubr.f32.gmra.mxu0 %v378
      %v1223 = vpop.f32.mrf.mxu0
      %v1224 = vadd.f32 %v960, %v1223
      %v1225 = vpop.f32.mrf.mxu0
      %1226 = vmatprep.mubr.f32.mxu0 0.0
      %1227 = vmatmul.mubr.f32.gmra.mxu0 %v379
      %v1228 = vpop.f32.mrf.mxu0
      %v1229 = vadd.f32 %v960, %v1228
      %v1230 = vpop.f32.mrf.mxu0
      %1231 = vmatprep.mubr.f32.mxu0 0.0
      %1232 = vmatmul.mubr.f32.gmra.mxu0 %v380
      %v1233 = vpop.f32.mrf.mxu0
      %v1234 = vadd.f32 %v960, %v1233
      %v1235 = vpop.f32.mrf.mxu0
      %1236 = vmatprep.mubr.f32.mxu0 0.0
      %1237 = vmatmul.mubr.f32.gmra.mxu0 %v381
      %v1238 = vpop.f32.mrf.mxu0
      %v1239 = vadd.f32 %v960, %v1238
      %v1240 = vpop.f32.mrf.mxu0
      %1241 = vmatprep.mubr.f32.mxu0 0.0
      %1242 = vmatmul.mubr.f32.gmra.mxu0 %v382
      %v1243 = vpop.f32.mrf.mxu0
      %v1244 = vadd.f32 %v960, %v1243
      %v1245 = vpop.f32.mrf.mxu0
      %1246 = vmatprep.mubr.f32.mxu0 0.0
      %1247 = vmatmul.mubr.f32.gmra.mxu0 %v383
      %v1248 = vpop.f32.mrf.mxu0
      %v1249 = vadd.f32 %v960, %v1248
      %v1250 = vpop.f32.mrf.mxu0
      %1251 = vmatprep.mubr.f32.mxu0 0.0
      %1252 = vmatmul.mubr.f32.gmra.mxu0 %v384
      %v1253 = vpop.f32.mrf.mxu0
      %v1254 = vadd.f32 %v960, %v1253
      %v1255 = vpop.f32.mrf.mxu0
      %1256 = vmatprep.mubr.f32.mxu0 0.0
      %1257 = vmatmul.mubr.f32.gmra.mxu0 %v385
      %v1258 = vpop.f32.mrf.mxu0
      %v1259 = vadd.f32 %v960, %v1258
      %v1260 = vpop.f32.mrf.mxu0
      %1261 = vmatprep.mubr.f32.mxu0 0.0
      %1262 = vmatmul.mubr.f32.gmra.mxu0 %v386
      %v1263 = vpop.f32.mrf.mxu0
      %v1264 = vadd.f32 %v960, %v1263
      %v1265 = vpop.f32.mrf.mxu0
      %1266 = vmatprep.mubr.f32.mxu0 0.0
      %1267 = vmatmul.mubr.f32.gmra.mxu0 %v387
      %v1268 = vpop.f32.mrf.mxu0
      %v1269 = vadd.f32 %v960, %v1268
      %v1270 = vpop.f32.mrf.mxu0
      %1271 = vmatprep.mubr.f32.mxu0 0.0
      %1272 = vmatmul.mubr.f32.gmra.mxu0 %v388
      %v1273 = vpop.f32.mrf.mxu0
      %v1274 = vadd.f32 %v960, %v1273
      %v1275 = vpop.f32.mrf.mxu0
      %1276 = vmatprep.mubr.f32.mxu0 0.0
      %1277 = vmatmul.mubr.f32.gmra.mxu0 %v389
      %v1278 = vpop.f32.mrf.mxu0
      %v1279 = vadd.f32 %v960, %v1278
      %v1280 = vpop.f32.mrf.mxu0
      %1281 = vmatprep.mubr.f32.mxu0 0.0
      %1282 = vmatmul.mubr.f32.gmra.mxu0 %v390
      %v1283 = vpop.f32.mrf.mxu0
      %v1284 = vadd.f32 %v960, %v1283
      %v1285 = vpop.f32.mrf.mxu0
      %1286 = vmatprep.mubr.f32.mxu0 0.0
      %1287 = vmatmul.mubr.f32.gmra.mxu0 %v391
      %v1288 = vpop.f32.mrf.mxu0
      %v1289 = vadd.f32 %v960, %v1288
      %v1290 = vpop.f32.mrf.mxu0
      %1291 = vmatprep.mubr.f32.mxu0 0.0
      %1292 = vmatmul.mubr.f32.gmra.mxu0 %v392
      %v1293 = vpop.f32.mrf.mxu0
      %v1294 = vadd.f32 %v960, %v1293
      %v1295 = vpop.f32.mrf.mxu0
      %1296 = vmatprep.mubr.f32.mxu0 0.0
      %1297 = vmatmul.mubr.f32.gmra.mxu0 %v393
      %v1298 = vpop.f32.mrf.mxu0
      %v1299 = vadd.f32 %v960, %v1298
      %v1300 = vpop.f32.mrf.mxu0
      %1301 = vmatprep.mubr.f32.mxu0 0.0
      %1302 = vmatmul.mubr.f32.gmra.mxu0 %v394
      %v1303 = vpop.f32.mrf.mxu0
      %v1304 = vadd.f32 %v960, %v1303
      %v1305 = vpop.f32.mrf.mxu0
      %1306 = vmatprep.mubr.f32.mxu0 0.0
      %1307 = vmatmul.mubr.f32.gmra.mxu0 %v395
      %v1308 = vpop.f32.mrf.mxu0
      %v1309 = vadd.f32 %v960, %v1308
      %v1310 = vpop.f32.mrf.mxu0
      %1311 = vmatprep.mubr.f32.mxu0 0.0
      %1312 = vmatmul.mubr.f32.gmra.mxu0 %v396
      %v1313 = vpop.f32.mrf.mxu0
      %v1314 = vadd.f32 %v960, %v1313
      %v1315 = vpop.f32.mrf.mxu0
      %1316 = vmatprep.mubr.f32.mxu0 0.0
      %1317 = vmatmul.mubr.f32.gmra.mxu0 %v397
      %v1318 = vpop.f32.mrf.mxu0
      %v1319 = vadd.f32 %v960, %v1318
      %v1320 = vpop.f32.mrf.mxu0
      %1321 = vmatprep.mubr.f32.mxu0 0.0
      %1322 = vmatmul.mubr.f32.gmra.mxu0 %v398
      %v1323 = vpop.f32.mrf.mxu0
      %v1324 = vadd.f32 %v960, %v1323
      %v1325 = vpop.f32.mrf.mxu0
      %1326 = vmatprep.mubr.f32.mxu0 0.0
      %1327 = vmatmul.mubr.f32.gmra.mxu0 %v399
      %v1328 = vpop.f32.mrf.mxu0
      %v1329 = vadd.f32 %v960, %v1328
      %v1330 = vpop.f32.mrf.mxu0
      %1331 = vmatprep.mubr.f32.mxu0 0.0
      %1332 = vmatmul.mubr.f32.gmra.mxu0 %v400
      %v1333 = vpop.f32.mrf.mxu0
      %v1334 = vadd.f32 %v960, %v1333
      %v1335 = vpop.f32.mrf.mxu0
      %1336 = vmatprep.mubr.f32.mxu0 0.0
      %1337 = vmatmul.mubr.f32.gmra.mxu0 %v401
      %v1338 = vpop.f32.mrf.mxu0
      %v1339 = vadd.f32 %v960, %v1338
      %v1340 = vpop.f32.mrf.mxu0
      %1341 = vmatprep.mubr.f32.mxu0 0.0
      %1342 = vmatmul.mubr.f32.gmra.mxu0 %v402
      %v1343 = vpop.f32.mrf.mxu0
      %v1344 = vadd.f32 %v960, %v1343
      %v1345 = vpop.f32.mrf.mxu0
      %1346 = vdwg.mxu0
      %1347 = vst [vmem:[%s331] sm:$0xff] %v1029
      %1348 = vst [vmem:[%s331 + $0x8] sm:$0xff] %v1034
      %1349 = vst [vmem:[%s331 + $0x10] sm:$0xff] %v1039
      %1350 = vst [vmem:[%s331 + $0x18] sm:$0xff] %v1044
      %1351 = vst [vmem:[%s331 + $0x20] sm:$0xff] %v1049
      %1352 = vst [vmem:[%s331 + $0x28] sm:$0xff] %v1054
      %1353 = vst [vmem:[%s331 + $0x30] sm:$0xff] %v1059
      %1354 = vst [vmem:[%s331 + $0x38] sm:$0xff] %v1064
      %1355 = vst [vmem:[%s331 + $0x40] sm:$0xff] %v1069
      %1356 = vst [vmem:[%s331 + $0x48] sm:$0xff] %v1074
      %1357 = vst [vmem:[%s331 + $0x50] sm:$0xff] %v1079
      %1358 = vst [vmem:[%s331 + $0x58] sm:$0xff] %v1084
      %1359 = vst [vmem:[%s331 + $0x60] sm:$0xff] %v1089
      %1360 = vst [vmem:[%s331 + $0x68] sm:$0xff] %v1094
      %1361 = vst [vmem:[%s331 + $0x70] sm:$0xff] %v1099
      %1362 = vst [vmem:[%s331 + $0x78] sm:$0xff] %v1104
      %1363 = vst [vmem:[%s331 + $0x80] sm:$0xff] %v1109
      %1364 = vst [vmem:[%s331 + $0x88] sm:$0xff] %v1114
      %1365 = vst [vmem:[%s331 + $0x90] sm:$0xff] %v1119
      %1366 = vst [vmem:[%s331 + $0x98] sm:$0xff] %v1124
      %1367 = vst [vmem:[%s331 + $0xa0] sm:$0xff] %v1129
      %1368 = vst [vmem:[%s331 + $0xa8] sm:$0xff] %v1134
      %1369 = vst [vmem:[%s331 + $0xb0] sm:$0xff] %v1139
      %1370 = vst [vmem:[%s331 + $0xb8] sm:$0xff] %v1144
      %1371 = vst [vmem:[%s331 + $0xc0] sm:$0xff] %v1149
      %1372 = vst [vmem:[%s331 + $0xc8] sm:$0xff] %v1154
      %1373 = vst [vmem:[%s331 + $0xd0] sm:$0xff] %v1159
      %1374 = vst [vmem:[%s331 + $0xd8] sm:$0xff] %v1164
      %1375 = vst [vmem:[%s331 + $0xe0] sm:$0xff] %v1169
      %1376 = vst [vmem:[%s331 + $0xe8] sm:$0xff] %v1174
      %1377 = vst [vmem:[%s331 + $0xf0] sm:$0xff] %v1179
      %1378 = vst [vmem:[%s331 + $0xf8] sm:$0xff] %v1184
      %1379 = vst [vmem:[%s331 + $0x100] sm:$0xff] %v1189
      %1380 = vst [vmem:[%s331 + $0x108] sm:$0xff] %v1194
      %1381 = vst [vmem:[%s331 + $0x110] sm:$0xff] %v1199
      %1382 = vst [vmem:[%s331 + $0x118] sm:$0xff] %v1204
      %1383 = vst [vmem:[%s331 + $0x120] sm:$0xff] %v1209
      %1384 = vst [vmem:[%s331 + $0x128] sm:$0xff] %v1214
      %1385 = vst [vmem:[%s331 + $0x130] sm:$0xff] %v1219
      %1386 = vst [vmem:[%s331 + $0x138] sm:$0xff] %v1224
      %1387 = vst [vmem:[%s331 + $0x140] sm:$0xff] %v1229
      %1388 = vst [vmem:[%s331 + $0x148] sm:$0xff] %v1234
      %1389 = vst [vmem:[%s331 + $0x150] sm:$0xff] %v1239
      %1390 = vst [vmem:[%s331 + $0x158] sm:$0xff] %v1244
      %1391 = vst [vmem:[%s331 + $0x160] sm:$0xff] %v1249
      %1392 = vst [vmem:[%s331 + $0x168] sm:$0xff] %v1254
      %1393 = vst [vmem:[%s331 + $0x170] sm:$0xff] %v1259
      %1394 = vst [vmem:[%s331 + $0x178] sm:$0xff] %v1264
      %1395 = vst [vmem:[%s331 + $0x180] sm:$0xff] %v1269
      %1396 = vst [vmem:[%s331 + $0x188] sm:$0xff] %v1274
      %1397 = vst [vmem:[%s331 + $0x190] sm:$0xff] %v1279
      %1398 = vst [vmem:[%s331 + $0x198] sm:$0xff] %v1284
      %1399 = vst [vmem:[%s331 + $0x1a0] sm:$0xff] %v1289
      %1400 = vst [vmem:[%s331 + $0x1a8] sm:$0xff] %v1294
      %1401 = vst [vmem:[%s331 + $0x1b0] sm:$0xff] %v1299
      %1402 = vst [vmem:[%s331 + $0x1b8] sm:$0xff] %v1304
      %1403 = vst [vmem:[%s331 + $0x1c0] sm:$0xff] %v1309
      %1404 = vst [vmem:[%s331 + $0x1c8] sm:$0xff] %v1314
      %1405 = vst [vmem:[%s331 + $0x1d0] sm:$0xff] %v1319
      %1406 = vst [vmem:[%s331 + $0x1d8] sm:$0xff] %v1324
      %1407 = vst [vmem:[%s331 + $0x1e0] sm:$0xff] %v1329
      %1408 = vst [vmem:[%s331 + $0x1e8] sm:$0xff] %v1334
      %1409 = vst [vmem:[%s331 + $0x1f0] sm:$0xff] %v1339
      %1410 = vst [vmem:[%s331 + $0x1f8] sm:$0xff] %v1344
      %s1411 = smul.u32 %s20, 512
      %v1412 = vlaneseq
      %v1413 = vshrl.u32 %v1412, 7
      %v1414 = vadd.s32 %v1413, 8
      %v1415 = vadd.s32 %v1413, 16
      %v1416 = vadd.s32 %v1413, 24
      %v1417 = vadd.s32 %v1413, 32
      %v1418 = vadd.s32 %v1413, 40
      %v1419 = vadd.s32 %v1413, 48
      %v1420 = vadd.s32 %v1413, 56
      %v1421 = vadd.s32 %v1413, 64
      %v1422 = vadd.s32 %v1413, 72
      %v1423 = vadd.s32 %v1413, 80
      %v1424 = vadd.s32 %v1413, 88
      %v1425 = vadd.s32 %v1413, 96
      %v1426 = vadd.s32 %v1413, 104
      %v1427 = vadd.s32 %v1413, 112
      %v1428 = vadd.s32 %v1413, 120
      %v1429 = vadd.s32 %v1413, 128
      %v1430 = vadd.s32 %v1413, 136
      %v1431 = vadd.s32 %v1413, 144
      %v1432 = vadd.s32 %v1413, 152
      %v1433 = vadd.s32 %v1413, 160
      %v1434 = vadd.s32 %v1413, 168
      %v1435 = vadd.s32 %v1413, 176
      %v1436 = vadd.s32 %v1413, 184
      %v1437 = vadd.s32 %v1413, 192
      %v1438 = vadd.s32 %v1413, 200
      %v1439 = vadd.s32 %v1413, 208
      %v1440 = vadd.s32 %v1413, 216
      %v1441 = vadd.s32 %v1413, 224
      %v1442 = vadd.s32 %v1413, 232
      %v1443 = vadd.s32 %v1413, 240
      %v1444 = vadd.s32 %v1413, 248
      %v1445 = vadd.s32 %v1413, 256
      %v1446 = vadd.s32 %v1413, 264
      %v1447 = vadd.s32 %v1413, 272
      %v1448 = vadd.s32 %v1413, 280
      %v1449 = vadd.s32 %v1413, 288
      %v1450 = vadd.s32 %v1413, 296
      %v1451 = vadd.s32 %v1413, 304
      %v1452 = vadd.s32 %v1413, 312
      %v1453 = vadd.s32 %v1413, 320
      %v1454 = vadd.s32 %v1413, 328
      %v1455 = vadd.s32 %v1413, 336
      %v1456 = vadd.s32 %v1413, 344
      %v1457 = vadd.s32 %v1413, 352
      %v1458 = vadd.s32 %v1413, 360
      %v1459 = vadd.s32 %v1413, 368
      %v1460 = vadd.s32 %v1413, 376
      %v1461 = vadd.s32 %v1413, 384
      %v1462 = vadd.s32 %v1413, 392
      %v1463 = vadd.s32 %v1413, 400
      %v1464 = vadd.s32 %v1413, 408
      %v1465 = vadd.s32 %v1413, 416
      %v1466 = vadd.s32 %v1413, 424
      %v1467 = vadd.s32 %v1413, 432
      %v1468 = vadd.s32 %v1413, 440
      %v1469 = vadd.s32 %v1413, 448
      %v1470 = vadd.s32 %v1413, 456
      %v1471 = vadd.s32 %v1413, 464
      %v1472 = vadd.s32 %v1413, 472
      %v1473 = vadd.s32 %v1413, 480
      %v1474 = vadd.s32 %v1413, 488
      %v1475 = vadd.s32 %v1413, 496
      %v1476 = vadd.s32 %v1413, 504
      %v1477 = vstv %s1411
      %v1478 = vadd.s32 %v1477, %v1413
      %v1479 = vadd.s32 %v1477, %v1414
      %v1480 = vadd.s32 %v1477, %v1415
      %v1481 = vadd.s32 %v1477, %v1416
      %v1482 = vadd.s32 %v1477, %v1417
      %v1483 = vadd.s32 %v1477, %v1418
      %v1484 = vadd.s32 %v1477, %v1419
      %v1485 = vadd.s32 %v1477, %v1420
      %v1486 = vadd.s32 %v1477, %v1421
      %v1487 = vadd.s32 %v1477, %v1422
      %v1488 = vadd.s32 %v1477, %v1423
      %v1489 = vadd.s32 %v1477, %v1424
      %v1490 = vadd.s32 %v1477, %v1425
      %v1491 = vadd.s32 %v1477, %v1426
      %v1492 = vadd.s32 %v1477, %v1427
      %v1493 = vadd.s32 %v1477, %v1428
      %v1494 = vadd.s32 %v1477, %v1429
      %v1495 = vadd.s32 %v1477, %v1430
      %v1496 = vadd.s32 %v1477, %v1431
      %v1497 = vadd.s32 %v1477, %v1432
      %v1498 = vadd.s32 %v1477, %v1433
      %v1499 = vadd.s32 %v1477, %v1434
      %v1500 = vadd.s32 %v1477, %v1435
      %v1501 = vadd.s32 %v1477, %v1436
      %v1502 = vadd.s32 %v1477, %v1437
      %v1503 = vadd.s32 %v1477, %v1438
      %v1504 = vadd.s32 %v1477, %v1439
      %v1505 = vadd.s32 %v1477, %v1440
      %v1506 = vadd.s32 %v1477, %v1441
      %v1507 = vadd.s32 %v1477, %v1442
      %v1508 = vadd.s32 %v1477, %v1443
      %v1509 = vadd.s32 %v1477, %v1444
      %v1510 = vadd.s32 %v1477, %v1445
      %v1511 = vadd.s32 %v1477, %v1446
      %v1512 = vadd.s32 %v1477, %v1447
      %v1513 = vadd.s32 %v1477, %v1448
      %v1514 = vadd.s32 %v1477, %v1449
      %v1515 = vadd.s32 %v1477, %v1450
      %v1516 = vadd.s32 %v1477, %v1451
      %v1517 = vadd.s32 %v1477, %v1452
      %v1518 = vadd.s32 %v1477, %v1453
      %v1519 = vadd.s32 %v1477, %v1454
      %v1520 = vadd.s32 %v1477, %v1455
      %v1521 = vadd.s32 %v1477, %v1456
      %v1522 = vadd.s32 %v1477, %v1457
      %v1523 = vadd.s32 %v1477, %v1458
      %v1524 = vadd.s32 %v1477, %v1459
      %v1525 = vadd.s32 %v1477, %v1460
      %v1526 = vadd.s32 %v1477, %v1461
      %v1527 = vadd.s32 %v1477, %v1462
      %v1528 = vadd.s32 %v1477, %v1463
      %v1529 = vadd.s32 %v1477, %v1464
      %v1530 = vadd.s32 %v1477, %v1465
      %v1531 = vadd.s32 %v1477, %v1466
      %v1532 = vadd.s32 %v1477, %v1467
      %v1533 = vadd.s32 %v1477, %v1468
      %v1534 = vadd.s32 %v1477, %v1469
      %v1535 = vadd.s32 %v1477, %v1470
      %v1536 = vadd.s32 %v1477, %v1471
      %v1537 = vadd.s32 %v1477, %v1472
      %v1538 = vadd.s32 %v1477, %v1473
      %v1539 = vadd.s32 %v1477, %v1474
      %v1540 = vadd.s32 %v1477, %v1475
      %v1541 = vadd.s32 %v1477, %v1476
      %vm1542 = vcmp.lt.s32.totalorder %v1478, 1280
      %vm1543 = vcmp.lt.s32.totalorder %v1479, 1280
      %vm1544 = vcmp.lt.s32.totalorder %v1480, 1280
      %vm1545 = vcmp.lt.s32.totalorder %v1481, 1280
      %vm1546 = vcmp.lt.s32.totalorder %v1482, 1280
      %vm1547 = vcmp.lt.s32.totalorder %v1483, 1280
      %vm1548 = vcmp.lt.s32.totalorder %v1484, 1280
      %vm1549 = vcmp.lt.s32.totalorder %v1485, 1280
      %vm1550 = vcmp.lt.s32.totalorder %v1486, 1280
      %vm1551 = vcmp.lt.s32.totalorder %v1487, 1280
      %vm1552 = vcmp.lt.s32.totalorder %v1488, 1280
      %vm1553 = vcmp.lt.s32.totalorder %v1489, 1280
      %vm1554 = vcmp.lt.s32.totalorder %v1490, 1280
      %vm1555 = vcmp.lt.s32.totalorder %v1491, 1280
      %vm1556 = vcmp.lt.s32.totalorder %v1492, 1280
      %vm1557 = vcmp.lt.s32.totalorder %v1493, 1280
      %vm1558 = vcmp.lt.s32.totalorder %v1494, 1280
      %vm1559 = vcmp.lt.s32.totalorder %v1495, 1280
      %vm1560 = vcmp.lt.s32.totalorder %v1496, 1280
      %vm1561 = vcmp.lt.s32.totalorder %v1497, 1280
      %vm1562 = vcmp.lt.s32.totalorder %v1498, 1280
      %vm1563 = vcmp.lt.s32.totalorder %v1499, 1280
      %vm1564 = vcmp.lt.s32.totalorder %v1500, 1280
      %vm1565 = vcmp.lt.s32.totalorder %v1501, 1280
      %vm1566 = vcmp.lt.s32.totalorder %v1502, 1280
      %vm1567 = vcmp.lt.s32.totalorder %v1503, 1280
      %vm1568 = vcmp.lt.s32.totalorder %v1504, 1280
      %vm1569 = vcmp.lt.s32.totalorder %v1505, 1280
      %vm1570 = vcmp.lt.s32.totalorder %v1506, 1280
      %vm1571 = vcmp.lt.s32.totalorder %v1507, 1280
      %vm1572 = vcmp.lt.s32.totalorder %v1508, 1280
      %vm1573 = vcmp.lt.s32.totalorder %v1509, 1280
      %vm1574 = vcmp.lt.s32.totalorder %v1510, 1280
      %vm1575 = vcmp.lt.s32.totalorder %v1511, 1280
      %vm1576 = vcmp.lt.s32.totalorder %v1512, 1280
      %vm1577 = vcmp.lt.s32.totalorder %v1513, 1280
      %vm1578 = vcmp.lt.s32.totalorder %v1514, 1280
      %vm1579 = vcmp.lt.s32.totalorder %v1515, 1280
      %vm1580 = vcmp.lt.s32.totalorder %v1516, 1280
      %vm1581 = vcmp.lt.s32.totalorder %v1517, 1280
      %vm1582 = vcmp.lt.s32.totalorder %v1518, 1280
      %vm1583 = vcmp.lt.s32.totalorder %v1519, 1280
      %vm1584 = vcmp.lt.s32.totalorder %v1520, 1280
      %vm1585 = vcmp.lt.s32.totalorder %v1521, 1280
      %vm1586 = vcmp.lt.s32.totalorder %v1522, 1280
      %vm1587 = vcmp.lt.s32.totalorder %v1523, 1280
      %vm1588 = vcmp.lt.s32.totalorder %v1524, 1280
      %vm1589 = vcmp.lt.s32.totalorder %v1525, 1280
      %vm1590 = vcmp.lt.s32.totalorder %v1526, 1280
      %vm1591 = vcmp.lt.s32.totalorder %v1527, 1280
      %vm1592 = vcmp.lt.s32.totalorder %v1528, 1280
      %vm1593 = vcmp.lt.s32.totalorder %v1529, 1280
      %vm1594 = vcmp.lt.s32.totalorder %v1530, 1280
      %vm1595 = vcmp.lt.s32.totalorder %v1531, 1280
      %vm1596 = vcmp.lt.s32.totalorder %v1532, 1280
      %vm1597 = vcmp.lt.s32.totalorder %v1533, 1280
      %vm1598 = vcmp.lt.s32.totalorder %v1534, 1280
      %vm1599 = vcmp.lt.s32.totalorder %v1535, 1280
      %vm1600 = vcmp.lt.s32.totalorder %v1536, 1280
      %vm1601 = vcmp.lt.s32.totalorder %v1537, 1280
      %vm1602 = vcmp.lt.s32.totalorder %v1538, 1280
      %vm1603 = vcmp.lt.s32.totalorder %v1539, 1280
      %vm1604 = vcmp.lt.s32.totalorder %v1540, 1280
      %vm1605 = vcmp.lt.s32.totalorder %v1541, 1280
      %v1606 = vsel %vm1542, 1, 0
      %v1607 = vsel %vm1543, 1, 0
      %v1608 = vsel %vm1544, 1, 0
      %v1609 = vsel %vm1545, 1, 0
      %v1610 = vsel %vm1546, 1, 0
      %v1611 = vsel %vm1547, 1, 0
      %v1612 = vsel %vm1548, 1, 0
      %v1613 = vsel %vm1549, 1, 0
      %v1614 = vsel %vm1550, 1, 0
      %v1615 = vsel %vm1551, 1, 0
      %v1616 = vsel %vm1552, 1, 0
      %v1617 = vsel %vm1553, 1, 0
      %v1618 = vsel %vm1554, 1, 0
      %v1619 = vsel %vm1555, 1, 0
      %v1620 = vsel %vm1556, 1, 0
      %v1621 = vsel %vm1557, 1, 0
      %v1622 = vsel %vm1558, 1, 0
      %v1623 = vsel %vm1559, 1, 0
      %v1624 = vsel %vm1560, 1, 0
      %v1625 = vsel %vm1561, 1, 0
      %v1626 = vsel %vm1562, 1, 0
      %v1627 = vsel %vm1563, 1, 0
      %v1628 = vsel %vm1564, 1, 0
      %v1629 = vsel %vm1565, 1, 0
      %v1630 = vsel %vm1566, 1, 0
      %v1631 = vsel %vm1567, 1, 0
      %v1632 = vsel %vm1568, 1, 0
      %v1633 = vsel %vm1569, 1, 0
      %v1634 = vsel %vm1570, 1, 0
      %v1635 = vsel %vm1571, 1, 0
      %v1636 = vsel %vm1572, 1, 0
      %v1637 = vsel %vm1573, 1, 0
      %v1638 = vsel %vm1574, 1, 0
      %v1639 = vsel %vm1575, 1, 0
      %v1640 = vsel %vm1576, 1, 0
      %v1641 = vsel %vm1577, 1, 0
      %v1642 = vsel %vm1578, 1, 0
      %v1643 = vsel %vm1579, 1, 0
      %v1644 = vsel %vm1580, 1, 0
      %v1645 = vsel %vm1581, 1, 0
      %v1646 = vsel %vm1582, 1, 0
      %v1647 = vsel %vm1583, 1, 0
      %v1648 = vsel %vm1584, 1, 0
      %v1649 = vsel %vm1585, 1, 0
      %v1650 = vsel %vm1586, 1, 0
      %v1651 = vsel %vm1587, 1, 0
      %v1652 = vsel %vm1588, 1, 0
      %v1653 = vsel %vm1589, 1, 0
      %v1654 = vsel %vm1590, 1, 0
      %v1655 = vsel %vm1591, 1, 0
      %v1656 = vsel %vm1592, 1, 0
      %v1657 = vsel %vm1593, 1, 0
      %v1658 = vsel %vm1594, 1, 0
      %v1659 = vsel %vm1595, 1, 0
      %v1660 = vsel %vm1596, 1, 0
      %v1661 = vsel %vm1597, 1, 0
      %v1662 = vsel %vm1598, 1, 0
      %v1663 = vsel %vm1599, 1, 0
      %v1664 = vsel %vm1600, 1, 0
      %v1665 = vsel %vm1601, 1, 0
      %v1666 = vsel %vm1602, 1, 0
      %v1667 = vsel %vm1603, 1, 0
      %v1668 = vsel %vm1604, 1, 0
      %v1669 = vsel %vm1605, 1, 0
      %vm1670 = vcmp.eq.s32.totalorder %v1606, 1
      %vm1671 = vcmp.eq.s32.totalorder %v1607, 1
      %vm1672 = vcmp.eq.s32.totalorder %v1608, 1
      %vm1673 = vcmp.eq.s32.totalorder %v1609, 1
      %vm1674 = vcmp.eq.s32.totalorder %v1610, 1
      %vm1675 = vcmp.eq.s32.totalorder %v1611, 1
      %vm1676 = vcmp.eq.s32.totalorder %v1612, 1
      %vm1677 = vcmp.eq.s32.totalorder %v1613, 1
      %vm1678 = vcmp.eq.s32.totalorder %v1614, 1
      %vm1679 = vcmp.eq.s32.totalorder %v1615, 1
      %vm1680 = vcmp.eq.s32.totalorder %v1616, 1
      %vm1681 = vcmp.eq.s32.totalorder %v1617, 1
      %vm1682 = vcmp.eq.s32.totalorder %v1618, 1
      %vm1683 = vcmp.eq.s32.totalorder %v1619, 1
      %vm1684 = vcmp.eq.s32.totalorder %v1620, 1
      %vm1685 = vcmp.eq.s32.totalorder %v1621, 1
      %vm1686 = vcmp.eq.s32.totalorder %v1622, 1
      %vm1687 = vcmp.eq.s32.totalorder %v1623, 1
      %vm1688 = vcmp.eq.s32.totalorder %v1624, 1
      %vm1689 = vcmp.eq.s32.totalorder %v1625, 1
      %vm1690 = vcmp.eq.s32.totalorder %v1626, 1
      %vm1691 = vcmp.eq.s32.totalorder %v1627, 1
      %vm1692 = vcmp.eq.s32.totalorder %v1628, 1
      %vm1693 = vcmp.eq.s32.totalorder %v1629, 1
      %vm1694 = vcmp.eq.s32.totalorder %v1630, 1
      %vm1695 = vcmp.eq.s32.totalorder %v1631, 1
      %vm1696 = vcmp.eq.s32.totalorder %v1632, 1
      %vm1697 = vcmp.eq.s32.totalorder %v1633, 1
      %vm1698 = vcmp.eq.s32.totalorder %v1634, 1
      %vm1699 = vcmp.eq.s32.totalorder %v1635, 1
      %vm1700 = vcmp.eq.s32.totalorder %v1636, 1
      %vm1701 = vcmp.eq.s32.totalorder %v1637, 1
      %vm1702 = vcmp.eq.s32.totalorder %v1638, 1
      %vm1703 = vcmp.eq.s32.totalorder %v1639, 1
      %vm1704 = vcmp.eq.s32.totalorder %v1640, 1
      %vm1705 = vcmp.eq.s32.totalorder %v1641, 1
      %vm1706 = vcmp.eq.s32.totalorder %v1642, 1
      %vm1707 = vcmp.eq.s32.totalorder %v1643, 1
      %vm1708 = vcmp.eq.s32.totalorder %v1644, 1
      %vm1709 = vcmp.eq.s32.totalorder %v1645, 1
      %vm1710 = vcmp.eq.s32.totalorder %v1646, 1
      %vm1711 = vcmp.eq.s32.totalorder %v1647, 1
      %vm1712 = vcmp.eq.s32.totalorder %v1648, 1
      %vm1713 = vcmp.eq.s32.totalorder %v1649, 1
      %vm1714 = vcmp.eq.s32.totalorder %v1650, 1
      %vm1715 = vcmp.eq.s32.totalorder %v1651, 1
      %vm1716 = vcmp.eq.s32.totalorder %v1652, 1
      %vm1717 = vcmp.eq.s32.totalorder %v1653, 1
      %vm1718 = vcmp.eq.s32.totalorder %v1654, 1
      %vm1719 = vcmp.eq.s32.totalorder %v1655, 1
      %vm1720 = vcmp.eq.s32.totalorder %v1656, 1
      %vm1721 = vcmp.eq.s32.totalorder %v1657, 1
      %vm1722 = vcmp.eq.s32.totalorder %v1658, 1
      %vm1723 = vcmp.eq.s32.totalorder %v1659, 1
      %vm1724 = vcmp.eq.s32.totalorder %v1660, 1
      %vm1725 = vcmp.eq.s32.totalorder %v1661, 1
      %vm1726 = vcmp.eq.s32.totalorder %v1662, 1
      %vm1727 = vcmp.eq.s32.totalorder %v1663, 1
      %vm1728 = vcmp.eq.s32.totalorder %v1664, 1
      %vm1729 = vcmp.eq.s32.totalorder %v1665, 1
      %vm1730 = vcmp.eq.s32.totalorder %v1666, 1
      %vm1731 = vcmp.eq.s32.totalorder %v1667, 1
      %vm1732 = vcmp.eq.s32.totalorder %v1668, 1
      %vm1733 = vcmp.eq.s32.totalorder %v1669, 1
      %v1734 = vsel %vm1670, %v1029, 0.0
      %v1735 = vsel %vm1671, %v1034, 0.0
      %v1736 = vsel %vm1672, %v1039, 0.0
      %v1737 = vsel %vm1673, %v1044, 0.0
      %v1738 = vsel %vm1674, %v1049, 0.0
      %v1739 = vsel %vm1675, %v1054, 0.0
      %v1740 = vsel %vm1676, %v1059, 0.0
      %v1741 = vsel %vm1677, %v1064, 0.0
      %v1742 = vsel %vm1678, %v1069, 0.0
      %v1743 = vsel %vm1679, %v1074, 0.0
      %v1744 = vsel %vm1680, %v1079, 0.0
      %v1745 = vsel %vm1681, %v1084, 0.0
      %v1746 = vsel %vm1682, %v1089, 0.0
      %v1747 = vsel %vm1683, %v1094, 0.0
      %v1748 = vsel %vm1684, %v1099, 0.0
      %v1749 = vsel %vm1685, %v1104, 0.0
      %v1750 = vsel %vm1686, %v1109, 0.0
      %v1751 = vsel %vm1687, %v1114, 0.0
      %v1752 = vsel %vm1688, %v1119, 0.0
      %v1753 = vsel %vm1689, %v1124, 0.0
      %v1754 = vsel %vm1690, %v1129, 0.0
      %v1755 = vsel %vm1691, %v1134, 0.0
      %v1756 = vsel %vm1692, %v1139, 0.0
      %v1757 = vsel %vm1693, %v1144, 0.0
      %v1758 = vsel %vm1694, %v1149, 0.0
      %v1759 = vsel %vm1695, %v1154, 0.0
      %v1760 = vsel %vm1696, %v1159, 0.0
      %v1761 = vsel %vm1697, %v1164, 0.0
      %v1762 = vsel %vm1698, %v1169, 0.0
      %v1763 = vsel %vm1699, %v1174, 0.0
      %v1764 = vsel %vm1700, %v1179, 0.0
      %v1765 = vsel %vm1701, %v1184, 0.0
      %v1766 = vsel %vm1702, %v1189, 0.0
      %v1767 = vsel %vm1703, %v1194, 0.0
      %v1768 = vsel %vm1704, %v1199, 0.0
      %v1769 = vsel %vm1705, %v1204, 0.0
      %v1770 = vsel %vm1706, %v1209, 0.0
      %v1771 = vsel %vm1707, %v1214, 0.0
      %v1772 = vsel %vm1708, %v1219, 0.0
      %v1773 = vsel %vm1709, %v1224, 0.0
      %v1774 = vsel %vm1710, %v1229, 0.0
      %v1775 = vsel %vm1711, %v1234, 0.0
      %v1776 = vsel %vm1712, %v1239, 0.0
      %v1777 = vsel %vm1713, %v1244, 0.0
      %v1778 = vsel %vm1714, %v1249, 0.0
      %v1779 = vsel %vm1715, %v1254, 0.0
      %v1780 = vsel %vm1716, %v1259, 0.0
      %v1781 = vsel %vm1717, %v1264, 0.0
      %v1782 = vsel %vm1718, %v1269, 0.0
      %v1783 = vsel %vm1719, %v1274, 0.0
      %v1784 = vsel %vm1720, %v1279, 0.0
      %v1785 = vsel %vm1721, %v1284, 0.0
      %v1786 = vsel %vm1722, %v1289, 0.0
      %v1787 = vsel %vm1723, %v1294, 0.0
      %v1788 = vsel %vm1724, %v1299, 0.0
      %v1789 = vsel %vm1725, %v1304, 0.0
      %v1790 = vsel %vm1726, %v1309, 0.0
      %v1791 = vsel %vm1727, %v1314, 0.0
      %v1792 = vsel %vm1728, %v1319, 0.0
      %v1793 = vsel %vm1729, %v1324, 0.0
      %v1794 = vsel %vm1730, %v1329, 0.0
      %v1795 = vsel %vm1731, %v1334, 0.0
      %v1796 = vsel %vm1732, %v1339, 0.0
      %v1797 = vsel %vm1733, %v1344, 0.0
      %v1798 = vadd.f32 %v1734, %v1735
      %v1799 = vadd.f32 %v1798, %v1736
      %v1800 = vadd.f32 %v1799, %v1737
      %v1801 = vadd.f32 %v1800, %v1738
      %v1802 = vadd.f32 %v1801, %v1739
      %v1803 = vadd.f32 %v1802, %v1740
      %v1804 = vadd.f32 %v1803, %v1741
      %v1805 = vadd.f32 %v1804, %v1742
      %v1806 = vadd.f32 %v1805, %v1743
      %v1807 = vadd.f32 %v1806, %v1744
      %v1808 = vadd.f32 %v1807, %v1745
      %v1809 = vadd.f32 %v1808, %v1746
      %v1810 = vadd.f32 %v1809, %v1747
      %v1811 = vadd.f32 %v1810, %v1748
      %v1812 = vadd.f32 %v1811, %v1749
      %v1813 = vadd.f32 %v1812, %v1750
      %v1814 = vadd.f32 %v1813, %v1751
      %v1815 = vadd.f32 %v1814, %v1752
      %v1816 = vadd.f32 %v1815, %v1753
      %v1817 = vadd.f32 %v1816, %v1754
      %v1818 = vadd.f32 %v1817, %v1755
      %v1819 = vadd.f32 %v1818, %v1756
      %v1820 = vadd.f32 %v1819, %v1757
      %v1821 = vadd.f32 %v1820, %v1758
      %v1822 = vadd.f32 %v1821, %v1759
      %v1823 = vadd.f32 %v1822, %v1760
      %v1824 = vadd.f32 %v1823, %v1761
      %v1825 = vadd.f32 %v1824, %v1762
      %v1826 = vadd.f32 %v1825, %v1763
      %v1827 = vadd.f32 %v1826, %v1764
      %v1828 = vadd.f32 %v1827, %v1765
      %v1829 = vadd.f32 %v1828, %v1766
      %v1830 = vadd.f32 %v1829, %v1767
      %v1831 = vadd.f32 %v1830, %v1768
      %v1832 = vadd.f32 %v1831, %v1769
      %v1833 = vadd.f32 %v1832, %v1770
      %v1834 = vadd.f32 %v1833, %v1771
      %v1835 = vadd.f32 %v1834, %v1772
      %v1836 = vadd.f32 %v1835, %v1773
      %v1837 = vadd.f32 %v1836, %v1774
      %v1838 = vadd.f32 %v1837, %v1775
      %v1839 = vadd.f32 %v1838, %v1776
      %v1840 = vadd.f32 %v1839, %v1777
      %v1841 = vadd.f32 %v1840, %v1778
      %v1842 = vadd.f32 %v1841, %v1779
      %v1843 = vadd.f32 %v1842, %v1780
      %v1844 = vadd.f32 %v1843, %v1781
      %v1845 = vadd.f32 %v1844, %v1782
      %v1846 = vadd.f32 %v1845, %v1783
      %v1847 = vadd.f32 %v1846, %v1784
      %v1848 = vadd.f32 %v1847, %v1785
      %v1849 = vadd.f32 %v1848, %v1786
      %v1850 = vadd.f32 %v1849, %v1787
      %v1851 = vadd.f32 %v1850, %v1788
      %v1852 = vadd.f32 %v1851, %v1789
      %v1853 = vadd.f32 %v1852, %v1790
      %v1854 = vadd.f32 %v1853, %v1791
      %v1855 = vadd.f32 %v1854, %v1792
      %v1856 = vadd.f32 %v1855, %v1793
      %v1857 = vadd.f32 %v1856, %v1794
      %v1858 = vadd.f32 %v1857, %v1795
      %v1859 = vadd.f32 %v1858, %v1796
      %v1860 = vadd.f32 %v1859, %v1797
      %v1861 = vrot.slane %v1860, 4
      %v1862 = vadd.f32 %v1860, %v1861
      %v1863 = vrot.slane %v1862, 2
      %v1864 = vadd.f32 %v1862, %v1863
      %v1865 = vrot.slane %v1864, 1
      %v1866 = vadd.f32 %v1864, %v1865
      %v1867 = vmul.f32 %v1734, %v1734
      %v1868 = vmul.f32 %v1735, %v1735
      %v1869 = vmul.f32 %v1736, %v1736
      %v1870 = vmul.f32 %v1737, %v1737
      %v1871 = vmul.f32 %v1738, %v1738
      %v1872 = vmul.f32 %v1739, %v1739
      %v1873 = vmul.f32 %v1740, %v1740
      %v1874 = vmul.f32 %v1741, %v1741
      %v1875 = vmul.f32 %v1742, %v1742
      %v1876 = vmul.f32 %v1743, %v1743
      %v1877 = vmul.f32 %v1744, %v1744
      %v1878 = vmul.f32 %v1745, %v1745
      %v1879 = vmul.f32 %v1746, %v1746
      %v1880 = vmul.f32 %v1747, %v1747
      %v1881 = vmul.f32 %v1748, %v1748
      %v1882 = vmul.f32 %v1749, %v1749
      %v1883 = vmul.f32 %v1750, %v1750
      %v1884 = vmul.f32 %v1751, %v1751
      %v1885 = vmul.f32 %v1752, %v1752
      %v1886 = vmul.f32 %v1753, %v1753
      %v1887 = vmul.f32 %v1754, %v1754
      %v1888 = vmul.f32 %v1755, %v1755
      %v1889 = vmul.f32 %v1756, %v1756
      %v1890 = vmul.f32 %v1757, %v1757
      %v1891 = vmul.f32 %v1758, %v1758
      %v1892 = vmul.f32 %v1759, %v1759
      %v1893 = vmul.f32 %v1760, %v1760
      %v1894 = vmul.f32 %v1761, %v1761
      %v1895 = vmul.f32 %v1762, %v1762
      %v1896 = vmul.f32 %v1763, %v1763
      %v1897 = vmul.f32 %v1764, %v1764
      %v1898 = vmul.f32 %v1765, %v1765
      %v1899 = vmul.f32 %v1766, %v1766
      %v1900 = vmul.f32 %v1767, %v1767
      %v1901 = vmul.f32 %v1768, %v1768
      %v1902 = vmul.f32 %v1769, %v1769
      %v1903 = vmul.f32 %v1770, %v1770
      %v1904 = vmul.f32 %v1771, %v1771
      %v1905 = vmul.f32 %v1772, %v1772
      %v1906 = vmul.f32 %v1773, %v1773
      %v1907 = vmul.f32 %v1774, %v1774
      %v1908 = vmul.f32 %v1775, %v1775
      %v1909 = vmul.f32 %v1776, %v1776
      %v1910 = vmul.f32 %v1777, %v1777
      %v1911 = vmul.f32 %v1778, %v1778
      %v1912 = vmul.f32 %v1779, %v1779
      %v1913 = vmul.f32 %v1780, %v1780
      %v1914 = vmul.f32 %v1781, %v1781
      %v1915 = vmul.f32 %v1782, %v1782
      %v1916 = vmul.f32 %v1783, %v1783
      %v1917 = vmul.f32 %v1784, %v1784
      %v1918 = vmul.f32 %v1785, %v1785
      %v1919 = vmul.f32 %v1786, %v1786
      %v1920 = vmul.f32 %v1787, %v1787
      %v1921 = vmul.f32 %v1788, %v1788
      %v1922 = vmul.f32 %v1789, %v1789
      %v1923 = vmul.f32 %v1790, %v1790
      %v1924 = vmul.f32 %v1791, %v1791
      %v1925 = vmul.f32 %v1792, %v1792
      %v1926 = vmul.f32 %v1793, %v1793
      %v1927 = vmul.f32 %v1794, %v1794
      %v1928 = vmul.f32 %v1795, %v1795
      %v1929 = vmul.f32 %v1796, %v1796
      %v1930 = vmul.f32 %v1797, %v1797
      %v1931 = vadd.f32 %v1867, %v1868
      %v1932 = vadd.f32 %v1931, %v1869
      %v1933 = vadd.f32 %v1932, %v1870
      %v1934 = vadd.f32 %v1933, %v1871
      %v1935 = vadd.f32 %v1934, %v1872
      %v1936 = vadd.f32 %v1935, %v1873
      %v1937 = vadd.f32 %v1936, %v1874
      %v1938 = vadd.f32 %v1937, %v1875
      %v1939 = vadd.f32 %v1938, %v1876
      %v1940 = vadd.f32 %v1939, %v1877
      %v1941 = vadd.f32 %v1940, %v1878
      %v1942 = vadd.f32 %v1941, %v1879
      %v1943 = vadd.f32 %v1942, %v1880
      %v1944 = vadd.f32 %v1943, %v1881
      %v1945 = vadd.f32 %v1944, %v1882
      %v1946 = vadd.f32 %v1945, %v1883
      %v1947 = vadd.f32 %v1946, %v1884
      %v1948 = vadd.f32 %v1947, %v1885
      %v1949 = vadd.f32 %v1948, %v1886
      %v1950 = vadd.f32 %v1949, %v1887
      %v1951 = vadd.f32 %v1950, %v1888
      %v1952 = vadd.f32 %v1951, %v1889
      %v1953 = vadd.f32 %v1952, %v1890
      %v1954 = vadd.f32 %v1953, %v1891
      %v1955 = vadd.f32 %v1954, %v1892
      %v1956 = vadd.f32 %v1955, %v1893
      %v1957 = vadd.f32 %v1956, %v1894
      %v1958 = vadd.f32 %v1957, %v1895
      %v1959 = vadd.f32 %v1958, %v1896
      %v1960 = vadd.f32 %v1959, %v1897
      %v1961 = vadd.f32 %v1960, %v1898
      %v1962 = vadd.f32 %v1961, %v1899
      %v1963 = vadd.f32 %v1962, %v1900
      %v1964 = vadd.f32 %v1963, %v1901
      %v1965 = vadd.f32 %v1964, %v1902
      %v1966 = vadd.f32 %v1965, %v1903
      %v1967 = vadd.f32 %v1966, %v1904
      %v1968 = vadd.f32 %v1967, %v1905
      %v1969 = vadd.f32 %v1968, %v1906
      %v1970 = vadd.f32 %v1969, %v1907
      %v1971 = vadd.f32 %v1970, %v1908
      %v1972 = vadd.f32 %v1971, %v1909
      %v1973 = vadd.f32 %v1972, %v1910
      %v1974 = vadd.f32 %v1973, %v1911
      %v1975 = vadd.f32 %v1974, %v1912
      %v1976 = vadd.f32 %v1975, %v1913
      %v1977 = vadd.f32 %v1976, %v1914
      %v1978 = vadd.f32 %v1977, %v1915
      %v1979 = vadd.f32 %v1978, %v1916
      %v1980 = vadd.f32 %v1979, %v1917
      %v1981 = vadd.f32 %v1980, %v1918
      %v1982 = vadd.f32 %v1981, %v1919
      %v1983 = vadd.f32 %v1982, %v1920
      %v1984 = vadd.f32 %v1983, %v1921
      %v1985 = vadd.f32 %v1984, %v1922
      %v1986 = vadd.f32 %v1985, %v1923
      %v1987 = vadd.f32 %v1986, %v1924
      %v1988 = vadd.f32 %v1987, %v1925
      %v1989 = vadd.f32 %v1988, %v1926
      %v1990 = vadd.f32 %v1989, %v1927
      %v1991 = vadd.f32 %v1990, %v1928
      %v1992 = vadd.f32 %v1991, %v1929
      %v1993 = vadd.f32 %v1992, %v1930
      %v1994 = vrot.slane %v1993, 4
      %v1995 = vadd.f32 %v1993, %v1994
      %v1996 = vrot.slane %v1995, 2
      %v1997 = vadd.f32 %v1995, %v1996
      %v1998 = vrot.slane %v1997, 1
      %v1999 = vadd.f32 %v1997, %v1998
      %2000 = vst [vmem:[%s335] sm:$0x1] %v1866
      %2001 = vst [vmem:[%s338] sm:$0x1] %v1999
      %s2002 = smul.u32 64, %s20
      %p2003 = scmp.lt.s32.totalorder %s2002, 191
      %s2004 = scalar_select %p2003, %s2002, 191
      %s2005 = smul.addr %s2004, 8
      %s2006 = scalar_lea.vmem %s5, %s2005
      %s2007 = smul.u32 64, %s20
      %p2008 = scmp.lt.s32.totalorder %s2007, 191
      %s2009 = scalar_select %p2008, %s2007, 191
      %s2010 = smul.addr %s2009, 8
      %s2011 = scalar_lea.vmem %s6, %s2010
      %p2012 = scmp.lt.s32.totalorder %s20, 2
      %s2013 = scalar_select %p2012, %s20, 2
      %s2014 = scalar_lea.vmem %s7, %s2013
      %p2015 = scmp.lt.s32.totalorder %s20, 2
      %s2016 = scalar_select %p2015, %s20, 2
      %s2017 = scalar_lea.vmem %s8, %s2016
      // Predicated region
      $region41: #{mpnn_conv_forward.6} parent=39 // pred_check
        %p2018 = pneg %p148
      $region42: #{mpnn_conv_forward.6} parent=39 // pred_check_branch
        %2020 = sbr.rel (%p2018) target = $region44
      $region43: #{mpnn_conv_forward.6} parent=39 // pred_region
        %s2021 = smul.u32 64, %s20
      $region44: #{mpnn_conv_forward.6} parent=39 // pred_fallthru
        _
      // Predicated region
      $region45: #{mpnn_conv_forward.6} parent=39 // pred_check
        %p2022 = pneg %p174
      $region46: #{mpnn_conv_forward.6} parent=39 // pred_check_branch
        %2024 = sbr.rel (%p2022) target = $region48
      $region47: #{mpnn_conv_forward.6} parent=39 // pred_region
        %s2025 = smul.u32 64, %s20
      $region48: #{mpnn_conv_forward.6} parent=39 // pred_fallthru
        _
      // Predicated region
      $region49: #{mpnn_conv_forward.6} parent=39 // pred_check
        %p2026 = pneg %p200
      $region50: #{mpnn_conv_forward.6} parent=39 // pred_check_branch
        %2028 = sbr.rel (%p2026) target = $region52
      $region51: #{mpnn_conv_forward.6} parent=39 // pred_region
        _
      $region52: #{mpnn_conv_forward.6} parent=39 // pred_fallthru
        _
      // Predicated region
      $region53: #{mpnn_conv_forward.6} parent=39 // pred_check
        %p2029 = pneg %p226
      $region54: #{mpnn_conv_forward.6} parent=39 // pred_check_branch
        %2031 = sbr.rel (%p2029) target = $region56
      $region55: #{mpnn_conv_forward.6} parent=39 // pred_region
        _
      $region56: #{mpnn_conv_forward.6} parent=39 // pred_fallthru
        _
    $region40: #{mpnn_conv_forward.6} parent=5 // pred_fallthru
      _
    %p2032 = scmp.le.s32.totalorder 2, %s15
    // Predicated region
    $region57: #{mpnn_conv_forward.6} parent=5 // pred_check
      %p2033 = pneg %p2032
    $region58: #{mpnn_conv_forward.6} parent=5 // pred_check_branch
      %2035 = sbr.rel (%p2033) target = $region60
    $region59: #{mpnn_conv_forward.6} parent=5 // pred_region
      %s2036 = ssub.s32 %s15, 2
      // Predicated region
      $region61: #{mpnn_conv_forward.6} parent=59 // pred_check
        %p2037 = pneg %p154
      $region62: #{mpnn_conv_forward.6} parent=59 // pred_check_branch
        %2039 = sbr.rel (%p2037) target = $region64
      $region63: #{mpnn_conv_forward.6} parent=59 // pred_region
        %s2040 = smul.u32 64, %s21
        %p2041 = scmp.lt.s32.totalorder %s2040, 191
        %s2042 = scalar_select %p2041, %s2040, 191
        %s2043 = smul.addr %s2042, 8
        %s2044 = scalar_lea.vmem %s5, %s2043
      $region64: #{mpnn_conv_forward.6} parent=59 // pred_fallthru
        _
      // Predicated region
      $region65: #{mpnn_conv_forward.6} parent=59 // pred_check
        %p2045 = pneg %p180
      $region66: #{mpnn_conv_forward.6} parent=59 // pred_check_branch
        %2047 = sbr.rel (%p2045) target = $region68
      $region67: #{mpnn_conv_forward.6} parent=59 // pred_region
        %s2048 = smul.u32 64, %s21
        %p2049 = scmp.lt.s32.totalorder %s2048, 191
        %s2050 = scalar_select %p2049, %s2048, 191
        %s2051 = smul.addr %s2050, 8
        %s2052 = scalar_lea.vmem %s6, %s2051
      $region68: #{mpnn_conv_forward.6} parent=59 // pred_fallthru
        _
      // Predicated region
      $region69: #{mpnn_conv_forward.6} parent=59 // pred_check
        %p2053 = pneg %p206
      $region70: #{mpnn_conv_forward.6} parent=59 // pred_check_branch
        %2055 = sbr.rel (%p2053) target = $region72
      $region71: #{mpnn_conv_forward.6} parent=59 // pred_region
        %p2056 = scmp.lt.s32.totalorder %s21, 2
        %s2057 = scalar_select %p2056, %s21, 2
        %s2058 = scalar_lea.vmem %s7, %s2057
      $region72: #{mpnn_conv_forward.6} parent=59 // pred_fallthru
        _
      // Predicated region
      $region73: #{mpnn_conv_forward.6} parent=59 // pred_check
        %p2059 = pneg %p232
      $region74: #{mpnn_conv_forward.6} parent=59 // pred_check_branch
        %2061 = sbr.rel (%p2059) target = $region76
      $region75: #{mpnn_conv_forward.6} parent=59 // pred_region
        %p2062 = scmp.lt.s32.totalorder %s21, 2
        %s2063 = scalar_select %p2062, %s21, 2
        %s2064 = scalar_lea.vmem %s8, %s2063
      $region76: #{mpnn_conv_forward.6} parent=59 // pred_fallthru
        _
    $region60: #{mpnn_conv_forward.6} parent=5 // pred_fallthru
      _
  $region6: #{mpnn_conv_forward.6} parent=0 // loop_footer
    %s19 = sadd.s32 1, %s15
  $region7: #{mpnn_conv_forward.6} parent=0 // loop_footer_branch
    %14 = sbr.rel target = $region3
  $region8: #{mpnn_conv_forward.6} parent=0 // loop_exit
    _

// kernel: mpnn_conv_forward.11
$region0: #{mpnn_conv_forward.11}
  #allocation0 [shape = 'u32[]', space=smem, size = 0x4, offset = 0x4, fixed_abs, tag = 'smem constant byte address 0x4 - core index']
  #allocation1 [shape = 'u32[144,128]{1,0:T(1,128)}', space=vmem, size = 0x12000, scoped, tag = 'internal scratch']
  %s0 = inlined_call_operand.vmem [shape: f32[1536,128], index: 0, kind: input, shape index: {}]
  %s1 = inlined_call_operand.vmem [shape: f32[1,128], index: 1, kind: input, shape index: {}]
  %s2 = inlined_call_operand.vmem [shape: f32[1,128], index: 2, kind: input, shape index: {}]
  %s3 = inlined_call_operand.vmem [shape: f32[1536,128], index: 3, kind: output, shape index: {}]
  %s4 = sld [smem:[#allocation0]]
  $region45: #{mpnn_conv_forward.11} parent=0
    _
  %s6 = ssub.s32 1, %s4
  %s7 = scalar_select 0, %s6, %s4
  loop: start=0, step=1, limit=5
  $region2: #{mpnn_conv_forward.11} parent=0 // loop_pre_header
    _
  $region3: #{mpnn_conv_forward.11} parent=0 // loop_header
    %s9 = sphi 0, %s13
    %p10 = scmp.ge.s32.totalorder %s9, 5
    %s19 = sphi 0, %s21
    %s22 = sphi 0, %s19
    %s23 = sphi 0, %s22
    %s39 = sphi 0, %s23
    %s43 = sphi 0, %s43
    %s45 = sphi 0, %s43
    %s46 = sphi 0, %s45
    %s60 = sphi 0, %s46
    %s64 = sphi 0, %s64
    %s66 = sphi 0, %s64
    %s67 = sphi 0, %s66
    %s81 = sphi 0, %s67
    %s87 = sphi 0, %s89
    %s90 = sphi 0, %s87
    %s91 = sphi 0, %s90
    %s107 = sphi 0, %s91
  $region4: #{mpnn_conv_forward.11} parent=0 // loop_header_branch
    %12 = sbr.rel (%p10) target = $region8
  $region5: #{mpnn_conv_forward.11} parent=0 // loop_body
    %s14 = ssub.s32 %s9, 1
    %s15 = ssub.s32 %s9, 2
    %s16 = sadd.s32 %s9, 1
    %s17 = ssub.s32 %s9, %s16
    %p18 = scmp.eq.s32.totalorder %s17, 0
    %s20 = sadd.s32 %s19, 1
    %s21 = scalar_select %p18, %s19, %s20
    %p24 = pneg %p18
    %p25 = scmp.eq.s32.totalorder %s9, 2
    %p26 = por %p24, %p25
    %p27 = scmp.ne.s32.totalorder %s19, %s22
    %p28 = scmp.eq.s32.totalorder %s9, 0
    %p29 = por %p27, %p28
    %p30 = scmp.ne.s32.totalorder %s19, %s22
    %p31 = scmp.eq.s32.totalorder %s14, 2
    %p32 = por %p30, %p31
    %p33 = scmp.ne.s32.totalorder %s22, %s23
    %p34 = scmp.eq.s32.totalorder %s14, 0
    %p35 = por %p33, %p34
    %p36 = scmp.ne.s32.totalorder %s22, %s23
    %p37 = scmp.eq.s32.totalorder %s15, 2
    %p38 = por %p36, %p37
    %p40 = scmp.ne.s32.totalorder %s23, %s39
    %p41 = scmp.eq.s32.totalorder %s15, 0
    %p42 = por %p40, %p41
    %s44 = sadd.s32 %s43, 1
    %p47 = scmp.eq.s32.totalorder %s9, 2
    %p48 = scmp.ne.s32.totalorder %s43, %s45
    %p49 = scmp.eq.s32.totalorder %s9, 0
    %p50 = por %p48, %p49
    %p51 = scmp.ne.s32.totalorder %s43, %s45
    %p52 = scmp.eq.s32.totalorder %s14, 2
    %p53 = por %p51, %p52
    %p54 = scmp.ne.s32.totalorder %s45, %s46
    %p55 = scmp.eq.s32.totalorder %s14, 0
    %p56 = por %p54, %p55
    %p57 = scmp.ne.s32.totalorder %s45, %s46
    %p58 = scmp.eq.s32.totalorder %s15, 2
    %p59 = por %p57, %p58
    %p61 = scmp.ne.s32.totalorder %s46, %s60
    %p62 = scmp.eq.s32.totalorder %s15, 0
    %p63 = por %p61, %p62
    %s65 = sadd.s32 %s64, 1
    %p68 = scmp.eq.s32.totalorder %s9, 2
    %p69 = scmp.ne.s32.totalorder %s64, %s66
    %p70 = scmp.eq.s32.totalorder %s9, 0
    %p71 = por %p69, %p70
    %p72 = scmp.ne.s32.totalorder %s64, %s66
    %p73 = scmp.eq.s32.totalorder %s14, 2
    %p74 = por %p72, %p73
    %p75 = scmp.ne.s32.totalorder %s66, %s67
    %p76 = scmp.eq.s32.totalorder %s14, 0
    %p77 = por %p75, %p76
    %p78 = scmp.ne.s32.totalorder %s66, %s67
    %p79 = scmp.eq.s32.totalorder %s15, 2
    %p80 = por %p78, %p79
    %p82 = scmp.ne.s32.totalorder %s67, %s81
    %p83 = scmp.eq.s32.totalorder %s15, 0
    %p84 = por %p82, %p83
    %s85 = ssub.s32 %s9, %s16
    %p86 = scmp.eq.s32.totalorder %s85, 0
    %s88 = sadd.s32 %s87, 1
    %s89 = scalar_select %p86, %s87, %s88
    %p92 = pneg %p86
    %p93 = scmp.eq.s32.totalorder %s9, 2
    %p94 = por %p92, %p93
    %p95 = scmp.ne.s32.totalorder %s87, %s90
    %p96 = scmp.eq.s32.totalorder %s9, 0
    %p97 = por %p95, %p96
    %p98 = scmp.ne.s32.totalorder %s87, %s90
    %p99 = scmp.eq.s32.totalorder %s14, 2
    %p100 = por %p98, %p99
    %p101 = scmp.ne.s32.totalorder %s90, %s91
    %p102 = scmp.eq.s32.totalorder %s14, 0
    %p103 = por %p101, %p102
    %p104 = scmp.ne.s32.totalorder %s90, %s91
    %p105 = scmp.eq.s32.totalorder %s15, 2
    %p106 = por %p104, %p105
    %p108 = scmp.ne.s32.totalorder %s91, %s107
    %p109 = scmp.eq.s32.totalorder %s15, 0
    %p110 = por %p108, %p109
    %p111 = scmp.le.s32.totalorder 1, %s9
    %p112 = scmp.lt.s32.totalorder %s9, 4
    %p113 = pnand %p111, %p112
    %p114 = pneg %p113
    // Predicated region
    $region9: #{mpnn_conv_forward.11} parent=5 // pred_check
      _
    $region10: #{mpnn_conv_forward.11} parent=5 // pred_check_branch
      %116 = sbr.rel (%p113) target = $region12
    $region11: #{mpnn_conv_forward.11} parent=5 // pred_region
      %s117 = ssub.s32 %s9, 1
      // Predicated region
      $region13: #{mpnn_conv_forward.11} parent=11 // pred_check
        %p118 = pneg %p56
      $region14: #{mpnn_conv_forward.11} parent=11 // pred_check_branch
        %120 = sbr.rel (%p118) target = $region16
      $region15: #{mpnn_conv_forward.11} parent=11 // pred_region
        _
      $region16: #{mpnn_conv_forward.11} parent=11 // pred_fallthru
        _
      // Predicated region
      $region17: #{mpnn_conv_forward.11} parent=11 // pred_check
        %p121 = pneg %p77
      $region18: #{mpnn_conv_forward.11} parent=11 // pred_check_branch
        %123 = sbr.rel (%p121) target = $region20
      $region19: #{mpnn_conv_forward.11} parent=11 // pred_region
        _
      $region20: #{mpnn_conv_forward.11} parent=11 // pred_fallthru
        _
    $region12: #{mpnn_conv_forward.11} parent=5 // pred_fallthru
      _
    %p124 = scmp.lt.s32.totalorder %s9, 3
    // Predicated region
    $region21: #{mpnn_conv_forward.11} parent=5 // pred_check
      %p125 = pneg %p124
    $region22: #{mpnn_conv_forward.11} parent=5 // pred_check_branch
      %127 = sbr.rel (%p125) target = $region24
    $region23: #{mpnn_conv_forward.11} parent=5 // pred_region
      // Predicated region
      $region25: #{mpnn_conv_forward.11} parent=23 // pred_check
        %p128 = pneg %p29
      $region26: #{mpnn_conv_forward.11} parent=23 // pred_check_branch
        %130 = sbr.rel (%p128) target = $region28
      $region27: #{mpnn_conv_forward.11} parent=23 // pred_region
        %s131 = smul.u32 64, %s9
        %p132 = scmp.lt.s32.totalorder %s131, 191
        %s133 = scalar_select %p132, %s131, 191
        %s134 = smul.addr %s133, 8
        %s135 = scalar_lea.vmem %s0, %s134
        %s136 = smul.u32 64, %s9
      $region28: #{mpnn_conv_forward.11} parent=23 // pred_fallthru
        _
    $region24: #{mpnn_conv_forward.11} parent=5 // pred_fallthru
      _
    %p137 = scmp.le.s32.totalorder 1, %s9
    %p138 = scmp.lt.s32.totalorder %s9, 4
    %p139 = pnand %p137, %p138
    %p140 = pneg %p139
    // Predicated region
    $region29: #{mpnn_conv_forward.11} parent=5 // pred_check
      _
    $region30: #{mpnn_conv_forward.11} parent=5 // pred_check_branch
      %142 = sbr.rel (%p139) target = $region32
    $region31: #{mpnn_conv_forward.11} parent=5 // pred_region
      %s143 = ssub.s32 %s9, 1
      %s144 = smul.u32 64, %s14
      %p145 = scmp.lt.s32.totalorder %s144, 191
      %s146 = scalar_select %p145, %s144, 191
      %s147 = smul.addr %s146, 8
      %s148 = scalar_lea.vmem %s0, %s147
      %p149 = pneg %p35
      %p150 = pneg %p32
      %p151 = pneg %p56
      %p152 = pneg %p53
      %p153 = pneg %p77
      %p154 = pneg %p74
      %p155 = pneg %p103
      %p156 = pneg %p100
      %s157 = smul.u32 64, %s14
      %p158 = scmp.lt.s32.totalorder %s157, 191
      %s159 = scalar_select %p158, %s157, 191
      %s160 = smul.addr %s159, 8
      %s161 = scalar_lea.vmem %s3, %s160
      %s162 = smul.u32 64, %s14
      %p163 = scmp.lt.s32.totalorder %s162, 191
      %s164 = scalar_select %p163, %s162, 191
      %s165 = smul.addr %s164, 8
      %s166 = scalar_lea.vmem %s0, %s165
      %s167 = smul.u32 64, %s14
      %s168 = smul.u32 64, %s14
      %p169 = scmp.lt.s32.totalorder %s168, 191
      %s170 = scalar_select %p169, %s168, 191
      %s171 = smul.addr %s170, 8
      %s172 = scalar_lea.vmem %s3, %s171
      %s173 = smul.u32 64, %s14
      %v174 = vld [vmem:[%s166] sm:$0xff]
      %v175 = vld [vmem:[%s166 + $0x8] sm:$0xff]
      %v176 = vld [vmem:[%s166 + $0x10] sm:$0xff]
      %v177 = vld [vmem:[%s166 + $0x18] sm:$0xff]
      %v178 = vld [vmem:[%s166 + $0x20] sm:$0xff]
      %v179 = vld [vmem:[%s166 + $0x28] sm:$0xff]
      %v180 = vld [vmem:[%s166 + $0x30] sm:$0xff]
      %v181 = vld [vmem:[%s166 + $0x38] sm:$0xff]
      %v182 = vld [vmem:[%s166 + $0x40] sm:$0xff]
      %v183 = vld [vmem:[%s166 + $0x48] sm:$0xff]
      %v184 = vld [vmem:[%s166 + $0x50] sm:$0xff]
      %v185 = vld [vmem:[%s166 + $0x58] sm:$0xff]
      %v186 = vld [vmem:[%s166 + $0x60] sm:$0xff]
      %v187 = vld [vmem:[%s166 + $0x68] sm:$0xff]
      %v188 = vld [vmem:[%s166 + $0x70] sm:$0xff]
      %v189 = vld [vmem:[%s166 + $0x78] sm:$0xff]
      %v190 = vld [vmem:[%s166 + $0x80] sm:$0xff]
      %v191 = vld [vmem:[%s166 + $0x88] sm:$0xff]
      %v192 = vld [vmem:[%s166 + $0x90] sm:$0xff]
      %v193 = vld [vmem:[%s166 + $0x98] sm:$0xff]
      %v194 = vld [vmem:[%s166 + $0xa0] sm:$0xff]
      %v195 = vld [vmem:[%s166 + $0xa8] sm:$0xff]
      %v196 = vld [vmem:[%s166 + $0xb0] sm:$0xff]
      %v197 = vld [vmem:[%s166 + $0xb8] sm:$0xff]
      %v198 = vld [vmem:[%s166 + $0xc0] sm:$0xff]
      %v199 = vld [vmem:[%s166 + $0xc8] sm:$0xff]
      %v200 = vld [vmem:[%s166 + $0xd0] sm:$0xff]
      %v201 = vld [vmem:[%s166 + $0xd8] sm:$0xff]
      %v202 = vld [vmem:[%s166 + $0xe0] sm:$0xff]
      %v203 = vld [vmem:[%s166 + $0xe8] sm:$0xff]
      %v204 = vld [vmem:[%s166 + $0xf0] sm:$0xff]
      %v205 = vld [vmem:[%s166 + $0xf8] sm:$0xff]
      %v206 = vld [vmem:[%s166 + $0x100] sm:$0xff]
      %v207 = vld [vmem:[%s166 + $0x108] sm:$0xff]
      %v208 = vld [vmem:[%s166 + $0x110] sm:$0xff]
      %v209 = vld [vmem:[%s166 + $0x118] sm:$0xff]
      %v210 = vld [vmem:[%s166 + $0x120] sm:$0xff]
      %v211 = vld [vmem:[%s166 + $0x128] sm:$0xff]
      %v212 = vld [vmem:[%s166 + $0x130] sm:$0xff]
      %v213 = vld [vmem:[%s166 + $0x138] sm:$0xff]
      %v214 = vld [vmem:[%s166 + $0x140] sm:$0xff]
      %v215 = vld [vmem:[%s166 + $0x148] sm:$0xff]
      %v216 = vld [vmem:[%s166 + $0x150] sm:$0xff]
      %v217 = vld [vmem:[%s166 + $0x158] sm:$0xff]
      %v218 = vld [vmem:[%s166 + $0x160] sm:$0xff]
      %v219 = vld [vmem:[%s166 + $0x168] sm:$0xff]
      %v220 = vld [vmem:[%s166 + $0x170] sm:$0xff]
      %v221 = vld [vmem:[%s166 + $0x178] sm:$0xff]
      %v222 = vld [vmem:[%s166 + $0x180] sm:$0xff]
      %v223 = vld [vmem:[%s166 + $0x188] sm:$0xff]
      %v224 = vld [vmem:[%s166 + $0x190] sm:$0xff]
      %v225 = vld [vmem:[%s166 + $0x198] sm:$0xff]
      %v226 = vld [vmem:[%s166 + $0x1a0] sm:$0xff]
      %v227 = vld [vmem:[%s166 + $0x1a8] sm:$0xff]
      %v228 = vld [vmem:[%s166 + $0x1b0] sm:$0xff]
      %v229 = vld [vmem:[%s166 + $0x1b8] sm:$0xff]
      %v230 = vld [vmem:[%s166 + $0x1c0] sm:$0xff]
      %v231 = vld [vmem:[%s166 + $0x1c8] sm:$0xff]
      %v232 = vld [vmem:[%s166 + $0x1d0] sm:$0xff]
      %v233 = vld [vmem:[%s166 + $0x1d8] sm:$0xff]
      %v234 = vld [vmem:[%s166 + $0x1e0] sm:$0xff]
      %v235 = vld [vmem:[%s166 + $0x1e8] sm:$0xff]
      %v236 = vld [vmem:[%s166 + $0x1f0] sm:$0xff]
      %v237 = vld [vmem:[%s166 + $0x1f8] sm:$0xff]
      %v238 = vld [vmem:[%s1] sm:$0x1]
      %v240 = vlaneseq
      %v241 = vshrl.u32 %v240, 7
      %v242 = vsub.s32 0, %v241
      %v243 = vrot.slane %v238, %v242
      %v245 = vmul.f32 %v174, %v243
      %v246 = vmul.f32 %v175, %v243
      %v247 = vmul.f32 %v176, %v243
      %v248 = vmul.f32 %v177, %v243
      %v249 = vmul.f32 %v178, %v243
      %v250 = vmul.f32 %v179, %v243
      %v251 = vmul.f32 %v180, %v243
      %v252 = vmul.f32 %v181, %v243
      %v253 = vmul.f32 %v182, %v243
      %v254 = vmul.f32 %v183, %v243
      %v255 = vmul.f32 %v184, %v243
      %v256 = vmul.f32 %v185, %v243
      %v257 = vmul.f32 %v186, %v243
      %v258 = vmul.f32 %v187, %v243
      %v259 = vmul.f32 %v188, %v243
      %v260 = vmul.f32 %v189, %v243
      %v261 = vmul.f32 %v190, %v243
      %v262 = vmul.f32 %v191, %v243
      %v263 = vmul.f32 %v192, %v243
      %v264 = vmul.f32 %v193, %v243
      %v265 = vmul.f32 %v194, %v243
      %v266 = vmul.f32 %v195, %v243
      %v267 = vmul.f32 %v196, %v243
      %v268 = vmul.f32 %v197, %v243
      %v269 = vmul.f32 %v198, %v243
      %v270 = vmul.f32 %v199, %v243
      %v271 = vmul.f32 %v200, %v243
      %v272 = vmul.f32 %v201, %v243
      %v273 = vmul.f32 %v202, %v243
      %v274 = vmul.f32 %v203, %v243
      %v275 = vmul.f32 %v204, %v243
      %v276 = vmul.f32 %v205, %v243
      %v277 = vmul.f32 %v206, %v243
      %v278 = vmul.f32 %v207, %v243
      %v279 = vmul.f32 %v208, %v243
      %v280 = vmul.f32 %v209, %v243
      %v281 = vmul.f32 %v210, %v243
      %v282 = vmul.f32 %v211, %v243
      %v283 = vmul.f32 %v212, %v243
      %v284 = vmul.f32 %v213, %v243
      %v285 = vmul.f32 %v214, %v243
      %v286 = vmul.f32 %v215, %v243
      %v287 = vmul.f32 %v216, %v243
      %v288 = vmul.f32 %v217, %v243
      %v289 = vmul.f32 %v218, %v243
      %v290 = vmul.f32 %v219, %v243
      %v291 = vmul.f32 %v220, %v243
      %v292 = vmul.f32 %v221, %v243
      %v293 = vmul.f32 %v222, %v243
      %v294 = vmul.f32 %v223, %v243
      %v295 = vmul.f32 %v224, %v243
      %v296 = vmul.f32 %v225, %v243
      %v297 = vmul.f32 %v226, %v243
      %v298 = vmul.f32 %v227, %v243
      %v299 = vmul.f32 %v228, %v243
      %v300 = vmul.f32 %v229, %v243
      %v301 = vmul.f32 %v230, %v243
      %v302 = vmul.f32 %v231, %v243
      %v303 = vmul.f32 %v232, %v243
      %v304 = vmul.f32 %v233, %v243
      %v305 = vmul.f32 %v234, %v243
      %v306 = vmul.f32 %v235, %v243
      %v307 = vmul.f32 %v236, %v243
      %v308 = vmul.f32 %v237, %v243
      %v309 = vld [vmem:[%s2] sm:$0x1]
      %v311 = vlaneseq
      %v312 = vshrl.u32 %v311, 7
      %v313 = vsub.s32 0, %v312
      %v314 = vrot.slane %v309, %v313
      %v316 = vadd.f32 %v245, %v314
      %v317 = vadd.f32 %v246, %v314
      %v318 = vadd.f32 %v247, %v314
      %v319 = vadd.f32 %v248, %v314
      %v320 = vadd.f32 %v249, %v314
      %v321 = vadd.f32 %v250, %v314
      %v322 = vadd.f32 %v251, %v314
      %v323 = vadd.f32 %v252, %v314
      %v324 = vadd.f32 %v253, %v314
      %v325 = vadd.f32 %v254, %v314
      %v326 = vadd.f32 %v255, %v314
      %v327 = vadd.f32 %v256, %v314
      %v328 = vadd.f32 %v257, %v314
      %v329 = vadd.f32 %v258, %v314
      %v330 = vadd.f32 %v259, %v314
      %v331 = vadd.f32 %v260, %v314
      %v332 = vadd.f32 %v261, %v314
      %v333 = vadd.f32 %v262, %v314
      %v334 = vadd.f32 %v263, %v314
      %v335 = vadd.f32 %v264, %v314
      %v336 = vadd.f32 %v265, %v314
      %v337 = vadd.f32 %v266, %v314
      %v338 = vadd.f32 %v267, %v314
      %v339 = vadd.f32 %v268, %v314
      %v340 = vadd.f32 %v269, %v314
      %v341 = vadd.f32 %v270, %v314
      %v342 = vadd.f32 %v271, %v314
      %v343 = vadd.f32 %v272, %v314
      %v344 = vadd.f32 %v273, %v314
      %v345 = vadd.f32 %v274, %v314
      %v346 = vadd.f32 %v275, %v314
      %v347 = vadd.f32 %v276, %v314
      %v348 = vadd.f32 %v277, %v314
      %v349 = vadd.f32 %v278, %v314
      %v350 = vadd.f32 %v279, %v314
      %v351 = vadd.f32 %v280, %v314
      %v352 = vadd.f32 %v281, %v314
      %v353 = vadd.f32 %v282, %v314
      %v354 = vadd.f32 %v283, %v314
      %v355 = vadd.f32 %v284, %v314
      %v356 = vadd.f32 %v285, %v314
      %v357 = vadd.f32 %v286, %v314
      %v358 = vadd.f32 %v287, %v314
      %v359 = vadd.f32 %v288, %v314
      %v360 = vadd.f32 %v289, %v314
      %v361 = vadd.f32 %v290, %v314
      %v362 = vadd.f32 %v291, %v314
      %v363 = vadd.f32 %v292, %v314
      %v364 = vadd.f32 %v293, %v314
      %v365 = vadd.f32 %v294, %v314
      %v366 = vadd.f32 %v295, %v314
      %v367 = vadd.f32 %v296, %v314
      %v368 = vadd.f32 %v297, %v314
      %v369 = vadd.f32 %v298, %v314
      %v370 = vadd.f32 %v299, %v314
      %v371 = vadd.f32 %v300, %v314
      %v372 = vadd.f32 %v301, %v314
      %v373 = vadd.f32 %v302, %v314
      %v374 = vadd.f32 %v303, %v314
      %v375 = vadd.f32 %v304, %v314
      %v376 = vadd.f32 %v305, %v314
      %v377 = vadd.f32 %v306, %v314
      %v378 = vadd.f32 %v307, %v314
      %v379 = vadd.f32 %v308, %v314
      %v380 = vmax.f32 %v316, 0.0
      %v381 = vmax.f32 %v317, 0.0
      %v382 = vmax.f32 %v318, 0.0
      %v383 = vmax.f32 %v319, 0.0
      %v384 = vmax.f32 %v320, 0.0
      %v385 = vmax.f32 %v321, 0.0
      %v386 = vmax.f32 %v322, 0.0
      %v387 = vmax.f32 %v323, 0.0
      %v388 = vmax.f32 %v324, 0.0
      %v389 = vmax.f32 %v325, 0.0
      %v390 = vmax.f32 %v326, 0.0
      %v391 = vmax.f32 %v327, 0.0
      %v392 = vmax.f32 %v328, 0.0
      %v393 = vmax.f32 %v329, 0.0
      %v394 = vmax.f32 %v330, 0.0
      %v395 = vmax.f32 %v331, 0.0
      %v396 = vmax.f32 %v332, 0.0
      %v397 = vmax.f32 %v333, 0.0
      %v398 = vmax.f32 %v334, 0.0
      %v399 = vmax.f32 %v335, 0.0
      %v400 = vmax.f32 %v336, 0.0
      %v401 = vmax.f32 %v337, 0.0
      %v402 = vmax.f32 %v338, 0.0
      %v403 = vmax.f32 %v339, 0.0
      %v404 = vmax.f32 %v340, 0.0
      %v405 = vmax.f32 %v341, 0.0
      %v406 = vmax.f32 %v342, 0.0
      %v407 = vmax.f32 %v343, 0.0
      %v408 = vmax.f32 %v344, 0.0
      %v409 = vmax.f32 %v345, 0.0
      %v410 = vmax.f32 %v346, 0.0
      %v411 = vmax.f32 %v347, 0.0
      %v412 = vmax.f32 %v348, 0.0
      %v413 = vmax.f32 %v349, 0.0
      %v414 = vmax.f32 %v350, 0.0
      %v415 = vmax.f32 %v351, 0.0
      %v416 = vmax.f32 %v352, 0.0
      %v417 = vmax.f32 %v353, 0.0
      %v418 = vmax.f32 %v354, 0.0
      %v419 = vmax.f32 %v355, 0.0
      %v420 = vmax.f32 %v356, 0.0
      %v421 = vmax.f32 %v357, 0.0
      %v422 = vmax.f32 %v358, 0.0
      %v423 = vmax.f32 %v359, 0.0
      %v424 = vmax.f32 %v360, 0.0
      %v425 = vmax.f32 %v361, 0.0
      %v426 = vmax.f32 %v362, 0.0
      %v427 = vmax.f32 %v363, 0.0
      %v428 = vmax.f32 %v364, 0.0
      %v429 = vmax.f32 %v365, 0.0
      %v430 = vmax.f32 %v366, 0.0
      %v431 = vmax.f32 %v367, 0.0
      %v432 = vmax.f32 %v368, 0.0
      %v433 = vmax.f32 %v369, 0.0
      %v434 = vmax.f32 %v370, 0.0
      %v435 = vmax.f32 %v371, 0.0
      %v436 = vmax.f32 %v372, 0.0
      %v437 = vmax.f32 %v373, 0.0
      %v438 = vmax.f32 %v374, 0.0
      %v439 = vmax.f32 %v375, 0.0
      %v440 = vmax.f32 %v376, 0.0
      %v441 = vmax.f32 %v377, 0.0
      %v442 = vmax.f32 %v378, 0.0
      %v443 = vmax.f32 %v379, 0.0
      %444 = vst [vmem:[%s172] sm:$0xff] %v380
      %445 = vst [vmem:[%s172 + $0x8] sm:$0xff] %v381
      %446 = vst [vmem:[%s172 + $0x10] sm:$0xff] %v382
      %447 = vst [vmem:[%s172 + $0x18] sm:$0xff] %v383
      %448 = vst [vmem:[%s172 + $0x20] sm:$0xff] %v384
      %449 = vst [vmem:[%s172 + $0x28] sm:$0xff] %v385
      %450 = vst [vmem:[%s172 + $0x30] sm:$0xff] %v386
      %451 = vst [vmem:[%s172 + $0x38] sm:$0xff] %v387
      %452 = vst [vmem:[%s172 + $0x40] sm:$0xff] %v388
      %453 = vst [vmem:[%s172 + $0x48] sm:$0xff] %v389
      %454 = vst [vmem:[%s172 + $0x50] sm:$0xff] %v390
      %455 = vst [vmem:[%s172 + $0x58] sm:$0xff] %v391
      %456 = vst [vmem:[%s172 + $0x60] sm:$0xff] %v392
      %457 = vst [vmem:[%s172 + $0x68] sm:$0xff] %v393
      %458 = vst [vmem:[%s172 + $0x70] sm:$0xff] %v394
      %459 = vst [vmem:[%s172 + $0x78] sm:$0xff] %v395
      %460 = vst [vmem:[%s172 + $0x80] sm:$0xff] %v396
      %461 = vst [vmem:[%s172 + $0x88] sm:$0xff] %v397
      %462 = vst [vmem:[%s172 + $0x90] sm:$0xff] %v398
      %463 = vst [vmem:[%s172 + $0x98] sm:$0xff] %v399
      %464 = vst [vmem:[%s172 + $0xa0] sm:$0xff] %v400
      %465 = vst [vmem:[%s172 + $0xa8] sm:$0xff] %v401
      %466 = vst [vmem:[%s172 + $0xb0] sm:$0xff] %v402
      %467 = vst [vmem:[%s172 + $0xb8] sm:$0xff] %v403
      %468 = vst [vmem:[%s172 + $0xc0] sm:$0xff] %v404
      %469 = vst [vmem:[%s172 + $0xc8] sm:$0xff] %v405
      %470 = vst [vmem:[%s172 + $0xd0] sm:$0xff] %v406
      %471 = vst [vmem:[%s172 + $0xd8] sm:$0xff] %v407
      %472 = vst [vmem:[%s172 + $0xe0] sm:$0xff] %v408
      %473 = vst [vmem:[%s172 + $0xe8] sm:$0xff] %v409
      %474 = vst [vmem:[%s172 + $0xf0] sm:$0xff] %v410
      %475 = vst [vmem:[%s172 + $0xf8] sm:$0xff] %v411
      %476 = vst [vmem:[%s172 + $0x100] sm:$0xff] %v412
      %477 = vst [vmem:[%s172 + $0x108] sm:$0xff] %v413
      %478 = vst [vmem:[%s172 + $0x110] sm:$0xff] %v414
      %479 = vst [vmem:[%s172 + $0x118] sm:$0xff] %v415
      %480 = vst [vmem:[%s172 + $0x120] sm:$0xff] %v416
      %481 = vst [vmem:[%s172 + $0x128] sm:$0xff] %v417
      %482 = vst [vmem:[%s172 + $0x130] sm:$0xff] %v418
      %483 = vst [vmem:[%s172 + $0x138] sm:$0xff] %v419
      %484 = vst [vmem:[%s172 + $0x140] sm:$0xff] %v420
      %485 = vst [vmem:[%s172 + $0x148] sm:$0xff] %v421
      %486 = vst [vmem:[%s172 + $0x150] sm:$0xff] %v422
      %487 = vst [vmem:[%s172 + $0x158] sm:$0xff] %v423
      %488 = vst [vmem:[%s172 + $0x160] sm:$0xff] %v424
      %489 = vst [vmem:[%s172 + $0x168] sm:$0xff] %v425
      %490 = vst [vmem:[%s172 + $0x170] sm:$0xff] %v426
      %491 = vst [vmem:[%s172 + $0x178] sm:$0xff] %v427
      %492 = vst [vmem:[%s172 + $0x180] sm:$0xff] %v428
      %493 = vst [vmem:[%s172 + $0x188] sm:$0xff] %v429
      %494 = vst [vmem:[%s172 + $0x190] sm:$0xff] %v430
      %495 = vst [vmem:[%s172 + $0x198] sm:$0xff] %v431
      %496 = vst [vmem:[%s172 + $0x1a0] sm:$0xff] %v432
      %497 = vst [vmem:[%s172 + $0x1a8] sm:$0xff] %v433
      %498 = vst [vmem:[%s172 + $0x1b0] sm:$0xff] %v434
      %499 = vst [vmem:[%s172 + $0x1b8] sm:$0xff] %v435
      %500 = vst [vmem:[%s172 + $0x1c0] sm:$0xff] %v436
      %501 = vst [vmem:[%s172 + $0x1c8] sm:$0xff] %v437
      %502 = vst [vmem:[%s172 + $0x1d0] sm:$0xff] %v438
      %503 = vst [vmem:[%s172 + $0x1d8] sm:$0xff] %v439
      %504 = vst [vmem:[%s172 + $0x1e0] sm:$0xff] %v440
      %505 = vst [vmem:[%s172 + $0x1e8] sm:$0xff] %v441
      %506 = vst [vmem:[%s172 + $0x1f0] sm:$0xff] %v442
      %507 = vst [vmem:[%s172 + $0x1f8] sm:$0xff] %v443
      %s508 = smul.u32 64, %s14
      %p509 = scmp.lt.s32.totalorder %s508, 191
      %s510 = scalar_select %p509, %s508, 191
      %s511 = smul.addr %s510, 8
      %s512 = scalar_lea.vmem %s3, %s511
      // Predicated region
      $region33: #{mpnn_conv_forward.11} parent=31 // pred_check
        %p513 = pneg %p100
      $region34: #{mpnn_conv_forward.11} parent=31 // pred_check_branch
        %515 = sbr.rel (%p513) target = $region36
      $region35: #{mpnn_conv_forward.11} parent=31 // pred_region
        %s516 = smul.u32 64, %s14
      $region36: #{mpnn_conv_forward.11} parent=31 // pred_fallthru
        _
    $region32: #{mpnn_conv_forward.11} parent=5 // pred_fallthru
      _
    %p517 = scmp.le.s32.totalorder 2, %s9
    // Predicated region
    $region37: #{mpnn_conv_forward.11} parent=5 // pred_check
      %p518 = pneg %p517
    $region38: #{mpnn_conv_forward.11} parent=5 // pred_check_branch
      %520 = sbr.rel (%p518) target = $region40
    $region39: #{mpnn_conv_forward.11} parent=5 // pred_region
      %s521 = ssub.s32 %s9, 2
      // Predicated region
      $region41: #{mpnn_conv_forward.11} parent=39 // pred_check
        %p522 = pneg %p106
      $region42: #{mpnn_conv_forward.11} parent=39 // pred_check_branch
        %524 = sbr.rel (%p522) target = $region44
      $region43: #{mpnn_conv_forward.11} parent=39 // pred_region
        %s525 = smul.u32 64, %s15
        %p526 = scmp.lt.s32.totalorder %s525, 191
        %s527 = scalar_select %p526, %s525, 191
        %s528 = smul.addr %s527, 8
        %s529 = scalar_lea.vmem %s3, %s528
      $region44: #{mpnn_conv_forward.11} parent=39 // pred_fallthru
        _
    $region40: #{mpnn_conv_forward.11} parent=5 // pred_fallthru
      _
  $region6: #{mpnn_conv_forward.11} parent=0 // loop_footer
    %s13 = sadd.s32 1, %s9
  $region7: #{mpnn_conv_forward.11} parent=0 // loop_footer_branch
    %8 = sbr.rel target = $region3
  $region8: #{mpnn_conv_forward.11} parent=0 // loop_exit
    _

// kernel: mpnn_conv_forward.10
$region0: #{mpnn_conv_forward.10}
  #allocation0 [shape = 'u32[]', space=smem, size = 0x4, offset = 0x4, fixed_abs, tag = 'smem constant byte address 0x4 - core index']
  #allocation1 [shape = 'u32[144,128]{1,0:T(1,128)}', space=vmem, size = 0x12000, scoped, tag = 'internal scratch']
  %s0 = inlined_call_operand.vmem [shape: f32[1536,128], index: 0, kind: input, shape index: {}]
  %s1 = inlined_call_operand.vmem [shape: f32[1,128], index: 1, kind: input, shape index: {}]
  %s2 = inlined_call_operand.vmem [shape: f32[1,128], index: 2, kind: input, shape index: {}]
  %s3 = inlined_call_operand.vmem [shape: f32[128,128], index: 3, kind: input, shape index: {}]
  %s4 = inlined_call_operand.vmem [shape: f32[1,128], index: 4, kind: input, shape index: {}]
  %s5 = inlined_call_operand.vmem [shape: f32[1536,128], index: 5, kind: output, shape index: {0}]
  %s6 = inlined_call_operand.vmem [shape: f32[3,1,128], index: 6, kind: output, shape index: {1}]
  %s7 = inlined_call_operand.vmem [shape: f32[3,1,128], index: 7, kind: output, shape index: {2}]
  %8 = xla_tuple %s5, %s6, %s7
  %s9 = sld [smem:[#allocation0]]
  $region69: #{mpnn_conv_forward.10} parent=0
    _
  %s11 = ssub.s32 1, %s9
  %s12 = scalar_select 0, %s11, %s9
  loop: start=0, step=1, limit=5
  $region2: #{mpnn_conv_forward.10} parent=0 // loop_pre_header
    _
  $region3: #{mpnn_conv_forward.10} parent=0 // loop_header
    %s14 = sphi 0, %s18
    %p15 = scmp.ge.s32.totalorder %s14, 5
    %s24 = sphi 0, %s26
    %s27 = sphi 0, %s24
    %s28 = sphi 0, %s27
    %s44 = sphi 0, %s28
    %s48 = sphi 0, %s48
    %s50 = sphi 0, %s48
    %s51 = sphi 0, %s50
    %s65 = sphi 0, %s51
    %s69 = sphi 0, %s69
    %s71 = sphi 0, %s69
    %s72 = sphi 0, %s71
    %s86 = sphi 0, %s72
    %s90 = sphi 0, %s90
    %s92 = sphi 0, %s90
    %s93 = sphi 0, %s92
    %s107 = sphi 0, %s93
    %s111 = sphi 0, %s111
    %s113 = sphi 0, %s111
    %s114 = sphi 0, %s113
    %s128 = sphi 0, %s114
    %s134 = sphi 0, %s136
    %s137 = sphi 0, %s134
    %s138 = sphi 0, %s137
    %s154 = sphi 0, %s138
    %s160 = sphi 0, %s162
    %s163 = sphi 0, %s160
    %s164 = sphi 0, %s163
    %s180 = sphi 0, %s164
    %s186 = sphi 0, %s188
    %s189 = sphi 0, %s186
    %s190 = sphi 0, %s189
    %s206 = sphi 0, %s190
  $region4: #{mpnn_conv_forward.10} parent=0 // loop_header_branch
    %17 = sbr.rel (%p15) target = $region8
  $region5: #{mpnn_conv_forward.10} parent=0 // loop_body
    %s19 = ssub.s32 %s14, 1
    %s20 = ssub.s32 %s14, 2
    %s21 = sadd.s32 %s14, 1
    %s22 = ssub.s32 %s14, %s21
    %p23 = scmp.eq.s32.totalorder %s22, 0
    %s25 = sadd.s32 %s24, 1
    %s26 = scalar_select %p23, %s24, %s25
    %p29 = pneg %p23
    %p30 = scmp.eq.s32.totalorder %s14, 2
    %p31 = por %p29, %p30
    %p32 = scmp.ne.s32.totalorder %s24, %s27
    %p33 = scmp.eq.s32.totalorder %s14, 0
    %p34 = por %p32, %p33
    %p35 = scmp.ne.s32.totalorder %s24, %s27
    %p36 = scmp.eq.s32.totalorder %s19, 2
    %p37 = por %p35, %p36
    %p38 = scmp.ne.s32.totalorder %s27, %s28
    %p39 = scmp.eq.s32.totalorder %s19, 0
    %p40 = por %p38, %p39
    %p41 = scmp.ne.s32.totalorder %s27, %s28
    %p42 = scmp.eq.s32.totalorder %s20, 2
    %p43 = por %p41, %p42
    %p45 = scmp.ne.s32.totalorder %s28, %s44
    %p46 = scmp.eq.s32.totalorder %s20, 0
    %p47 = por %p45, %p46
    %s49 = sadd.s32 %s48, 1
    %p52 = scmp.eq.s32.totalorder %s14, 2
    %p53 = scmp.ne.s32.totalorder %s48, %s50
    %p54 = scmp.eq.s32.totalorder %s14, 0
    %p55 = por %p53, %p54
    %p56 = scmp.ne.s32.totalorder %s48, %s50
    %p57 = scmp.eq.s32.totalorder %s19, 2
    %p58 = por %p56, %p57
    %p59 = scmp.ne.s32.totalorder %s50, %s51
    %p60 = scmp.eq.s32.totalorder %s19, 0
    %p61 = por %p59, %p60
    %p62 = scmp.ne.s32.totalorder %s50, %s51
    %p63 = scmp.eq.s32.totalorder %s20, 2
    %p64 = por %p62, %p63
    %p66 = scmp.ne.s32.totalorder %s51, %s65
    %p67 = scmp.eq.s32.totalorder %s20, 0
    %p68 = por %p66, %p67
    %s70 = sadd.s32 %s69, 1
    %p73 = scmp.eq.s32.totalorder %s14, 2
    %p74 = scmp.ne.s32.totalorder %s69, %s71
    %p75 = scmp.eq.s32.totalorder %s14, 0
    %p76 = por %p74, %p75
    %p77 = scmp.ne.s32.totalorder %s69, %s71
    %p78 = scmp.eq.s32.totalorder %s19, 2
    %p79 = por %p77, %p78
    %p80 = scmp.ne.s32.totalorder %s71, %s72
    %p81 = scmp.eq.s32.totalorder %s19, 0
    %p82 = por %p80, %p81
    %p83 = scmp.ne.s32.totalorder %s71, %s72
    %p84 = scmp.eq.s32.totalorder %s20, 2
    %p85 = por %p83, %p84
    %p87 = scmp.ne.s32.totalorder %s72, %s86
    %p88 = scmp.eq.s32.totalorder %s20, 0
    %p89 = por %p87, %p88
    %s91 = sadd.s32 %s90, 1
    %p94 = scmp.eq.s32.totalorder %s14, 2
    %p95 = scmp.ne.s32.totalorder %s90, %s92
    %p96 = scmp.eq.s32.totalorder %s14, 0
    %p97 = por %p95, %p96
    %p98 = scmp.ne.s32.totalorder %s90, %s92
    %p99 = scmp.eq.s32.totalorder %s19, 2
    %p100 = por %p98, %p99
    %p101 = scmp.ne.s32.totalorder %s92, %s93
    %p102 = scmp.eq.s32.totalorder %s19, 0
    %p103 = por %p101, %p102
    %p104 = scmp.ne.s32.totalorder %s92, %s93
    %p105 = scmp.eq.s32.totalorder %s20, 2
    %p106 = por %p104, %p105
    %p108 = scmp.ne.s32.totalorder %s93, %s107
    %p109 = scmp.eq.s32.totalorder %s20, 0
    %p110 = por %p108, %p109
    %s112 = sadd.s32 %s111, 1
    %p115 = scmp.eq.s32.totalorder %s14, 2
    %p116 = scmp.ne.s32.totalorder %s111, %s113
    %p117 = scmp.eq.s32.totalorder %s14, 0
    %p118 = por %p116, %p117
    %p119 = scmp.ne.s32.totalorder %s111, %s113
    %p120 = scmp.eq.s32.totalorder %s19, 2
    %p121 = por %p119, %p120
    %p122 = scmp.ne.s32.totalorder %s113, %s114
    %p123 = scmp.eq.s32.totalorder %s19, 0
    %p124 = por %p122, %p123
    %p125 = scmp.ne.s32.totalorder %s113, %s114
    %p126 = scmp.eq.s32.totalorder %s20, 2
    %p127 = por %p125, %p126
    %p129 = scmp.ne.s32.totalorder %s114, %s128
    %p130 = scmp.eq.s32.totalorder %s20, 0
    %p131 = por %p129, %p130
    %s132 = ssub.s32 %s14, %s21
    %p133 = scmp.eq.s32.totalorder %s132, 0
    %s135 = sadd.s32 %s134, 1
    %s136 = scalar_select %p133, %s134, %s135
    %p139 = pneg %p133
    %p140 = scmp.eq.s32.totalorder %s14, 2
    %p141 = por %p139, %p140
    %p142 = scmp.ne.s32.totalorder %s134, %s137
    %p143 = scmp.eq.s32.totalorder %s14, 0
    %p144 = por %p142, %p143
    %p145 = scmp.ne.s32.totalorder %s134, %s137
    %p146 = scmp.eq.s32.totalorder %s19, 2
    %p147 = por %p145, %p146
    %p148 = scmp.ne.s32.totalorder %s137, %s138
    %p149 = scmp.eq.s32.totalorder %s19, 0
    %p150 = por %p148, %p149
    %p151 = scmp.ne.s32.totalorder %s137, %s138
    %p152 = scmp.eq.s32.totalorder %s20, 2
    %p153 = por %p151, %p152
    %p155 = scmp.ne.s32.totalorder %s138, %s154
    %p156 = scmp.eq.s32.totalorder %s20, 0
    %p157 = por %p155, %p156
    %s158 = ssub.s32 %s14, %s21
    %p159 = scmp.eq.s32.totalorder %s158, 0
    %s161 = sadd.s32 %s160, 1
    %s162 = scalar_select %p159, %s160, %s161
    %p165 = pneg %p159
    %p166 = scmp.eq.s32.totalorder %s14, 2
    %p167 = por %p165, %p166
    %p168 = scmp.ne.s32.totalorder %s160, %s163
    %p169 = scmp.eq.s32.totalorder %s14, 0
    %p170 = por %p168, %p169
    %p171 = scmp.ne.s32.totalorder %s160, %s163
    %p172 = scmp.eq.s32.totalorder %s19, 2
    %p173 = por %p171, %p172
    %p174 = scmp.ne.s32.totalorder %s163, %s164
    %p175 = scmp.eq.s32.totalorder %s19, 0
    %p176 = por %p174, %p175
    %p177 = scmp.ne.s32.totalorder %s163, %s164
    %p178 = scmp.eq.s32.totalorder %s20, 2
    %p179 = por %p177, %p178
    %p181 = scmp.ne.s32.totalorder %s164, %s180
    %p182 = scmp.eq.s32.totalorder %s20, 0
    %p183 = por %p181, %p182
    %s184 = ssub.s32 %s14, %s21
    %p185 = scmp.eq.s32.totalorder %s184, 0
    %s187 = sadd.s32 %s186, 1
    %s188 = scalar_select %p185, %s186, %s187
    %p191 = pneg %p185
    %p192 = scmp.eq.s32.totalorder %s14, 2
    %p193 = por %p191, %p192
    %p194 = scmp.ne.s32.totalorder %s186, %s189
    %p195 = scmp.eq.s32.totalorder %s14, 0
    %p196 = por %p194, %p195
    %p197 = scmp.ne.s32.totalorder %s186, %s189
    %p198 = scmp.eq.s32.totalorder %s19, 2
    %p199 = por %p197, %p198
    %p200 = scmp.ne.s32.totalorder %s189, %s190
    %p201 = scmp.eq.s32.totalorder %s19, 0
    %p202 = por %p200, %p201
    %p203 = scmp.ne.s32.totalorder %s189, %s190
    %p204 = scmp.eq.s32.totalorder %s20, 2
    %p205 = por %p203, %p204
    %p207 = scmp.ne.s32.totalorder %s190, %s206
    %p208 = scmp.eq.s32.totalorder %s20, 0
    %p209 = por %p207, %p208
    %p210 = scmp.le.s32.totalorder 1, %s14
    %p211 = scmp.lt.s32.totalorder %s14, 4
    %p212 = pnand %p210, %p211
    %p213 = pneg %p212
    // Predicated region
    $region9: #{mpnn_conv_forward.10} parent=5 // pred_check
      _
    $region10: #{mpnn_conv_forward.10} parent=5 // pred_check_branch
      %215 = sbr.rel (%p212) target = $region12
    $region11: #{mpnn_conv_forward.10} parent=5 // pred_region
      %s216 = ssub.s32 %s14, 1
      // Predicated region
      $region13: #{mpnn_conv_forward.10} parent=11 // pred_check
        %p217 = pneg %p61
      $region14: #{mpnn_conv_forward.10} parent=11 // pred_check_branch
        %219 = sbr.rel (%p217) target = $region16
      $region15: #{mpnn_conv_forward.10} parent=11 // pred_region
        _
      $region16: #{mpnn_conv_forward.10} parent=11 // pred_fallthru
        _
      // Predicated region
      $region17: #{mpnn_conv_forward.10} parent=11 // pred_check
        %p220 = pneg %p82
      $region18: #{mpnn_conv_forward.10} parent=11 // pred_check_branch
        %222 = sbr.rel (%p220) target = $region20
      $region19: #{mpnn_conv_forward.10} parent=11 // pred_region
        _
      $region20: #{mpnn_conv_forward.10} parent=11 // pred_fallthru
        _
      // Predicated region
      $region21: #{mpnn_conv_forward.10} parent=11 // pred_check
        %p223 = pneg %p103
      $region22: #{mpnn_conv_forward.10} parent=11 // pred_check_branch
        %225 = sbr.rel (%p223) target = $region24
      $region23: #{mpnn_conv_forward.10} parent=11 // pred_region
        _
      $region24: #{mpnn_conv_forward.10} parent=11 // pred_fallthru
        _
      // Predicated region
      $region25: #{mpnn_conv_forward.10} parent=11 // pred_check
        %p226 = pneg %p124
      $region26: #{mpnn_conv_forward.10} parent=11 // pred_check_branch
        %228 = sbr.rel (%p226) target = $region28
      $region27: #{mpnn_conv_forward.10} parent=11 // pred_region
        _
      $region28: #{mpnn_conv_forward.10} parent=11 // pred_fallthru
        _
    $region12: #{mpnn_conv_forward.10} parent=5 // pred_fallthru
      _
    %p229 = scmp.lt.s32.totalorder %s14, 3
    // Predicated region
    $region29: #{mpnn_conv_forward.10} parent=5 // pred_check
      %p230 = pneg %p229
    $region30: #{mpnn_conv_forward.10} parent=5 // pred_check_branch
      %232 = sbr.rel (%p230) target = $region32
    $region31: #{mpnn_conv_forward.10} parent=5 // pred_region
      // Predicated region
      $region33: #{mpnn_conv_forward.10} parent=31 // pred_check
        %p233 = pneg %p34
      $region34: #{mpnn_conv_forward.10} parent=31 // pred_check_branch
        %235 = sbr.rel (%p233) target = $region36
      $region35: #{mpnn_conv_forward.10} parent=31 // pred_region
        %s236 = smul.u32 64, %s14
        %p237 = scmp.lt.s32.totalorder %s236, 191
        %s238 = scalar_select %p237, %s236, 191
        %s239 = smul.addr %s238, 8
        %s240 = scalar_lea.vmem %s0, %s239
        %s241 = smul.u32 64, %s14
      $region36: #{mpnn_conv_forward.10} parent=31 // pred_fallthru
        _
    $region32: #{mpnn_conv_forward.10} parent=5 // pred_fallthru
      _
    %p242 = scmp.le.s32.totalorder 1, %s14
    %p243 = scmp.lt.s32.totalorder %s14, 4
    %p244 = pnand %p242, %p243
    %p245 = pneg %p244
    // Predicated region
    $region37: #{mpnn_conv_forward.10} parent=5 // pred_check
      _
    $region38: #{mpnn_conv_forward.10} parent=5 // pred_check_branch
      %247 = sbr.rel (%p244) target = $region40
    $region39: #{mpnn_conv_forward.10} parent=5 // pred_region
      %s248 = ssub.s32 %s14, 1
      %s249 = smul.u32 64, %s19
      %p250 = scmp.lt.s32.totalorder %s249, 191
      %s251 = scalar_select %p250, %s249, 191
      %s252 = smul.addr %s251, 8
      %s253 = scalar_lea.vmem %s0, %s252
      %p254 = pneg %p40
      %p255 = pneg %p37
      %p256 = pneg %p61
      %p257 = pneg %p58
      %p258 = pneg %p82
      %p259 = pneg %p79
      %p260 = pneg %p103
      %p261 = pneg %p100
      %p262 = pneg %p124
      %p263 = pneg %p121
      %p264 = pneg %p150
      %p265 = pneg %p147
      %s266 = smul.u32 64, %s19
      %p267 = scmp.lt.s32.totalorder %s266, 191
      %s268 = scalar_select %p267, %s266, 191
      %s269 = smul.addr %s268, 8
      %s270 = scalar_lea.vmem %s5, %s269
      %p271 = pneg %p176
      %p272 = pneg %p173
      %p273 = scmp.lt.s32.totalorder %s19, 2
      %s274 = scalar_select %p273, %s19, 2
      %s275 = scalar_lea.vmem %s6, %s274
      %p276 = pneg %p202
      %p277 = pneg %p199
      %p278 = scmp.lt.s32.totalorder %s19, 2
      %s279 = scalar_select %p278, %s19, 2
      %s280 = scalar_lea.vmem %s7, %s279
      %s281 = smul.u32 64, %s19
      %p282 = scmp.lt.s32.totalorder %s281, 191
      %s283 = scalar_select %p282, %s281, 191
      %s284 = smul.addr %s283, 8
      %s285 = scalar_lea.vmem %s0, %s284
      %s286 = smul.u32 64, %s19
      %s287 = smul.u32 64, %s19
      %p288 = scmp.lt.s32.totalorder %s287, 191
      %s289 = scalar_select %p288, %s287, 191
      %s290 = smul.addr %s289, 8
      %s291 = scalar_lea.vmem %s5, %s290
      %s292 = smul.u32 64, %s19
      %p293 = scmp.lt.s32.totalorder %s19, 2
      %s294 = scalar_select %p293, %s19, 2
      %s295 = scalar_lea.vmem %s6, %s294
      %p296 = scmp.lt.s32.totalorder %s19, 2
      %s297 = scalar_select %p296, %s19, 2
      %s298 = scalar_lea.vmem %s7, %s297
      %v299 = vld [vmem:[%s285] sm:$0xff]
      %v300 = vld [vmem:[%s285 + $0x8] sm:$0xff]
      %v301 = vld [vmem:[%s285 + $0x10] sm:$0xff]
      %v302 = vld [vmem:[%s285 + $0x18] sm:$0xff]
      %v303 = vld [vmem:[%s285 + $0x20] sm:$0xff]
      %v304 = vld [vmem:[%s285 + $0x28] sm:$0xff]
      %v305 = vld [vmem:[%s285 + $0x30] sm:$0xff]
      %v306 = vld [vmem:[%s285 + $0x38] sm:$0xff]
      %v307 = vld [vmem:[%s285 + $0x40] sm:$0xff]
      %v308 = vld [vmem:[%s285 + $0x48] sm:$0xff]
      %v309 = vld [vmem:[%s285 + $0x50] sm:$0xff]
      %v310 = vld [vmem:[%s285 + $0x58] sm:$0xff]
      %v311 = vld [vmem:[%s285 + $0x60] sm:$0xff]
      %v312 = vld [vmem:[%s285 + $0x68] sm:$0xff]
      %v313 = vld [vmem:[%s285 + $0x70] sm:$0xff]
      %v314 = vld [vmem:[%s285 + $0x78] sm:$0xff]
      %v315 = vld [vmem:[%s285 + $0x80] sm:$0xff]
      %v316 = vld [vmem:[%s285 + $0x88] sm:$0xff]
      %v317 = vld [vmem:[%s285 + $0x90] sm:$0xff]
      %v318 = vld [vmem:[%s285 + $0x98] sm:$0xff]
      %v319 = vld [vmem:[%s285 + $0xa0] sm:$0xff]
      %v320 = vld [vmem:[%s285 + $0xa8] sm:$0xff]
      %v321 = vld [vmem:[%s285 + $0xb0] sm:$0xff]
      %v322 = vld [vmem:[%s285 + $0xb8] sm:$0xff]
      %v323 = vld [vmem:[%s285 + $0xc0] sm:$0xff]
      %v324 = vld [vmem:[%s285 + $0xc8] sm:$0xff]
      %v325 = vld [vmem:[%s285 + $0xd0] sm:$0xff]
      %v326 = vld [vmem:[%s285 + $0xd8] sm:$0xff]
      %v327 = vld [vmem:[%s285 + $0xe0] sm:$0xff]
      %v328 = vld [vmem:[%s285 + $0xe8] sm:$0xff]
      %v329 = vld [vmem:[%s285 + $0xf0] sm:$0xff]
      %v330 = vld [vmem:[%s285 + $0xf8] sm:$0xff]
      %v331 = vld [vmem:[%s285 + $0x100] sm:$0xff]
      %v332 = vld [vmem:[%s285 + $0x108] sm:$0xff]
      %v333 = vld [vmem:[%s285 + $0x110] sm:$0xff]
      %v334 = vld [vmem:[%s285 + $0x118] sm:$0xff]
      %v335 = vld [vmem:[%s285 + $0x120] sm:$0xff]
      %v336 = vld [vmem:[%s285 + $0x128] sm:$0xff]
      %v337 = vld [vmem:[%s285 + $0x130] sm:$0xff]
      %v338 = vld [vmem:[%s285 + $0x138] sm:$0xff]
      %v339 = vld [vmem:[%s285 + $0x140] sm:$0xff]
      %v340 = vld [vmem:[%s285 + $0x148] sm:$0xff]
      %v341 = vld [vmem:[%s285 + $0x150] sm:$0xff]
      %v342 = vld [vmem:[%s285 + $0x158] sm:$0xff]
      %v343 = vld [vmem:[%s285 + $0x160] sm:$0xff]
      %v344 = vld [vmem:[%s285 + $0x168] sm:$0xff]
      %v345 = vld [vmem:[%s285 + $0x170] sm:$0xff]
      %v346 = vld [vmem:[%s285 + $0x178] sm:$0xff]
      %v347 = vld [vmem:[%s285 + $0x180] sm:$0xff]
      %v348 = vld [vmem:[%s285 + $0x188] sm:$0xff]
      %v349 = vld [vmem:[%s285 + $0x190] sm:$0xff]
      %v350 = vld [vmem:[%s285 + $0x198] sm:$0xff]
      %v351 = vld [vmem:[%s285 + $0x1a0] sm:$0xff]
      %v352 = vld [vmem:[%s285 + $0x1a8] sm:$0xff]
      %v353 = vld [vmem:[%s285 + $0x1b0] sm:$0xff]
      %v354 = vld [vmem:[%s285 + $0x1b8] sm:$0xff]
      %v355 = vld [vmem:[%s285 + $0x1c0] sm:$0xff]
      %v356 = vld [vmem:[%s285 + $0x1c8] sm:$0xff]
      %v357 = vld [vmem:[%s285 + $0x1d0] sm:$0xff]
      %v358 = vld [vmem:[%s285 + $0x1d8] sm:$0xff]
      %v359 = vld [vmem:[%s285 + $0x1e0] sm:$0xff]
      %v360 = vld [vmem:[%s285 + $0x1e8] sm:$0xff]
      %v361 = vld [vmem:[%s285 + $0x1f0] sm:$0xff]
      %v362 = vld [vmem:[%s285 + $0x1f8] sm:$0xff]
      %v363 = vld [vmem:[%s1] sm:$0x1]
      %v365 = vlaneseq
      %v366 = vshrl.u32 %v365, 7
      %v367 = vsub.s32 0, %v366
      %v368 = vrot.slane %v363, %v367
      %v370 = vmul.f32 %v299, %v368
      %v371 = vmul.f32 %v300, %v368
      %v372 = vmul.f32 %v301, %v368
      %v373 = vmul.f32 %v302, %v368
      %v374 = vmul.f32 %v303, %v368
      %v375 = vmul.f32 %v304, %v368
      %v376 = vmul.f32 %v305, %v368
      %v377 = vmul.f32 %v306, %v368
      %v378 = vmul.f32 %v307, %v368
      %v379 = vmul.f32 %v308, %v368
      %v380 = vmul.f32 %v309, %v368
      %v381 = vmul.f32 %v310, %v368
      %v382 = vmul.f32 %v311, %v368
      %v383 = vmul.f32 %v312, %v368
      %v384 = vmul.f32 %v313, %v368
      %v385 = vmul.f32 %v314, %v368
      %v386 = vmul.f32 %v315, %v368
      %v387 = vmul.f32 %v316, %v368
      %v388 = vmul.f32 %v317, %v368
      %v389 = vmul.f32 %v318, %v368
      %v390 = vmul.f32 %v319, %v368
      %v391 = vmul.f32 %v320, %v368
      %v392 = vmul.f32 %v321, %v368
      %v393 = vmul.f32 %v322, %v368
      %v394 = vmul.f32 %v323, %v368
      %v395 = vmul.f32 %v324, %v368
      %v396 = vmul.f32 %v325, %v368
      %v397 = vmul.f32 %v326, %v368
      %v398 = vmul.f32 %v327, %v368
      %v399 = vmul.f32 %v328, %v368
      %v400 = vmul.f32 %v329, %v368
      %v401 = vmul.f32 %v330, %v368
      %v402 = vmul.f32 %v331, %v368
      %v403 = vmul.f32 %v332, %v368
      %v404 = vmul.f32 %v333, %v368
      %v405 = vmul.f32 %v334, %v368
      %v406 = vmul.f32 %v335, %v368
      %v407 = vmul.f32 %v336, %v368
      %v408 = vmul.f32 %v337, %v368
      %v409 = vmul.f32 %v338, %v368
      %v410 = vmul.f32 %v339, %v368
      %v411 = vmul.f32 %v340, %v368
      %v412 = vmul.f32 %v341, %v368
      %v413 = vmul.f32 %v342, %v368
      %v414 = vmul.f32 %v343, %v368
      %v415 = vmul.f32 %v344, %v368
      %v416 = vmul.f32 %v345, %v368
      %v417 = vmul.f32 %v346, %v368
      %v418 = vmul.f32 %v347, %v368
      %v419 = vmul.f32 %v348, %v368
      %v420 = vmul.f32 %v349, %v368
      %v421 = vmul.f32 %v350, %v368
      %v422 = vmul.f32 %v351, %v368
      %v423 = vmul.f32 %v352, %v368
      %v424 = vmul.f32 %v353, %v368
      %v425 = vmul.f32 %v354, %v368
      %v426 = vmul.f32 %v355, %v368
      %v427 = vmul.f32 %v356, %v368
      %v428 = vmul.f32 %v357, %v368
      %v429 = vmul.f32 %v358, %v368
      %v430 = vmul.f32 %v359, %v368
      %v431 = vmul.f32 %v360, %v368
      %v432 = vmul.f32 %v361, %v368
      %v433 = vmul.f32 %v362, %v368
      %v434 = vld [vmem:[%s2] sm:$0x1]
      %v436 = vlaneseq
      %v437 = vshrl.u32 %v436, 7
      %v438 = vsub.s32 0, %v437
      %v439 = vrot.slane %v434, %v438
      %v441 = vadd.f32 %v370, %v439
      %v442 = vadd.f32 %v371, %v439
      %v443 = vadd.f32 %v372, %v439
      %v444 = vadd.f32 %v373, %v439
      %v445 = vadd.f32 %v374, %v439
      %v446 = vadd.f32 %v375, %v439
      %v447 = vadd.f32 %v376, %v439
      %v448 = vadd.f32 %v377, %v439
      %v449 = vadd.f32 %v378, %v439
      %v450 = vadd.f32 %v379, %v439
      %v451 = vadd.f32 %v380, %v439
      %v452 = vadd.f32 %v381, %v439
      %v453 = vadd.f32 %v382, %v439
      %v454 = vadd.f32 %v383, %v439
      %v455 = vadd.f32 %v384, %v439
      %v456 = vadd.f32 %v385, %v439
      %v457 = vadd.f32 %v386, %v439
      %v458 = vadd.f32 %v387, %v439
      %v459 = vadd.f32 %v388, %v439
      %v460 = vadd.f32 %v389, %v439
      %v461 = vadd.f32 %v390, %v439
      %v462 = vadd.f32 %v391, %v439
      %v463 = vadd.f32 %v392, %v439
      %v464 = vadd.f32 %v393, %v439
      %v465 = vadd.f32 %v394, %v439
      %v466 = vadd.f32 %v395, %v439
      %v467 = vadd.f32 %v396, %v439
      %v468 = vadd.f32 %v397, %v439
      %v469 = vadd.f32 %v398, %v439
      %v470 = vadd.f32 %v399, %v439
      %v471 = vadd.f32 %v400, %v439
      %v472 = vadd.f32 %v401, %v439
      %v473 = vadd.f32 %v402, %v439
      %v474 = vadd.f32 %v403, %v439
      %v475 = vadd.f32 %v404, %v439
      %v476 = vadd.f32 %v405, %v439
      %v477 = vadd.f32 %v406, %v439
      %v478 = vadd.f32 %v407, %v439
      %v479 = vadd.f32 %v408, %v439
      %v480 = vadd.f32 %v409, %v439
      %v481 = vadd.f32 %v410, %v439
      %v482 = vadd.f32 %v411, %v439
      %v483 = vadd.f32 %v412, %v439
      %v484 = vadd.f32 %v413, %v439
      %v485 = vadd.f32 %v414, %v439
      %v486 = vadd.f32 %v415, %v439
      %v487 = vadd.f32 %v416, %v439
      %v488 = vadd.f32 %v417, %v439
      %v489 = vadd.f32 %v418, %v439
      %v490 = vadd.f32 %v419, %v439
      %v491 = vadd.f32 %v420, %v439
      %v492 = vadd.f32 %v421, %v439
      %v493 = vadd.f32 %v422, %v439
      %v494 = vadd.f32 %v423, %v439
      %v495 = vadd.f32 %v424, %v439
      %v496 = vadd.f32 %v425, %v439
      %v497 = vadd.f32 %v426, %v439
      %v498 = vadd.f32 %v427, %v439
      %v499 = vadd.f32 %v428, %v439
      %v500 = vadd.f32 %v429, %v439
      %v501 = vadd.f32 %v430, %v439
      %v502 = vadd.f32 %v431, %v439
      %v503 = vadd.f32 %v432, %v439
      %v504 = vadd.f32 %v433, %v439
      %v505 = vmax.f32 %v441, 0.0
      %v506 = vmax.f32 %v442, 0.0
      %v507 = vmax.f32 %v443, 0.0
      %v508 = vmax.f32 %v444, 0.0
      %v509 = vmax.f32 %v445, 0.0
      %v510 = vmax.f32 %v446, 0.0
      %v511 = vmax.f32 %v447, 0.0
      %v512 = vmax.f32 %v448, 0.0
      %v513 = vmax.f32 %v449, 0.0
      %v514 = vmax.f32 %v450, 0.0
      %v515 = vmax.f32 %v451, 0.0
      %v516 = vmax.f32 %v452, 0.0
      %v517 = vmax.f32 %v453, 0.0
      %v518 = vmax.f32 %v454, 0.0
      %v519 = vmax.f32 %v455, 0.0
      %v520 = vmax.f32 %v456, 0.0
      %v521 = vmax.f32 %v457, 0.0
      %v522 = vmax.f32 %v458, 0.0
      %v523 = vmax.f32 %v459, 0.0
      %v524 = vmax.f32 %v460, 0.0
      %v525 = vmax.f32 %v461, 0.0
      %v526 = vmax.f32 %v462, 0.0
      %v527 = vmax.f32 %v463, 0.0
      %v528 = vmax.f32 %v464, 0.0
      %v529 = vmax.f32 %v465, 0.0
      %v530 = vmax.f32 %v466, 0.0
      %v531 = vmax.f32 %v467, 0.0
      %v532 = vmax.f32 %v468, 0.0
      %v533 = vmax.f32 %v469, 0.0
      %v534 = vmax.f32 %v470, 0.0
      %v535 = vmax.f32 %v471, 0.0
      %v536 = vmax.f32 %v472, 0.0
      %v537 = vmax.f32 %v473, 0.0
      %v538 = vmax.f32 %v474, 0.0
      %v539 = vmax.f32 %v475, 0.0
      %v540 = vmax.f32 %v476, 0.0
      %v541 = vmax.f32 %v477, 0.0
      %v542 = vmax.f32 %v478, 0.0
      %v543 = vmax.f32 %v479, 0.0
      %v544 = vmax.f32 %v480, 0.0
      %v545 = vmax.f32 %v481, 0.0
      %v546 = vmax.f32 %v482, 0.0
      %v547 = vmax.f32 %v483, 0.0
      %v548 = vmax.f32 %v484, 0.0
      %v549 = vmax.f32 %v485, 0.0
      %v550 = vmax.f32 %v486, 0.0
      %v551 = vmax.f32 %v487, 0.0
      %v552 = vmax.f32 %v488, 0.0
      %v553 = vmax.f32 %v489, 0.0
      %v554 = vmax.f32 %v490, 0.0
      %v555 = vmax.f32 %v491, 0.0
      %v556 = vmax.f32 %v492, 0.0
      %v557 = vmax.f32 %v493, 0.0
      %v558 = vmax.f32 %v494, 0.0
      %v559 = vmax.f32 %v495, 0.0
      %v560 = vmax.f32 %v496, 0.0
      %v561 = vmax.f32 %v497, 0.0
      %v562 = vmax.f32 %v498, 0.0
      %v563 = vmax.f32 %v499, 0.0
      %v564 = vmax.f32 %v500, 0.0
      %v565 = vmax.f32 %v501, 0.0
      %v566 = vmax.f32 %v502, 0.0
      %v567 = vmax.f32 %v503, 0.0
      %v568 = vmax.f32 %v504, 0.0
      %v569 = vld [vmem:[%s3] sm:$0xff]
      %v570 = vld [vmem:[%s3 + $0x8] sm:$0xff]
      %v571 = vld [vmem:[%s3 + $0x10] sm:$0xff]
      %v572 = vld [vmem:[%s3 + $0x18] sm:$0xff]
      %v573 = vld [vmem:[%s3 + $0x20] sm:$0xff]
      %v574 = vld [vmem:[%s3 + $0x28] sm:$0xff]
      %v575 = vld [vmem:[%s3 + $0x30] sm:$0xff]
      %v576 = vld [vmem:[%s3 + $0x38] sm:$0xff]
      %v577 = vld [vmem:[%s3 + $0x40] sm:$0xff]
      %v578 = vld [vmem:[%s3 + $0x48] sm:$0xff]
      %v579 = vld [vmem:[%s3 + $0x50] sm:$0xff]
      %v580 = vld [vmem:[%s3 + $0x58] sm:$0xff]
      %v581 = vld [vmem:[%s3 + $0x60] sm:$0xff]
      %v582 = vld [vmem:[%s3 + $0x68] sm:$0xff]
      %v583 = vld [vmem:[%s3 + $0x70] sm:$0xff]
      %v584 = vld [vmem:[%s3 + $0x78] sm:$0xff]
      %v585 = vld [vmem:[%s4] sm:$0x1]
      %v587 = vlaneseq
      %v588 = vshrl.u32 %v587, 7
      %v589 = vsub.s32 0, %v588
      %v590 = vrot.slane %v585, %v589
      %592 = vmatprep.subr.mxu0 0.0
      %593 = vmatpush1.msra.mxu0 %v584
      %594 = vmatprep.subr.mxu0 0.0
      %595 = vmatpush1.msra.mxu0 %v583
      %596 = vmatprep.subr.mxu0 0.0
      %597 = vmatpush1.msra.mxu0 %v582
      %598 = vmatprep.subr.mxu0 0.0
      %599 = vmatpush1.msra.mxu0 %v581
      %600 = vmatprep.subr.mxu0 0.0
      %601 = vmatpush1.msra.mxu0 %v580
      %602 = vmatprep.subr.mxu0 0.0
      %603 = vmatpush1.msra.mxu0 %v579
      %604 = vmatprep.subr.mxu0 0.0
      %605 = vmatpush1.msra.mxu0 %v578
      %606 = vmatprep.subr.mxu0 0.0
      %607 = vmatpush1.msra.mxu0 %v577
      %608 = vmatprep.subr.mxu0 0.0
      %609 = vmatpush1.msra.mxu0 %v576
      %610 = vmatprep.subr.mxu0 0.0
      %611 = vmatpush1.msra.mxu0 %v575
      %612 = vmatprep.subr.mxu0 0.0
      %613 = vmatpush1.msra.mxu0 %v574
      %614 = vmatprep.subr.mxu0 0.0
      %615 = vmatpush1.msra.mxu0 %v573
      %616 = vmatprep.subr.mxu0 0.0
      %617 = vmatpush1.msra.mxu0 %v572
      %618 = vmatprep.subr.mxu0 0.0
      %619 = vmatpush1.msra.mxu0 %v571
      %620 = vmatprep.subr.mxu0 0.0
      %621 = vmatpush1.msra.mxu0 %v570
      %622 = vmatprep.subr.mxu0 0.0
      %623 = vmatpush1.msra.mxu0 %v569
      %624 = vmatprep.subr.mxu0 0.0
      %625 = vmatpush2.msra.mxu0 0.0
      %626 = vmatprep.subr.mxu0 0.0
      %627 = vmatpush2.msra.mxu0 0.0
      %628 = vmatprep.subr.mxu0 0.0
      %629 = vmatpush2.msra.mxu0 0.0
      %630 = vmatprep.subr.mxu0 0.0
      %631 = vmatpush2.msra.mxu0 0.0
      %632 = vmatprep.subr.mxu0 0.0
      %633 = vmatpush2.msra.mxu0 0.0
      %634 = vmatprep.subr.mxu0 0.0
      %635 = vmatpush2.msra.mxu0 0.0
      %636 = vmatprep.subr.mxu0 0.0
      %637 = vmatpush2.msra.mxu0 0.0
      %638 = vmatprep.subr.mxu0 0.0
      %639 = vmatpush2.msra.mxu0 0.0
      %640 = vmatprep.subr.mxu0 0.0
      %641 = vmatpush2.msra.mxu0 0.0
      %642 = vmatprep.subr.mxu0 0.0
      %643 = vmatpush2.msra.mxu0 0.0
      %644 = vmatprep.subr.mxu0 0.0
      %645 = vmatpush2.msra.mxu0 0.0
      %646 = vmatprep.subr.mxu0 0.0
      %647 = vmatpush2.msra.mxu0 0.0
      %648 = vmatprep.subr.mxu0 0.0
      %649 = vmatpush2.msra.mxu0 0.0
      %650 = vmatprep.subr.mxu0 0.0
      %651 = vmatpush2.msra.mxu0 0.0
      %652 = vmatprep.subr.mxu0 0.0
      %653 = vmatpush2.msra.mxu0 0.0
      %654 = vmatprep.subr.mxu0 0.0
      %655 = vmatpush2.msra.mxu0 0.0
      %656 = vmatprep.mubr.f32.mxu0 0.0
      %657 = vmatmul.mubr.f32.gmra.mxu0 %v505
      %v658 = vpop.f32.mrf.mxu0
      %v659 = vadd.f32 %v590, %v658
      %v660 = vpop.f32.mrf.mxu0
      %661 = vmatprep.mubr.f32.mxu0 0.0
      %662 = vmatmul.mubr.f32.gmra.mxu0 %v506
      %v663 = vpop.f32.mrf.mxu0
      %v664 = vadd.f32 %v590, %v663
      %v665 = vpop.f32.mrf.mxu0
      %666 = vmatprep.mubr.f32.mxu0 0.0
      %667 = vmatmul.mubr.f32.gmra.mxu0 %v507
      %v668 = vpop.f32.mrf.mxu0
      %v669 = vadd.f32 %v590, %v668
      %v670 = vpop.f32.mrf.mxu0
      %671 = vmatprep.mubr.f32.mxu0 0.0
      %672 = vmatmul.mubr.f32.gmra.mxu0 %v508
      %v673 = vpop.f32.mrf.mxu0
      %v674 = vadd.f32 %v590, %v673
      %v675 = vpop.f32.mrf.mxu0
      %676 = vmatprep.mubr.f32.mxu0 0.0
      %677 = vmatmul.mubr.f32.gmra.mxu0 %v509
      %v678 = vpop.f32.mrf.mxu0
      %v679 = vadd.f32 %v590, %v678
      %v680 = vpop.f32.mrf.mxu0
      %681 = vmatprep.mubr.f32.mxu0 0.0
      %682 = vmatmul.mubr.f32.gmra.mxu0 %v510
      %v683 = vpop.f32.mrf.mxu0
      %v684 = vadd.f32 %v590, %v683
      %v685 = vpop.f32.mrf.mxu0
      %686 = vmatprep.mubr.f32.mxu0 0.0
      %687 = vmatmul.mubr.f32.gmra.mxu0 %v511
      %v688 = vpop.f32.mrf.mxu0
      %v689 = vadd.f32 %v590, %v688
      %v690 = vpop.f32.mrf.mxu0
      %691 = vmatprep.mubr.f32.mxu0 0.0
      %692 = vmatmul.mubr.f32.gmra.mxu0 %v512
      %v693 = vpop.f32.mrf.mxu0
      %v694 = vadd.f32 %v590, %v693
      %v695 = vpop.f32.mrf.mxu0
      %696 = vmatprep.mubr.f32.mxu0 0.0
      %697 = vmatmul.mubr.f32.gmra.mxu0 %v513
      %v698 = vpop.f32.mrf.mxu0
      %v699 = vadd.f32 %v590, %v698
      %v700 = vpop.f32.mrf.mxu0
      %701 = vmatprep.mubr.f32.mxu0 0.0
      %702 = vmatmul.mubr.f32.gmra.mxu0 %v514
      %v703 = vpop.f32.mrf.mxu0
      %v704 = vadd.f32 %v590, %v703
      %v705 = vpop.f32.mrf.mxu0
      %706 = vmatprep.mubr.f32.mxu0 0.0
      %707 = vmatmul.mubr.f32.gmra.mxu0 %v515
      %v708 = vpop.f32.mrf.mxu0
      %v709 = vadd.f32 %v590, %v708
      %v710 = vpop.f32.mrf.mxu0
      %711 = vmatprep.mubr.f32.mxu0 0.0
      %712 = vmatmul.mubr.f32.gmra.mxu0 %v516
      %v713 = vpop.f32.mrf.mxu0
      %v714 = vadd.f32 %v590, %v713
      %v715 = vpop.f32.mrf.mxu0
      %716 = vmatprep.mubr.f32.mxu0 0.0
      %717 = vmatmul.mubr.f32.gmra.mxu0 %v517
      %v718 = vpop.f32.mrf.mxu0
      %v719 = vadd.f32 %v590, %v718
      %v720 = vpop.f32.mrf.mxu0
      %721 = vmatprep.mubr.f32.mxu0 0.0
      %722 = vmatmul.mubr.f32.gmra.mxu0 %v518
      %v723 = vpop.f32.mrf.mxu0
      %v724 = vadd.f32 %v590, %v723
      %v725 = vpop.f32.mrf.mxu0
      %726 = vmatprep.mubr.f32.mxu0 0.0
      %727 = vmatmul.mubr.f32.gmra.mxu0 %v519
      %v728 = vpop.f32.mrf.mxu0
      %v729 = vadd.f32 %v590, %v728
      %v730 = vpop.f32.mrf.mxu0
      %731 = vmatprep.mubr.f32.mxu0 0.0
      %732 = vmatmul.mubr.f32.gmra.mxu0 %v520
      %v733 = vpop.f32.mrf.mxu0
      %v734 = vadd.f32 %v590, %v733
      %v735 = vpop.f32.mrf.mxu0
      %736 = vmatprep.mubr.f32.mxu0 0.0
      %737 = vmatmul.mubr.f32.gmra.mxu0 %v521
      %v738 = vpop.f32.mrf.mxu0
      %v739 = vadd.f32 %v590, %v738
      %v740 = vpop.f32.mrf.mxu0
      %741 = vmatprep.mubr.f32.mxu0 0.0
      %742 = vmatmul.mubr.f32.gmra.mxu0 %v522
      %v743 = vpop.f32.mrf.mxu0
      %v744 = vadd.f32 %v590, %v743
      %v745 = vpop.f32.mrf.mxu0
      %746 = vmatprep.mubr.f32.mxu0 0.0
      %747 = vmatmul.mubr.f32.gmra.mxu0 %v523
      %v748 = vpop.f32.mrf.mxu0
      %v749 = vadd.f32 %v590, %v748
      %v750 = vpop.f32.mrf.mxu0
      %751 = vmatprep.mubr.f32.mxu0 0.0
      %752 = vmatmul.mubr.f32.gmra.mxu0 %v524
      %v753 = vpop.f32.mrf.mxu0
      %v754 = vadd.f32 %v590, %v753
      %v755 = vpop.f32.mrf.mxu0
      %756 = vmatprep.mubr.f32.mxu0 0.0
      %757 = vmatmul.mubr.f32.gmra.mxu0 %v525
      %v758 = vpop.f32.mrf.mxu0
      %v759 = vadd.f32 %v590, %v758
      %v760 = vpop.f32.mrf.mxu0
      %761 = vmatprep.mubr.f32.mxu0 0.0
      %762 = vmatmul.mubr.f32.gmra.mxu0 %v526
      %v763 = vpop.f32.mrf.mxu0
      %v764 = vadd.f32 %v590, %v763
      %v765 = vpop.f32.mrf.mxu0
      %766 = vmatprep.mubr.f32.mxu0 0.0
      %767 = vmatmul.mubr.f32.gmra.mxu0 %v527
      %v768 = vpop.f32.mrf.mxu0
      %v769 = vadd.f32 %v590, %v768
      %v770 = vpop.f32.mrf.mxu0
      %771 = vmatprep.mubr.f32.mxu0 0.0
      %772 = vmatmul.mubr.f32.gmra.mxu0 %v528
      %v773 = vpop.f32.mrf.mxu0
      %v774 = vadd.f32 %v590, %v773
      %v775 = vpop.f32.mrf.mxu0
      %776 = vmatprep.mubr.f32.mxu0 0.0
      %777 = vmatmul.mubr.f32.gmra.mxu0 %v529
      %v778 = vpop.f32.mrf.mxu0
      %v779 = vadd.f32 %v590, %v778
      %v780 = vpop.f32.mrf.mxu0
      %781 = vmatprep.mubr.f32.mxu0 0.0
      %782 = vmatmul.mubr.f32.gmra.mxu0 %v530
      %v783 = vpop.f32.mrf.mxu0
      %v784 = vadd.f32 %v590, %v783
      %v785 = vpop.f32.mrf.mxu0
      %786 = vmatprep.mubr.f32.mxu0 0.0
      %787 = vmatmul.mubr.f32.gmra.mxu0 %v531
      %v788 = vpop.f32.mrf.mxu0
      %v789 = vadd.f32 %v590, %v788
      %v790 = vpop.f32.mrf.mxu0
      %791 = vmatprep.mubr.f32.mxu0 0.0
      %792 = vmatmul.mubr.f32.gmra.mxu0 %v532
      %v793 = vpop.f32.mrf.mxu0
      %v794 = vadd.f32 %v590, %v793
      %v795 = vpop.f32.mrf.mxu0
      %796 = vmatprep.mubr.f32.mxu0 0.0
      %797 = vmatmul.mubr.f32.gmra.mxu0 %v533
      %v798 = vpop.f32.mrf.mxu0
      %v799 = vadd.f32 %v590, %v798
      %v800 = vpop.f32.mrf.mxu0
      %801 = vmatprep.mubr.f32.mxu0 0.0
      %802 = vmatmul.mubr.f32.gmra.mxu0 %v534
      %v803 = vpop.f32.mrf.mxu0
      %v804 = vadd.f32 %v590, %v803
      %v805 = vpop.f32.mrf.mxu0
      %806 = vmatprep.mubr.f32.mxu0 0.0
      %807 = vmatmul.mubr.f32.gmra.mxu0 %v535
      %v808 = vpop.f32.mrf.mxu0
      %v809 = vadd.f32 %v590, %v808
      %v810 = vpop.f32.mrf.mxu0
      %811 = vmatprep.mubr.f32.mxu0 0.0
      %812 = vmatmul.mubr.f32.gmra.mxu0 %v536
      %v813 = vpop.f32.mrf.mxu0
      %v814 = vadd.f32 %v590, %v813
      %v815 = vpop.f32.mrf.mxu0
      %816 = vmatprep.mubr.f32.mxu0 0.0
      %817 = vmatmul.mubr.f32.gmra.mxu0 %v537
      %v818 = vpop.f32.mrf.mxu0
      %v819 = vadd.f32 %v590, %v818
      %v820 = vpop.f32.mrf.mxu0
      %821 = vmatprep.mubr.f32.mxu0 0.0
      %822 = vmatmul.mubr.f32.gmra.mxu0 %v538
      %v823 = vpop.f32.mrf.mxu0
      %v824 = vadd.f32 %v590, %v823
      %v825 = vpop.f32.mrf.mxu0
      %826 = vmatprep.mubr.f32.mxu0 0.0
      %827 = vmatmul.mubr.f32.gmra.mxu0 %v539
      %v828 = vpop.f32.mrf.mxu0
      %v829 = vadd.f32 %v590, %v828
      %v830 = vpop.f32.mrf.mxu0
      %831 = vmatprep.mubr.f32.mxu0 0.0
      %832 = vmatmul.mubr.f32.gmra.mxu0 %v540
      %v833 = vpop.f32.mrf.mxu0
      %v834 = vadd.f32 %v590, %v833
      %v835 = vpop.f32.mrf.mxu0
      %836 = vmatprep.mubr.f32.mxu0 0.0
      %837 = vmatmul.mubr.f32.gmra.mxu0 %v541
      %v838 = vpop.f32.mrf.mxu0
      %v839 = vadd.f32 %v590, %v838
      %v840 = vpop.f32.mrf.mxu0
      %841 = vmatprep.mubr.f32.mxu0 0.0
      %842 = vmatmul.mubr.f32.gmra.mxu0 %v542
      %v843 = vpop.f32.mrf.mxu0
      %v844 = vadd.f32 %v590, %v843
      %v845 = vpop.f32.mrf.mxu0
      %846 = vmatprep.mubr.f32.mxu0 0.0
      %847 = vmatmul.mubr.f32.gmra.mxu0 %v543
      %v848 = vpop.f32.mrf.mxu0
      %v849 = vadd.f32 %v590, %v848
      %v850 = vpop.f32.mrf.mxu0
      %851 = vmatprep.mubr.f32.mxu0 0.0
      %852 = vmatmul.mubr.f32.gmra.mxu0 %v544
      %v853 = vpop.f32.mrf.mxu0
      %v854 = vadd.f32 %v590, %v853
      %v855 = vpop.f32.mrf.mxu0
      %856 = vmatprep.mubr.f32.mxu0 0.0
      %857 = vmatmul.mubr.f32.gmra.mxu0 %v545
      %v858 = vpop.f32.mrf.mxu0
      %v859 = vadd.f32 %v590, %v858
      %v860 = vpop.f32.mrf.mxu0
      %861 = vmatprep.mubr.f32.mxu0 0.0
      %862 = vmatmul.mubr.f32.gmra.mxu0 %v546
      %v863 = vpop.f32.mrf.mxu0
      %v864 = vadd.f32 %v590, %v863
      %v865 = vpop.f32.mrf.mxu0
      %866 = vmatprep.mubr.f32.mxu0 0.0
      %867 = vmatmul.mubr.f32.gmra.mxu0 %v547
      %v868 = vpop.f32.mrf.mxu0
      %v869 = vadd.f32 %v590, %v868
      %v870 = vpop.f32.mrf.mxu0
      %871 = vmatprep.mubr.f32.mxu0 0.0
      %872 = vmatmul.mubr.f32.gmra.mxu0 %v548
      %v873 = vpop.f32.mrf.mxu0
      %v874 = vadd.f32 %v590, %v873
      %v875 = vpop.f32.mrf.mxu0
      %876 = vmatprep.mubr.f32.mxu0 0.0
      %877 = vmatmul.mubr.f32.gmra.mxu0 %v549
      %v878 = vpop.f32.mrf.mxu0
      %v879 = vadd.f32 %v590, %v878
      %v880 = vpop.f32.mrf.mxu0
      %881 = vmatprep.mubr.f32.mxu0 0.0
      %882 = vmatmul.mubr.f32.gmra.mxu0 %v550
      %v883 = vpop.f32.mrf.mxu0
      %v884 = vadd.f32 %v590, %v883
      %v885 = vpop.f32.mrf.mxu0
      %886 = vmatprep.mubr.f32.mxu0 0.0
      %887 = vmatmul.mubr.f32.gmra.mxu0 %v551
      %v888 = vpop.f32.mrf.mxu0
      %v889 = vadd.f32 %v590, %v888
      %v890 = vpop.f32.mrf.mxu0
      %891 = vmatprep.mubr.f32.mxu0 0.0
      %892 = vmatmul.mubr.f32.gmra.mxu0 %v552
      %v893 = vpop.f32.mrf.mxu0
      %v894 = vadd.f32 %v590, %v893
      %v895 = vpop.f32.mrf.mxu0
      %896 = vmatprep.mubr.f32.mxu0 0.0
      %897 = vmatmul.mubr.f32.gmra.mxu0 %v553
      %v898 = vpop.f32.mrf.mxu0
      %v899 = vadd.f32 %v590, %v898
      %v900 = vpop.f32.mrf.mxu0
      %901 = vmatprep.mubr.f32.mxu0 0.0
      %902 = vmatmul.mubr.f32.gmra.mxu0 %v554
      %v903 = vpop.f32.mrf.mxu0
      %v904 = vadd.f32 %v590, %v903
      %v905 = vpop.f32.mrf.mxu0
      %906 = vmatprep.mubr.f32.mxu0 0.0
      %907 = vmatmul.mubr.f32.gmra.mxu0 %v555
      %v908 = vpop.f32.mrf.mxu0
      %v909 = vadd.f32 %v590, %v908
      %v910 = vpop.f32.mrf.mxu0
      %911 = vmatprep.mubr.f32.mxu0 0.0
      %912 = vmatmul.mubr.f32.gmra.mxu0 %v556
      %v913 = vpop.f32.mrf.mxu0
      %v914 = vadd.f32 %v590, %v913
      %v915 = vpop.f32.mrf.mxu0
      %916 = vmatprep.mubr.f32.mxu0 0.0
      %917 = vmatmul.mubr.f32.gmra.mxu0 %v557
      %v918 = vpop.f32.mrf.mxu0
      %v919 = vadd.f32 %v590, %v918
      %v920 = vpop.f32.mrf.mxu0
      %921 = vmatprep.mubr.f32.mxu0 0.0
      %922 = vmatmul.mubr.f32.gmra.mxu0 %v558
      %v923 = vpop.f32.mrf.mxu0
      %v924 = vadd.f32 %v590, %v923
      %v925 = vpop.f32.mrf.mxu0
      %926 = vmatprep.mubr.f32.mxu0 0.0
      %927 = vmatmul.mubr.f32.gmra.mxu0 %v559
      %v928 = vpop.f32.mrf.mxu0
      %v929 = vadd.f32 %v590, %v928
      %v930 = vpop.f32.mrf.mxu0
      %931 = vmatprep.mubr.f32.mxu0 0.0
      %932 = vmatmul.mubr.f32.gmra.mxu0 %v560
      %v933 = vpop.f32.mrf.mxu0
      %v934 = vadd.f32 %v590, %v933
      %v935 = vpop.f32.mrf.mxu0
      %936 = vmatprep.mubr.f32.mxu0 0.0
      %937 = vmatmul.mubr.f32.gmra.mxu0 %v561
      %v938 = vpop.f32.mrf.mxu0
      %v939 = vadd.f32 %v590, %v938
      %v940 = vpop.f32.mrf.mxu0
      %941 = vmatprep.mubr.f32.mxu0 0.0
      %942 = vmatmul.mubr.f32.gmra.mxu0 %v562
      %v943 = vpop.f32.mrf.mxu0
      %v944 = vadd.f32 %v590, %v943
      %v945 = vpop.f32.mrf.mxu0
      %946 = vmatprep.mubr.f32.mxu0 0.0
      %947 = vmatmul.mubr.f32.gmra.mxu0 %v563
      %v948 = vpop.f32.mrf.mxu0
      %v949 = vadd.f32 %v590, %v948
      %v950 = vpop.f32.mrf.mxu0
      %951 = vmatprep.mubr.f32.mxu0 0.0
      %952 = vmatmul.mubr.f32.gmra.mxu0 %v564
      %v953 = vpop.f32.mrf.mxu0
      %v954 = vadd.f32 %v590, %v953
      %v955 = vpop.f32.mrf.mxu0
      %956 = vmatprep.mubr.f32.mxu0 0.0
      %957 = vmatmul.mubr.f32.gmra.mxu0 %v565
      %v958 = vpop.f32.mrf.mxu0
      %v959 = vadd.f32 %v590, %v958
      %v960 = vpop.f32.mrf.mxu0
      %961 = vmatprep.mubr.f32.mxu0 0.0
      %962 = vmatmul.mubr.f32.gmra.mxu0 %v566
      %v963 = vpop.f32.mrf.mxu0
      %v964 = vadd.f32 %v590, %v963
      %v965 = vpop.f32.mrf.mxu0
      %966 = vmatprep.mubr.f32.mxu0 0.0
      %967 = vmatmul.mubr.f32.gmra.mxu0 %v567
      %v968 = vpop.f32.mrf.mxu0
      %v969 = vadd.f32 %v590, %v968
      %v970 = vpop.f32.mrf.mxu0
      %971 = vmatprep.mubr.f32.mxu0 0.0
      %972 = vmatmul.mubr.f32.gmra.mxu0 %v568
      %v973 = vpop.f32.mrf.mxu0
      %v974 = vadd.f32 %v590, %v973
      %v975 = vpop.f32.mrf.mxu0
      %976 = vdwg.mxu0
      %977 = vst [vmem:[%s291] sm:$0xff] %v659
      %978 = vst [vmem:[%s291 + $0x8] sm:$0xff] %v664
      %979 = vst [vmem:[%s291 + $0x10] sm:$0xff] %v669
      %980 = vst [vmem:[%s291 + $0x18] sm:$0xff] %v674
      %981 = vst [vmem:[%s291 + $0x20] sm:$0xff] %v679
      %982 = vst [vmem:[%s291 + $0x28] sm:$0xff] %v684
      %983 = vst [vmem:[%s291 + $0x30] sm:$0xff] %v689
      %984 = vst [vmem:[%s291 + $0x38] sm:$0xff] %v694
      %985 = vst [vmem:[%s291 + $0x40] sm:$0xff] %v699
      %986 = vst [vmem:[%s291 + $0x48] sm:$0xff] %v704
      %987 = vst [vmem:[%s291 + $0x50] sm:$0xff] %v709
      %988 = vst [vmem:[%s291 + $0x58] sm:$0xff] %v714
      %989 = vst [vmem:[%s291 + $0x60] sm:$0xff] %v719
      %990 = vst [vmem:[%s291 + $0x68] sm:$0xff] %v724
      %991 = vst [vmem:[%s291 + $0x70] sm:$0xff] %v729
      %992 = vst [vmem:[%s291 + $0x78] sm:$0xff] %v734
      %993 = vst [vmem:[%s291 + $0x80] sm:$0xff] %v739
      %994 = vst [vmem:[%s291 + $0x88] sm:$0xff] %v744
      %995 = vst [vmem:[%s291 + $0x90] sm:$0xff] %v749
      %996 = vst [vmem:[%s291 + $0x98] sm:$0xff] %v754
      %997 = vst [vmem:[%s291 + $0xa0] sm:$0xff] %v759
      %998 = vst [vmem:[%s291 + $0xa8] sm:$0xff] %v764
      %999 = vst [vmem:[%s291 + $0xb0] sm:$0xff] %v769
      %1000 = vst [vmem:[%s291 + $0xb8] sm:$0xff] %v774
      %1001 = vst [vmem:[%s291 + $0xc0] sm:$0xff] %v779
      %1002 = vst [vmem:[%s291 + $0xc8] sm:$0xff] %v784
      %1003 = vst [vmem:[%s291 + $0xd0] sm:$0xff] %v789
      %1004 = vst [vmem:[%s291 + $0xd8] sm:$0xff] %v794
      %1005 = vst [vmem:[%s291 + $0xe0] sm:$0xff] %v799
      %1006 = vst [vmem:[%s291 + $0xe8] sm:$0xff] %v804
      %1007 = vst [vmem:[%s291 + $0xf0] sm:$0xff] %v809
      %1008 = vst [vmem:[%s291 + $0xf8] sm:$0xff] %v814
      %1009 = vst [vmem:[%s291 + $0x100] sm:$0xff] %v819
      %1010 = vst [vmem:[%s291 + $0x108] sm:$0xff] %v824
      %1011 = vst [vmem:[%s291 + $0x110] sm:$0xff] %v829
      %1012 = vst [vmem:[%s291 + $0x118] sm:$0xff] %v834
      %1013 = vst [vmem:[%s291 + $0x120] sm:$0xff] %v839
      %1014 = vst [vmem:[%s291 + $0x128] sm:$0xff] %v844
      %1015 = vst [vmem:[%s291 + $0x130] sm:$0xff] %v849
      %1016 = vst [vmem:[%s291 + $0x138] sm:$0xff] %v854
      %1017 = vst [vmem:[%s291 + $0x140] sm:$0xff] %v859
      %1018 = vst [vmem:[%s291 + $0x148] sm:$0xff] %v864
      %1019 = vst [vmem:[%s291 + $0x150] sm:$0xff] %v869
      %1020 = vst [vmem:[%s291 + $0x158] sm:$0xff] %v874
      %1021 = vst [vmem:[%s291 + $0x160] sm:$0xff] %v879
      %1022 = vst [vmem:[%s291 + $0x168] sm:$0xff] %v884
      %1023 = vst [vmem:[%s291 + $0x170] sm:$0xff] %v889
      %1024 = vst [vmem:[%s291 + $0x178] sm:$0xff] %v894
      %1025 = vst [vmem:[%s291 + $0x180] sm:$0xff] %v899
      %1026 = vst [vmem:[%s291 + $0x188] sm:$0xff] %v904
      %1027 = vst [vmem:[%s291 + $0x190] sm:$0xff] %v909
      %1028 = vst [vmem:[%s291 + $0x198] sm:$0xff] %v914
      %1029 = vst [vmem:[%s291 + $0x1a0] sm:$0xff] %v919
      %1030 = vst [vmem:[%s291 + $0x1a8] sm:$0xff] %v924
      %1031 = vst [vmem:[%s291 + $0x1b0] sm:$0xff] %v929
      %1032 = vst [vmem:[%s291 + $0x1b8] sm:$0xff] %v934
      %1033 = vst [vmem:[%s291 + $0x1c0] sm:$0xff] %v939
      %1034 = vst [vmem:[%s291 + $0x1c8] sm:$0xff] %v944
      %1035 = vst [vmem:[%s291 + $0x1d0] sm:$0xff] %v949
      %1036 = vst [vmem:[%s291 + $0x1d8] sm:$0xff] %v954
      %1037 = vst [vmem:[%s291 + $0x1e0] sm:$0xff] %v959
      %1038 = vst [vmem:[%s291 + $0x1e8] sm:$0xff] %v964
      %1039 = vst [vmem:[%s291 + $0x1f0] sm:$0xff] %v969
      %1040 = vst [vmem:[%s291 + $0x1f8] sm:$0xff] %v974
      %s1041 = smul.u32 %s19, 512
      %v1042 = vlaneseq
      %v1043 = vshrl.u32 %v1042, 7
      %v1044 = vadd.s32 %v1043, 8
      %v1045 = vadd.s32 %v1043, 16
      %v1046 = vadd.s32 %v1043, 24
      %v1047 = vadd.s32 %v1043, 32
      %v1048 = vadd.s32 %v1043, 40
      %v1049 = vadd.s32 %v1043, 48
      %v1050 = vadd.s32 %v1043, 56
      %v1051 = vadd.s32 %v1043, 64
      %v1052 = vadd.s32 %v1043, 72
      %v1053 = vadd.s32 %v1043, 80
      %v1054 = vadd.s32 %v1043, 88
      %v1055 = vadd.s32 %v1043, 96
      %v1056 = vadd.s32 %v1043, 104
      %v1057 = vadd.s32 %v1043, 112
      %v1058 = vadd.s32 %v1043, 120
      %v1059 = vadd.s32 %v1043, 128
      %v1060 = vadd.s32 %v1043, 136
      %v1061 = vadd.s32 %v1043, 144
      %v1062 = vadd.s32 %v1043, 152
      %v1063 = vadd.s32 %v1043, 160
      %v1064 = vadd.s32 %v1043, 168
      %v1065 = vadd.s32 %v1043, 176
      %v1066 = vadd.s32 %v1043, 184
      %v1067 = vadd.s32 %v1043, 192
      %v1068 = vadd.s32 %v1043, 200
      %v1069 = vadd.s32 %v1043, 208
      %v1070 = vadd.s32 %v1043, 216
      %v1071 = vadd.s32 %v1043, 224
      %v1072 = vadd.s32 %v1043, 232
      %v1073 = vadd.s32 %v1043, 240
      %v1074 = vadd.s32 %v1043, 248
      %v1075 = vadd.s32 %v1043, 256
      %v1076 = vadd.s32 %v1043, 264
      %v1077 = vadd.s32 %v1043, 272
      %v1078 = vadd.s32 %v1043, 280
      %v1079 = vadd.s32 %v1043, 288
      %v1080 = vadd.s32 %v1043, 296
      %v1081 = vadd.s32 %v1043, 304
      %v1082 = vadd.s32 %v1043, 312
      %v1083 = vadd.s32 %v1043, 320
      %v1084 = vadd.s32 %v1043, 328
      %v1085 = vadd.s32 %v1043, 336
      %v1086 = vadd.s32 %v1043, 344
      %v1087 = vadd.s32 %v1043, 352
      %v1088 = vadd.s32 %v1043, 360
      %v1089 = vadd.s32 %v1043, 368
      %v1090 = vadd.s32 %v1043, 376
      %v1091 = vadd.s32 %v1043, 384
      %v1092 = vadd.s32 %v1043, 392
      %v1093 = vadd.s32 %v1043, 400
      %v1094 = vadd.s32 %v1043, 408
      %v1095 = vadd.s32 %v1043, 416
      %v1096 = vadd.s32 %v1043, 424
      %v1097 = vadd.s32 %v1043, 432
      %v1098 = vadd.s32 %v1043, 440
      %v1099 = vadd.s32 %v1043, 448
      %v1100 = vadd.s32 %v1043, 456
      %v1101 = vadd.s32 %v1043, 464
      %v1102 = vadd.s32 %v1043, 472
      %v1103 = vadd.s32 %v1043, 480
      %v1104 = vadd.s32 %v1043, 488
      %v1105 = vadd.s32 %v1043, 496
      %v1106 = vadd.s32 %v1043, 504
      %v1107 = vstv %s1041
      %v1108 = vadd.s32 %v1107, %v1043
      %v1109 = vadd.s32 %v1107, %v1044
      %v1110 = vadd.s32 %v1107, %v1045
      %v1111 = vadd.s32 %v1107, %v1046
      %v1112 = vadd.s32 %v1107, %v1047
      %v1113 = vadd.s32 %v1107, %v1048
      %v1114 = vadd.s32 %v1107, %v1049
      %v1115 = vadd.s32 %v1107, %v1050
      %v1116 = vadd.s32 %v1107, %v1051
      %v1117 = vadd.s32 %v1107, %v1052
      %v1118 = vadd.s32 %v1107, %v1053
      %v1119 = vadd.s32 %v1107, %v1054
      %v1120 = vadd.s32 %v1107, %v1055
      %v1121 = vadd.s32 %v1107, %v1056
      %v1122 = vadd.s32 %v1107, %v1057
      %v1123 = vadd.s32 %v1107, %v1058
      %v1124 = vadd.s32 %v1107, %v1059
      %v1125 = vadd.s32 %v1107, %v1060
      %v1126 = vadd.s32 %v1107, %v1061
      %v1127 = vadd.s32 %v1107, %v1062
      %v1128 = vadd.s32 %v1107, %v1063
      %v1129 = vadd.s32 %v1107, %v1064
      %v1130 = vadd.s32 %v1107, %v1065
      %v1131 = vadd.s32 %v1107, %v1066
      %v1132 = vadd.s32 %v1107, %v1067
      %v1133 = vadd.s32 %v1107, %v1068
      %v1134 = vadd.s32 %v1107, %v1069
      %v1135 = vadd.s32 %v1107, %v1070
      %v1136 = vadd.s32 %v1107, %v1071
      %v1137 = vadd.s32 %v1107, %v1072
      %v1138 = vadd.s32 %v1107, %v1073
      %v1139 = vadd.s32 %v1107, %v1074
      %v1140 = vadd.s32 %v1107, %v1075
      %v1141 = vadd.s32 %v1107, %v1076
      %v1142 = vadd.s32 %v1107, %v1077
      %v1143 = vadd.s32 %v1107, %v1078
      %v1144 = vadd.s32 %v1107, %v1079
      %v1145 = vadd.s32 %v1107, %v1080
      %v1146 = vadd.s32 %v1107, %v1081
      %v1147 = vadd.s32 %v1107, %v1082
      %v1148 = vadd.s32 %v1107, %v1083
      %v1149 = vadd.s32 %v1107, %v1084
      %v1150 = vadd.s32 %v1107, %v1085
      %v1151 = vadd.s32 %v1107, %v1086
      %v1152 = vadd.s32 %v1107, %v1087
      %v1153 = vadd.s32 %v1107, %v1088
      %v1154 = vadd.s32 %v1107, %v1089
      %v1155 = vadd.s32 %v1107, %v1090
      %v1156 = vadd.s32 %v1107, %v1091
      %v1157 = vadd.s32 %v1107, %v1092
      %v1158 = vadd.s32 %v1107, %v1093
      %v1159 = vadd.s32 %v1107, %v1094
      %v1160 = vadd.s32 %v1107, %v1095
      %v1161 = vadd.s32 %v1107, %v1096
      %v1162 = vadd.s32 %v1107, %v1097
      %v1163 = vadd.s32 %v1107, %v1098
      %v1164 = vadd.s32 %v1107, %v1099
      %v1165 = vadd.s32 %v1107, %v1100
      %v1166 = vadd.s32 %v1107, %v1101
      %v1167 = vadd.s32 %v1107, %v1102
      %v1168 = vadd.s32 %v1107, %v1103
      %v1169 = vadd.s32 %v1107, %v1104
      %v1170 = vadd.s32 %v1107, %v1105
      %v1171 = vadd.s32 %v1107, %v1106
      %vm1172 = vcmp.lt.s32.totalorder %v1108, 1280
      %vm1173 = vcmp.lt.s32.totalorder %v1109, 1280
      %vm1174 = vcmp.lt.s32.totalorder %v1110, 1280
      %vm1175 = vcmp.lt.s32.totalorder %v1111, 1280
      %vm1176 = vcmp.lt.s32.totalorder %v1112, 1280
      %vm1177 = vcmp.lt.s32.totalorder %v1113, 1280
      %vm1178 = vcmp.lt.s32.totalorder %v1114, 1280
      %vm1179 = vcmp.lt.s32.totalorder %v1115, 1280
      %vm1180 = vcmp.lt.s32.totalorder %v1116, 1280
      %vm1181 = vcmp.lt.s32.totalorder %v1117, 1280
      %vm1182 = vcmp.lt.s32.totalorder %v1118, 1280
      %vm1183 = vcmp.lt.s32.totalorder %v1119, 1280
      %vm1184 = vcmp.lt.s32.totalorder %v1120, 1280
      %vm1185 = vcmp.lt.s32.totalorder %v1121, 1280
      %vm1186 = vcmp.lt.s32.totalorder %v1122, 1280
      %vm1187 = vcmp.lt.s32.totalorder %v1123, 1280
      %vm1188 = vcmp.lt.s32.totalorder %v1124, 1280
      %vm1189 = vcmp.lt.s32.totalorder %v1125, 1280
      %vm1190 = vcmp.lt.s32.totalorder %v1126, 1280
      %vm1191 = vcmp.lt.s32.totalorder %v1127, 1280
      %vm1192 = vcmp.lt.s32.totalorder %v1128, 1280
      %vm1193 = vcmp.lt.s32.totalorder %v1129, 1280
      %vm1194 = vcmp.lt.s32.totalorder %v1130, 1280
      %vm1195 = vcmp.lt.s32.totalorder %v1131, 1280
      %vm1196 = vcmp.lt.s32.totalorder %v1132, 1280
      %vm1197 = vcmp.lt.s32.totalorder %v1133, 1280
      %vm1198 = vcmp.lt.s32.totalorder %v1134, 1280
      %vm1199 = vcmp.lt.s32.totalorder %v1135, 1280
      %vm1200 = vcmp.lt.s32.totalorder %v1136, 1280
      %vm1201 = vcmp.lt.s32.totalorder %v1137, 1280
      %vm1202 = vcmp.lt.s32.totalorder %v1138, 1280
      %vm1203 = vcmp.lt.s32.totalorder %v1139, 1280
      %vm1204 = vcmp.lt.s32.totalorder %v1140, 1280
      %vm1205 = vcmp.lt.s32.totalorder %v1141, 1280
      %vm1206 = vcmp.lt.s32.totalorder %v1142, 1280
      %vm1207 = vcmp.lt.s32.totalorder %v1143, 1280
      %vm1208 = vcmp.lt.s32.totalorder %v1144, 1280
      %vm1209 = vcmp.lt.s32.totalorder %v1145, 1280
      %vm1210 = vcmp.lt.s32.totalorder %v1146, 1280
      %vm1211 = vcmp.lt.s32.totalorder %v1147, 1280
      %vm1212 = vcmp.lt.s32.totalorder %v1148, 1280
      %vm1213 = vcmp.lt.s32.totalorder %v1149, 1280
      %vm1214 = vcmp.lt.s32.totalorder %v1150, 1280
      %vm1215 = vcmp.lt.s32.totalorder %v1151, 1280
      %vm1216 = vcmp.lt.s32.totalorder %v1152, 1280
      %vm1217 = vcmp.lt.s32.totalorder %v1153, 1280
      %vm1218 = vcmp.lt.s32.totalorder %v1154, 1280
      %vm1219 = vcmp.lt.s32.totalorder %v1155, 1280
      %vm1220 = vcmp.lt.s32.totalorder %v1156, 1280
      %vm1221 = vcmp.lt.s32.totalorder %v1157, 1280
      %vm1222 = vcmp.lt.s32.totalorder %v1158, 1280
      %vm1223 = vcmp.lt.s32.totalorder %v1159, 1280
      %vm1224 = vcmp.lt.s32.totalorder %v1160, 1280
      %vm1225 = vcmp.lt.s32.totalorder %v1161, 1280
      %vm1226 = vcmp.lt.s32.totalorder %v1162, 1280
      %vm1227 = vcmp.lt.s32.totalorder %v1163, 1280
      %vm1228 = vcmp.lt.s32.totalorder %v1164, 1280
      %vm1229 = vcmp.lt.s32.totalorder %v1165, 1280
      %vm1230 = vcmp.lt.s32.totalorder %v1166, 1280
      %vm1231 = vcmp.lt.s32.totalorder %v1167, 1280
      %vm1232 = vcmp.lt.s32.totalorder %v1168, 1280
      %vm1233 = vcmp.lt.s32.totalorder %v1169, 1280
      %vm1234 = vcmp.lt.s32.totalorder %v1170, 1280
      %vm1235 = vcmp.lt.s32.totalorder %v1171, 1280
      %v1236 = vsel %vm1172, 1, 0
      %v1237 = vsel %vm1173, 1, 0
      %v1238 = vsel %vm1174, 1, 0
      %v1239 = vsel %vm1175, 1, 0
      %v1240 = vsel %vm1176, 1, 0
      %v1241 = vsel %vm1177, 1, 0
      %v1242 = vsel %vm1178, 1, 0
      %v1243 = vsel %vm1179, 1, 0
      %v1244 = vsel %vm1180, 1, 0
      %v1245 = vsel %vm1181, 1, 0
      %v1246 = vsel %vm1182, 1, 0
      %v1247 = vsel %vm1183, 1, 0
      %v1248 = vsel %vm1184, 1, 0
      %v1249 = vsel %vm1185, 1, 0
      %v1250 = vsel %vm1186, 1, 0
      %v1251 = vsel %vm1187, 1, 0
      %v1252 = vsel %vm1188, 1, 0
      %v1253 = vsel %vm1189, 1, 0
      %v1254 = vsel %vm1190, 1, 0
      %v1255 = vsel %vm1191, 1, 0
      %v1256 = vsel %vm1192, 1, 0
      %v1257 = vsel %vm1193, 1, 0
      %v1258 = vsel %vm1194, 1, 0
      %v1259 = vsel %vm1195, 1, 0
      %v1260 = vsel %vm1196, 1, 0
      %v1261 = vsel %vm1197, 1, 0
      %v1262 = vsel %vm1198, 1, 0
      %v1263 = vsel %vm1199, 1, 0
      %v1264 = vsel %vm1200, 1, 0
      %v1265 = vsel %vm1201, 1, 0
      %v1266 = vsel %vm1202, 1, 0
      %v1267 = vsel %vm1203, 1, 0
      %v1268 = vsel %vm1204, 1, 0
      %v1269 = vsel %vm1205, 1, 0
      %v1270 = vsel %vm1206, 1, 0
      %v1271 = vsel %vm1207, 1, 0
      %v1272 = vsel %vm1208, 1, 0
      %v1273 = vsel %vm1209, 1, 0
      %v1274 = vsel %vm1210, 1, 0
      %v1275 = vsel %vm1211, 1, 0
      %v1276 = vsel %vm1212, 1, 0
      %v1277 = vsel %vm1213, 1, 0
      %v1278 = vsel %vm1214, 1, 0
      %v1279 = vsel %vm1215, 1, 0
      %v1280 = vsel %vm1216, 1, 0
      %v1281 = vsel %vm1217, 1, 0
      %v1282 = vsel %vm1218, 1, 0
      %v1283 = vsel %vm1219, 1, 0
      %v1284 = vsel %vm1220, 1, 0
      %v1285 = vsel %vm1221, 1, 0
      %v1286 = vsel %vm1222, 1, 0
      %v1287 = vsel %vm1223, 1, 0
      %v1288 = vsel %vm1224, 1, 0
      %v1289 = vsel %vm1225, 1, 0
      %v1290 = vsel %vm1226, 1, 0
      %v1291 = vsel %vm1227, 1, 0
      %v1292 = vsel %vm1228, 1, 0
      %v1293 = vsel %vm1229, 1, 0
      %v1294 = vsel %vm1230, 1, 0
      %v1295 = vsel %vm1231, 1, 0
      %v1296 = vsel %vm1232, 1, 0
      %v1297 = vsel %vm1233, 1, 0
      %v1298 = vsel %vm1234, 1, 0
      %v1299 = vsel %vm1235, 1, 0
      %vm1300 = vcmp.eq.s32.totalorder %v1236, 1
      %vm1301 = vcmp.eq.s32.totalorder %v1237, 1
      %vm1302 = vcmp.eq.s32.totalorder %v1238, 1
      %vm1303 = vcmp.eq.s32.totalorder %v1239, 1
      %vm1304 = vcmp.eq.s32.totalorder %v1240, 1
      %vm1305 = vcmp.eq.s32.totalorder %v1241, 1
      %vm1306 = vcmp.eq.s32.totalorder %v1242, 1
      %vm1307 = vcmp.eq.s32.totalorder %v1243, 1
      %vm1308 = vcmp.eq.s32.totalorder %v1244, 1
      %vm1309 = vcmp.eq.s32.totalorder %v1245, 1
      %vm1310 = vcmp.eq.s32.totalorder %v1246, 1
      %vm1311 = vcmp.eq.s32.totalorder %v1247, 1
      %vm1312 = vcmp.eq.s32.totalorder %v1248, 1
      %vm1313 = vcmp.eq.s32.totalorder %v1249, 1
      %vm1314 = vcmp.eq.s32.totalorder %v1250, 1
      %vm1315 = vcmp.eq.s32.totalorder %v1251, 1
      %vm1316 = vcmp.eq.s32.totalorder %v1252, 1
      %vm1317 = vcmp.eq.s32.totalorder %v1253, 1
      %vm1318 = vcmp.eq.s32.totalorder %v1254, 1
      %vm1319 = vcmp.eq.s32.totalorder %v1255, 1
      %vm1320 = vcmp.eq.s32.totalorder %v1256, 1
      %vm1321 = vcmp.eq.s32.totalorder %v1257, 1
      %vm1322 = vcmp.eq.s32.totalorder %v1258, 1
      %vm1323 = vcmp.eq.s32.totalorder %v1259, 1
      %vm1324 = vcmp.eq.s32.totalorder %v1260, 1
      %vm1325 = vcmp.eq.s32.totalorder %v1261, 1
      %vm1326 = vcmp.eq.s32.totalorder %v1262, 1
      %vm1327 = vcmp.eq.s32.totalorder %v1263, 1
      %vm1328 = vcmp.eq.s32.totalorder %v1264, 1
      %vm1329 = vcmp.eq.s32.totalorder %v1265, 1
      %vm1330 = vcmp.eq.s32.totalorder %v1266, 1
      %vm1331 = vcmp.eq.s32.totalorder %v1267, 1
      %vm1332 = vcmp.eq.s32.totalorder %v1268, 1
      %vm1333 = vcmp.eq.s32.totalorder %v1269, 1
      %vm1334 = vcmp.eq.s32.totalorder %v1270, 1
      %vm1335 = vcmp.eq.s32.totalorder %v1271, 1
      %vm1336 = vcmp.eq.s32.totalorder %v1272, 1
      %vm1337 = vcmp.eq.s32.totalorder %v1273, 1
      %vm1338 = vcmp.eq.s32.totalorder %v1274, 1
      %vm1339 = vcmp.eq.s32.totalorder %v1275, 1
      %vm1340 = vcmp.eq.s32.totalorder %v1276, 1
      %vm1341 = vcmp.eq.s32.totalorder %v1277, 1
      %vm1342 = vcmp.eq.s32.totalorder %v1278, 1
      %vm1343 = vcmp.eq.s32.totalorder %v1279, 1
      %vm1344 = vcmp.eq.s32.totalorder %v1280, 1
      %vm1345 = vcmp.eq.s32.totalorder %v1281, 1
      %vm1346 = vcmp.eq.s32.totalorder %v1282, 1
      %vm1347 = vcmp.eq.s32.totalorder %v1283, 1
      %vm1348 = vcmp.eq.s32.totalorder %v1284, 1
      %vm1349 = vcmp.eq.s32.totalorder %v1285, 1
      %vm1350 = vcmp.eq.s32.totalorder %v1286, 1
      %vm1351 = vcmp.eq.s32.totalorder %v1287, 1
      %vm1352 = vcmp.eq.s32.totalorder %v1288, 1
      %vm1353 = vcmp.eq.s32.totalorder %v1289, 1
      %vm1354 = vcmp.eq.s32.totalorder %v1290, 1
      %vm1355 = vcmp.eq.s32.totalorder %v1291, 1
      %vm1356 = vcmp.eq.s32.totalorder %v1292, 1
      %vm1357 = vcmp.eq.s32.totalorder %v1293, 1
      %vm1358 = vcmp.eq.s32.totalorder %v1294, 1
      %vm1359 = vcmp.eq.s32.totalorder %v1295, 1
      %vm1360 = vcmp.eq.s32.totalorder %v1296, 1
      %vm1361 = vcmp.eq.s32.totalorder %v1297, 1
      %vm1362 = vcmp.eq.s32.totalorder %v1298, 1
      %vm1363 = vcmp.eq.s32.totalorder %v1299, 1
      %v1364 = vsel %vm1300, %v659, 0.0
      %v1365 = vsel %vm1301, %v664, 0.0
      %v1366 = vsel %vm1302, %v669, 0.0
      %v1367 = vsel %vm1303, %v674, 0.0
      %v1368 = vsel %vm1304, %v679, 0.0
      %v1369 = vsel %vm1305, %v684, 0.0
      %v1370 = vsel %vm1306, %v689, 0.0
      %v1371 = vsel %vm1307, %v694, 0.0
      %v1372 = vsel %vm1308, %v699, 0.0
      %v1373 = vsel %vm1309, %v704, 0.0
      %v1374 = vsel %vm1310, %v709, 0.0
      %v1375 = vsel %vm1311, %v714, 0.0
      %v1376 = vsel %vm1312, %v719, 0.0
      %v1377 = vsel %vm1313, %v724, 0.0
      %v1378 = vsel %vm1314, %v729, 0.0
      %v1379 = vsel %vm1315, %v734, 0.0
      %v1380 = vsel %vm1316, %v739, 0.0
      %v1381 = vsel %vm1317, %v744, 0.0
      %v1382 = vsel %vm1318, %v749, 0.0
      %v1383 = vsel %vm1319, %v754, 0.0
      %v1384 = vsel %vm1320, %v759, 0.0
      %v1385 = vsel %vm1321, %v764, 0.0
      %v1386 = vsel %vm1322, %v769, 0.0
      %v1387 = vsel %vm1323, %v774, 0.0
      %v1388 = vsel %vm1324, %v779, 0.0
      %v1389 = vsel %vm1325, %v784, 0.0
      %v1390 = vsel %vm1326, %v789, 0.0
      %v1391 = vsel %vm1327, %v794, 0.0
      %v1392 = vsel %vm1328, %v799, 0.0
      %v1393 = vsel %vm1329, %v804, 0.0
      %v1394 = vsel %vm1330, %v809, 0.0
      %v1395 = vsel %vm1331, %v814, 0.0
      %v1396 = vsel %vm1332, %v819, 0.0
      %v1397 = vsel %vm1333, %v824, 0.0
      %v1398 = vsel %vm1334, %v829, 0.0
      %v1399 = vsel %vm1335, %v834, 0.0
      %v1400 = vsel %vm1336, %v839, 0.0
      %v1401 = vsel %vm1337, %v844, 0.0
      %v1402 = vsel %vm1338, %v849, 0.0
      %v1403 = vsel %vm1339, %v854, 0.0
      %v1404 = vsel %vm1340, %v859, 0.0
      %v1405 = vsel %vm1341, %v864, 0.0
      %v1406 = vsel %vm1342, %v869, 0.0
      %v1407 = vsel %vm1343, %v874, 0.0
      %v1408 = vsel %vm1344, %v879, 0.0
      %v1409 = vsel %vm1345, %v884, 0.0
      %v1410 = vsel %vm1346, %v889, 0.0
      %v1411 = vsel %vm1347, %v894, 0.0
      %v1412 = vsel %vm1348, %v899, 0.0
      %v1413 = vsel %vm1349, %v904, 0.0
      %v1414 = vsel %vm1350, %v909, 0.0
      %v1415 = vsel %vm1351, %v914, 0.0
      %v1416 = vsel %vm1352, %v919, 0.0
      %v1417 = vsel %vm1353, %v924, 0.0
      %v1418 = vsel %vm1354, %v929, 0.0
      %v1419 = vsel %vm1355, %v934, 0.0
      %v1420 = vsel %vm1356, %v939, 0.0
      %v1421 = vsel %vm1357, %v944, 0.0
      %v1422 = vsel %vm1358, %v949, 0.0
      %v1423 = vsel %vm1359, %v954, 0.0
      %v1424 = vsel %vm1360, %v959, 0.0
      %v1425 = vsel %vm1361, %v964, 0.0
      %v1426 = vsel %vm1362, %v969, 0.0
      %v1427 = vsel %vm1363, %v974, 0.0
      %v1428 = vadd.f32 %v1364, %v1365
      %v1429 = vadd.f32 %v1428, %v1366
      %v1430 = vadd.f32 %v1429, %v1367
      %v1431 = vadd.f32 %v1430, %v1368
      %v1432 = vadd.f32 %v1431, %v1369
      %v1433 = vadd.f32 %v1432, %v1370
      %v1434 = vadd.f32 %v1433, %v1371
      %v1435 = vadd.f32 %v1434, %v1372
      %v1436 = vadd.f32 %v1435, %v1373
      %v1437 = vadd.f32 %v1436, %v1374
      %v1438 = vadd.f32 %v1437, %v1375
      %v1439 = vadd.f32 %v1438, %v1376
      %v1440 = vadd.f32 %v1439, %v1377
      %v1441 = vadd.f32 %v1440, %v1378
      %v1442 = vadd.f32 %v1441, %v1379
      %v1443 = vadd.f32 %v1442, %v1380
      %v1444 = vadd.f32 %v1443, %v1381
      %v1445 = vadd.f32 %v1444, %v1382
      %v1446 = vadd.f32 %v1445, %v1383
      %v1447 = vadd.f32 %v1446, %v1384
      %v1448 = vadd.f32 %v1447, %v1385
      %v1449 = vadd.f32 %v1448, %v1386
      %v1450 = vadd.f32 %v1449, %v1387
      %v1451 = vadd.f32 %v1450, %v1388
      %v1452 = vadd.f32 %v1451, %v1389
      %v1453 = vadd.f32 %v1452, %v1390
      %v1454 = vadd.f32 %v1453, %v1391
      %v1455 = vadd.f32 %v1454, %v1392
      %v1456 = vadd.f32 %v1455, %v1393
      %v1457 = vadd.f32 %v1456, %v1394
      %v1458 = vadd.f32 %v1457, %v1395
      %v1459 = vadd.f32 %v1458, %v1396
      %v1460 = vadd.f32 %v1459, %v1397
      %v1461 = vadd.f32 %v1460, %v1398
      %v1462 = vadd.f32 %v1461, %v1399
      %v1463 = vadd.f32 %v1462, %v1400
      %v1464 = vadd.f32 %v1463, %v1401
      %v1465 = vadd.f32 %v1464, %v1402
      %v1466 = vadd.f32 %v1465, %v1403
      %v1467 = vadd.f32 %v1466, %v1404
      %v1468 = vadd.f32 %v1467, %v1405
      %v1469 = vadd.f32 %v1468, %v1406
      %v1470 = vadd.f32 %v1469, %v1407
      %v1471 = vadd.f32 %v1470, %v1408
      %v1472 = vadd.f32 %v1471, %v1409
      %v1473 = vadd.f32 %v1472, %v1410
      %v1474 = vadd.f32 %v1473, %v1411
      %v1475 = vadd.f32 %v1474, %v1412
      %v1476 = vadd.f32 %v1475, %v1413
      %v1477 = vadd.f32 %v1476, %v1414
      %v1478 = vadd.f32 %v1477, %v1415
      %v1479 = vadd.f32 %v1478, %v1416
      %v1480 = vadd.f32 %v1479, %v1417
      %v1481 = vadd.f32 %v1480, %v1418
      %v1482 = vadd.f32 %v1481, %v1419
      %v1483 = vadd.f32 %v1482, %v1420
      %v1484 = vadd.f32 %v1483, %v1421
      %v1485 = vadd.f32 %v1484, %v1422
      %v1486 = vadd.f32 %v1485, %v1423
      %v1487 = vadd.f32 %v1486, %v1424
      %v1488 = vadd.f32 %v1487, %v1425
      %v1489 = vadd.f32 %v1488, %v1426
      %v1490 = vadd.f32 %v1489, %v1427
      %v1491 = vrot.slane %v1490, 4
      %v1492 = vadd.f32 %v1490, %v1491
      %v1493 = vrot.slane %v1492, 2
      %v1494 = vadd.f32 %v1492, %v1493
      %v1495 = vrot.slane %v1494, 1
      %v1496 = vadd.f32 %v1494, %v1495
      %v1497 = vmul.f32 %v1364, %v1364
      %v1498 = vmul.f32 %v1365, %v1365
      %v1499 = vmul.f32 %v1366, %v1366
      %v1500 = vmul.f32 %v1367, %v1367
      %v1501 = vmul.f32 %v1368, %v1368
      %v1502 = vmul.f32 %v1369, %v1369
      %v1503 = vmul.f32 %v1370, %v1370
      %v1504 = vmul.f32 %v1371, %v1371
      %v1505 = vmul.f32 %v1372, %v1372
      %v1506 = vmul.f32 %v1373, %v1373
      %v1507 = vmul.f32 %v1374, %v1374
      %v1508 = vmul.f32 %v1375, %v1375
      %v1509 = vmul.f32 %v1376, %v1376
      %v1510 = vmul.f32 %v1377, %v1377
      %v1511 = vmul.f32 %v1378, %v1378
      %v1512 = vmul.f32 %v1379, %v1379
      %v1513 = vmul.f32 %v1380, %v1380
      %v1514 = vmul.f32 %v1381, %v1381
      %v1515 = vmul.f32 %v1382, %v1382
      %v1516 = vmul.f32 %v1383, %v1383
      %v1517 = vmul.f32 %v1384, %v1384
      %v1518 = vmul.f32 %v1385, %v1385
      %v1519 = vmul.f32 %v1386, %v1386
      %v1520 = vmul.f32 %v1387, %v1387
      %v1521 = vmul.f32 %v1388, %v1388
      %v1522 = vmul.f32 %v1389, %v1389
      %v1523 = vmul.f32 %v1390, %v1390
      %v1524 = vmul.f32 %v1391, %v1391
      %v1525 = vmul.f32 %v1392, %v1392
      %v1526 = vmul.f32 %v1393, %v1393
      %v1527 = vmul.f32 %v1394, %v1394
      %v1528 = vmul.f32 %v1395, %v1395
      %v1529 = vmul.f32 %v1396, %v1396
      %v1530 = vmul.f32 %v1397, %v1397
      %v1531 = vmul.f32 %v1398, %v1398
      %v1532 = vmul.f32 %v1399, %v1399
      %v1533 = vmul.f32 %v1400, %v1400
      %v1534 = vmul.f32 %v1401, %v1401
      %v1535 = vmul.f32 %v1402, %v1402
      %v1536 = vmul.f32 %v1403, %v1403
      %v1537 = vmul.f32 %v1404, %v1404
      %v1538 = vmul.f32 %v1405, %v1405
      %v1539 = vmul.f32 %v1406, %v1406
      %v1540 = vmul.f32 %v1407, %v1407
      %v1541 = vmul.f32 %v1408, %v1408
      %v1542 = vmul.f32 %v1409, %v1409
      %v1543 = vmul.f32 %v1410, %v1410
      %v1544 = vmul.f32 %v1411, %v1411
      %v1545 = vmul.f32 %v1412, %v1412
      %v1546 = vmul.f32 %v1413, %v1413
      %v1547 = vmul.f32 %v1414, %v1414
      %v1548 = vmul.f32 %v1415, %v1415
      %v1549 = vmul.f32 %v1416, %v1416
      %v1550 = vmul.f32 %v1417, %v1417
      %v1551 = vmul.f32 %v1418, %v1418
      %v1552 = vmul.f32 %v1419, %v1419
      %v1553 = vmul.f32 %v1420, %v1420
      %v1554 = vmul.f32 %v1421, %v1421
      %v1555 = vmul.f32 %v1422, %v1422
      %v1556 = vmul.f32 %v1423, %v1423
      %v1557 = vmul.f32 %v1424, %v1424
      %v1558 = vmul.f32 %v1425, %v1425
      %v1559 = vmul.f32 %v1426, %v1426
      %v1560 = vmul.f32 %v1427, %v1427
      %v1561 = vadd.f32 %v1497, %v1498
      %v1562 = vadd.f32 %v1561, %v1499
      %v1563 = vadd.f32 %v1562, %v1500
      %v1564 = vadd.f32 %v1563, %v1501
      %v1565 = vadd.f32 %v1564, %v1502
      %v1566 = vadd.f32 %v1565, %v1503
      %v1567 = vadd.f32 %v1566, %v1504
      %v1568 = vadd.f32 %v1567, %v1505
      %v1569 = vadd.f32 %v1568, %v1506
      %v1570 = vadd.f32 %v1569, %v1507
      %v1571 = vadd.f32 %v1570, %v1508
      %v1572 = vadd.f32 %v1571, %v1509
      %v1573 = vadd.f32 %v1572, %v1510
      %v1574 = vadd.f32 %v1573, %v1511
      %v1575 = vadd.f32 %v1574, %v1512
      %v1576 = vadd.f32 %v1575, %v1513
      %v1577 = vadd.f32 %v1576, %v1514
      %v1578 = vadd.f32 %v1577, %v1515
      %v1579 = vadd.f32 %v1578, %v1516
      %v1580 = vadd.f32 %v1579, %v1517
      %v1581 = vadd.f32 %v1580, %v1518
      %v1582 = vadd.f32 %v1581, %v1519
      %v1583 = vadd.f32 %v1582, %v1520
      %v1584 = vadd.f32 %v1583, %v1521
      %v1585 = vadd.f32 %v1584, %v1522
      %v1586 = vadd.f32 %v1585, %v1523
      %v1587 = vadd.f32 %v1586, %v1524
      %v1588 = vadd.f32 %v1587, %v1525
      %v1589 = vadd.f32 %v1588, %v1526
      %v1590 = vadd.f32 %v1589, %v1527
      %v1591 = vadd.f32 %v1590, %v1528
      %v1592 = vadd.f32 %v1591, %v1529
      %v1593 = vadd.f32 %v1592, %v1530
      %v1594 = vadd.f32 %v1593, %v1531
      %v1595 = vadd.f32 %v1594, %v1532
      %v1596 = vadd.f32 %v1595, %v1533
      %v1597 = vadd.f32 %v1596, %v1534
      %v1598 = vadd.f32 %v1597, %v1535
      %v1599 = vadd.f32 %v1598, %v1536
      %v1600 = vadd.f32 %v1599, %v1537
      %v1601 = vadd.f32 %v1600, %v1538
      %v1602 = vadd.f32 %v1601, %v1539
      %v1603 = vadd.f32 %v1602, %v1540
      %v1604 = vadd.f32 %v1603, %v1541
      %v1605 = vadd.f32 %v1604, %v1542
      %v1606 = vadd.f32 %v1605, %v1543
      %v1607 = vadd.f32 %v1606, %v1544
      %v1608 = vadd.f32 %v1607, %v1545
      %v1609 = vadd.f32 %v1608, %v1546
      %v1610 = vadd.f32 %v1609, %v1547
      %v1611 = vadd.f32 %v1610, %v1548
      %v1612 = vadd.f32 %v1611, %v1549
      %v1613 = vadd.f32 %v1612, %v1550
      %v1614 = vadd.f32 %v1613, %v1551
      %v1615 = vadd.f32 %v1614, %v1552
      %v1616 = vadd.f32 %v1615, %v1553
      %v1617 = vadd.f32 %v1616, %v1554
      %v1618 = vadd.f32 %v1617, %v1555
      %v1619 = vadd.f32 %v1618, %v1556
      %v1620 = vadd.f32 %v1619, %v1557
      %v1621 = vadd.f32 %v1620, %v1558
      %v1622 = vadd.f32 %v1621, %v1559
      %v1623 = vadd.f32 %v1622, %v1560
      %v1624 = vrot.slane %v1623, 4
      %v1625 = vadd.f32 %v1623, %v1624
      %v1626 = vrot.slane %v1625, 2
      %v1627 = vadd.f32 %v1625, %v1626
      %v1628 = vrot.slane %v1627, 1
      %v1629 = vadd.f32 %v1627, %v1628
      %1630 = vst [vmem:[%s295] sm:$0x1] %v1496
      %1631 = vst [vmem:[%s298] sm:$0x1] %v1629
      %s1632 = smul.u32 64, %s19
      %p1633 = scmp.lt.s32.totalorder %s1632, 191
      %s1634 = scalar_select %p1633, %s1632, 191
      %s1635 = smul.addr %s1634, 8
      %s1636 = scalar_lea.vmem %s5, %s1635
      %p1637 = scmp.lt.s32.totalorder %s19, 2
      %s1638 = scalar_select %p1637, %s19, 2
      %s1639 = scalar_lea.vmem %s6, %s1638
      %p1640 = scmp.lt.s32.totalorder %s19, 2
      %s1641 = scalar_select %p1640, %s19, 2
      %s1642 = scalar_lea.vmem %s7, %s1641
      // Predicated region
      $region41: #{mpnn_conv_forward.10} parent=39 // pred_check
        %p1643 = pneg %p147
      $region42: #{mpnn_conv_forward.10} parent=39 // pred_check_branch
        %1645 = sbr.rel (%p1643) target = $region44
      $region43: #{mpnn_conv_forward.10} parent=39 // pred_region
        %s1646 = smul.u32 64, %s19
      $region44: #{mpnn_conv_forward.10} parent=39 // pred_fallthru
        _
      // Predicated region
      $region45: #{mpnn_conv_forward.10} parent=39 // pred_check
        %p1647 = pneg %p173
      $region46: #{mpnn_conv_forward.10} parent=39 // pred_check_branch
        %1649 = sbr.rel (%p1647) target = $region48
      $region47: #{mpnn_conv_forward.10} parent=39 // pred_region
        _
      $region48: #{mpnn_conv_forward.10} parent=39 // pred_fallthru
        _
      // Predicated region
      $region49: #{mpnn_conv_forward.10} parent=39 // pred_check
        %p1650 = pneg %p199
      $region50: #{mpnn_conv_forward.10} parent=39 // pred_check_branch
        %1652 = sbr.rel (%p1650) target = $region52
      $region51: #{mpnn_conv_forward.10} parent=39 // pred_region
        _
      $region52: #{mpnn_conv_forward.10} parent=39 // pred_fallthru
        _
    $region40: #{mpnn_conv_forward.10} parent=5 // pred_fallthru
      _
    %p1653 = scmp.le.s32.totalorder 2, %s14
    // Predicated region
    $region53: #{mpnn_conv_forward.10} parent=5 // pred_check
      %p1654 = pneg %p1653
    $region54: #{mpnn_conv_forward.10} parent=5 // pred_check_branch
      %1656 = sbr.rel (%p1654) target = $region56
    $region55: #{mpnn_conv_forward.10} parent=5 // pred_region
      %s1657 = ssub.s32 %s14, 2
      // Predicated region
      $region57: #{mpnn_conv_forward.10} parent=55 // pred_check
        %p1658 = pneg %p153
      $region58: #{mpnn_conv_forward.10} parent=55 // pred_check_branch
        %1660 = sbr.rel (%p1658) target = $region60
      $region59: #{mpnn_conv_forward.10} parent=55 // pred_region
        %s1661 = smul.u32 64, %s20
        %p1662 = scmp.lt.s32.totalorder %s1661, 191
        %s1663 = scalar_select %p1662, %s1661, 191
        %s1664 = smul.addr %s1663, 8
        %s1665 = scalar_lea.vmem %s5, %s1664
      $region60: #{mpnn_conv_forward.10} parent=55 // pred_fallthru
        _
      // Predicated region
      $region61: #{mpnn_conv_forward.10} parent=55 // pred_check
        %p1666 = pneg %p179
      $region62: #{mpnn_conv_forward.10} parent=55 // pred_check_branch
        %1668 = sbr.rel (%p1666) target = $region64
      $region63: #{mpnn_conv_forward.10} parent=55 // pred_region
        %p1669 = scmp.lt.s32.totalorder %s20, 2
        %s1670 = scalar_select %p1669, %s20, 2
        %s1671 = scalar_lea.vmem %s6, %s1670
      $region64: #{mpnn_conv_forward.10} parent=55 // pred_fallthru
        _
      // Predicated region
      $region65: #{mpnn_conv_forward.10} parent=55 // pred_check
        %p1672 = pneg %p205
      $region66: #{mpnn_conv_forward.10} parent=55 // pred_check_branch
        %1674 = sbr.rel (%p1672) target = $region68
      $region67: #{mpnn_conv_forward.10} parent=55 // pred_region
        %p1675 = scmp.lt.s32.totalorder %s20, 2
        %s1676 = scalar_select %p1675, %s20, 2
        %s1677 = scalar_lea.vmem %s7, %s1676
      $region68: #{mpnn_conv_forward.10} parent=55 // pred_fallthru
        _
    $region56: #{mpnn_conv_forward.10} parent=5 // pred_fallthru
      _
  $region6: #{mpnn_conv_forward.10} parent=0 // loop_footer
    %s18 = sadd.s32 1, %s14
  $region7: #{mpnn_conv_forward.10} parent=0 // loop_footer_branch
    %13 = sbr.rel target = $region3
  $region8: #{mpnn_conv_forward.10} parent=0 // loop_exit
    _

// kernel: mpnn_conv_forward.9
$region0: #{mpnn_conv_forward.9}
  #allocation0 [shape = 'u32[]', space=smem, size = 0x4, offset = 0x4, fixed_abs, tag = 'smem constant byte address 0x4 - core index']
  #allocation1 [shape = 'u32[144,128]{1,0:T(1,128)}', space=vmem, size = 0x12000, scoped, tag = 'internal scratch']
  %s0 = inlined_call_operand.vmem [shape: f32[1024,128], index: 0, kind: input, shape index: {}]
  %s1 = inlined_call_operand.vmem [shape: f32[1,128], index: 1, kind: input, shape index: {}]
  %s2 = inlined_call_operand.vmem [shape: f32[1,128], index: 2, kind: input, shape index: {}]
  %s3 = inlined_call_operand.vmem [shape: f32[1024,128], index: 3, kind: output, shape index: {}]
  %s4 = sld [smem:[#allocation0]]
  $region45: #{mpnn_conv_forward.9} parent=0
    _
  %s6 = ssub.s32 1, %s4
  %s7 = scalar_select 0, %s6, %s4
  loop: start=0, step=1, limit=4
  $region2: #{mpnn_conv_forward.9} parent=0 // loop_pre_header
    _
  $region3: #{mpnn_conv_forward.9} parent=0 // loop_header
    %s9 = sphi 0, %s13
    %p10 = scmp.ge.s32.totalorder %s9, 4
    %s19 = sphi 0, %s21
    %s22 = sphi 0, %s19
    %s23 = sphi 0, %s22
    %s39 = sphi 0, %s23
    %s43 = sphi 0, %s43
    %s45 = sphi 0, %s43
    %s46 = sphi 0, %s45
    %s60 = sphi 0, %s46
    %s64 = sphi 0, %s64
    %s66 = sphi 0, %s64
    %s67 = sphi 0, %s66
    %s81 = sphi 0, %s67
    %s87 = sphi 0, %s89
    %s90 = sphi 0, %s87
    %s91 = sphi 0, %s90
    %s107 = sphi 0, %s91
  $region4: #{mpnn_conv_forward.9} parent=0 // loop_header_branch
    %12 = sbr.rel (%p10) target = $region8
  $region5: #{mpnn_conv_forward.9} parent=0 // loop_body
    %s14 = ssub.s32 %s9, 1
    %s15 = ssub.s32 %s9, 2
    %s16 = sadd.s32 %s9, 1
    %s17 = ssub.s32 %s9, %s16
    %p18 = scmp.eq.s32.totalorder %s17, 0
    %s20 = sadd.s32 %s19, 1
    %s21 = scalar_select %p18, %s19, %s20
    %p24 = pneg %p18
    %p25 = scmp.eq.s32.totalorder %s9, 1
    %p26 = por %p24, %p25
    %p27 = scmp.ne.s32.totalorder %s19, %s22
    %p28 = scmp.eq.s32.totalorder %s9, 0
    %p29 = por %p27, %p28
    %p30 = scmp.ne.s32.totalorder %s19, %s22
    %p31 = scmp.eq.s32.totalorder %s14, 1
    %p32 = por %p30, %p31
    %p33 = scmp.ne.s32.totalorder %s22, %s23
    %p34 = scmp.eq.s32.totalorder %s14, 0
    %p35 = por %p33, %p34
    %p36 = scmp.ne.s32.totalorder %s22, %s23
    %p37 = scmp.eq.s32.totalorder %s15, 1
    %p38 = por %p36, %p37
    %p40 = scmp.ne.s32.totalorder %s23, %s39
    %p41 = scmp.eq.s32.totalorder %s15, 0
    %p42 = por %p40, %p41
    %s44 = sadd.s32 %s43, 1
    %p47 = scmp.eq.s32.totalorder %s9, 1
    %p48 = scmp.ne.s32.totalorder %s43, %s45
    %p49 = scmp.eq.s32.totalorder %s9, 0
    %p50 = por %p48, %p49
    %p51 = scmp.ne.s32.totalorder %s43, %s45
    %p52 = scmp.eq.s32.totalorder %s14, 1
    %p53 = por %p51, %p52
    %p54 = scmp.ne.s32.totalorder %s45, %s46
    %p55 = scmp.eq.s32.totalorder %s14, 0
    %p56 = por %p54, %p55
    %p57 = scmp.ne.s32.totalorder %s45, %s46
    %p58 = scmp.eq.s32.totalorder %s15, 1
    %p59 = por %p57, %p58
    %p61 = scmp.ne.s32.totalorder %s46, %s60
    %p62 = scmp.eq.s32.totalorder %s15, 0
    %p63 = por %p61, %p62
    %s65 = sadd.s32 %s64, 1
    %p68 = scmp.eq.s32.totalorder %s9, 1
    %p69 = scmp.ne.s32.totalorder %s64, %s66
    %p70 = scmp.eq.s32.totalorder %s9, 0
    %p71 = por %p69, %p70
    %p72 = scmp.ne.s32.totalorder %s64, %s66
    %p73 = scmp.eq.s32.totalorder %s14, 1
    %p74 = por %p72, %p73
    %p75 = scmp.ne.s32.totalorder %s66, %s67
    %p76 = scmp.eq.s32.totalorder %s14, 0
    %p77 = por %p75, %p76
    %p78 = scmp.ne.s32.totalorder %s66, %s67
    %p79 = scmp.eq.s32.totalorder %s15, 1
    %p80 = por %p78, %p79
    %p82 = scmp.ne.s32.totalorder %s67, %s81
    %p83 = scmp.eq.s32.totalorder %s15, 0
    %p84 = por %p82, %p83
    %s85 = ssub.s32 %s9, %s16
    %p86 = scmp.eq.s32.totalorder %s85, 0
    %s88 = sadd.s32 %s87, 1
    %s89 = scalar_select %p86, %s87, %s88
    %p92 = pneg %p86
    %p93 = scmp.eq.s32.totalorder %s9, 1
    %p94 = por %p92, %p93
    %p95 = scmp.ne.s32.totalorder %s87, %s90
    %p96 = scmp.eq.s32.totalorder %s9, 0
    %p97 = por %p95, %p96
    %p98 = scmp.ne.s32.totalorder %s87, %s90
    %p99 = scmp.eq.s32.totalorder %s14, 1
    %p100 = por %p98, %p99
    %p101 = scmp.ne.s32.totalorder %s90, %s91
    %p102 = scmp.eq.s32.totalorder %s14, 0
    %p103 = por %p101, %p102
    %p104 = scmp.ne.s32.totalorder %s90, %s91
    %p105 = scmp.eq.s32.totalorder %s15, 1
    %p106 = por %p104, %p105
    %p108 = scmp.ne.s32.totalorder %s91, %s107
    %p109 = scmp.eq.s32.totalorder %s15, 0
    %p110 = por %p108, %p109
    %p111 = scmp.le.s32.totalorder 1, %s9
    %p112 = scmp.lt.s32.totalorder %s9, 3
    %p113 = pnand %p111, %p112
    %p114 = pneg %p113
    // Predicated region
    $region9: #{mpnn_conv_forward.9} parent=5 // pred_check
      _
    $region10: #{mpnn_conv_forward.9} parent=5 // pred_check_branch
      %116 = sbr.rel (%p113) target = $region12
    $region11: #{mpnn_conv_forward.9} parent=5 // pred_region
      %s117 = ssub.s32 %s9, 1
      // Predicated region
      $region13: #{mpnn_conv_forward.9} parent=11 // pred_check
        %p118 = pneg %p56
      $region14: #{mpnn_conv_forward.9} parent=11 // pred_check_branch
        %120 = sbr.rel (%p118) target = $region16
      $region15: #{mpnn_conv_forward.9} parent=11 // pred_region
        _
      $region16: #{mpnn_conv_forward.9} parent=11 // pred_fallthru
        _
      // Predicated region
      $region17: #{mpnn_conv_forward.9} parent=11 // pred_check
        %p121 = pneg %p77
      $region18: #{mpnn_conv_forward.9} parent=11 // pred_check_branch
        %123 = sbr.rel (%p121) target = $region20
      $region19: #{mpnn_conv_forward.9} parent=11 // pred_region
        _
      $region20: #{mpnn_conv_forward.9} parent=11 // pred_fallthru
        _
    $region12: #{mpnn_conv_forward.9} parent=5 // pred_fallthru
      _
    %p124 = scmp.lt.s32.totalorder %s9, 2
    // Predicated region
    $region21: #{mpnn_conv_forward.9} parent=5 // pred_check
      %p125 = pneg %p124
    $region22: #{mpnn_conv_forward.9} parent=5 // pred_check_branch
      %127 = sbr.rel (%p125) target = $region24
    $region23: #{mpnn_conv_forward.9} parent=5 // pred_region
      // Predicated region
      $region25: #{mpnn_conv_forward.9} parent=23 // pred_check
        %p128 = pneg %p29
      $region26: #{mpnn_conv_forward.9} parent=23 // pred_check_branch
        %130 = sbr.rel (%p128) target = $region28
      $region27: #{mpnn_conv_forward.9} parent=23 // pred_region
        %s131 = smul.u32 64, %s9
        %p132 = scmp.lt.s32.totalorder %s131, 127
        %s133 = scalar_select %p132, %s131, 127
        %s134 = smul.addr %s133, 8
        %s135 = scalar_lea.vmem %s0, %s134
        %s136 = smul.u32 64, %s9
      $region28: #{mpnn_conv_forward.9} parent=23 // pred_fallthru
        _
    $region24: #{mpnn_conv_forward.9} parent=5 // pred_fallthru
      _
    %p137 = scmp.le.s32.totalorder 1, %s9
    %p138 = scmp.lt.s32.totalorder %s9, 3
    %p139 = pnand %p137, %p138
    %p140 = pneg %p139
    // Predicated region
    $region29: #{mpnn_conv_forward.9} parent=5 // pred_check
      _
    $region30: #{mpnn_conv_forward.9} parent=5 // pred_check_branch
      %142 = sbr.rel (%p139) target = $region32
    $region31: #{mpnn_conv_forward.9} parent=5 // pred_region
      %s143 = ssub.s32 %s9, 1
      %s144 = smul.u32 64, %s14
      %p145 = scmp.lt.s32.totalorder %s144, 127
      %s146 = scalar_select %p145, %s144, 127
      %s147 = smul.addr %s146, 8
      %s148 = scalar_lea.vmem %s0, %s147
      %p149 = pneg %p35
      %p150 = pneg %p32
      %p151 = pneg %p56
      %p152 = pneg %p53
      %p153 = pneg %p77
      %p154 = pneg %p74
      %p155 = pneg %p103
      %p156 = pneg %p100
      %s157 = smul.u32 64, %s14
      %p158 = scmp.lt.s32.totalorder %s157, 127
      %s159 = scalar_select %p158, %s157, 127
      %s160 = smul.addr %s159, 8
      %s161 = scalar_lea.vmem %s3, %s160
      %s162 = smul.u32 64, %s14
      %p163 = scmp.lt.s32.totalorder %s162, 127
      %s164 = scalar_select %p163, %s162, 127
      %s165 = smul.addr %s164, 8
      %s166 = scalar_lea.vmem %s0, %s165
      %s167 = smul.u32 64, %s14
      %s168 = smul.u32 64, %s14
      %p169 = scmp.lt.s32.totalorder %s168, 127
      %s170 = scalar_select %p169, %s168, 127
      %s171 = smul.addr %s170, 8
      %s172 = scalar_lea.vmem %s3, %s171
      %s173 = smul.u32 64, %s14
      %v174 = vld [vmem:[%s166] sm:$0xff]
      %v175 = vld [vmem:[%s166 + $0x8] sm:$0xff]
      %v176 = vld [vmem:[%s166 + $0x10] sm:$0xff]
      %v177 = vld [vmem:[%s166 + $0x18] sm:$0xff]
      %v178 = vld [vmem:[%s166 + $0x20] sm:$0xff]
      %v179 = vld [vmem:[%s166 + $0x28] sm:$0xff]
      %v180 = vld [vmem:[%s166 + $0x30] sm:$0xff]
      %v181 = vld [vmem:[%s166 + $0x38] sm:$0xff]
      %v182 = vld [vmem:[%s166 + $0x40] sm:$0xff]
      %v183 = vld [vmem:[%s166 + $0x48] sm:$0xff]
      %v184 = vld [vmem:[%s166 + $0x50] sm:$0xff]
      %v185 = vld [vmem:[%s166 + $0x58] sm:$0xff]
      %v186 = vld [vmem:[%s166 + $0x60] sm:$0xff]
      %v187 = vld [vmem:[%s166 + $0x68] sm:$0xff]
      %v188 = vld [vmem:[%s166 + $0x70] sm:$0xff]
      %v189 = vld [vmem:[%s166 + $0x78] sm:$0xff]
      %v190 = vld [vmem:[%s166 + $0x80] sm:$0xff]
      %v191 = vld [vmem:[%s166 + $0x88] sm:$0xff]
      %v192 = vld [vmem:[%s166 + $0x90] sm:$0xff]
      %v193 = vld [vmem:[%s166 + $0x98] sm:$0xff]
      %v194 = vld [vmem:[%s166 + $0xa0] sm:$0xff]
      %v195 = vld [vmem:[%s166 + $0xa8] sm:$0xff]
      %v196 = vld [vmem:[%s166 + $0xb0] sm:$0xff]
      %v197 = vld [vmem:[%s166 + $0xb8] sm:$0xff]
      %v198 = vld [vmem:[%s166 + $0xc0] sm:$0xff]
      %v199 = vld [vmem:[%s166 + $0xc8] sm:$0xff]
      %v200 = vld [vmem:[%s166 + $0xd0] sm:$0xff]
      %v201 = vld [vmem:[%s166 + $0xd8] sm:$0xff]
      %v202 = vld [vmem:[%s166 + $0xe0] sm:$0xff]
      %v203 = vld [vmem:[%s166 + $0xe8] sm:$0xff]
      %v204 = vld [vmem:[%s166 + $0xf0] sm:$0xff]
      %v205 = vld [vmem:[%s166 + $0xf8] sm:$0xff]
      %v206 = vld [vmem:[%s166 + $0x100] sm:$0xff]
      %v207 = vld [vmem:[%s166 + $0x108] sm:$0xff]
      %v208 = vld [vmem:[%s166 + $0x110] sm:$0xff]
      %v209 = vld [vmem:[%s166 + $0x118] sm:$0xff]
      %v210 = vld [vmem:[%s166 + $0x120] sm:$0xff]
      %v211 = vld [vmem:[%s166 + $0x128] sm:$0xff]
      %v212 = vld [vmem:[%s166 + $0x130] sm:$0xff]
      %v213 = vld [vmem:[%s166 + $0x138] sm:$0xff]
      %v214 = vld [vmem:[%s166 + $0x140] sm:$0xff]
      %v215 = vld [vmem:[%s166 + $0x148] sm:$0xff]
      %v216 = vld [vmem:[%s166 + $0x150] sm:$0xff]
      %v217 = vld [vmem:[%s166 + $0x158] sm:$0xff]
      %v218 = vld [vmem:[%s166 + $0x160] sm:$0xff]
      %v219 = vld [vmem:[%s166 + $0x168] sm:$0xff]
      %v220 = vld [vmem:[%s166 + $0x170] sm:$0xff]
      %v221 = vld [vmem:[%s166 + $0x178] sm:$0xff]
      %v222 = vld [vmem:[%s166 + $0x180] sm:$0xff]
      %v223 = vld [vmem:[%s166 + $0x188] sm:$0xff]
      %v224 = vld [vmem:[%s166 + $0x190] sm:$0xff]
      %v225 = vld [vmem:[%s166 + $0x198] sm:$0xff]
      %v226 = vld [vmem:[%s166 + $0x1a0] sm:$0xff]
      %v227 = vld [vmem:[%s166 + $0x1a8] sm:$0xff]
      %v228 = vld [vmem:[%s166 + $0x1b0] sm:$0xff]
      %v229 = vld [vmem:[%s166 + $0x1b8] sm:$0xff]
      %v230 = vld [vmem:[%s166 + $0x1c0] sm:$0xff]
      %v231 = vld [vmem:[%s166 + $0x1c8] sm:$0xff]
      %v232 = vld [vmem:[%s166 + $0x1d0] sm:$0xff]
      %v233 = vld [vmem:[%s166 + $0x1d8] sm:$0xff]
      %v234 = vld [vmem:[%s166 + $0x1e0] sm:$0xff]
      %v235 = vld [vmem:[%s166 + $0x1e8] sm:$0xff]
      %v236 = vld [vmem:[%s166 + $0x1f0] sm:$0xff]
      %v237 = vld [vmem:[%s166 + $0x1f8] sm:$0xff]
      %v238 = vld [vmem:[%s1] sm:$0x1]
      %v240 = vlaneseq
      %v241 = vshrl.u32 %v240, 7
      %v242 = vsub.s32 0, %v241
      %v243 = vrot.slane %v238, %v242
      %v245 = vmul.f32 %v174, %v243
      %v246 = vmul.f32 %v175, %v243
      %v247 = vmul.f32 %v176, %v243
      %v248 = vmul.f32 %v177, %v243
      %v249 = vmul.f32 %v178, %v243
      %v250 = vmul.f32 %v179, %v243
      %v251 = vmul.f32 %v180, %v243
      %v252 = vmul.f32 %v181, %v243
      %v253 = vmul.f32 %v182, %v243
      %v254 = vmul.f32 %v183, %v243
      %v255 = vmul.f32 %v184, %v243
      %v256 = vmul.f32 %v185, %v243
      %v257 = vmul.f32 %v186, %v243
      %v258 = vmul.f32 %v187, %v243
      %v259 = vmul.f32 %v188, %v243
      %v260 = vmul.f32 %v189, %v243
      %v261 = vmul.f32 %v190, %v243
      %v262 = vmul.f32 %v191, %v243
      %v263 = vmul.f32 %v192, %v243
      %v264 = vmul.f32 %v193, %v243
      %v265 = vmul.f32 %v194, %v243
      %v266 = vmul.f32 %v195, %v243
      %v267 = vmul.f32 %v196, %v243
      %v268 = vmul.f32 %v197, %v243
      %v269 = vmul.f32 %v198, %v243
      %v270 = vmul.f32 %v199, %v243
      %v271 = vmul.f32 %v200, %v243
      %v272 = vmul.f32 %v201, %v243
      %v273 = vmul.f32 %v202, %v243
      %v274 = vmul.f32 %v203, %v243
      %v275 = vmul.f32 %v204, %v243
      %v276 = vmul.f32 %v205, %v243
      %v277 = vmul.f32 %v206, %v243
      %v278 = vmul.f32 %v207, %v243
      %v279 = vmul.f32 %v208, %v243
      %v280 = vmul.f32 %v209, %v243
      %v281 = vmul.f32 %v210, %v243
      %v282 = vmul.f32 %v211, %v243
      %v283 = vmul.f32 %v212, %v243
      %v284 = vmul.f32 %v213, %v243
      %v285 = vmul.f32 %v214, %v243
      %v286 = vmul.f32 %v215, %v243
      %v287 = vmul.f32 %v216, %v243
      %v288 = vmul.f32 %v217, %v243
      %v289 = vmul.f32 %v218, %v243
      %v290 = vmul.f32 %v219, %v243
      %v291 = vmul.f32 %v220, %v243
      %v292 = vmul.f32 %v221, %v243
      %v293 = vmul.f32 %v222, %v243
      %v294 = vmul.f32 %v223, %v243
      %v295 = vmul.f32 %v224, %v243
      %v296 = vmul.f32 %v225, %v243
      %v297 = vmul.f32 %v226, %v243
      %v298 = vmul.f32 %v227, %v243
      %v299 = vmul.f32 %v228, %v243
      %v300 = vmul.f32 %v229, %v243
      %v301 = vmul.f32 %v230, %v243
      %v302 = vmul.f32 %v231, %v243
      %v303 = vmul.f32 %v232, %v243
      %v304 = vmul.f32 %v233, %v243
      %v305 = vmul.f32 %v234, %v243
      %v306 = vmul.f32 %v235, %v243
      %v307 = vmul.f32 %v236, %v243
      %v308 = vmul.f32 %v237, %v243
      %v309 = vld [vmem:[%s2] sm:$0x1]
      %v311 = vlaneseq
      %v312 = vshrl.u32 %v311, 7
      %v313 = vsub.s32 0, %v312
      %v314 = vrot.slane %v309, %v313
      %v316 = vadd.f32 %v245, %v314
      %v317 = vadd.f32 %v246, %v314
      %v318 = vadd.f32 %v247, %v314
      %v319 = vadd.f32 %v248, %v314
      %v320 = vadd.f32 %v249, %v314
      %v321 = vadd.f32 %v250, %v314
      %v322 = vadd.f32 %v251, %v314
      %v323 = vadd.f32 %v252, %v314
      %v324 = vadd.f32 %v253, %v314
      %v325 = vadd.f32 %v254, %v314
      %v326 = vadd.f32 %v255, %v314
      %v327 = vadd.f32 %v256, %v314
      %v328 = vadd.f32 %v257, %v314
      %v329 = vadd.f32 %v258, %v314
      %v330 = vadd.f32 %v259, %v314
      %v331 = vadd.f32 %v260, %v314
      %v332 = vadd.f32 %v261, %v314
      %v333 = vadd.f32 %v262, %v314
      %v334 = vadd.f32 %v263, %v314
      %v335 = vadd.f32 %v264, %v314
      %v336 = vadd.f32 %v265, %v314
      %v337 = vadd.f32 %v266, %v314
      %v338 = vadd.f32 %v267, %v314
      %v339 = vadd.f32 %v268, %v314
      %v340 = vadd.f32 %v269, %v314
      %v341 = vadd.f32 %v270, %v314
      %v342 = vadd.f32 %v271, %v314
      %v343 = vadd.f32 %v272, %v314
      %v344 = vadd.f32 %v273, %v314
      %v345 = vadd.f32 %v274, %v314
      %v346 = vadd.f32 %v275, %v314
      %v347 = vadd.f32 %v276, %v314
      %v348 = vadd.f32 %v277, %v314
      %v349 = vadd.f32 %v278, %v314
      %v350 = vadd.f32 %v279, %v314
      %v351 = vadd.f32 %v280, %v314
      %v352 = vadd.f32 %v281, %v314
      %v353 = vadd.f32 %v282, %v314
      %v354 = vadd.f32 %v283, %v314
      %v355 = vadd.f32 %v284, %v314
      %v356 = vadd.f32 %v285, %v314
      %v357 = vadd.f32 %v286, %v314
      %v358 = vadd.f32 %v287, %v314
      %v359 = vadd.f32 %v288, %v314
      %v360 = vadd.f32 %v289, %v314
      %v361 = vadd.f32 %v290, %v314
      %v362 = vadd.f32 %v291, %v314
      %v363 = vadd.f32 %v292, %v314
      %v364 = vadd.f32 %v293, %v314
      %v365 = vadd.f32 %v294, %v314
      %v366 = vadd.f32 %v295, %v314
      %v367 = vadd.f32 %v296, %v314
      %v368 = vadd.f32 %v297, %v314
      %v369 = vadd.f32 %v298, %v314
      %v370 = vadd.f32 %v299, %v314
      %v371 = vadd.f32 %v300, %v314
      %v372 = vadd.f32 %v301, %v314
      %v373 = vadd.f32 %v302, %v314
      %v374 = vadd.f32 %v303, %v314
      %v375 = vadd.f32 %v304, %v314
      %v376 = vadd.f32 %v305, %v314
      %v377 = vadd.f32 %v306, %v314
      %v378 = vadd.f32 %v307, %v314
      %v379 = vadd.f32 %v308, %v314
      %v380 = vmax.f32 %v316, 0.0
      %v381 = vmax.f32 %v317, 0.0
      %v382 = vmax.f32 %v318, 0.0
      %v383 = vmax.f32 %v319, 0.0
      %v384 = vmax.f32 %v320, 0.0
      %v385 = vmax.f32 %v321, 0.0
      %v386 = vmax.f32 %v322, 0.0
      %v387 = vmax.f32 %v323, 0.0
      %v388 = vmax.f32 %v324, 0.0
      %v389 = vmax.f32 %v325, 0.0
      %v390 = vmax.f32 %v326, 0.0
      %v391 = vmax.f32 %v327, 0.0
      %v392 = vmax.f32 %v328, 0.0
      %v393 = vmax.f32 %v329, 0.0
      %v394 = vmax.f32 %v330, 0.0
      %v395 = vmax.f32 %v331, 0.0
      %v396 = vmax.f32 %v332, 0.0
      %v397 = vmax.f32 %v333, 0.0
      %v398 = vmax.f32 %v334, 0.0
      %v399 = vmax.f32 %v335, 0.0
      %v400 = vmax.f32 %v336, 0.0
      %v401 = vmax.f32 %v337, 0.0
      %v402 = vmax.f32 %v338, 0.0
      %v403 = vmax.f32 %v339, 0.0
      %v404 = vmax.f32 %v340, 0.0
      %v405 = vmax.f32 %v341, 0.0
      %v406 = vmax.f32 %v342, 0.0
      %v407 = vmax.f32 %v343, 0.0
      %v408 = vmax.f32 %v344, 0.0
      %v409 = vmax.f32 %v345, 0.0
      %v410 = vmax.f32 %v346, 0.0
      %v411 = vmax.f32 %v347, 0.0
      %v412 = vmax.f32 %v348, 0.0
      %v413 = vmax.f32 %v349, 0.0
      %v414 = vmax.f32 %v350, 0.0
      %v415 = vmax.f32 %v351, 0.0
      %v416 = vmax.f32 %v352, 0.0
      %v417 = vmax.f32 %v353, 0.0
      %v418 = vmax.f32 %v354, 0.0
      %v419 = vmax.f32 %v355, 0.0
      %v420 = vmax.f32 %v356, 0.0
      %v421 = vmax.f32 %v357, 0.0
      %v422 = vmax.f32 %v358, 0.0
      %v423 = vmax.f32 %v359, 0.0
      %v424 = vmax.f32 %v360, 0.0
      %v425 = vmax.f32 %v361, 0.0
      %v426 = vmax.f32 %v362, 0.0
      %v427 = vmax.f32 %v363, 0.0
      %v428 = vmax.f32 %v364, 0.0
      %v429 = vmax.f32 %v365, 0.0
      %v430 = vmax.f32 %v366, 0.0
      %v431 = vmax.f32 %v367, 0.0
      %v432 = vmax.f32 %v368, 0.0
      %v433 = vmax.f32 %v369, 0.0
      %v434 = vmax.f32 %v370, 0.0
      %v435 = vmax.f32 %v371, 0.0
      %v436 = vmax.f32 %v372, 0.0
      %v437 = vmax.f32 %v373, 0.0
      %v438 = vmax.f32 %v374, 0.0
      %v439 = vmax.f32 %v375, 0.0
      %v440 = vmax.f32 %v376, 0.0
      %v441 = vmax.f32 %v377, 0.0
      %v442 = vmax.f32 %v378, 0.0
      %v443 = vmax.f32 %v379, 0.0
      %444 = vst [vmem:[%s172] sm:$0xff] %v380
      %445 = vst [vmem:[%s172 + $0x8] sm:$0xff] %v381
      %446 = vst [vmem:[%s172 + $0x10] sm:$0xff] %v382
      %447 = vst [vmem:[%s172 + $0x18] sm:$0xff] %v383
      %448 = vst [vmem:[%s172 + $0x20] sm:$0xff] %v384
      %449 = vst [vmem:[%s172 + $0x28] sm:$0xff] %v385
      %450 = vst [vmem:[%s172 + $0x30] sm:$0xff] %v386
      %451 = vst [vmem:[%s172 + $0x38] sm:$0xff] %v387
      %452 = vst [vmem:[%s172 + $0x40] sm:$0xff] %v388
      %453 = vst [vmem:[%s172 + $0x48] sm:$0xff] %v389
      %454 = vst [vmem:[%s172 + $0x50] sm:$0xff] %v390
      %455 = vst [vmem:[%s172 + $0x58] sm:$0xff] %v391
      %456 = vst [vmem:[%s172 + $0x60] sm:$0xff] %v392
      %457 = vst [vmem:[%s172 + $0x68] sm:$0xff] %v393
      %458 = vst [vmem:[%s172 + $0x70] sm:$0xff] %v394
      %459 = vst [vmem:[%s172 + $0x78] sm:$0xff] %v395
      %460 = vst [vmem:[%s172 + $0x80] sm:$0xff] %v396
      %461 = vst [vmem:[%s172 + $0x88] sm:$0xff] %v397
      %462 = vst [vmem:[%s172 + $0x90] sm:$0xff] %v398
      %463 = vst [vmem:[%s172 + $0x98] sm:$0xff] %v399
      %464 = vst [vmem:[%s172 + $0xa0] sm:$0xff] %v400
      %465 = vst [vmem:[%s172 + $0xa8] sm:$0xff] %v401
      %466 = vst [vmem:[%s172 + $0xb0] sm:$0xff] %v402
      %467 = vst [vmem:[%s172 + $0xb8] sm:$0xff] %v403
      %468 = vst [vmem:[%s172 + $0xc0] sm:$0xff] %v404
      %469 = vst [vmem:[%s172 + $0xc8] sm:$0xff] %v405
      %470 = vst [vmem:[%s172 + $0xd0] sm:$0xff] %v406
      %471 = vst [vmem:[%s172 + $0xd8] sm:$0xff] %v407
      %472 = vst [vmem:[%s172 + $0xe0] sm:$0xff] %v408
      %473 = vst [vmem:[%s172 + $0xe8] sm:$0xff] %v409
      %474 = vst [vmem:[%s172 + $0xf0] sm:$0xff] %v410
      %475 = vst [vmem:[%s172 + $0xf8] sm:$0xff] %v411
      %476 = vst [vmem:[%s172 + $0x100] sm:$0xff] %v412
      %477 = vst [vmem:[%s172 + $0x108] sm:$0xff] %v413
      %478 = vst [vmem:[%s172 + $0x110] sm:$0xff] %v414
      %479 = vst [vmem:[%s172 + $0x118] sm:$0xff] %v415
      %480 = vst [vmem:[%s172 + $0x120] sm:$0xff] %v416
      %481 = vst [vmem:[%s172 + $0x128] sm:$0xff] %v417
      %482 = vst [vmem:[%s172 + $0x130] sm:$0xff] %v418
      %483 = vst [vmem:[%s172 + $0x138] sm:$0xff] %v419
      %484 = vst [vmem:[%s172 + $0x140] sm:$0xff] %v420
      %485 = vst [vmem:[%s172 + $0x148] sm:$0xff] %v421
      %486 = vst [vmem:[%s172 + $0x150] sm:$0xff] %v422
      %487 = vst [vmem:[%s172 + $0x158] sm:$0xff] %v423
      %488 = vst [vmem:[%s172 + $0x160] sm:$0xff] %v424
      %489 = vst [vmem:[%s172 + $0x168] sm:$0xff] %v425
      %490 = vst [vmem:[%s172 + $0x170] sm:$0xff] %v426
      %491 = vst [vmem:[%s172 + $0x178] sm:$0xff] %v427
      %492 = vst [vmem:[%s172 + $0x180] sm:$0xff] %v428
      %493 = vst [vmem:[%s172 + $0x188] sm:$0xff] %v429
      %494 = vst [vmem:[%s172 + $0x190] sm:$0xff] %v430
      %495 = vst [vmem:[%s172 + $0x198] sm:$0xff] %v431
      %496 = vst [vmem:[%s172 + $0x1a0] sm:$0xff] %v432
      %497 = vst [vmem:[%s172 + $0x1a8] sm:$0xff] %v433
      %498 = vst [vmem:[%s172 + $0x1b0] sm:$0xff] %v434
      %499 = vst [vmem:[%s172 + $0x1b8] sm:$0xff] %v435
      %500 = vst [vmem:[%s172 + $0x1c0] sm:$0xff] %v436
      %501 = vst [vmem:[%s172 + $0x1c8] sm:$0xff] %v437
      %502 = vst [vmem:[%s172 + $0x1d0] sm:$0xff] %v438
      %503 = vst [vmem:[%s172 + $0x1d8] sm:$0xff] %v439
      %504 = vst [vmem:[%s172 + $0x1e0] sm:$0xff] %v440
      %505 = vst [vmem:[%s172 + $0x1e8] sm:$0xff] %v441
      %506 = vst [vmem:[%s172 + $0x1f0] sm:$0xff] %v442
      %507 = vst [vmem:[%s172 + $0x1f8] sm:$0xff] %v443
      %s508 = smul.u32 64, %s14
      %p509 = scmp.lt.s32.totalorder %s508, 127
      %s510 = scalar_select %p509, %s508, 127
      %s511 = smul.addr %s510, 8
      %s512 = scalar_lea.vmem %s3, %s511
      // Predicated region
      $region33: #{mpnn_conv_forward.9} parent=31 // pred_check
        %p513 = pneg %p100
      $region34: #{mpnn_conv_forward.9} parent=31 // pred_check_branch
        %515 = sbr.rel (%p513) target = $region36
      $region35: #{mpnn_conv_forward.9} parent=31 // pred_region
        %s516 = smul.u32 64, %s14
      $region36: #{mpnn_conv_forward.9} parent=31 // pred_fallthru
        _
    $region32: #{mpnn_conv_forward.9} parent=5 // pred_fallthru
      _
    %p517 = scmp.le.s32.totalorder 2, %s9
    // Predicated region
    $region37: #{mpnn_conv_forward.9} parent=5 // pred_check
      %p518 = pneg %p517
    $region38: #{mpnn_conv_forward.9} parent=5 // pred_check_branch
      %520 = sbr.rel (%p518) target = $region40
    $region39: #{mpnn_conv_forward.9} parent=5 // pred_region
      %s521 = ssub.s32 %s9, 2
      // Predicated region
      $region41: #{mpnn_conv_forward.9} parent=39 // pred_check
        %p522 = pneg %p106
      $region42: #{mpnn_conv_forward.9} parent=39 // pred_check_branch
        %524 = sbr.rel (%p522) target = $region44
      $region43: #{mpnn_conv_forward.9} parent=39 // pred_region
        %s525 = smul.u32 64, %s15
        %p526 = scmp.lt.s32.totalorder %s525, 127
        %s527 = scalar_select %p526, %s525, 127
        %s528 = smul.addr %s527, 8
        %s529 = scalar_lea.vmem %s3, %s528
      $region44: #{mpnn_conv_forward.9} parent=39 // pred_fallthru
        _
    $region40: #{mpnn_conv_forward.9} parent=5 // pred_fallthru
      _
  $region6: #{mpnn_conv_forward.9} parent=0 // loop_footer
    %s13 = sadd.s32 1, %s9
  $region7: #{mpnn_conv_forward.9} parent=0 // loop_footer_branch
    %8 = sbr.rel target = $region3
  $region8: #{mpnn_conv_forward.9} parent=0 // loop_exit
    _

// kernel: mpnn_conv_forward.8
$region0: #{mpnn_conv_forward.8}
  #allocation0 [shape = 'u32[]', space=smem, size = 0x4, offset = 0x4, fixed_abs, tag = 'smem constant byte address 0x4 - core index']
  #allocation1 [shape = 'u32[144,128]{1,0:T(1,128)}', space=vmem, size = 0x12000, scoped, tag = 'internal scratch']
  %s0 = inlined_call_operand.vmem [shape: f32[1024,128], index: 0, kind: input, shape index: {}]
  %s1 = inlined_call_operand.vmem [shape: f32[1,128], index: 1, kind: input, shape index: {}]
  %s2 = inlined_call_operand.vmem [shape: f32[1,128], index: 2, kind: input, shape index: {}]
  %s3 = inlined_call_operand.vmem [shape: f32[128,128], index: 3, kind: input, shape index: {}]
  %s4 = inlined_call_operand.vmem [shape: f32[1,128], index: 4, kind: input, shape index: {}]
  %s5 = inlined_call_operand.vmem [shape: f32[1024,128], index: 5, kind: output, shape index: {0}]
  %s6 = inlined_call_operand.vmem [shape: f32[2,1,128], index: 6, kind: output, shape index: {1}]
  %s7 = inlined_call_operand.vmem [shape: f32[2,1,128], index: 7, kind: output, shape index: {2}]
  %8 = xla_tuple %s5, %s6, %s7
  %s9 = sld [smem:[#allocation0]]
  $region69: #{mpnn_conv_forward.8} parent=0
    _
  %s11 = ssub.s32 1, %s9
  %s12 = scalar_select 0, %s11, %s9
  loop: start=0, step=1, limit=4
  $region2: #{mpnn_conv_forward.8} parent=0 // loop_pre_header
    _
  $region3: #{mpnn_conv_forward.8} parent=0 // loop_header
    %s14 = sphi 0, %s18
    %p15 = scmp.ge.s32.totalorder %s14, 4
    %s24 = sphi 0, %s26
    %s27 = sphi 0, %s24
    %s28 = sphi 0, %s27
    %s44 = sphi 0, %s28
    %s48 = sphi 0, %s48
    %s50 = sphi 0, %s48
    %s51 = sphi 0, %s50
    %s65 = sphi 0, %s51
    %s69 = sphi 0, %s69
    %s71 = sphi 0, %s69
    %s72 = sphi 0, %s71
    %s86 = sphi 0, %s72
    %s90 = sphi 0, %s90
    %s92 = sphi 0, %s90
    %s93 = sphi 0, %s92
    %s107 = sphi 0, %s93
    %s111 = sphi 0, %s111
    %s113 = sphi 0, %s111
    %s114 = sphi 0, %s113
    %s128 = sphi 0, %s114
    %s134 = sphi 0, %s136
    %s137 = sphi 0, %s134
    %s138 = sphi 0, %s137
    %s154 = sphi 0, %s138
    %s160 = sphi 0, %s162
    %s163 = sphi 0, %s160
    %s164 = sphi 0, %s163
    %s180 = sphi 0, %s164
    %s186 = sphi 0, %s188
    %s189 = sphi 0, %s186
    %s190 = sphi 0, %s189
    %s206 = sphi 0, %s190
  $region4: #{mpnn_conv_forward.8} parent=0 // loop_header_branch
    %17 = sbr.rel (%p15) target = $region8
  $region5: #{mpnn_conv_forward.8} parent=0 // loop_body
    %s19 = ssub.s32 %s14, 1
    %s20 = ssub.s32 %s14, 2
    %s21 = sadd.s32 %s14, 1
    %s22 = ssub.s32 %s14, %s21
    %p23 = scmp.eq.s32.totalorder %s22, 0
    %s25 = sadd.s32 %s24, 1
    %s26 = scalar_select %p23, %s24, %s25
    %p29 = pneg %p23
    %p30 = scmp.eq.s32.totalorder %s14, 1
    %p31 = por %p29, %p30
    %p32 = scmp.ne.s32.totalorder %s24, %s27
    %p33 = scmp.eq.s32.totalorder %s14, 0
    %p34 = por %p32, %p33
    %p35 = scmp.ne.s32.totalorder %s24, %s27
    %p36 = scmp.eq.s32.totalorder %s19, 1
    %p37 = por %p35, %p36
    %p38 = scmp.ne.s32.totalorder %s27, %s28
    %p39 = scmp.eq.s32.totalorder %s19, 0
    %p40 = por %p38, %p39
    %p41 = scmp.ne.s32.totalorder %s27, %s28
    %p42 = scmp.eq.s32.totalorder %s20, 1
    %p43 = por %p41, %p42
    %p45 = scmp.ne.s32.totalorder %s28, %s44
    %p46 = scmp.eq.s32.totalorder %s20, 0
    %p47 = por %p45, %p46
    %s49 = sadd.s32 %s48, 1
    %p52 = scmp.eq.s32.totalorder %s14, 1
    %p53 = scmp.ne.s32.totalorder %s48, %s50
    %p54 = scmp.eq.s32.totalorder %s14, 0
    %p55 = por %p53, %p54
    %p56 = scmp.ne.s32.totalorder %s48, %s50
    %p57 = scmp.eq.s32.totalorder %s19, 1
    %p58 = por %p56, %p57
    %p59 = scmp.ne.s32.totalorder %s50, %s51
    %p60 = scmp.eq.s32.totalorder %s19, 0
    %p61 = por %p59, %p60
    %p62 = scmp.ne.s32.totalorder %s50, %s51
    %p63 = scmp.eq.s32.totalorder %s20, 1
    %p64 = por %p62, %p63
    %p66 = scmp.ne.s32.totalorder %s51, %s65
    %p67 = scmp.eq.s32.totalorder %s20, 0
    %p68 = por %p66, %p67
    %s70 = sadd.s32 %s69, 1
    %p73 = scmp.eq.s32.totalorder %s14, 1
    %p74 = scmp.ne.s32.totalorder %s69, %s71
    %p75 = scmp.eq.s32.totalorder %s14, 0
    %p76 = por %p74, %p75
    %p77 = scmp.ne.s32.totalorder %s69, %s71
    %p78 = scmp.eq.s32.totalorder %s19, 1
    %p79 = por %p77, %p78
    %p80 = scmp.ne.s32.totalorder %s71, %s72
    %p81 = scmp.eq.s32.totalorder %s19, 0
    %p82 = por %p80, %p81
    %p83 = scmp.ne.s32.totalorder %s71, %s72
    %p84 = scmp.eq.s32.totalorder %s20, 1
    %p85 = por %p83, %p84
    %p87 = scmp.ne.s32.totalorder %s72, %s86
    %p88 = scmp.eq.s32.totalorder %s20, 0
    %p89 = por %p87, %p88
    %s91 = sadd.s32 %s90, 1
    %p94 = scmp.eq.s32.totalorder %s14, 1
    %p95 = scmp.ne.s32.totalorder %s90, %s92
    %p96 = scmp.eq.s32.totalorder %s14, 0
    %p97 = por %p95, %p96
    %p98 = scmp.ne.s32.totalorder %s90, %s92
    %p99 = scmp.eq.s32.totalorder %s19, 1
    %p100 = por %p98, %p99
    %p101 = scmp.ne.s32.totalorder %s92, %s93
    %p102 = scmp.eq.s32.totalorder %s19, 0
    %p103 = por %p101, %p102
    %p104 = scmp.ne.s32.totalorder %s92, %s93
    %p105 = scmp.eq.s32.totalorder %s20, 1
    %p106 = por %p104, %p105
    %p108 = scmp.ne.s32.totalorder %s93, %s107
    %p109 = scmp.eq.s32.totalorder %s20, 0
    %p110 = por %p108, %p109
    %s112 = sadd.s32 %s111, 1
    %p115 = scmp.eq.s32.totalorder %s14, 1
    %p116 = scmp.ne.s32.totalorder %s111, %s113
    %p117 = scmp.eq.s32.totalorder %s14, 0
    %p118 = por %p116, %p117
    %p119 = scmp.ne.s32.totalorder %s111, %s113
    %p120 = scmp.eq.s32.totalorder %s19, 1
    %p121 = por %p119, %p120
    %p122 = scmp.ne.s32.totalorder %s113, %s114
    %p123 = scmp.eq.s32.totalorder %s19, 0
    %p124 = por %p122, %p123
    %p125 = scmp.ne.s32.totalorder %s113, %s114
    %p126 = scmp.eq.s32.totalorder %s20, 1
    %p127 = por %p125, %p126
    %p129 = scmp.ne.s32.totalorder %s114, %s128
    %p130 = scmp.eq.s32.totalorder %s20, 0
    %p131 = por %p129, %p130
    %s132 = ssub.s32 %s14, %s21
    %p133 = scmp.eq.s32.totalorder %s132, 0
    %s135 = sadd.s32 %s134, 1
    %s136 = scalar_select %p133, %s134, %s135
    %p139 = pneg %p133
    %p140 = scmp.eq.s32.totalorder %s14, 1
    %p141 = por %p139, %p140
    %p142 = scmp.ne.s32.totalorder %s134, %s137
    %p143 = scmp.eq.s32.totalorder %s14, 0
    %p144 = por %p142, %p143
    %p145 = scmp.ne.s32.totalorder %s134, %s137
    %p146 = scmp.eq.s32.totalorder %s19, 1
    %p147 = por %p145, %p146
    %p148 = scmp.ne.s32.totalorder %s137, %s138
    %p149 = scmp.eq.s32.totalorder %s19, 0
    %p150 = por %p148, %p149
    %p151 = scmp.ne.s32.totalorder %s137, %s138
    %p152 = scmp.eq.s32.totalorder %s20, 1
    %p153 = por %p151, %p152
    %p155 = scmp.ne.s32.totalorder %s138, %s154
    %p156 = scmp.eq.s32.totalorder %s20, 0
    %p157 = por %p155, %p156
    %s158 = ssub.s32 %s14, %s21
    %p159 = scmp.eq.s32.totalorder %s158, 0
    %s161 = sadd.s32 %s160, 1
    %s162 = scalar_select %p159, %s160, %s161
    %p165 = pneg %p159
    %p166 = scmp.eq.s32.totalorder %s14, 1
    %p167 = por %p165, %p166
    %p168 = scmp.ne.s32.totalorder %s160, %s163
    %p169 = scmp.eq.s32.totalorder %s14, 0
    %p170 = por %p168, %p169
    %p171 = scmp.ne.s32.totalorder %s160, %s163
    %p172 = scmp.eq.s32.totalorder %s19, 1
    %p173 = por %p171, %p172
    %p174 = scmp.ne.s32.totalorder %s163, %s164
    %p175 = scmp.eq.s32.totalorder %s19, 0
    %p176 = por %p174, %p175
    %p177 = scmp.ne.s32.totalorder %s163, %s164
    %p178 = scmp.eq.s32.totalorder %s20, 1
    %p179 = por %p177, %p178
    %p181 = scmp.ne.s32.totalorder %s164, %s180
    %p182 = scmp.eq.s32.totalorder %s20, 0
    %p183 = por %p181, %p182
    %s184 = ssub.s32 %s14, %s21
    %p185 = scmp.eq.s32.totalorder %s184, 0
    %s187 = sadd.s32 %s186, 1
    %s188 = scalar_select %p185, %s186, %s187
    %p191 = pneg %p185
    %p192 = scmp.eq.s32.totalorder %s14, 1
    %p193 = por %p191, %p192
    %p194 = scmp.ne.s32.totalorder %s186, %s189
    %p195 = scmp.eq.s32.totalorder %s14, 0
    %p196 = por %p194, %p195
    %p197 = scmp.ne.s32.totalorder %s186, %s189
    %p198 = scmp.eq.s32.totalorder %s19, 1
    %p199 = por %p197, %p198
    %p200 = scmp.ne.s32.totalorder %s189, %s190
    %p201 = scmp.eq.s32.totalorder %s19, 0
    %p202 = por %p200, %p201
    %p203 = scmp.ne.s32.totalorder %s189, %s190
    %p204 = scmp.eq.s32.totalorder %s20, 1
    %p205 = por %p203, %p204
    %p207 = scmp.ne.s32.totalorder %s190, %s206
    %p208 = scmp.eq.s32.totalorder %s20, 0
    %p209 = por %p207, %p208
    %p210 = scmp.le.s32.totalorder 1, %s14
    %p211 = scmp.lt.s32.totalorder %s14, 3
    %p212 = pnand %p210, %p211
    %p213 = pneg %p212
    // Predicated region
    $region9: #{mpnn_conv_forward.8} parent=5 // pred_check
      _
    $region10: #{mpnn_conv_forward.8} parent=5 // pred_check_branch
      %215 = sbr.rel (%p212) target = $region12
    $region11: #{mpnn_conv_forward.8} parent=5 // pred_region
      %s216 = ssub.s32 %s14, 1
      // Predicated region
      $region13: #{mpnn_conv_forward.8} parent=11 // pred_check
        %p217 = pneg %p61
      $region14: #{mpnn_conv_forward.8} parent=11 // pred_check_branch
        %219 = sbr.rel (%p217) target = $region16
      $region15: #{mpnn_conv_forward.8} parent=11 // pred_region
        _
      $region16: #{mpnn_conv_forward.8} parent=11 // pred_fallthru
        _
      // Predicated region
      $region17: #{mpnn_conv_forward.8} parent=11 // pred_check
        %p220 = pneg %p82
      $region18: #{mpnn_conv_forward.8} parent=11 // pred_check_branch
        %222 = sbr.rel (%p220) target = $region20
      $region19: #{mpnn_conv_forward.8} parent=11 // pred_region
        _
      $region20: #{mpnn_conv_forward.8} parent=11 // pred_fallthru
        _
      // Predicated region
      $region21: #{mpnn_conv_forward.8} parent=11 // pred_check
        %p223 = pneg %p103
      $region22: #{mpnn_conv_forward.8} parent=11 // pred_check_branch
        %225 = sbr.rel (%p223) target = $region24
      $region23: #{mpnn_conv_forward.8} parent=11 // pred_region
        _
      $region24: #{mpnn_conv_forward.8} parent=11 // pred_fallthru
        _
      // Predicated region
      $region25: #{mpnn_conv_forward.8} parent=11 // pred_check
        %p226 = pneg %p124
      $region26: #{mpnn_conv_forward.8} parent=11 // pred_check_branch
        %228 = sbr.rel (%p226) target = $region28
      $region27: #{mpnn_conv_forward.8} parent=11 // pred_region
        _
      $region28: #{mpnn_conv_forward.8} parent=11 // pred_fallthru
        _
    $region12: #{mpnn_conv_forward.8} parent=5 // pred_fallthru
      _
    %p229 = scmp.lt.s32.totalorder %s14, 2
    // Predicated region
    $region29: #{mpnn_conv_forward.8} parent=5 // pred_check
      %p230 = pneg %p229
    $region30: #{mpnn_conv_forward.8} parent=5 // pred_check_branch
      %232 = sbr.rel (%p230) target = $region32
    $region31: #{mpnn_conv_forward.8} parent=5 // pred_region
      // Predicated region
      $region33: #{mpnn_conv_forward.8} parent=31 // pred_check
        %p233 = pneg %p34
      $region34: #{mpnn_conv_forward.8} parent=31 // pred_check_branch
        %235 = sbr.rel (%p233) target = $region36
      $region35: #{mpnn_conv_forward.8} parent=31 // pred_region
        %s236 = smul.u32 64, %s14
        %p237 = scmp.lt.s32.totalorder %s236, 127
        %s238 = scalar_select %p237, %s236, 127
        %s239 = smul.addr %s238, 8
        %s240 = scalar_lea.vmem %s0, %s239
        %s241 = smul.u32 64, %s14
      $region36: #{mpnn_conv_forward.8} parent=31 // pred_fallthru
        _
    $region32: #{mpnn_conv_forward.8} parent=5 // pred_fallthru
      _
    %p242 = scmp.le.s32.totalorder 1, %s14
    %p243 = scmp.lt.s32.totalorder %s14, 3
    %p244 = pnand %p242, %p243
    %p245 = pneg %p244
    // Predicated region
    $region37: #{mpnn_conv_forward.8} parent=5 // pred_check
      _
    $region38: #{mpnn_conv_forward.8} parent=5 // pred_check_branch
      %247 = sbr.rel (%p244) target = $region40
    $region39: #{mpnn_conv_forward.8} parent=5 // pred_region
      %s248 = ssub.s32 %s14, 1
      %s249 = smul.u32 64, %s19
      %p250 = scmp.lt.s32.totalorder %s249, 127
      %s251 = scalar_select %p250, %s249, 127
      %s252 = smul.addr %s251, 8
      %s253 = scalar_lea.vmem %s0, %s252
      %p254 = pneg %p40
      %p255 = pneg %p37
      %p256 = pneg %p61
      %p257 = pneg %p58
      %p258 = pneg %p82
      %p259 = pneg %p79
      %p260 = pneg %p103
      %p261 = pneg %p100
      %p262 = pneg %p124
      %p263 = pneg %p121
      %p264 = pneg %p150
      %p265 = pneg %p147
      %s266 = smul.u32 64, %s19
      %p267 = scmp.lt.s32.totalorder %s266, 127
      %s268 = scalar_select %p267, %s266, 127
      %s269 = smul.addr %s268, 8
      %s270 = scalar_lea.vmem %s5, %s269
      %p271 = pneg %p176
      %p272 = pneg %p173
      %p273 = scmp.lt.s32.totalorder %s19, 1
      %s274 = scalar_select %p273, %s19, 1
      %s275 = scalar_lea.vmem %s6, %s274
      %p276 = pneg %p202
      %p277 = pneg %p199
      %p278 = scmp.lt.s32.totalorder %s19, 1
      %s279 = scalar_select %p278, %s19, 1
      %s280 = scalar_lea.vmem %s7, %s279
      %s281 = smul.u32 64, %s19
      %p282 = scmp.lt.s32.totalorder %s281, 127
      %s283 = scalar_select %p282, %s281, 127
      %s284 = smul.addr %s283, 8
      %s285 = scalar_lea.vmem %s0, %s284
      %s286 = smul.u32 64, %s19
      %s287 = smul.u32 64, %s19
      %p288 = scmp.lt.s32.totalorder %s287, 127
      %s289 = scalar_select %p288, %s287, 127
      %s290 = smul.addr %s289, 8
      %s291 = scalar_lea.vmem %s5, %s290
      %s292 = smul.u32 64, %s19
      %p293 = scmp.lt.s32.totalorder %s19, 1
      %s294 = scalar_select %p293, %s19, 1
      %s295 = scalar_lea.vmem %s6, %s294
      %p296 = scmp.lt.s32.totalorder %s19, 1
      %s297 = scalar_select %p296, %s19, 1
      %s298 = scalar_lea.vmem %s7, %s297
      %v299 = vld [vmem:[%s285] sm:$0xff]
      %v300 = vld [vmem:[%s285 + $0x8] sm:$0xff]
      %v301 = vld [vmem:[%s285 + $0x10] sm:$0xff]
      %v302 = vld [vmem:[%s285 + $0x18] sm:$0xff]
      %v303 = vld [vmem:[%s285 + $0x20] sm:$0xff]
      %v304 = vld [vmem:[%s285 + $0x28] sm:$0xff]
      %v305 = vld [vmem:[%s285 + $0x30] sm:$0xff]
      %v306 = vld [vmem:[%s285 + $0x38] sm:$0xff]
      %v307 = vld [vmem:[%s285 + $0x40] sm:$0xff]
      %v308 = vld [vmem:[%s285 + $0x48] sm:$0xff]
      %v309 = vld [vmem:[%s285 + $0x50] sm:$0xff]
      %v310 = vld [vmem:[%s285 + $0x58] sm:$0xff]
      %v311 = vld [vmem:[%s285 + $0x60] sm:$0xff]
      %v312 = vld [vmem:[%s285 + $0x68] sm:$0xff]
      %v313 = vld [vmem:[%s285 + $0x70] sm:$0xff]
      %v314 = vld [vmem:[%s285 + $0x78] sm:$0xff]
      %v315 = vld [vmem:[%s285 + $0x80] sm:$0xff]
      %v316 = vld [vmem:[%s285 + $0x88] sm:$0xff]
      %v317 = vld [vmem:[%s285 + $0x90] sm:$0xff]
      %v318 = vld [vmem:[%s285 + $0x98] sm:$0xff]
      %v319 = vld [vmem:[%s285 + $0xa0] sm:$0xff]
      %v320 = vld [vmem:[%s285 + $0xa8] sm:$0xff]
      %v321 = vld [vmem:[%s285 + $0xb0] sm:$0xff]
      %v322 = vld [vmem:[%s285 + $0xb8] sm:$0xff]
      %v323 = vld [vmem:[%s285 + $0xc0] sm:$0xff]
      %v324 = vld [vmem:[%s285 + $0xc8] sm:$0xff]
      %v325 = vld [vmem:[%s285 + $0xd0] sm:$0xff]
      %v326 = vld [vmem:[%s285 + $0xd8] sm:$0xff]
      %v327 = vld [vmem:[%s285 + $0xe0] sm:$0xff]
      %v328 = vld [vmem:[%s285 + $0xe8] sm:$0xff]
      %v329 = vld [vmem:[%s285 + $0xf0] sm:$0xff]
      %v330 = vld [vmem:[%s285 + $0xf8] sm:$0xff]
      %v331 = vld [vmem:[%s285 + $0x100] sm:$0xff]
      %v332 = vld [vmem:[%s285 + $0x108] sm:$0xff]
      %v333 = vld [vmem:[%s285 + $0x110] sm:$0xff]
      %v334 = vld [vmem:[%s285 + $0x118] sm:$0xff]
      %v335 = vld [vmem:[%s285 + $0x120] sm:$0xff]
      %v336 = vld [vmem:[%s285 + $0x128] sm:$0xff]
      %v337 = vld [vmem:[%s285 + $0x130] sm:$0xff]
      %v338 = vld [vmem:[%s285 + $0x138] sm:$0xff]
      %v339 = vld [vmem:[%s285 + $0x140] sm:$0xff]
      %v340 = vld [vmem:[%s285 + $0x148] sm:$0xff]
      %v341 = vld [vmem:[%s285 + $0x150] sm:$0xff]
      %v342 = vld [vmem:[%s285 + $0x158] sm:$0xff]
      %v343 = vld [vmem:[%s285 + $0x160] sm:$0xff]
      %v344 = vld [vmem:[%s285 + $0x168] sm:$0xff]
      %v345 = vld [vmem:[%s285 + $0x170] sm:$0xff]
      %v346 = vld [vmem:[%s285 + $0x178] sm:$0xff]
      %v347 = vld [vmem:[%s285 + $0x180] sm:$0xff]
      %v348 = vld [vmem:[%s285 + $0x188] sm:$0xff]
      %v349 = vld [vmem:[%s285 + $0x190] sm:$0xff]
      %v350 = vld [vmem:[%s285 + $0x198] sm:$0xff]
      %v351 = vld [vmem:[%s285 + $0x1a0] sm:$0xff]
      %v352 = vld [vmem:[%s285 + $0x1a8] sm:$0xff]
      %v353 = vld [vmem:[%s285 + $0x1b0] sm:$0xff]
      %v354 = vld [vmem:[%s285 + $0x1b8] sm:$0xff]
      %v355 = vld [vmem:[%s285 + $0x1c0] sm:$0xff]
      %v356 = vld [vmem:[%s285 + $0x1c8] sm:$0xff]
      %v357 = vld [vmem:[%s285 + $0x1d0] sm:$0xff]
      %v358 = vld [vmem:[%s285 + $0x1d8] sm:$0xff]
      %v359 = vld [vmem:[%s285 + $0x1e0] sm:$0xff]
      %v360 = vld [vmem:[%s285 + $0x1e8] sm:$0xff]
      %v361 = vld [vmem:[%s285 + $0x1f0] sm:$0xff]
      %v362 = vld [vmem:[%s285 + $0x1f8] sm:$0xff]
      %v363 = vld [vmem:[%s1] sm:$0x1]
      %v365 = vlaneseq
      %v366 = vshrl.u32 %v365, 7
      %v367 = vsub.s32 0, %v366
      %v368 = vrot.slane %v363, %v367
      %v370 = vmul.f32 %v299, %v368
      %v371 = vmul.f32 %v300, %v368
      %v372 = vmul.f32 %v301, %v368
      %v373 = vmul.f32 %v302, %v368
      %v374 = vmul.f32 %v303, %v368
      %v375 = vmul.f32 %v304, %v368
      %v376 = vmul.f32 %v305, %v368
      %v377 = vmul.f32 %v306, %v368
      %v378 = vmul.f32 %v307, %v368
      %v379 = vmul.f32 %v308, %v368
      %v380 = vmul.f32 %v309, %v368
      %v381 = vmul.f32 %v310, %v368
      %v382 = vmul.f32 %v311, %v368
      %v383 = vmul.f32 %v312, %v368
      %v384 = vmul.f32 %v313, %v368
      %v385 = vmul.f32 %v314, %v368
      %v386 = vmul.f32 %v315, %v368
      %v387 = vmul.f32 %v316, %v368
      %v388 = vmul.f32 %v317, %v368
      %v389 = vmul.f32 %v318, %v368
      %v390 = vmul.f32 %v319, %v368
      %v391 = vmul.f32 %v320, %v368
      %v392 = vmul.f32 %v321, %v368
      %v393 = vmul.f32 %v322, %v368
      %v394 = vmul.f32 %v323, %v368
      %v395 = vmul.f32 %v324, %v368
      %v396 = vmul.f32 %v325, %v368
      %v397 = vmul.f32 %v326, %v368
      %v398 = vmul.f32 %v327, %v368
      %v399 = vmul.f32 %v328, %v368
      %v400 = vmul.f32 %v329, %v368
      %v401 = vmul.f32 %v330, %v368
      %v402 = vmul.f32 %v331, %v368
      %v403 = vmul.f32 %v332, %v368
      %v404 = vmul.f32 %v333, %v368
      %v405 = vmul.f32 %v334, %v368
      %v406 = vmul.f32 %v335, %v368
      %v407 = vmul.f32 %v336, %v368
      %v408 = vmul.f32 %v337, %v368
      %v409 = vmul.f32 %v338, %v368
      %v410 = vmul.f32 %v339, %v368
      %v411 = vmul.f32 %v340, %v368
      %v412 = vmul.f32 %v341, %v368
      %v413 = vmul.f32 %v342, %v368
      %v414 = vmul.f32 %v343, %v368
      %v415 = vmul.f32 %v344, %v368
      %v416 = vmul.f32 %v345, %v368
      %v417 = vmul.f32 %v346, %v368
      %v418 = vmul.f32 %v347, %v368
      %v419 = vmul.f32 %v348, %v368
      %v420 = vmul.f32 %v349, %v368
      %v421 = vmul.f32 %v350, %v368
      %v422 = vmul.f32 %v351, %v368
      %v423 = vmul.f32 %v352, %v368
      %v424 = vmul.f32 %v353, %v368
      %v425 = vmul.f32 %v354, %v368
      %v426 = vmul.f32 %v355, %v368
      %v427 = vmul.f32 %v356, %v368
      %v428 = vmul.f32 %v357, %v368
      %v429 = vmul.f32 %v358, %v368
      %v430 = vmul.f32 %v359, %v368
      %v431 = vmul.f32 %v360, %v368
      %v432 = vmul.f32 %v361, %v368
      %v433 = vmul.f32 %v362, %v368
      %v434 = vld [vmem:[%s2] sm:$0x1]
      %v436 = vlaneseq
      %v437 = vshrl.u32 %v436, 7
      %v438 = vsub.s32 0, %v437
      %v439 = vrot.slane %v434, %v438
      %v441 = vadd.f32 %v370, %v439
      %v442 = vadd.f32 %v371, %v439
      %v443 = vadd.f32 %v372, %v439
      %v444 = vadd.f32 %v373, %v439
      %v445 = vadd.f32 %v374, %v439
      %v446 = vadd.f32 %v375, %v439
      %v447 = vadd.f32 %v376, %v439
      %v448 = vadd.f32 %v377, %v439
      %v449 = vadd.f32 %v378, %v439
      %v450 = vadd.f32 %v379, %v439
      %v451 = vadd.f32 %v380, %v439
      %v452 = vadd.f32 %v381, %v439
      %v453 = vadd.f32 %v382, %v439
      %v454 = vadd.f32 %v383, %v439
      %v455 = vadd.f32 %v384, %v439
      %v456 = vadd.f32 %v385, %v439
      %v457 = vadd.f32 %v386, %v439
      %v458 = vadd.f32 %v387, %v439
      %v459 = vadd.f32 %v388, %v439
      %v460 = vadd.f32 %v389, %v439
      %v461 = vadd.f32 %v390, %v439
      %v462 = vadd.f32 %v391, %v439
      %v463 = vadd.f32 %v392, %v439
      %v464 = vadd.f32 %v393, %v439
      %v465 = vadd.f32 %v394, %v439
      %v466 = vadd.f32 %v395, %v439
      %v467 = vadd.f32 %v396, %v439
      %v468 = vadd.f32 %v397, %v439
      %v469 = vadd.f32 %v398, %v439
      %v470 = vadd.f32 %v399, %v439
      %v471 = vadd.f32 %v400, %v439
      %v472 = vadd.f32 %v401, %v439
      %v473 = vadd.f32 %v402, %v439
      %v474 = vadd.f32 %v403, %v439
      %v475 = vadd.f32 %v404, %v439
      %v476 = vadd.f32 %v405, %v439
      %v477 = vadd.f32 %v406, %v439
      %v478 = vadd.f32 %v407, %v439
      %v479 = vadd.f32 %v408, %v439
      %v480 = vadd.f32 %v409, %v439
      %v481 = vadd.f32 %v410, %v439
      %v482 = vadd.f32 %v411, %v439
      %v483 = vadd.f32 %v412, %v439
      %v484 = vadd.f32 %v413, %v439
      %v485 = vadd.f32 %v414, %v439
      %v486 = vadd.f32 %v415, %v439
      %v487 = vadd.f32 %v416, %v439
      %v488 = vadd.f32 %v417, %v439
      %v489 = vadd.f32 %v418, %v439
      %v490 = vadd.f32 %v419, %v439
      %v491 = vadd.f32 %v420, %v439
      %v492 = vadd.f32 %v421, %v439
      %v493 = vadd.f32 %v422, %v439
      %v494 = vadd.f32 %v423, %v439
      %v495 = vadd.f32 %v424, %v439
      %v496 = vadd.f32 %v425, %v439
      %v497 = vadd.f32 %v426, %v439
      %v498 = vadd.f32 %v427, %v439
      %v499 = vadd.f32 %v428, %v439
      %v500 = vadd.f32 %v429, %v439
      %v501 = vadd.f32 %v430, %v439
      %v502 = vadd.f32 %v431, %v439
      %v503 = vadd.f32 %v432, %v439
      %v504 = vadd.f32 %v433, %v439
      %v505 = vmax.f32 %v441, 0.0
      %v506 = vmax.f32 %v442, 0.0
      %v507 = vmax.f32 %v443, 0.0
      %v508 = vmax.f32 %v444, 0.0
      %v509 = vmax.f32 %v445, 0.0
      %v510 = vmax.f32 %v446, 0.0
      %v511 = vmax.f32 %v447, 0.0
      %v512 = vmax.f32 %v448, 0.0
      %v513 = vmax.f32 %v449, 0.0
      %v514 = vmax.f32 %v450, 0.0
      %v515 = vmax.f32 %v451, 0.0
      %v516 = vmax.f32 %v452, 0.0
      %v517 = vmax.f32 %v453, 0.0
      %v518 = vmax.f32 %v454, 0.0
      %v519 = vmax.f32 %v455, 0.0
      %v520 = vmax.f32 %v456, 0.0
      %v521 = vmax.f32 %v457, 0.0
      %v522 = vmax.f32 %v458, 0.0
      %v523 = vmax.f32 %v459, 0.0
      %v524 = vmax.f32 %v460, 0.0
      %v525 = vmax.f32 %v461, 0.0
      %v526 = vmax.f32 %v462, 0.0
      %v527 = vmax.f32 %v463, 0.0
      %v528 = vmax.f32 %v464, 0.0
      %v529 = vmax.f32 %v465, 0.0
      %v530 = vmax.f32 %v466, 0.0
      %v531 = vmax.f32 %v467, 0.0
      %v532 = vmax.f32 %v468, 0.0
      %v533 = vmax.f32 %v469, 0.0
      %v534 = vmax.f32 %v470, 0.0
      %v535 = vmax.f32 %v471, 0.0
      %v536 = vmax.f32 %v472, 0.0
      %v537 = vmax.f32 %v473, 0.0
      %v538 = vmax.f32 %v474, 0.0
      %v539 = vmax.f32 %v475, 0.0
      %v540 = vmax.f32 %v476, 0.0
      %v541 = vmax.f32 %v477, 0.0
      %v542 = vmax.f32 %v478, 0.0
      %v543 = vmax.f32 %v479, 0.0
      %v544 = vmax.f32 %v480, 0.0
      %v545 = vmax.f32 %v481, 0.0
      %v546 = vmax.f32 %v482, 0.0
      %v547 = vmax.f32 %v483, 0.0
      %v548 = vmax.f32 %v484, 0.0
      %v549 = vmax.f32 %v485, 0.0
      %v550 = vmax.f32 %v486, 0.0
      %v551 = vmax.f32 %v487, 0.0
      %v552 = vmax.f32 %v488, 0.0
      %v553 = vmax.f32 %v489, 0.0
      %v554 = vmax.f32 %v490, 0.0
      %v555 = vmax.f32 %v491, 0.0
      %v556 = vmax.f32 %v492, 0.0
      %v557 = vmax.f32 %v493, 0.0
      %v558 = vmax.f32 %v494, 0.0
      %v559 = vmax.f32 %v495, 0.0
      %v560 = vmax.f32 %v496, 0.0
      %v561 = vmax.f32 %v497, 0.0
      %v562 = vmax.f32 %v498, 0.0
      %v563 = vmax.f32 %v499, 0.0
      %v564 = vmax.f32 %v500, 0.0
      %v565 = vmax.f32 %v501, 0.0
      %v566 = vmax.f32 %v502, 0.0
      %v567 = vmax.f32 %v503, 0.0
      %v568 = vmax.f32 %v504, 0.0
      %v569 = vld [vmem:[%s3] sm:$0xff]
      %v570 = vld [vmem:[%s3 + $0x8] sm:$0xff]
      %v571 = vld [vmem:[%s3 + $0x10] sm:$0xff]
      %v572 = vld [vmem:[%s3 + $0x18] sm:$0xff]
      %v573 = vld [vmem:[%s3 + $0x20] sm:$0xff]
      %v574 = vld [vmem:[%s3 + $0x28] sm:$0xff]
      %v575 = vld [vmem:[%s3 + $0x30] sm:$0xff]
      %v576 = vld [vmem:[%s3 + $0x38] sm:$0xff]
      %v577 = vld [vmem:[%s3 + $0x40] sm:$0xff]
      %v578 = vld [vmem:[%s3 + $0x48] sm:$0xff]
      %v579 = vld [vmem:[%s3 + $0x50] sm:$0xff]
      %v580 = vld [vmem:[%s3 + $0x58] sm:$0xff]
      %v581 = vld [vmem:[%s3 + $0x60] sm:$0xff]
      %v582 = vld [vmem:[%s3 + $0x68] sm:$0xff]
      %v583 = vld [vmem:[%s3 + $0x70] sm:$0xff]
      %v584 = vld [vmem:[%s3 + $0x78] sm:$0xff]
      %v585 = vld [vmem:[%s4] sm:$0x1]
      %v587 = vlaneseq
      %v588 = vshrl.u32 %v587, 7
      %v589 = vsub.s32 0, %v588
      %v590 = vrot.slane %v585, %v589
      %592 = vmatprep.subr.mxu0 0.0
      %593 = vmatpush1.msra.mxu0 %v584
      %594 = vmatprep.subr.mxu0 0.0
      %595 = vmatpush1.msra.mxu0 %v583
      %596 = vmatprep.subr.mxu0 0.0
      %597 = vmatpush1.msra.mxu0 %v582
      %598 = vmatprep.subr.mxu0 0.0
      %599 = vmatpush1.msra.mxu0 %v581
      %600 = vmatprep.subr.mxu0 0.0
      %601 = vmatpush1.msra.mxu0 %v580
      %602 = vmatprep.subr.mxu0 0.0
      %603 = vmatpush1.msra.mxu0 %v579
      %604 = vmatprep.subr.mxu0 0.0
      %605 = vmatpush1.msra.mxu0 %v578
      %606 = vmatprep.subr.mxu0 0.0
      %607 = vmatpush1.msra.mxu0 %v577
      %608 = vmatprep.subr.mxu0 0.0
      %609 = vmatpush1.msra.mxu0 %v576
      %610 = vmatprep.subr.mxu0 0.0
      %611 = vmatpush1.msra.mxu0 %v575
      %612 = vmatprep.subr.mxu0 0.0
      %613 = vmatpush1.msra.mxu0 %v574
      %614 = vmatprep.subr.mxu0 0.0
      %615 = vmatpush1.msra.mxu0 %v573
      %616 = vmatprep.subr.mxu0 0.0
      %617 = vmatpush1.msra.mxu0 %v572
      %618 = vmatprep.subr.mxu0 0.0
      %619 = vmatpush1.msra.mxu0 %v571
      %620 = vmatprep.subr.mxu0 0.0
      %621 = vmatpush1.msra.mxu0 %v570
      %622 = vmatprep.subr.mxu0 0.0
      %623 = vmatpush1.msra.mxu0 %v569
      %624 = vmatprep.subr.mxu0 0.0
      %625 = vmatpush2.msra.mxu0 0.0
      %626 = vmatprep.subr.mxu0 0.0
      %627 = vmatpush2.msra.mxu0 0.0
      %628 = vmatprep.subr.mxu0 0.0
      %629 = vmatpush2.msra.mxu0 0.0
      %630 = vmatprep.subr.mxu0 0.0
      %631 = vmatpush2.msra.mxu0 0.0
      %632 = vmatprep.subr.mxu0 0.0
      %633 = vmatpush2.msra.mxu0 0.0
      %634 = vmatprep.subr.mxu0 0.0
      %635 = vmatpush2.msra.mxu0 0.0
      %636 = vmatprep.subr.mxu0 0.0
      %637 = vmatpush2.msra.mxu0 0.0
      %638 = vmatprep.subr.mxu0 0.0
      %639 = vmatpush2.msra.mxu0 0.0
      %640 = vmatprep.subr.mxu0 0.0
      %641 = vmatpush2.msra.mxu0 0.0
      %642 = vmatprep.subr.mxu0 0.0
      %643 = vmatpush2.msra.mxu0 0.0
      %644 = vmatprep.subr.mxu0 0.0
      %645 = vmatpush2.msra.mxu0 0.0
      %646 = vmatprep.subr.mxu0 0.0
      %647 = vmatpush2.msra.mxu0 0.0
      %648 = vmatprep.subr.mxu0 0.0
      %649 = vmatpush2.msra.mxu0 0.0
      %650 = vmatprep.subr.mxu0 0.0
      %651 = vmatpush2.msra.mxu0 0.0
      %652 = vmatprep.subr.mxu0 0.0
      %653 = vmatpush2.msra.mxu0 0.0
      %654 = vmatprep.subr.mxu0 0.0
      %655 = vmatpush2.msra.mxu0 0.0
      %656 = vmatprep.mubr.f32.mxu0 0.0
      %657 = vmatmul.mubr.f32.gmra.mxu0 %v505
      %v658 = vpop.f32.mrf.mxu0
      %v659 = vadd.f32 %v590, %v658
      %v660 = vpop.f32.mrf.mxu0
      %661 = vmatprep.mubr.f32.mxu0 0.0
      %662 = vmatmul.mubr.f32.gmra.mxu0 %v506
      %v663 = vpop.f32.mrf.mxu0
      %v664 = vadd.f32 %v590, %v663
      %v665 = vpop.f32.mrf.mxu0
      %666 = vmatprep.mubr.f32.mxu0 0.0
      %667 = vmatmul.mubr.f32.gmra.mxu0 %v507
      %v668 = vpop.f32.mrf.mxu0
      %v669 = vadd.f32 %v590, %v668
      %v670 = vpop.f32.mrf.mxu0
      %671 = vmatprep.mubr.f32.mxu0 0.0
      %672 = vmatmul.mubr.f32.gmra.mxu0 %v508
      %v673 = vpop.f32.mrf.mxu0
      %v674 = vadd.f32 %v590, %v673
      %v675 = vpop.f32.mrf.mxu0
      %676 = vmatprep.mubr.f32.mxu0 0.0
      %677 = vmatmul.mubr.f32.gmra.mxu0 %v509
      %v678 = vpop.f32.mrf.mxu0
      %v679 = vadd.f32 %v590, %v678
      %v680 = vpop.f32.mrf.mxu0
      %681 = vmatprep.mubr.f32.mxu0 0.0
      %682 = vmatmul.mubr.f32.gmra.mxu0 %v510
      %v683 = vpop.f32.mrf.mxu0
      %v684 = vadd.f32 %v590, %v683
      %v685 = vpop.f32.mrf.mxu0
      %686 = vmatprep.mubr.f32.mxu0 0.0
      %687 = vmatmul.mubr.f32.gmra.mxu0 %v511
      %v688 = vpop.f32.mrf.mxu0
      %v689 = vadd.f32 %v590, %v688
      %v690 = vpop.f32.mrf.mxu0
      %691 = vmatprep.mubr.f32.mxu0 0.0
      %692 = vmatmul.mubr.f32.gmra.mxu0 %v512
      %v693 = vpop.f32.mrf.mxu0
      %v694 = vadd.f32 %v590, %v693
      %v695 = vpop.f32.mrf.mxu0
      %696 = vmatprep.mubr.f32.mxu0 0.0
      %697 = vmatmul.mubr.f32.gmra.mxu0 %v513
      %v698 = vpop.f32.mrf.mxu0
      %v699 = vadd.f32 %v590, %v698
      %v700 = vpop.f32.mrf.mxu0
      %701 = vmatprep.mubr.f32.mxu0 0.0
      %702 = vmatmul.mubr.f32.gmra.mxu0 %v514
      %v703 = vpop.f32.mrf.mxu0
      %v704 = vadd.f32 %v590, %v703
      %v705 = vpop.f32.mrf.mxu0
      %706 = vmatprep.mubr.f32.mxu0 0.0
      %707 = vmatmul.mubr.f32.gmra.mxu0 %v515
      %v708 = vpop.f32.mrf.mxu0
      %v709 = vadd.f32 %v590, %v708
      %v710 = vpop.f32.mrf.mxu0
      %711 = vmatprep.mubr.f32.mxu0 0.0
      %712 = vmatmul.mubr.f32.gmra.mxu0 %v516
      %v713 = vpop.f32.mrf.mxu0
      %v714 = vadd.f32 %v590, %v713
      %v715 = vpop.f32.mrf.mxu0
      %716 = vmatprep.mubr.f32.mxu0 0.0
      %717 = vmatmul.mubr.f32.gmra.mxu0 %v517
      %v718 = vpop.f32.mrf.mxu0
      %v719 = vadd.f32 %v590, %v718
      %v720 = vpop.f32.mrf.mxu0
      %721 = vmatprep.mubr.f32.mxu0 0.0
      %722 = vmatmul.mubr.f32.gmra.mxu0 %v518
      %v723 = vpop.f32.mrf.mxu0
      %v724 = vadd.f32 %v590, %v723
      %v725 = vpop.f32.mrf.mxu0
      %726 = vmatprep.mubr.f32.mxu0 0.0
      %727 = vmatmul.mubr.f32.gmra.mxu0 %v519
      %v728 = vpop.f32.mrf.mxu0
      %v729 = vadd.f32 %v590, %v728
      %v730 = vpop.f32.mrf.mxu0
      %731 = vmatprep.mubr.f32.mxu0 0.0
      %732 = vmatmul.mubr.f32.gmra.mxu0 %v520
      %v733 = vpop.f32.mrf.mxu0
      %v734 = vadd.f32 %v590, %v733
      %v735 = vpop.f32.mrf.mxu0
      %736 = vmatprep.mubr.f32.mxu0 0.0
      %737 = vmatmul.mubr.f32.gmra.mxu0 %v521
      %v738 = vpop.f32.mrf.mxu0
      %v739 = vadd.f32 %v590, %v738
      %v740 = vpop.f32.mrf.mxu0
      %741 = vmatprep.mubr.f32.mxu0 0.0
      %742 = vmatmul.mubr.f32.gmra.mxu0 %v522
      %v743 = vpop.f32.mrf.mxu0
      %v744 = vadd.f32 %v590, %v743
      %v745 = vpop.f32.mrf.mxu0
      %746 = vmatprep.mubr.f32.mxu0 0.0
      %747 = vmatmul.mubr.f32.gmra.mxu0 %v523
      %v748 = vpop.f32.mrf.mxu0
      %v749 = vadd.f32 %v590, %v748
      %v750 = vpop.f32.mrf.mxu0
      %751 = vmatprep.mubr.f32.mxu0 0.0
      %752 = vmatmul.mubr.f32.gmra.mxu0 %v524
      %v753 = vpop.f32.mrf.mxu0
      %v754 = vadd.f32 %v590, %v753
      %v755 = vpop.f32.mrf.mxu0
      %756 = vmatprep.mubr.f32.mxu0 0.0
      %757 = vmatmul.mubr.f32.gmra.mxu0 %v525
      %v758 = vpop.f32.mrf.mxu0
      %v759 = vadd.f32 %v590, %v758
      %v760 = vpop.f32.mrf.mxu0
      %761 = vmatprep.mubr.f32.mxu0 0.0
      %762 = vmatmul.mubr.f32.gmra.mxu0 %v526
      %v763 = vpop.f32.mrf.mxu0
      %v764 = vadd.f32 %v590, %v763
      %v765 = vpop.f32.mrf.mxu0
      %766 = vmatprep.mubr.f32.mxu0 0.0
      %767 = vmatmul.mubr.f32.gmra.mxu0 %v527
      %v768 = vpop.f32.mrf.mxu0
      %v769 = vadd.f32 %v590, %v768
      %v770 = vpop.f32.mrf.mxu0
      %771 = vmatprep.mubr.f32.mxu0 0.0
      %772 = vmatmul.mubr.f32.gmra.mxu0 %v528
      %v773 = vpop.f32.mrf.mxu0
      %v774 = vadd.f32 %v590, %v773
      %v775 = vpop.f32.mrf.mxu0
      %776 = vmatprep.mubr.f32.mxu0 0.0
      %777 = vmatmul.mubr.f32.gmra.mxu0 %v529
      %v778 = vpop.f32.mrf.mxu0
      %v779 = vadd.f32 %v590, %v778
      %v780 = vpop.f32.mrf.mxu0
      %781 = vmatprep.mubr.f32.mxu0 0.0
      %782 = vmatmul.mubr.f32.gmra.mxu0 %v530
      %v783 = vpop.f32.mrf.mxu0
      %v784 = vadd.f32 %v590, %v783
      %v785 = vpop.f32.mrf.mxu0
      %786 = vmatprep.mubr.f32.mxu0 0.0
      %787 = vmatmul.mubr.f32.gmra.mxu0 %v531
      %v788 = vpop.f32.mrf.mxu0
      %v789 = vadd.f32 %v590, %v788
      %v790 = vpop.f32.mrf.mxu0
      %791 = vmatprep.mubr.f32.mxu0 0.0
      %792 = vmatmul.mubr.f32.gmra.mxu0 %v532
      %v793 = vpop.f32.mrf.mxu0
      %v794 = vadd.f32 %v590, %v793
      %v795 = vpop.f32.mrf.mxu0
      %796 = vmatprep.mubr.f32.mxu0 0.0
      %797 = vmatmul.mubr.f32.gmra.mxu0 %v533
      %v798 = vpop.f32.mrf.mxu0
      %v799 = vadd.f32 %v590, %v798
      %v800 = vpop.f32.mrf.mxu0
      %801 = vmatprep.mubr.f32.mxu0 0.0
      %802 = vmatmul.mubr.f32.gmra.mxu0 %v534
      %v803 = vpop.f32.mrf.mxu0
      %v804 = vadd.f32 %v590, %v803
      %v805 = vpop.f32.mrf.mxu0
      %806 = vmatprep.mubr.f32.mxu0 0.0
      %807 = vmatmul.mubr.f32.gmra.mxu0 %v535
      %v808 = vpop.f32.mrf.mxu0
      %v809 = vadd.f32 %v590, %v808
      %v810 = vpop.f32.mrf.mxu0
      %811 = vmatprep.mubr.f32.mxu0 0.0
      %812 = vmatmul.mubr.f32.gmra.mxu0 %v536
      %v813 = vpop.f32.mrf.mxu0
      %v814 = vadd.f32 %v590, %v813
      %v815 = vpop.f32.mrf.mxu0
      %816 = vmatprep.mubr.f32.mxu0 0.0
      %817 = vmatmul.mubr.f32.gmra.mxu0 %v537
      %v818 = vpop.f32.mrf.mxu0
      %v819 = vadd.f32 %v590, %v818
      %v820 = vpop.f32.mrf.mxu0
      %821 = vmatprep.mubr.f32.mxu0 0.0
      %822 = vmatmul.mubr.f32.gmra.mxu0 %v538
      %v823 = vpop.f32.mrf.mxu0
      %v824 = vadd.f32 %v590, %v823
      %v825 = vpop.f32.mrf.mxu0
      %826 = vmatprep.mubr.f32.mxu0 0.0
      %827 = vmatmul.mubr.f32.gmra.mxu0 %v539
      %v828 = vpop.f32.mrf.mxu0
      %v829 = vadd.f32 %v590, %v828
      %v830 = vpop.f32.mrf.mxu0
      %831 = vmatprep.mubr.f32.mxu0 0.0
      %832 = vmatmul.mubr.f32.gmra.mxu0 %v540
      %v833 = vpop.f32.mrf.mxu0
      %v834 = vadd.f32 %v590, %v833
      %v835 = vpop.f32.mrf.mxu0
      %836 = vmatprep.mubr.f32.mxu0 0.0
      %837 = vmatmul.mubr.f32.gmra.mxu0 %v541
      %v838 = vpop.f32.mrf.mxu0
      %v839 = vadd.f32 %v590, %v838
      %v840 = vpop.f32.mrf.mxu0
      %841 = vmatprep.mubr.f32.mxu0 0.0
      %842 = vmatmul.mubr.f32.gmra.mxu0 %v542
      %v843 = vpop.f32.mrf.mxu0
      %v844 = vadd.f32 %v590, %v843
      %v845 = vpop.f32.mrf.mxu0
      %846 = vmatprep.mubr.f32.mxu0 0.0
      %847 = vmatmul.mubr.f32.gmra.mxu0 %v543
      %v848 = vpop.f32.mrf.mxu0
      %v849 = vadd.f32 %v590, %v848
      %v850 = vpop.f32.mrf.mxu0
      %851 = vmatprep.mubr.f32.mxu0 0.0
      %852 = vmatmul.mubr.f32.gmra.mxu0 %v544
      %v853 = vpop.f32.mrf.mxu0
      %v854 = vadd.f32 %v590, %v853
      %v855 = vpop.f32.mrf.mxu0
      %856 = vmatprep.mubr.f32.mxu0 0.0
      %857 = vmatmul.mubr.f32.gmra.mxu0 %v545
      %v858 = vpop.f32.mrf.mxu0
      %v859 = vadd.f32 %v590, %v858
      %v860 = vpop.f32.mrf.mxu0
      %861 = vmatprep.mubr.f32.mxu0 0.0
      %862 = vmatmul.mubr.f32.gmra.mxu0 %v546
      %v863 = vpop.f32.mrf.mxu0
      %v864 = vadd.f32 %v590, %v863
      %v865 = vpop.f32.mrf.mxu0
      %866 = vmatprep.mubr.f32.mxu0 0.0
      %867 = vmatmul.mubr.f32.gmra.mxu0 %v547
      %v868 = vpop.f32.mrf.mxu0
      %v869 = vadd.f32 %v590, %v868
      %v870 = vpop.f32.mrf.mxu0
      %871 = vmatprep.mubr.f32.mxu0 0.0
      %872 = vmatmul.mubr.f32.gmra.mxu0 %v548
      %v873 = vpop.f32.mrf.mxu0
      %v874 = vadd.f32 %v590, %v873
      %v875 = vpop.f32.mrf.mxu0
      %876 = vmatprep.mubr.f32.mxu0 0.0
      %877 = vmatmul.mubr.f32.gmra.mxu0 %v549
      %v878 = vpop.f32.mrf.mxu0
      %v879 = vadd.f32 %v590, %v878
      %v880 = vpop.f32.mrf.mxu0
      %881 = vmatprep.mubr.f32.mxu0 0.0
      %882 = vmatmul.mubr.f32.gmra.mxu0 %v550
      %v883 = vpop.f32.mrf.mxu0
      %v884 = vadd.f32 %v590, %v883
      %v885 = vpop.f32.mrf.mxu0
      %886 = vmatprep.mubr.f32.mxu0 0.0
      %887 = vmatmul.mubr.f32.gmra.mxu0 %v551
      %v888 = vpop.f32.mrf.mxu0
      %v889 = vadd.f32 %v590, %v888
      %v890 = vpop.f32.mrf.mxu0
      %891 = vmatprep.mubr.f32.mxu0 0.0
      %892 = vmatmul.mubr.f32.gmra.mxu0 %v552
      %v893 = vpop.f32.mrf.mxu0
      %v894 = vadd.f32 %v590, %v893
      %v895 = vpop.f32.mrf.mxu0
      %896 = vmatprep.mubr.f32.mxu0 0.0
      %897 = vmatmul.mubr.f32.gmra.mxu0 %v553
      %v898 = vpop.f32.mrf.mxu0
      %v899 = vadd.f32 %v590, %v898
      %v900 = vpop.f32.mrf.mxu0
      %901 = vmatprep.mubr.f32.mxu0 0.0
      %902 = vmatmul.mubr.f32.gmra.mxu0 %v554
      %v903 = vpop.f32.mrf.mxu0
      %v904 = vadd.f32 %v590, %v903
      %v905 = vpop.f32.mrf.mxu0
      %906 = vmatprep.mubr.f32.mxu0 0.0
      %907 = vmatmul.mubr.f32.gmra.mxu0 %v555
      %v908 = vpop.f32.mrf.mxu0
      %v909 = vadd.f32 %v590, %v908
      %v910 = vpop.f32.mrf.mxu0
      %911 = vmatprep.mubr.f32.mxu0 0.0
      %912 = vmatmul.mubr.f32.gmra.mxu0 %v556
      %v913 = vpop.f32.mrf.mxu0
      %v914 = vadd.f32 %v590, %v913
      %v915 = vpop.f32.mrf.mxu0
      %916 = vmatprep.mubr.f32.mxu0 0.0
      %917 = vmatmul.mubr.f32.gmra.mxu0 %v557
      %v918 = vpop.f32.mrf.mxu0
      %v919 = vadd.f32 %v590, %v918
      %v920 = vpop.f32.mrf.mxu0
      %921 = vmatprep.mubr.f32.mxu0 0.0
      %922 = vmatmul.mubr.f32.gmra.mxu0 %v558
      %v923 = vpop.f32.mrf.mxu0
      %v924 = vadd.f32 %v590, %v923
      %v925 = vpop.f32.mrf.mxu0
      %926 = vmatprep.mubr.f32.mxu0 0.0
      %927 = vmatmul.mubr.f32.gmra.mxu0 %v559
      %v928 = vpop.f32.mrf.mxu0
      %v929 = vadd.f32 %v590, %v928
      %v930 = vpop.f32.mrf.mxu0
      %931 = vmatprep.mubr.f32.mxu0 0.0
      %932 = vmatmul.mubr.f32.gmra.mxu0 %v560
      %v933 = vpop.f32.mrf.mxu0
      %v934 = vadd.f32 %v590, %v933
      %v935 = vpop.f32.mrf.mxu0
      %936 = vmatprep.mubr.f32.mxu0 0.0
      %937 = vmatmul.mubr.f32.gmra.mxu0 %v561
      %v938 = vpop.f32.mrf.mxu0
      %v939 = vadd.f32 %v590, %v938
      %v940 = vpop.f32.mrf.mxu0
      %941 = vmatprep.mubr.f32.mxu0 0.0
      %942 = vmatmul.mubr.f32.gmra.mxu0 %v562
      %v943 = vpop.f32.mrf.mxu0
      %v944 = vadd.f32 %v590, %v943
      %v945 = vpop.f32.mrf.mxu0
      %946 = vmatprep.mubr.f32.mxu0 0.0
      %947 = vmatmul.mubr.f32.gmra.mxu0 %v563
      %v948 = vpop.f32.mrf.mxu0
      %v949 = vadd.f32 %v590, %v948
      %v950 = vpop.f32.mrf.mxu0
      %951 = vmatprep.mubr.f32.mxu0 0.0
      %952 = vmatmul.mubr.f32.gmra.mxu0 %v564
      %v953 = vpop.f32.mrf.mxu0
      %v954 = vadd.f32 %v590, %v953
      %v955 = vpop.f32.mrf.mxu0
      %956 = vmatprep.mubr.f32.mxu0 0.0
      %957 = vmatmul.mubr.f32.gmra.mxu0 %v565
      %v958 = vpop.f32.mrf.mxu0
      %v959 = vadd.f32 %v590, %v958
      %v960 = vpop.f32.mrf.mxu0
      %961 = vmatprep.mubr.f32.mxu0 0.0
      %962 = vmatmul.mubr.f32.gmra.mxu0 %v566
      %v963 = vpop.f32.mrf.mxu0
      %v964 = vadd.f32 %v590, %v963
      %v965 = vpop.f32.mrf.mxu0
      %966 = vmatprep.mubr.f32.mxu0 0.0
      %967 = vmatmul.mubr.f32.gmra.mxu0 %v567
      %v968 = vpop.f32.mrf.mxu0
      %v969 = vadd.f32 %v590, %v968
      %v970 = vpop.f32.mrf.mxu0
      %971 = vmatprep.mubr.f32.mxu0 0.0
      %972 = vmatmul.mubr.f32.gmra.mxu0 %v568
      %v973 = vpop.f32.mrf.mxu0
      %v974 = vadd.f32 %v590, %v973
      %v975 = vpop.f32.mrf.mxu0
      %976 = vdwg.mxu0
      %977 = vst [vmem:[%s291] sm:$0xff] %v659
      %978 = vst [vmem:[%s291 + $0x8] sm:$0xff] %v664
      %979 = vst [vmem:[%s291 + $0x10] sm:$0xff] %v669
      %980 = vst [vmem:[%s291 + $0x18] sm:$0xff] %v674
      %981 = vst [vmem:[%s291 + $0x20] sm:$0xff] %v679
      %982 = vst [vmem:[%s291 + $0x28] sm:$0xff] %v684
      %983 = vst [vmem:[%s291 + $0x30] sm:$0xff] %v689
      %984 = vst [vmem:[%s291 + $0x38] sm:$0xff] %v694
      %985 = vst [vmem:[%s291 + $0x40] sm:$0xff] %v699
      %986 = vst [vmem:[%s291 + $0x48] sm:$0xff] %v704
      %987 = vst [vmem:[%s291 + $0x50] sm:$0xff] %v709
      %988 = vst [vmem:[%s291 + $0x58] sm:$0xff] %v714
      %989 = vst [vmem:[%s291 + $0x60] sm:$0xff] %v719
      %990 = vst [vmem:[%s291 + $0x68] sm:$0xff] %v724
      %991 = vst [vmem:[%s291 + $0x70] sm:$0xff] %v729
      %992 = vst [vmem:[%s291 + $0x78] sm:$0xff] %v734
      %993 = vst [vmem:[%s291 + $0x80] sm:$0xff] %v739
      %994 = vst [vmem:[%s291 + $0x88] sm:$0xff] %v744
      %995 = vst [vmem:[%s291 + $0x90] sm:$0xff] %v749
      %996 = vst [vmem:[%s291 + $0x98] sm:$0xff] %v754
      %997 = vst [vmem:[%s291 + $0xa0] sm:$0xff] %v759
      %998 = vst [vmem:[%s291 + $0xa8] sm:$0xff] %v764
      %999 = vst [vmem:[%s291 + $0xb0] sm:$0xff] %v769
      %1000 = vst [vmem:[%s291 + $0xb8] sm:$0xff] %v774
      %1001 = vst [vmem:[%s291 + $0xc0] sm:$0xff] %v779
      %1002 = vst [vmem:[%s291 + $0xc8] sm:$0xff] %v784
      %1003 = vst [vmem:[%s291 + $0xd0] sm:$0xff] %v789
      %1004 = vst [vmem:[%s291 + $0xd8] sm:$0xff] %v794
      %1005 = vst [vmem:[%s291 + $0xe0] sm:$0xff] %v799
      %1006 = vst [vmem:[%s291 + $0xe8] sm:$0xff] %v804
      %1007 = vst [vmem:[%s291 + $0xf0] sm:$0xff] %v809
      %1008 = vst [vmem:[%s291 + $0xf8] sm:$0xff] %v814
      %1009 = vst [vmem:[%s291 + $0x100] sm:$0xff] %v819
      %1010 = vst [vmem:[%s291 + $0x108] sm:$0xff] %v824
      %1011 = vst [vmem:[%s291 + $0x110] sm:$0xff] %v829
      %1012 = vst [vmem:[%s291 + $0x118] sm:$0xff] %v834
      %1013 = vst [vmem:[%s291 + $0x120] sm:$0xff] %v839
      %1014 = vst [vmem:[%s291 + $0x128] sm:$0xff] %v844
      %1015 = vst [vmem:[%s291 + $0x130] sm:$0xff] %v849
      %1016 = vst [vmem:[%s291 + $0x138] sm:$0xff] %v854
      %1017 = vst [vmem:[%s291 + $0x140] sm:$0xff] %v859
      %1018 = vst [vmem:[%s291 + $0x148] sm:$0xff] %v864
      %1019 = vst [vmem:[%s291 + $0x150] sm:$0xff] %v869
      %1020 = vst [vmem:[%s291 + $0x158] sm:$0xff] %v874
      %1021 = vst [vmem:[%s291 + $0x160] sm:$0xff] %v879
      %1022 = vst [vmem:[%s291 + $0x168] sm:$0xff] %v884
      %1023 = vst [vmem:[%s291 + $0x170] sm:$0xff] %v889
      %1024 = vst [vmem:[%s291 + $0x178] sm:$0xff] %v894
      %1025 = vst [vmem:[%s291 + $0x180] sm:$0xff] %v899
      %1026 = vst [vmem:[%s291 + $0x188] sm:$0xff] %v904
      %1027 = vst [vmem:[%s291 + $0x190] sm:$0xff] %v909
      %1028 = vst [vmem:[%s291 + $0x198] sm:$0xff] %v914
      %1029 = vst [vmem:[%s291 + $0x1a0] sm:$0xff] %v919
      %1030 = vst [vmem:[%s291 + $0x1a8] sm:$0xff] %v924
      %1031 = vst [vmem:[%s291 + $0x1b0] sm:$0xff] %v929
      %1032 = vst [vmem:[%s291 + $0x1b8] sm:$0xff] %v934
      %1033 = vst [vmem:[%s291 + $0x1c0] sm:$0xff] %v939
      %1034 = vst [vmem:[%s291 + $0x1c8] sm:$0xff] %v944
      %1035 = vst [vmem:[%s291 + $0x1d0] sm:$0xff] %v949
      %1036 = vst [vmem:[%s291 + $0x1d8] sm:$0xff] %v954
      %1037 = vst [vmem:[%s291 + $0x1e0] sm:$0xff] %v959
      %1038 = vst [vmem:[%s291 + $0x1e8] sm:$0xff] %v964
      %1039 = vst [vmem:[%s291 + $0x1f0] sm:$0xff] %v969
      %1040 = vst [vmem:[%s291 + $0x1f8] sm:$0xff] %v974
      %s1041 = smul.u32 %s19, 512
      %v1042 = vlaneseq
      %v1043 = vshrl.u32 %v1042, 7
      %v1044 = vadd.s32 %v1043, 8
      %v1045 = vadd.s32 %v1043, 16
      %v1046 = vadd.s32 %v1043, 24
      %v1047 = vadd.s32 %v1043, 32
      %v1048 = vadd.s32 %v1043, 40
      %v1049 = vadd.s32 %v1043, 48
      %v1050 = vadd.s32 %v1043, 56
      %v1051 = vadd.s32 %v1043, 64
      %v1052 = vadd.s32 %v1043, 72
      %v1053 = vadd.s32 %v1043, 80
      %v1054 = vadd.s32 %v1043, 88
      %v1055 = vadd.s32 %v1043, 96
      %v1056 = vadd.s32 %v1043, 104
      %v1057 = vadd.s32 %v1043, 112
      %v1058 = vadd.s32 %v1043, 120
      %v1059 = vadd.s32 %v1043, 128
      %v1060 = vadd.s32 %v1043, 136
      %v1061 = vadd.s32 %v1043, 144
      %v1062 = vadd.s32 %v1043, 152
      %v1063 = vadd.s32 %v1043, 160
      %v1064 = vadd.s32 %v1043, 168
      %v1065 = vadd.s32 %v1043, 176
      %v1066 = vadd.s32 %v1043, 184
      %v1067 = vadd.s32 %v1043, 192
      %v1068 = vadd.s32 %v1043, 200
      %v1069 = vadd.s32 %v1043, 208
      %v1070 = vadd.s32 %v1043, 216
      %v1071 = vadd.s32 %v1043, 224
      %v1072 = vadd.s32 %v1043, 232
      %v1073 = vadd.s32 %v1043, 240
      %v1074 = vadd.s32 %v1043, 248
      %v1075 = vadd.s32 %v1043, 256
      %v1076 = vadd.s32 %v1043, 264
      %v1077 = vadd.s32 %v1043, 272
      %v1078 = vadd.s32 %v1043, 280
      %v1079 = vadd.s32 %v1043, 288
      %v1080 = vadd.s32 %v1043, 296
      %v1081 = vadd.s32 %v1043, 304
      %v1082 = vadd.s32 %v1043, 312
      %v1083 = vadd.s32 %v1043, 320
      %v1084 = vadd.s32 %v1043, 328
      %v1085 = vadd.s32 %v1043, 336
      %v1086 = vadd.s32 %v1043, 344
      %v1087 = vadd.s32 %v1043, 352
      %v1088 = vadd.s32 %v1043, 360
      %v1089 = vadd.s32 %v1043, 368
      %v1090 = vadd.s32 %v1043, 376
      %v1091 = vadd.s32 %v1043, 384
      %v1092 = vadd.s32 %v1043, 392
      %v1093 = vadd.s32 %v1043, 400
      %v1094 = vadd.s32 %v1043, 408
      %v1095 = vadd.s32 %v1043, 416
      %v1096 = vadd.s32 %v1043, 424
      %v1097 = vadd.s32 %v1043, 432
      %v1098 = vadd.s32 %v1043, 440
      %v1099 = vadd.s32 %v1043, 448
      %v1100 = vadd.s32 %v1043, 456
      %v1101 = vadd.s32 %v1043, 464
      %v1102 = vadd.s32 %v1043, 472
      %v1103 = vadd.s32 %v1043, 480
      %v1104 = vadd.s32 %v1043, 488
      %v1105 = vadd.s32 %v1043, 496
      %v1106 = vadd.s32 %v1043, 504
      %v1107 = vstv %s1041
      %v1108 = vadd.s32 %v1107, %v1043
      %v1109 = vadd.s32 %v1107, %v1044
      %v1110 = vadd.s32 %v1107, %v1045
      %v1111 = vadd.s32 %v1107, %v1046
      %v1112 = vadd.s32 %v1107, %v1047
      %v1113 = vadd.s32 %v1107, %v1048
      %v1114 = vadd.s32 %v1107, %v1049
      %v1115 = vadd.s32 %v1107, %v1050
      %v1116 = vadd.s32 %v1107, %v1051
      %v1117 = vadd.s32 %v1107, %v1052
      %v1118 = vadd.s32 %v1107, %v1053
      %v1119 = vadd.s32 %v1107, %v1054
      %v1120 = vadd.s32 %v1107, %v1055
      %v1121 = vadd.s32 %v1107, %v1056
      %v1122 = vadd.s32 %v1107, %v1057
      %v1123 = vadd.s32 %v1107, %v1058
      %v1124 = vadd.s32 %v1107, %v1059
      %v1125 = vadd.s32 %v1107, %v1060
      %v1126 = vadd.s32 %v1107, %v1061
      %v1127 = vadd.s32 %v1107, %v1062
      %v1128 = vadd.s32 %v1107, %v1063
      %v1129 = vadd.s32 %v1107, %v1064
      %v1130 = vadd.s32 %v1107, %v1065
      %v1131 = vadd.s32 %v1107, %v1066
      %v1132 = vadd.s32 %v1107, %v1067
      %v1133 = vadd.s32 %v1107, %v1068
      %v1134 = vadd.s32 %v1107, %v1069
      %v1135 = vadd.s32 %v1107, %v1070
      %v1136 = vadd.s32 %v1107, %v1071
      %v1137 = vadd.s32 %v1107, %v1072
      %v1138 = vadd.s32 %v1107, %v1073
      %v1139 = vadd.s32 %v1107, %v1074
      %v1140 = vadd.s32 %v1107, %v1075
      %v1141 = vadd.s32 %v1107, %v1076
      %v1142 = vadd.s32 %v1107, %v1077
      %v1143 = vadd.s32 %v1107, %v1078
      %v1144 = vadd.s32 %v1107, %v1079
      %v1145 = vadd.s32 %v1107, %v1080
      %v1146 = vadd.s32 %v1107, %v1081
      %v1147 = vadd.s32 %v1107, %v1082
      %v1148 = vadd.s32 %v1107, %v1083
      %v1149 = vadd.s32 %v1107, %v1084
      %v1150 = vadd.s32 %v1107, %v1085
      %v1151 = vadd.s32 %v1107, %v1086
      %v1152 = vadd.s32 %v1107, %v1087
      %v1153 = vadd.s32 %v1107, %v1088
      %v1154 = vadd.s32 %v1107, %v1089
      %v1155 = vadd.s32 %v1107, %v1090
      %v1156 = vadd.s32 %v1107, %v1091
      %v1157 = vadd.s32 %v1107, %v1092
      %v1158 = vadd.s32 %v1107, %v1093
      %v1159 = vadd.s32 %v1107, %v1094
      %v1160 = vadd.s32 %v1107, %v1095
      %v1161 = vadd.s32 %v1107, %v1096
      %v1162 = vadd.s32 %v1107, %v1097
      %v1163 = vadd.s32 %v1107, %v1098
      %v1164 = vadd.s32 %v1107, %v1099
      %v1165 = vadd.s32 %v1107, %v1100
      %v1166 = vadd.s32 %v1107, %v1101
      %v1167 = vadd.s32 %v1107, %v1102
      %v1168 = vadd.s32 %v1107, %v1103
      %v1169 = vadd.s32 %v1107, %v1104
      %v1170 = vadd.s32 %v1107, %v1105
      %v1171 = vadd.s32 %v1107, %v1106
      %vm1172 = vcmp.lt.s32.totalorder %v1108, 640
      %vm1173 = vcmp.lt.s32.totalorder %v1109, 640
      %vm1174 = vcmp.lt.s32.totalorder %v1110, 640
      %vm1175 = vcmp.lt.s32.totalorder %v1111, 640
      %vm1176 = vcmp.lt.s32.totalorder %v1112, 640
      %vm1177 = vcmp.lt.s32.totalorder %v1113, 640
      %vm1178 = vcmp.lt.s32.totalorder %v1114, 640
      %vm1179 = vcmp.lt.s32.totalorder %v1115, 640
      %vm1180 = vcmp.lt.s32.totalorder %v1116, 640
      %vm1181 = vcmp.lt.s32.totalorder %v1117, 640
      %vm1182 = vcmp.lt.s32.totalorder %v1118, 640
      %vm1183 = vcmp.lt.s32.totalorder %v1119, 640
      %vm1184 = vcmp.lt.s32.totalorder %v1120, 640
      %vm1185 = vcmp.lt.s32.totalorder %v1121, 640
      %vm1186 = vcmp.lt.s32.totalorder %v1122, 640
      %vm1187 = vcmp.lt.s32.totalorder %v1123, 640
      %vm1188 = vcmp.lt.s32.totalorder %v1124, 640
      %vm1189 = vcmp.lt.s32.totalorder %v1125, 640
      %vm1190 = vcmp.lt.s32.totalorder %v1126, 640
      %vm1191 = vcmp.lt.s32.totalorder %v1127, 640
      %vm1192 = vcmp.lt.s32.totalorder %v1128, 640
      %vm1193 = vcmp.lt.s32.totalorder %v1129, 640
      %vm1194 = vcmp.lt.s32.totalorder %v1130, 640
      %vm1195 = vcmp.lt.s32.totalorder %v1131, 640
      %vm1196 = vcmp.lt.s32.totalorder %v1132, 640
      %vm1197 = vcmp.lt.s32.totalorder %v1133, 640
      %vm1198 = vcmp.lt.s32.totalorder %v1134, 640
      %vm1199 = vcmp.lt.s32.totalorder %v1135, 640
      %vm1200 = vcmp.lt.s32.totalorder %v1136, 640
      %vm1201 = vcmp.lt.s32.totalorder %v1137, 640
      %vm1202 = vcmp.lt.s32.totalorder %v1138, 640
      %vm1203 = vcmp.lt.s32.totalorder %v1139, 640
      %vm1204 = vcmp.lt.s32.totalorder %v1140, 640
      %vm1205 = vcmp.lt.s32.totalorder %v1141, 640
      %vm1206 = vcmp.lt.s32.totalorder %v1142, 640
      %vm1207 = vcmp.lt.s32.totalorder %v1143, 640
      %vm1208 = vcmp.lt.s32.totalorder %v1144, 640
      %vm1209 = vcmp.lt.s32.totalorder %v1145, 640
      %vm1210 = vcmp.lt.s32.totalorder %v1146, 640
      %vm1211 = vcmp.lt.s32.totalorder %v1147, 640
      %vm1212 = vcmp.lt.s32.totalorder %v1148, 640
      %vm1213 = vcmp.lt.s32.totalorder %v1149, 640
      %vm1214 = vcmp.lt.s32.totalorder %v1150, 640
      %vm1215 = vcmp.lt.s32.totalorder %v1151, 640
      %vm1216 = vcmp.lt.s32.totalorder %v1152, 640
      %vm1217 = vcmp.lt.s32.totalorder %v1153, 640
      %vm1218 = vcmp.lt.s32.totalorder %v1154, 640
      %vm1219 = vcmp.lt.s32.totalorder %v1155, 640
      %vm1220 = vcmp.lt.s32.totalorder %v1156, 640
      %vm1221 = vcmp.lt.s32.totalorder %v1157, 640
      %vm1222 = vcmp.lt.s32.totalorder %v1158, 640
      %vm1223 = vcmp.lt.s32.totalorder %v1159, 640
      %vm1224 = vcmp.lt.s32.totalorder %v1160, 640
      %vm1225 = vcmp.lt.s32.totalorder %v1161, 640
      %vm1226 = vcmp.lt.s32.totalorder %v1162, 640
      %vm1227 = vcmp.lt.s32.totalorder %v1163, 640
      %vm1228 = vcmp.lt.s32.totalorder %v1164, 640
      %vm1229 = vcmp.lt.s32.totalorder %v1165, 640
      %vm1230 = vcmp.lt.s32.totalorder %v1166, 640
      %vm1231 = vcmp.lt.s32.totalorder %v1167, 640
      %vm1232 = vcmp.lt.s32.totalorder %v1168, 640
      %vm1233 = vcmp.lt.s32.totalorder %v1169, 640
      %vm1234 = vcmp.lt.s32.totalorder %v1170, 640
      %vm1235 = vcmp.lt.s32.totalorder %v1171, 640
      %v1236 = vsel %vm1172, 1, 0
      %v1237 = vsel %vm1173, 1, 0
      %v1238 = vsel %vm1174, 1, 0
      %v1239 = vsel %vm1175, 1, 0
      %v1240 = vsel %vm1176, 1, 0
      %v1241 = vsel %vm1177, 1, 0
      %v1242 = vsel %vm1178, 1, 0
      %v1243 = vsel %vm1179, 1, 0
      %v1244 = vsel %vm1180, 1, 0
      %v1245 = vsel %vm1181, 1, 0
      %v1246 = vsel %vm1182, 1, 0
      %v1247 = vsel %vm1183, 1, 0
      %v1248 = vsel %vm1184, 1, 0
      %v1249 = vsel %vm1185, 1, 0
      %v1250 = vsel %vm1186, 1, 0
      %v1251 = vsel %vm1187, 1, 0
      %v1252 = vsel %vm1188, 1, 0
      %v1253 = vsel %vm1189, 1, 0
      %v1254 = vsel %vm1190, 1, 0
      %v1255 = vsel %vm1191, 1, 0
      %v1256 = vsel %vm1192, 1, 0
      %v1257 = vsel %vm1193, 1, 0
      %v1258 = vsel %vm1194, 1, 0
      %v1259 = vsel %vm1195, 1, 0
      %v1260 = vsel %vm1196, 1, 0
      %v1261 = vsel %vm1197, 1, 0
      %v1262 = vsel %vm1198, 1, 0
      %v1263 = vsel %vm1199, 1, 0
      %v1264 = vsel %vm1200, 1, 0
      %v1265 = vsel %vm1201, 1, 0
      %v1266 = vsel %vm1202, 1, 0
      %v1267 = vsel %vm1203, 1, 0
      %v1268 = vsel %vm1204, 1, 0
      %v1269 = vsel %vm1205, 1, 0
      %v1270 = vsel %vm1206, 1, 0
      %v1271 = vsel %vm1207, 1, 0
      %v1272 = vsel %vm1208, 1, 0
      %v1273 = vsel %vm1209, 1, 0
      %v1274 = vsel %vm1210, 1, 0
      %v1275 = vsel %vm1211, 1, 0
      %v1276 = vsel %vm1212, 1, 0
      %v1277 = vsel %vm1213, 1, 0
      %v1278 = vsel %vm1214, 1, 0
      %v1279 = vsel %vm1215, 1, 0
      %v1280 = vsel %vm1216, 1, 0
      %v1281 = vsel %vm1217, 1, 0
      %v1282 = vsel %vm1218, 1, 0
      %v1283 = vsel %vm1219, 1, 0
      %v1284 = vsel %vm1220, 1, 0
      %v1285 = vsel %vm1221, 1, 0
      %v1286 = vsel %vm1222, 1, 0
      %v1287 = vsel %vm1223, 1, 0
      %v1288 = vsel %vm1224, 1, 0
      %v1289 = vsel %vm1225, 1, 0
      %v1290 = vsel %vm1226, 1, 0
      %v1291 = vsel %vm1227, 1, 0
      %v1292 = vsel %vm1228, 1, 0
      %v1293 = vsel %vm1229, 1, 0
      %v1294 = vsel %vm1230, 1, 0
      %v1295 = vsel %vm1231, 1, 0
      %v1296 = vsel %vm1232, 1, 0
      %v1297 = vsel %vm1233, 1, 0
      %v1298 = vsel %vm1234, 1, 0
      %v1299 = vsel %vm1235, 1, 0
      %vm1300 = vcmp.eq.s32.totalorder %v1236, 1
      %vm1301 = vcmp.eq.s32.totalorder %v1237, 1
      %vm1302 = vcmp.eq.s32.totalorder %v1238, 1
      %vm1303 = vcmp.eq.s32.totalorder %v1239, 1
      %vm1304 = vcmp.eq.s32.totalorder %v1240, 1
      %vm1305 = vcmp.eq.s32.totalorder %v1241, 1
      %vm1306 = vcmp.eq.s32.totalorder %v1242, 1
      %vm1307 = vcmp.eq.s32.totalorder %v1243, 1
      %vm1308 = vcmp.eq.s32.totalorder %v1244, 1
      %vm1309 = vcmp.eq.s32.totalorder %v1245, 1
      %vm1310 = vcmp.eq.s32.totalorder %v1246, 1
      %vm1311 = vcmp.eq.s32.totalorder %v1247, 1
      %vm1312 = vcmp.eq.s32.totalorder %v1248, 1
      %vm1313 = vcmp.eq.s32.totalorder %v1249, 1
      %vm1314 = vcmp.eq.s32.totalorder %v1250, 1
      %vm1315 = vcmp.eq.s32.totalorder %v1251, 1
      %vm1316 = vcmp.eq.s32.totalorder %v1252, 1
      %vm1317 = vcmp.eq.s32.totalorder %v1253, 1
      %vm1318 = vcmp.eq.s32.totalorder %v1254, 1
      %vm1319 = vcmp.eq.s32.totalorder %v1255, 1
      %vm1320 = vcmp.eq.s32.totalorder %v1256, 1
      %vm1321 = vcmp.eq.s32.totalorder %v1257, 1
      %vm1322 = vcmp.eq.s32.totalorder %v1258, 1
      %vm1323 = vcmp.eq.s32.totalorder %v1259, 1
      %vm1324 = vcmp.eq.s32.totalorder %v1260, 1
      %vm1325 = vcmp.eq.s32.totalorder %v1261, 1
      %vm1326 = vcmp.eq.s32.totalorder %v1262, 1
      %vm1327 = vcmp.eq.s32.totalorder %v1263, 1
      %vm1328 = vcmp.eq.s32.totalorder %v1264, 1
      %vm1329 = vcmp.eq.s32.totalorder %v1265, 1
      %vm1330 = vcmp.eq.s32.totalorder %v1266, 1
      %vm1331 = vcmp.eq.s32.totalorder %v1267, 1
      %vm1332 = vcmp.eq.s32.totalorder %v1268, 1
      %vm1333 = vcmp.eq.s32.totalorder %v1269, 1
      %vm1334 = vcmp.eq.s32.totalorder %v1270, 1
      %vm1335 = vcmp.eq.s32.totalorder %v1271, 1
      %vm1336 = vcmp.eq.s32.totalorder %v1272, 1
      %vm1337 = vcmp.eq.s32.totalorder %v1273, 1
      %vm1338 = vcmp.eq.s32.totalorder %v1274, 1
      %vm1339 = vcmp.eq.s32.totalorder %v1275, 1
      %vm1340 = vcmp.eq.s32.totalorder %v1276, 1
      %vm1341 = vcmp.eq.s32.totalorder %v1277, 1
      %vm1342 = vcmp.eq.s32.totalorder %v1278, 1
      %vm1343 = vcmp.eq.s32.totalorder %v1279, 1
      %vm1344 = vcmp.eq.s32.totalorder %v1280, 1
      %vm1345 = vcmp.eq.s32.totalorder %v1281, 1
      %vm1346 = vcmp.eq.s32.totalorder %v1282, 1
      %vm1347 = vcmp.eq.s32.totalorder %v1283, 1
      %vm1348 = vcmp.eq.s32.totalorder %v1284, 1
      %vm1349 = vcmp.eq.s32.totalorder %v1285, 1
      %vm1350 = vcmp.eq.s32.totalorder %v1286, 1
      %vm1351 = vcmp.eq.s32.totalorder %v1287, 1
      %vm1352 = vcmp.eq.s32.totalorder %v1288, 1
      %vm1353 = vcmp.eq.s32.totalorder %v1289, 1
      %vm1354 = vcmp.eq.s32.totalorder %v1290, 1
      %vm1355 = vcmp.eq.s32.totalorder %v1291, 1
      %vm1356 = vcmp.eq.s32.totalorder %v1292, 1
      %vm1357 = vcmp.eq.s32.totalorder %v1293, 1
      %vm1358 = vcmp.eq.s32.totalorder %v1294, 1
      %vm1359 = vcmp.eq.s32.totalorder %v1295, 1
      %vm1360 = vcmp.eq.s32.totalorder %v1296, 1
      %vm1361 = vcmp.eq.s32.totalorder %v1297, 1
      %vm1362 = vcmp.eq.s32.totalorder %v1298, 1
      %vm1363 = vcmp.eq.s32.totalorder %v1299, 1
      %v1364 = vsel %vm1300, %v659, 0.0
      %v1365 = vsel %vm1301, %v664, 0.0
      %v1366 = vsel %vm1302, %v669, 0.0
      %v1367 = vsel %vm1303, %v674, 0.0
      %v1368 = vsel %vm1304, %v679, 0.0
      %v1369 = vsel %vm1305, %v684, 0.0
      %v1370 = vsel %vm1306, %v689, 0.0
      %v1371 = vsel %vm1307, %v694, 0.0
      %v1372 = vsel %vm1308, %v699, 0.0
      %v1373 = vsel %vm1309, %v704, 0.0
      %v1374 = vsel %vm1310, %v709, 0.0
      %v1375 = vsel %vm1311, %v714, 0.0
      %v1376 = vsel %vm1312, %v719, 0.0
      %v1377 = vsel %vm1313, %v724, 0.0
      %v1378 = vsel %vm1314, %v729, 0.0
      %v1379 = vsel %vm1315, %v734, 0.0
      %v1380 = vsel %vm1316, %v739, 0.0
      %v1381 = vsel %vm1317, %v744, 0.0
      %v1382 = vsel %vm1318, %v749, 0.0
      %v1383 = vsel %vm1319, %v754, 0.0
      %v1384 = vsel %vm1320, %v759, 0.0
      %v1385 = vsel %vm1321, %v764, 0.0
      %v1386 = vsel %vm1322, %v769, 0.0
      %v1387 = vsel %vm1323, %v774, 0.0
      %v1388 = vsel %vm1324, %v779, 0.0
      %v1389 = vsel %vm1325, %v784, 0.0
      %v1390 = vsel %vm1326, %v789, 0.0
      %v1391 = vsel %vm1327, %v794, 0.0
      %v1392 = vsel %vm1328, %v799, 0.0
      %v1393 = vsel %vm1329, %v804, 0.0
      %v1394 = vsel %vm1330, %v809, 0.0
      %v1395 = vsel %vm1331, %v814, 0.0
      %v1396 = vsel %vm1332, %v819, 0.0
      %v1397 = vsel %vm1333, %v824, 0.0
      %v1398 = vsel %vm1334, %v829, 0.0
      %v1399 = vsel %vm1335, %v834, 0.0
      %v1400 = vsel %vm1336, %v839, 0.0
      %v1401 = vsel %vm1337, %v844, 0.0
      %v1402 = vsel %vm1338, %v849, 0.0
      %v1403 = vsel %vm1339, %v854, 0.0
      %v1404 = vsel %vm1340, %v859, 0.0
      %v1405 = vsel %vm1341, %v864, 0.0
      %v1406 = vsel %vm1342, %v869, 0.0
      %v1407 = vsel %vm1343, %v874, 0.0
      %v1408 = vsel %vm1344, %v879, 0.0
      %v1409 = vsel %vm1345, %v884, 0.0
      %v1410 = vsel %vm1346, %v889, 0.0
      %v1411 = vsel %vm1347, %v894, 0.0
      %v1412 = vsel %vm1348, %v899, 0.0
      %v1413 = vsel %vm1349, %v904, 0.0
      %v1414 = vsel %vm1350, %v909, 0.0
      %v1415 = vsel %vm1351, %v914, 0.0
      %v1416 = vsel %vm1352, %v919, 0.0
      %v1417 = vsel %vm1353, %v924, 0.0
      %v1418 = vsel %vm1354, %v929, 0.0
      %v1419 = vsel %vm1355, %v934, 0.0
      %v1420 = vsel %vm1356, %v939, 0.0
      %v1421 = vsel %vm1357, %v944, 0.0
      %v1422 = vsel %vm1358, %v949, 0.0
      %v1423 = vsel %vm1359, %v954, 0.0
      %v1424 = vsel %vm1360, %v959, 0.0
      %v1425 = vsel %vm1361, %v964, 0.0
      %v1426 = vsel %vm1362, %v969, 0.0
      %v1427 = vsel %vm1363, %v974, 0.0
      %v1428 = vadd.f32 %v1364, %v1365
      %v1429 = vadd.f32 %v1428, %v1366
      %v1430 = vadd.f32 %v1429, %v1367
      %v1431 = vadd.f32 %v1430, %v1368
      %v1432 = vadd.f32 %v1431, %v1369
      %v1433 = vadd.f32 %v1432, %v1370
      %v1434 = vadd.f32 %v1433, %v1371
      %v1435 = vadd.f32 %v1434, %v1372
      %v1436 = vadd.f32 %v1435, %v1373
      %v1437 = vadd.f32 %v1436, %v1374
      %v1438 = vadd.f32 %v1437, %v1375
      %v1439 = vadd.f32 %v1438, %v1376
      %v1440 = vadd.f32 %v1439, %v1377
      %v1441 = vadd.f32 %v1440, %v1378
      %v1442 = vadd.f32 %v1441, %v1379
      %v1443 = vadd.f32 %v1442, %v1380
      %v1444 = vadd.f32 %v1443, %v1381
      %v1445 = vadd.f32 %v1444, %v1382
      %v1446 = vadd.f32 %v1445, %v1383
      %v1447 = vadd.f32 %v1446, %v1384
      %v1448 = vadd.f32 %v1447, %v1385
      %v1449 = vadd.f32 %v1448, %v1386
      %v1450 = vadd.f32 %v1449, %v1387
      %v1451 = vadd.f32 %v1450, %v1388
      %v1452 = vadd.f32 %v1451, %v1389
      %v1453 = vadd.f32 %v1452, %v1390
      %v1454 = vadd.f32 %v1453, %v1391
      %v1455 = vadd.f32 %v1454, %v1392
      %v1456 = vadd.f32 %v1455, %v1393
      %v1457 = vadd.f32 %v1456, %v1394
      %v1458 = vadd.f32 %v1457, %v1395
      %v1459 = vadd.f32 %v1458, %v1396
      %v1460 = vadd.f32 %v1459, %v1397
      %v1461 = vadd.f32 %v1460, %v1398
      %v1462 = vadd.f32 %v1461, %v1399
      %v1463 = vadd.f32 %v1462, %v1400
      %v1464 = vadd.f32 %v1463, %v1401
      %v1465 = vadd.f32 %v1464, %v1402
      %v1466 = vadd.f32 %v1465, %v1403
      %v1467 = vadd.f32 %v1466, %v1404
      %v1468 = vadd.f32 %v1467, %v1405
      %v1469 = vadd.f32 %v1468, %v1406
      %v1470 = vadd.f32 %v1469, %v1407
      %v1471 = vadd.f32 %v1470, %v1408
      %v1472 = vadd.f32 %v1471, %v1409
      %v1473 = vadd.f32 %v1472, %v1410
      %v1474 = vadd.f32 %v1473, %v1411
      %v1475 = vadd.f32 %v1474, %v1412
      %v1476 = vadd.f32 %v1475, %v1413
      %v1477 = vadd.f32 %v1476, %v1414
      %v1478 = vadd.f32 %v1477, %v1415
      %v1479 = vadd.f32 %v1478, %v1416
      %v1480 = vadd.f32 %v1479, %v1417
      %v1481 = vadd.f32 %v1480, %v1418
      %v1482 = vadd.f32 %v1481, %v1419
      %v1483 = vadd.f32 %v1482, %v1420
      %v1484 = vadd.f32 %v1483, %v1421
      %v1485 = vadd.f32 %v1484, %v1422
      %v1486 = vadd.f32 %v1485, %v1423
      %v1487 = vadd.f32 %v1486, %v1424
      %v1488 = vadd.f32 %v1487, %v1425
      %v1489 = vadd.f32 %v1488, %v1426
      %v1490 = vadd.f32 %v1489, %v1427
      %v1491 = vrot.slane %v1490, 4
      %v1492 = vadd.f32 %v1490, %v1491
      %v1493 = vrot.slane %v1492, 2
      %v1494 = vadd.f32 %v1492, %v1493
      %v1495 = vrot.slane %v1494, 1
      %v1496 = vadd.f32 %v1494, %v1495
      %v1497 = vmul.f32 %v1364, %v1364
      %v1498 = vmul.f32 %v1365, %v1365
      %v1499 = vmul.f32 %v1366, %v1366
      %v1500 = vmul.f32 %v1367, %v1367
      %v1501 = vmul.f32 %v1368, %v1368
      %v1502 = vmul.f32 %v1369, %v1369
      %v1503 = vmul.f32 %v1370, %v1370
      %v1504 = vmul.f32 %v1371, %v1371
      %v1505 = vmul.f32 %v1372, %v1372
      %v1506 = vmul.f32 %v1373, %v1373
      %v1507 = vmul.f32 %v1374, %v1374
      %v1508 = vmul.f32 %v1375, %v1375
      %v1509 = vmul.f32 %v1376, %v1376
      %v1510 = vmul.f32 %v1377, %v1377
      %v1511 = vmul.f32 %v1378, %v1378
      %v1512 = vmul.f32 %v1379, %v1379
      %v1513 = vmul.f32 %v1380, %v1380
      %v1514 = vmul.f32 %v1381, %v1381
      %v1515 = vmul.f32 %v1382, %v1382
      %v1516 = vmul.f32 %v1383, %v1383
      %v1517 = vmul.f32 %v1384, %v1384
      %v1518 = vmul.f32 %v1385, %v1385
      %v1519 = vmul.f32 %v1386, %v1386
      %v1520 = vmul.f32 %v1387, %v1387
      %v1521 = vmul.f32 %v1388, %v1388
      %v1522 = vmul.f32 %v1389, %v1389
      %v1523 = vmul.f32 %v1390, %v1390
      %v1524 = vmul.f32 %v1391, %v1391
      %v1525 = vmul.f32 %v1392, %v1392
      %v1526 = vmul.f32 %v1393, %v1393
      %v1527 = vmul.f32 %v1394, %v1394
      %v1528 = vmul.f32 %v1395, %v1395
      %v1529 = vmul.f32 %v1396, %v1396
      %v1530 = vmul.f32 %v1397, %v1397
      %v1531 = vmul.f32 %v1398, %v1398
      %v1532 = vmul.f32 %v1399, %v1399
      %v1533 = vmul.f32 %v1400, %v1400
      %v1534 = vmul.f32 %v1401, %v1401
      %v1535 = vmul.f32 %v1402, %v1402
      %v1536 = vmul.f32 %v1403, %v1403
      %v1537 = vmul.f32 %v1404, %v1404
      %v1538 = vmul.f32 %v1405, %v1405
      %v1539 = vmul.f32 %v1406, %v1406
      %v1540 = vmul.f32 %v1407, %v1407
      %v1541 = vmul.f32 %v1408, %v1408
      %v1542 = vmul.f32 %v1409, %v1409
      %v1543 = vmul.f32 %v1410, %v1410
      %v1544 = vmul.f32 %v1411, %v1411
      %v1545 = vmul.f32 %v1412, %v1412
      %v1546 = vmul.f32 %v1413, %v1413
      %v1547 = vmul.f32 %v1414, %v1414
      %v1548 = vmul.f32 %v1415, %v1415
      %v1549 = vmul.f32 %v1416, %v1416
      %v1550 = vmul.f32 %v1417, %v1417
      %v1551 = vmul.f32 %v1418, %v1418
      %v1552 = vmul.f32 %v1419, %v1419
      %v1553 = vmul.f32 %v1420, %v1420
      %v1554 = vmul.f32 %v1421, %v1421
      %v1555 = vmul.f32 %v1422, %v1422
      %v1556 = vmul.f32 %v1423, %v1423
      %v1557 = vmul.f32 %v1424, %v1424
      %v1558 = vmul.f32 %v1425, %v1425
      %v1559 = vmul.f32 %v1426, %v1426
      %v1560 = vmul.f32 %v1427, %v1427
      %v1561 = vadd.f32 %v1497, %v1498
      %v1562 = vadd.f32 %v1561, %v1499
      %v1563 = vadd.f32 %v1562, %v1500
      %v1564 = vadd.f32 %v1563, %v1501
      %v1565 = vadd.f32 %v1564, %v1502
      %v1566 = vadd.f32 %v1565, %v1503
      %v1567 = vadd.f32 %v1566, %v1504
      %v1568 = vadd.f32 %v1567, %v1505
      %v1569 = vadd.f32 %v1568, %v1506
      %v1570 = vadd.f32 %v1569, %v1507
      %v1571 = vadd.f32 %v1570, %v1508
      %v1572 = vadd.f32 %v1571, %v1509
      %v1573 = vadd.f32 %v1572, %v1510
      %v1574 = vadd.f32 %v1573, %v1511
      %v1575 = vadd.f32 %v1574, %v1512
      %v1576 = vadd.f32 %v1575, %v1513
      %v1577 = vadd.f32 %v1576, %v1514
      %v1578 = vadd.f32 %v1577, %v1515
      %v1579 = vadd.f32 %v1578, %v1516
      %v1580 = vadd.f32 %v1579, %v1517
      %v1581 = vadd.f32 %v1580, %v1518
      %v1582 = vadd.f32 %v1581, %v1519
      %v1583 = vadd.f32 %v1582, %v1520
      %v1584 = vadd.f32 %v1583, %v1521
      %v1585 = vadd.f32 %v1584, %v1522
      %v1586 = vadd.f32 %v1585, %v1523
      %v1587 = vadd.f32 %v1586, %v1524
      %v1588 = vadd.f32 %v1587, %v1525
      %v1589 = vadd.f32 %v1588, %v1526
      %v1590 = vadd.f32 %v1589, %v1527
      %v1591 = vadd.f32 %v1590, %v1528
      %v1592 = vadd.f32 %v1591, %v1529
      %v1593 = vadd.f32 %v1592, %v1530
      %v1594 = vadd.f32 %v1593, %v1531
      %v1595 = vadd.f32 %v1594, %v1532
      %v1596 = vadd.f32 %v1595, %v1533
      %v1597 = vadd.f32 %v1596, %v1534
      %v1598 = vadd.f32 %v1597, %v1535
      %v1599 = vadd.f32 %v1598, %v1536
      %v1600 = vadd.f32 %v1599, %v1537
      %v1601 = vadd.f32 %v1600, %v1538
      %v1602 = vadd.f32 %v1601, %v1539
      %v1603 = vadd.f32 %v1602, %v1540
      %v1604 = vadd.f32 %v1603, %v1541
      %v1605 = vadd.f32 %v1604, %v1542
      %v1606 = vadd.f32 %v1605, %v1543
      %v1607 = vadd.f32 %v1606, %v1544
      %v1608 = vadd.f32 %v1607, %v1545
      %v1609 = vadd.f32 %v1608, %v1546
      %v1610 = vadd.f32 %v1609, %v1547
      %v1611 = vadd.f32 %v1610, %v1548
      %v1612 = vadd.f32 %v1611, %v1549
      %v1613 = vadd.f32 %v1612, %v1550
      %v1614 = vadd.f32 %v1613, %v1551
      %v1615 = vadd.f32 %v1614, %v1552
      %v1616 = vadd.f32 %v1615, %v1553
      %v1617 = vadd.f32 %v1616, %v1554
      %v1618 = vadd.f32 %v1617, %v1555
      %v1619 = vadd.f32 %v1618, %v1556
      %v1620 = vadd.f32 %v1619, %v1557
      %v1621 = vadd.f32 %v1620, %v1558
      %v1622 = vadd.f32 %v1621, %v1559
      %v1623 = vadd.f32 %v1622, %v1560
      %v1624 = vrot.slane %v1623, 4
      %v1625 = vadd.f32 %v1623, %v1624
      %v1626 = vrot.slane %v1625, 2
      %v1627 = vadd.f32 %v1625, %v1626
      %v1628 = vrot.slane %v1627, 1
      %v1629 = vadd.f32 %v1627, %v1628
      %1630 = vst [vmem:[%s295] sm:$0x1] %v1496
      %1631 = vst [vmem:[%s298] sm:$0x1] %v1629
      %s1632 = smul.u32 64, %s19
      %p1633 = scmp.lt.s32.totalorder %s1632, 127
      %s1634 = scalar_select %p1633, %s1632, 127
      %s1635 = smul.addr %s1634, 8
      %s1636 = scalar_lea.vmem %s5, %s1635
      %p1637 = scmp.lt.s32.totalorder %s19, 1
      %s1638 = scalar_select %p1637, %s19, 1
      %s1639 = scalar_lea.vmem %s6, %s1638
      %p1640 = scmp.lt.s32.totalorder %s19, 1
      %s1641 = scalar_select %p1640, %s19, 1
      %s1642 = scalar_lea.vmem %s7, %s1641
      // Predicated region
      $region41: #{mpnn_conv_forward.8} parent=39 // pred_check
        %p1643 = pneg %p147
      $region42: #{mpnn_conv_forward.8} parent=39 // pred_check_branch
        %1645 = sbr.rel (%p1643) target = $region44
      $region43: #{mpnn_conv_forward.8} parent=39 // pred_region
        %s1646 = smul.u32 64, %s19
      $region44: #{mpnn_conv_forward.8} parent=39 // pred_fallthru
        _
      // Predicated region
      $region45: #{mpnn_conv_forward.8} parent=39 // pred_check
        %p1647 = pneg %p173
      $region46: #{mpnn_conv_forward.8} parent=39 // pred_check_branch
        %1649 = sbr.rel (%p1647) target = $region48
      $region47: #{mpnn_conv_forward.8} parent=39 // pred_region
        _
      $region48: #{mpnn_conv_forward.8} parent=39 // pred_fallthru
        _
      // Predicated region
      $region49: #{mpnn_conv_forward.8} parent=39 // pred_check
        %p1650 = pneg %p199
      $region50: #{mpnn_conv_forward.8} parent=39 // pred_check_branch
        %1652 = sbr.rel (%p1650) target = $region52
      $region51: #{mpnn_conv_forward.8} parent=39 // pred_region
        _
      $region52: #{mpnn_conv_forward.8} parent=39 // pred_fallthru
        _
    $region40: #{mpnn_conv_forward.8} parent=5 // pred_fallthru
      _
    %p1653 = scmp.le.s32.totalorder 2, %s14
    // Predicated region
    $region53: #{mpnn_conv_forward.8} parent=5 // pred_check
      %p1654 = pneg %p1653
    $region54: #{mpnn_conv_forward.8} parent=5 // pred_check_branch
      %1656 = sbr.rel (%p1654) target = $region56
    $region55: #{mpnn_conv_forward.8} parent=5 // pred_region
      %s1657 = ssub.s32 %s14, 2
      // Predicated region
      $region57: #{mpnn_conv_forward.8} parent=55 // pred_check
        %p1658 = pneg %p153
      $region58: #{mpnn_conv_forward.8} parent=55 // pred_check_branch
        %1660 = sbr.rel (%p1658) target = $region60
      $region59: #{mpnn_conv_forward.8} parent=55 // pred_region
        %s1661 = smul.u32 64, %s20
        %p1662 = scmp.lt.s32.totalorder %s1661, 127
        %s1663 = scalar_select %p1662, %s1661, 127
        %s1664 = smul.addr %s1663, 8
        %s1665 = scalar_lea.vmem %s5, %s1664
      $region60: #{mpnn_conv_forward.8} parent=55 // pred_fallthru
        _
      // Predicated region
      $region61: #{mpnn_conv_forward.8} parent=55 // pred_check
        %p1666 = pneg %p179
      $region62: #{mpnn_conv_forward.8} parent=55 // pred_check_branch
        %1668 = sbr.rel (%p1666) target = $region64
      $region63: #{mpnn_conv_forward.8} parent=55 // pred_region
        %p1669 = scmp.lt.s32.totalorder %s20, 1
        %s1670 = scalar_select %p1669, %s20, 1
        %s1671 = scalar_lea.vmem %s6, %s1670
      $region64: #{mpnn_conv_forward.8} parent=55 // pred_fallthru
        _
      // Predicated region
      $region65: #{mpnn_conv_forward.8} parent=55 // pred_check
        %p1672 = pneg %p205
      $region66: #{mpnn_conv_forward.8} parent=55 // pred_check_branch
        %1674 = sbr.rel (%p1672) target = $region68
      $region67: #{mpnn_conv_forward.8} parent=55 // pred_region
        %p1675 = scmp.lt.s32.totalorder %s20, 1
        %s1676 = scalar_select %p1675, %s20, 1
        %s1677 = scalar_lea.vmem %s7, %s1676
      $region68: #{mpnn_conv_forward.8} parent=55 // pred_fallthru
        _
    $region56: #{mpnn_conv_forward.8} parent=5 // pred_fallthru
      _
  $region6: #{mpnn_conv_forward.8} parent=0 // loop_footer
    %s18 = sadd.s32 1, %s14
  $region7: #{mpnn_conv_forward.8} parent=0 // loop_footer_branch
    %13 = sbr.rel target = $region3
  $region8: #{mpnn_conv_forward.8} parent=0 // loop_exit
    _

// kernel: mpnn_conv_forward.7
$region0: #{mpnn_conv_forward.7}
  #allocation0 [shape = 'u32[]', space=smem, size = 0x4, offset = 0x4, fixed_abs, tag = 'smem constant byte address 0x4 - core index']
  #allocation1 [shape = 'u32[144,128]{1,0:T(1,128)}', space=vmem, size = 0x12000, scoped, tag = 'internal scratch']
  #allocation2 [shape = 'f32[512,128]{1,0:T(8,128)}', space=vmem, size = 0x40000, scoped, tag = 'scratch operand']
  #allocation3 [shape = 'f32[1,1]{1,0:T(1,128)S(6)}', space=smem, size = 0x200, scoped, tag = 'scoped memory for mpnn_conv_forward.7']
  %s0 = inlined_call_operand.vmem [shape: s32[1,1536], index: 0, kind: input, shape index: {}]
  %s1 = inlined_call_operand.vmem [shape: f32[1536,128], index: 1, kind: input, shape index: {}]
  %s2 = inlined_call_operand.vmem [shape: f32[1024,128], index: 2, kind: input, shape index: {}]
  %s3 = inlined_call_operand.vmem [shape: f32[128,128], index: 3, kind: input, shape index: {}]
  %s4 = inlined_call_operand.vmem [shape: f32[1,128], index: 4, kind: input, shape index: {}]
  %s5 = inlined_call_operand.<no memory space> [shape: f32[1,1], index: 5, kind: input, shape index: {}]
  %s6 = inlined_call_operand.vmem [shape: f32[1024,128], index: 6, kind: output, shape index: {0}]
  %s7 = inlined_call_operand.vmem [shape: f32[2,1,128], index: 7, kind: output, shape index: {1}]
  %s8 = inlined_call_operand.vmem [shape: f32[2,1,128], index: 8, kind: output, shape index: {2}]
  %9 = xla_tuple %s6, %s7, %s8
  %s10 = sld [smem:[#allocation0]]
  $region81: #{mpnn_conv_forward.7} parent=0
    _
  %s12 = ssub.s32 1, %s10
  %s13 = scalar_select 0, %s12, %s10
  %14 = sst [smem:[#allocation3]] %s5
  loop: start=0, step=1, limit=8
  $region2: #{mpnn_conv_forward.7} parent=0 // loop_pre_header
    _
  $region3: #{mpnn_conv_forward.7} parent=0 // loop_header
    %s16 = sphi 0, %s20
    %p17 = scmp.ge.s32.totalorder %s16, 8
    %s23 = sphi 0, %s35
    %s24 = sphi 0, %s31
    %s25 = sphi 0, %s23
    %s26 = sphi 0, %s24
    %s27 = sphi 0, %s25
    %s28 = sphi 0, %s26
    %s38 = sphi 0, %s40
    %s41 = sphi 0, %s38
    %s42 = sphi 0, %s41
    %s58 = sphi 0, %s42
    %s64 = sphi 0, %s66
    %s67 = sphi 0, %s64
    %s68 = sphi 0, %s67
    %s84 = sphi 0, %s68
    %s90 = sphi 0, %s92
    %s93 = sphi 0, %s90
    %s94 = sphi 0, %s93
    %s110 = sphi 0, %s94
    %s114 = sphi 0, %s114
    %s116 = sphi 0, %s114
    %s117 = sphi 0, %s116
    %s131 = sphi 0, %s117
    %s135 = sphi 0, %s135
    %s137 = sphi 0, %s135
    %s138 = sphi 0, %s137
    %s152 = sphi 0, %s138
    %s156 = sphi 0, %s156
    %s158 = sphi 0, %s156
    %s159 = sphi 0, %s158
    %s173 = sphi 0, %s159
    %s179 = sphi 0, %s181
    %s182 = sphi 0, %s179
    %s183 = sphi 0, %s182
    %s199 = sphi 0, %s183
    %s205 = sphi 0, %s207
    %s208 = sphi 0, %s205
    %s209 = sphi 0, %s208
    %s225 = sphi 0, %s209
    %s231 = sphi 0, %s233
    %s234 = sphi 0, %s231
    %s235 = sphi 0, %s234
    %s251 = sphi 0, %s235
  $region4: #{mpnn_conv_forward.7} parent=0 // loop_header_branch
    %19 = sbr.rel (%p17) target = $region8
  $region5: #{mpnn_conv_forward.7} parent=0 // loop_body
    %s21 = ssub.s32 %s16, 1
    %s22 = ssub.s32 %s16, 2
    %s29 = sadd.s32 1, %s24
    %p30 = scmp.ge.s32.totalorder %s29, 3
    %s31 = scalar_select %p30, 0, %s29
    %s32 = sadd.s32 1, %s23
    %s33 = scalar_select %p30, %s32, %s23
    %p34 = scmp.ge.s32.totalorder %s33, 2
    %s35 = scalar_select %p34, 0, %s33
    %s36 = ssub.s32 %s24, %s31
    %p37 = scmp.eq.s32.totalorder %s36, 0
    %s39 = sadd.s32 %s38, 1
    %s40 = scalar_select %p37, %s38, %s39
    %p43 = pneg %p37
    %p44 = scmp.eq.s32.totalorder %s16, 5
    %p45 = por %p43, %p44
    %p46 = scmp.ne.s32.totalorder %s38, %s41
    %p47 = scmp.eq.s32.totalorder %s16, 0
    %p48 = por %p46, %p47
    %p49 = scmp.ne.s32.totalorder %s38, %s41
    %p50 = scmp.eq.s32.totalorder %s21, 5
    %p51 = por %p49, %p50
    %p52 = scmp.ne.s32.totalorder %s41, %s42
    %p53 = scmp.eq.s32.totalorder %s21, 0
    %p54 = por %p52, %p53
    %p55 = scmp.ne.s32.totalorder %s41, %s42
    %p56 = scmp.eq.s32.totalorder %s22, 5
    %p57 = por %p55, %p56
    %p59 = scmp.ne.s32.totalorder %s42, %s58
    %p60 = scmp.eq.s32.totalorder %s22, 0
    %p61 = por %p59, %p60
    %s62 = ssub.s32 %s24, %s31
    %p63 = scmp.eq.s32.totalorder %s62, 0
    %s65 = sadd.s32 %s64, 1
    %s66 = scalar_select %p63, %s64, %s65
    %p69 = pneg %p63
    %p70 = scmp.eq.s32.totalorder %s16, 5
    %p71 = por %p69, %p70
    %p72 = scmp.ne.s32.totalorder %s64, %s67
    %p73 = scmp.eq.s32.totalorder %s16, 0
    %p74 = por %p72, %p73
    %p75 = scmp.ne.s32.totalorder %s64, %s67
    %p76 = scmp.eq.s32.totalorder %s21, 5
    %p77 = por %p75, %p76
    %p78 = scmp.ne.s32.totalorder %s67, %s68
    %p79 = scmp.eq.s32.totalorder %s21, 0
    %p80 = por %p78, %p79
    %p81 = scmp.ne.s32.totalorder %s67, %s68
    %p82 = scmp.eq.s32.totalorder %s22, 5
    %p83 = por %p81, %p82
    %p85 = scmp.ne.s32.totalorder %s68, %s84
    %p86 = scmp.eq.s32.totalorder %s22, 0
    %p87 = por %p85, %p86
    %s88 = ssub.s32 %s23, %s35
    %p89 = scmp.eq.s32.totalorder %s88, 0
    %s91 = sadd.s32 %s90, 1
    %s92 = scalar_select %p89, %s90, %s91
    %p95 = pneg %p89
    %p96 = scmp.eq.s32.totalorder %s16, 5
    %p97 = por %p95, %p96
    %p98 = scmp.ne.s32.totalorder %s90, %s93
    %p99 = scmp.eq.s32.totalorder %s16, 0
    %p100 = por %p98, %p99
    %p101 = scmp.ne.s32.totalorder %s90, %s93
    %p102 = scmp.eq.s32.totalorder %s21, 5
    %p103 = por %p101, %p102
    %p104 = scmp.ne.s32.totalorder %s93, %s94
    %p105 = scmp.eq.s32.totalorder %s21, 0
    %p106 = por %p104, %p105
    %p107 = scmp.ne.s32.totalorder %s93, %s94
    %p108 = scmp.eq.s32.totalorder %s22, 5
    %p109 = por %p107, %p108
    %p111 = scmp.ne.s32.totalorder %s94, %s110
    %p112 = scmp.eq.s32.totalorder %s22, 0
    %p113 = por %p111, %p112
    %s115 = sadd.s32 %s114, 1
    %p118 = scmp.eq.s32.totalorder %s16, 5
    %p119 = scmp.ne.s32.totalorder %s114, %s116
    %p120 = scmp.eq.s32.totalorder %s16, 0
    %p121 = por %p119, %p120
    %p122 = scmp.ne.s32.totalorder %s114, %s116
    %p123 = scmp.eq.s32.totalorder %s21, 5
    %p124 = por %p122, %p123
    %p125 = scmp.ne.s32.totalorder %s116, %s117
    %p126 = scmp.eq.s32.totalorder %s21, 0
    %p127 = por %p125, %p126
    %p128 = scmp.ne.s32.totalorder %s116, %s117
    %p129 = scmp.eq.s32.totalorder %s22, 5
    %p130 = por %p128, %p129
    %p132 = scmp.ne.s32.totalorder %s117, %s131
    %p133 = scmp.eq.s32.totalorder %s22, 0
    %p134 = por %p132, %p133
    %s136 = sadd.s32 %s135, 1
    %p139 = scmp.eq.s32.totalorder %s16, 5
    %p140 = scmp.ne.s32.totalorder %s135, %s137
    %p141 = scmp.eq.s32.totalorder %s16, 0
    %p142 = por %p140, %p141
    %p143 = scmp.ne.s32.totalorder %s135, %s137
    %p144 = scmp.eq.s32.totalorder %s21, 5
    %p145 = por %p143, %p144
    %p146 = scmp.ne.s32.totalorder %s137, %s138
    %p147 = scmp.eq.s32.totalorder %s21, 0
    %p148 = por %p146, %p147
    %p149 = scmp.ne.s32.totalorder %s137, %s138
    %p150 = scmp.eq.s32.totalorder %s22, 5
    %p151 = por %p149, %p150
    %p153 = scmp.ne.s32.totalorder %s138, %s152
    %p154 = scmp.eq.s32.totalorder %s22, 0
    %p155 = por %p153, %p154
    %s157 = sadd.s32 %s156, 1
    %p160 = scmp.eq.s32.totalorder %s16, 5
    %p161 = scmp.ne.s32.totalorder %s156, %s158
    %p162 = scmp.eq.s32.totalorder %s16, 0
    %p163 = por %p161, %p162
    %p164 = scmp.ne.s32.totalorder %s156, %s158
    %p165 = scmp.eq.s32.totalorder %s21, 5
    %p166 = por %p164, %p165
    %p167 = scmp.ne.s32.totalorder %s158, %s159
    %p168 = scmp.eq.s32.totalorder %s21, 0
    %p169 = por %p167, %p168
    %p170 = scmp.ne.s32.totalorder %s158, %s159
    %p171 = scmp.eq.s32.totalorder %s22, 5
    %p172 = por %p170, %p171
    %p174 = scmp.ne.s32.totalorder %s159, %s173
    %p175 = scmp.eq.s32.totalorder %s22, 0
    %p176 = por %p174, %p175
    %s177 = ssub.s32 %s23, %s35
    %p178 = scmp.eq.s32.totalorder %s177, 0
    %s180 = sadd.s32 %s179, 1
    %s181 = scalar_select %p178, %s179, %s180
    %p184 = pneg %p178
    %p185 = scmp.eq.s32.totalorder %s16, 5
    %p186 = por %p184, %p185
    %p187 = scmp.ne.s32.totalorder %s179, %s182
    %p188 = scmp.eq.s32.totalorder %s16, 0
    %p189 = por %p187, %p188
    %p190 = scmp.ne.s32.totalorder %s179, %s182
    %p191 = scmp.eq.s32.totalorder %s21, 5
    %p192 = por %p190, %p191
    %p193 = scmp.ne.s32.totalorder %s182, %s183
    %p194 = scmp.eq.s32.totalorder %s21, 0
    %p195 = por %p193, %p194
    %p196 = scmp.ne.s32.totalorder %s182, %s183
    %p197 = scmp.eq.s32.totalorder %s22, 5
    %p198 = por %p196, %p197
    %p200 = scmp.ne.s32.totalorder %s183, %s199
    %p201 = scmp.eq.s32.totalorder %s22, 0
    %p202 = por %p200, %p201
    %s203 = ssub.s32 %s23, %s35
    %p204 = scmp.eq.s32.totalorder %s203, 0
    %s206 = sadd.s32 %s205, 1
    %s207 = scalar_select %p204, %s205, %s206
    %p210 = pneg %p204
    %p211 = scmp.eq.s32.totalorder %s16, 5
    %p212 = por %p210, %p211
    %p213 = scmp.ne.s32.totalorder %s205, %s208
    %p214 = scmp.eq.s32.totalorder %s16, 0
    %p215 = por %p213, %p214
    %p216 = scmp.ne.s32.totalorder %s205, %s208
    %p217 = scmp.eq.s32.totalorder %s21, 5
    %p218 = por %p216, %p217
    %p219 = scmp.ne.s32.totalorder %s208, %s209
    %p220 = scmp.eq.s32.totalorder %s21, 0
    %p221 = por %p219, %p220
    %p222 = scmp.ne.s32.totalorder %s208, %s209
    %p223 = scmp.eq.s32.totalorder %s22, 5
    %p224 = por %p222, %p223
    %p226 = scmp.ne.s32.totalorder %s209, %s225
    %p227 = scmp.eq.s32.totalorder %s22, 0
    %p228 = por %p226, %p227
    %s229 = ssub.s32 %s23, %s35
    %p230 = scmp.eq.s32.totalorder %s229, 0
    %s232 = sadd.s32 %s231, 1
    %s233 = scalar_select %p230, %s231, %s232
    %p236 = pneg %p230
    %p237 = scmp.eq.s32.totalorder %s16, 5
    %p238 = por %p236, %p237
    %p239 = scmp.ne.s32.totalorder %s231, %s234
    %p240 = scmp.eq.s32.totalorder %s16, 0
    %p241 = por %p239, %p240
    %p242 = scmp.ne.s32.totalorder %s231, %s234
    %p243 = scmp.eq.s32.totalorder %s21, 5
    %p244 = por %p242, %p243
    %p245 = scmp.ne.s32.totalorder %s234, %s235
    %p246 = scmp.eq.s32.totalorder %s21, 0
    %p247 = por %p245, %p246
    %p248 = scmp.ne.s32.totalorder %s234, %s235
    %p249 = scmp.eq.s32.totalorder %s22, 5
    %p250 = por %p248, %p249
    %p252 = scmp.ne.s32.totalorder %s235, %s251
    %p253 = scmp.eq.s32.totalorder %s22, 0
    %p254 = por %p252, %p253
    %p255 = scmp.le.s32.totalorder 1, %s16
    %p256 = scmp.lt.s32.totalorder %s16, 7
    %p257 = pnand %p255, %p256
    %p258 = pneg %p257
    // Predicated region
    $region9: #{mpnn_conv_forward.7} parent=5 // pred_check
      _
    $region10: #{mpnn_conv_forward.7} parent=5 // pred_check_branch
      %260 = sbr.rel (%p257) target = $region12
    $region11: #{mpnn_conv_forward.7} parent=5 // pred_region
      %s261 = ssub.s32 %s16, 1
      // Predicated region
      $region13: #{mpnn_conv_forward.7} parent=11 // pred_check
        %p262 = pneg %p127
      $region14: #{mpnn_conv_forward.7} parent=11 // pred_check_branch
        %264 = sbr.rel (%p262) target = $region16
      $region15: #{mpnn_conv_forward.7} parent=11 // pred_region
        _
      $region16: #{mpnn_conv_forward.7} parent=11 // pred_fallthru
        _
      // Predicated region
      $region17: #{mpnn_conv_forward.7} parent=11 // pred_check
        %p265 = pneg %p148
      $region18: #{mpnn_conv_forward.7} parent=11 // pred_check_branch
        %267 = sbr.rel (%p265) target = $region20
      $region19: #{mpnn_conv_forward.7} parent=11 // pred_region
        _
      $region20: #{mpnn_conv_forward.7} parent=11 // pred_fallthru
        _
      // Predicated region
      $region21: #{mpnn_conv_forward.7} parent=11 // pred_check
        %p268 = pneg %p169
      $region22: #{mpnn_conv_forward.7} parent=11 // pred_check_branch
        %270 = sbr.rel (%p268) target = $region24
      $region23: #{mpnn_conv_forward.7} parent=11 // pred_region
        _
      $region24: #{mpnn_conv_forward.7} parent=11 // pred_fallthru
        _
    $region12: #{mpnn_conv_forward.7} parent=5 // pred_fallthru
      _
    %p271 = scmp.lt.s32.totalorder %s16, 6
    // Predicated region
    $region25: #{mpnn_conv_forward.7} parent=5 // pred_check
      %p272 = pneg %p271
    $region26: #{mpnn_conv_forward.7} parent=5 // pred_check_branch
      %274 = sbr.rel (%p272) target = $region28
    $region27: #{mpnn_conv_forward.7} parent=5 // pred_region
      // Predicated region
      $region29: #{mpnn_conv_forward.7} parent=27 // pred_check
        %p275 = pneg %p48
      $region30: #{mpnn_conv_forward.7} parent=27 // pred_check_branch
        %277 = sbr.rel (%p275) target = $region32
      $region31: #{mpnn_conv_forward.7} parent=27 // pred_region
        %s278 = smul.u32 4, %s24
        %p279 = scmp.lt.s32.totalorder %s278, 11
        %s280 = scalar_select %p279, %s278, 11
        %s281 = scalar_lea.vmem %s0, %s280
        %s282 = smul.u32 4, %s24
      $region32: #{mpnn_conv_forward.7} parent=27 // pred_fallthru
        _
      // Predicated region
      $region33: #{mpnn_conv_forward.7} parent=27 // pred_check
        %p283 = pneg %p74
      $region34: #{mpnn_conv_forward.7} parent=27 // pred_check_branch
        %285 = sbr.rel (%p283) target = $region36
      $region35: #{mpnn_conv_forward.7} parent=27 // pred_region
        %s286 = smul.u32 64, %s24
        %p287 = scmp.lt.s32.totalorder %s286, 191
        %s288 = scalar_select %p287, %s286, 191
        %s289 = smul.addr %s288, 8
        %s290 = scalar_lea.vmem %s1, %s289
        %s291 = smul.u32 64, %s24
      $region36: #{mpnn_conv_forward.7} parent=27 // pred_fallthru
        _
      // Predicated region
      $region37: #{mpnn_conv_forward.7} parent=27 // pred_check
        %p292 = pneg %p100
      $region38: #{mpnn_conv_forward.7} parent=27 // pred_check_branch
        %294 = sbr.rel (%p292) target = $region40
      $region39: #{mpnn_conv_forward.7} parent=27 // pred_region
        %s295 = smul.u32 64, %s23
        %p296 = scmp.lt.s32.totalorder %s295, 127
        %s297 = scalar_select %p296, %s295, 127
        %s298 = smul.addr %s297, 8
        %s299 = scalar_lea.vmem %s2, %s298
        %s300 = smul.u32 64, %s23
      $region40: #{mpnn_conv_forward.7} parent=27 // pred_fallthru
        _
    $region28: #{mpnn_conv_forward.7} parent=5 // pred_fallthru
      _
    %p301 = scmp.le.s32.totalorder 1, %s16
    %p302 = scmp.lt.s32.totalorder %s16, 7
    %p303 = pnand %p301, %p302
    %p304 = pneg %p303
    // Predicated region
    $region41: #{mpnn_conv_forward.7} parent=5 // pred_check
      _
    $region42: #{mpnn_conv_forward.7} parent=5 // pred_check_branch
      %306 = sbr.rel (%p303) target = $region44
    $region43: #{mpnn_conv_forward.7} parent=5 // pred_region
      %s307 = ssub.s32 %s16, 1
      %s308 = smul.u32 4, %s26
      %p309 = scmp.lt.s32.totalorder %s308, 11
      %s310 = scalar_select %p309, %s308, 11
      %s311 = scalar_lea.vmem %s0, %s310
      %p312 = pneg %p54
      %p313 = pneg %p51
      %s314 = smul.u32 64, %s26
      %p315 = scmp.lt.s32.totalorder %s314, 191
      %s316 = scalar_select %p315, %s314, 191
      %s317 = smul.addr %s316, 8
      %s318 = scalar_lea.vmem %s1, %s317
      %p319 = pneg %p80
      %p320 = pneg %p77
      %s321 = smul.u32 64, %s25
      %p322 = scmp.lt.s32.totalorder %s321, 127
      %s323 = scalar_select %p322, %s321, 127
      %s324 = smul.addr %s323, 8
      %s325 = scalar_lea.vmem %s2, %s324
      %p326 = pneg %p106
      %p327 = pneg %p103
      %p328 = pneg %p127
      %p329 = pneg %p124
      %p330 = pneg %p148
      %p331 = pneg %p145
      %p332 = pneg %p169
      %p333 = pneg %p166
      %p334 = pneg %p195
      %p335 = pneg %p192
      %s336 = smul.u32 64, %s25
      %p337 = scmp.lt.s32.totalorder %s336, 127
      %s338 = scalar_select %p337, %s336, 127
      %s339 = smul.addr %s338, 8
      %s340 = scalar_lea.vmem %s6, %s339
      %p341 = pneg %p221
      %p342 = pneg %p218
      %p343 = scmp.lt.s32.totalorder %s25, 1
      %s344 = scalar_select %p343, %s25, 1
      %s345 = scalar_lea.vmem %s7, %s344
      %p346 = pneg %p247
      %p347 = pneg %p244
      %p348 = scmp.lt.s32.totalorder %s25, 1
      %s349 = scalar_select %p348, %s25, 1
      %s350 = scalar_lea.vmem %s8, %s349
      %s351 = smul.u32 4, %s26
      %p352 = scmp.lt.s32.totalorder %s351, 11
      %s353 = scalar_select %p352, %s351, 11
      %s354 = scalar_lea.vmem %s0, %s353
      %s355 = smul.u32 4, %s26
      %s356 = smul.u32 64, %s26
      %p357 = scmp.lt.s32.totalorder %s356, 191
      %s358 = scalar_select %p357, %s356, 191
      %s359 = smul.addr %s358, 8
      %s360 = scalar_lea.vmem %s1, %s359
      %s361 = smul.u32 64, %s26
      %s362 = smul.u32 64, %s25
      %p363 = scmp.lt.s32.totalorder %s362, 127
      %s364 = scalar_select %p363, %s362, 127
      %s365 = smul.addr %s364, 8
      %s366 = scalar_lea.vmem %s2, %s365
      %s367 = smul.u32 64, %s25
      %s368 = smul.u32 64, %s25
      %p369 = scmp.lt.s32.totalorder %s368, 127
      %s370 = scalar_select %p369, %s368, 127
      %s371 = smul.addr %s370, 8
      %s372 = scalar_lea.vmem %s6, %s371
      %s373 = smul.u32 64, %s25
      %p374 = scmp.lt.s32.totalorder %s25, 1
      %s375 = scalar_select %p374, %s25, 1
      %s376 = scalar_lea.vmem %s7, %s375
      %p377 = scmp.lt.s32.totalorder %s25, 1
      %s378 = scalar_select %p377, %s25, 1
      %s379 = scalar_lea.vmem %s8, %s378
      %p380 = scmp.eq.s32.totalorder %s26, 0
      // Predicated region
      $region45: #{mpnn_conv_forward.7} parent=43 // pred_check
        %p381 = pneg %p380
      $region46: #{mpnn_conv_forward.7} parent=43 // pred_check_branch
        %383 = sbr.rel (%p381) target = $region48
      $region47: #{mpnn_conv_forward.7} parent=43 // pred_region
        %s384 = sld [smem:[#allocation3]]
        %s385 = sadd.f32 %s384, 1.0
        %v386 = vld [vmem:[%s366] sm:$0xff]
        %v387 = vld [vmem:[%s366 + $0x8] sm:$0xff]
        %v388 = vld [vmem:[%s366 + $0x10] sm:$0xff]
        %v389 = vld [vmem:[%s366 + $0x18] sm:$0xff]
        %v390 = vld [vmem:[%s366 + $0x20] sm:$0xff]
        %v391 = vld [vmem:[%s366 + $0x28] sm:$0xff]
        %v392 = vld [vmem:[%s366 + $0x30] sm:$0xff]
        %v393 = vld [vmem:[%s366 + $0x38] sm:$0xff]
        %v394 = vld [vmem:[%s366 + $0x40] sm:$0xff]
        %v395 = vld [vmem:[%s366 + $0x48] sm:$0xff]
        %v396 = vld [vmem:[%s366 + $0x50] sm:$0xff]
        %v397 = vld [vmem:[%s366 + $0x58] sm:$0xff]
        %v398 = vld [vmem:[%s366 + $0x60] sm:$0xff]
        %v399 = vld [vmem:[%s366 + $0x68] sm:$0xff]
        %v400 = vld [vmem:[%s366 + $0x70] sm:$0xff]
        %v401 = vld [vmem:[%s366 + $0x78] sm:$0xff]
        %v402 = vld [vmem:[%s366 + $0x80] sm:$0xff]
        %v403 = vld [vmem:[%s366 + $0x88] sm:$0xff]
        %v404 = vld [vmem:[%s366 + $0x90] sm:$0xff]
        %v405 = vld [vmem:[%s366 + $0x98] sm:$0xff]
        %v406 = vld [vmem:[%s366 + $0xa0] sm:$0xff]
        %v407 = vld [vmem:[%s366 + $0xa8] sm:$0xff]
        %v408 = vld [vmem:[%s366 + $0xb0] sm:$0xff]
        %v409 = vld [vmem:[%s366 + $0xb8] sm:$0xff]
        %v410 = vld [vmem:[%s366 + $0xc0] sm:$0xff]
        %v411 = vld [vmem:[%s366 + $0xc8] sm:$0xff]
        %v412 = vld [vmem:[%s366 + $0xd0] sm:$0xff]
        %v413 = vld [vmem:[%s366 + $0xd8] sm:$0xff]
        %v414 = vld [vmem:[%s366 + $0xe0] sm:$0xff]
        %v415 = vld [vmem:[%s366 + $0xe8] sm:$0xff]
        %v416 = vld [vmem:[%s366 + $0xf0] sm:$0xff]
        %v417 = vld [vmem:[%s366 + $0xf8] sm:$0xff]
        %v418 = vld [vmem:[%s366 + $0x100] sm:$0xff]
        %v419 = vld [vmem:[%s366 + $0x108] sm:$0xff]
        %v420 = vld [vmem:[%s366 + $0x110] sm:$0xff]
        %v421 = vld [vmem:[%s366 + $0x118] sm:$0xff]
        %v422 = vld [vmem:[%s366 + $0x120] sm:$0xff]
        %v423 = vld [vmem:[%s366 + $0x128] sm:$0xff]
        %v424 = vld [vmem:[%s366 + $0x130] sm:$0xff]
        %v425 = vld [vmem:[%s366 + $0x138] sm:$0xff]
        %v426 = vld [vmem:[%s366 + $0x140] sm:$0xff]
        %v427 = vld [vmem:[%s366 + $0x148] sm:$0xff]
        %v428 = vld [vmem:[%s366 + $0x150] sm:$0xff]
        %v429 = vld [vmem:[%s366 + $0x158] sm:$0xff]
        %v430 = vld [vmem:[%s366 + $0x160] sm:$0xff]
        %v431 = vld [vmem:[%s366 + $0x168] sm:$0xff]
        %v432 = vld [vmem:[%s366 + $0x170] sm:$0xff]
        %v433 = vld [vmem:[%s366 + $0x178] sm:$0xff]
        %v434 = vld [vmem:[%s366 + $0x180] sm:$0xff]
        %v435 = vld [vmem:[%s366 + $0x188] sm:$0xff]
        %v436 = vld [vmem:[%s366 + $0x190] sm:$0xff]
        %v437 = vld [vmem:[%s366 + $0x198] sm:$0xff]
        %v438 = vld [vmem:[%s366 + $0x1a0] sm:$0xff]
        %v439 = vld [vmem:[%s366 + $0x1a8] sm:$0xff]
        %v440 = vld [vmem:[%s366 + $0x1b0] sm:$0xff]
        %v441 = vld [vmem:[%s366 + $0x1b8] sm:$0xff]
        %v442 = vld [vmem:[%s366 + $0x1c0] sm:$0xff]
        %v443 = vld [vmem:[%s366 + $0x1c8] sm:$0xff]
        %v444 = vld [vmem:[%s366 + $0x1d0] sm:$0xff]
        %v445 = vld [vmem:[%s366 + $0x1d8] sm:$0xff]
        %v446 = vld [vmem:[%s366 + $0x1e0] sm:$0xff]
        %v447 = vld [vmem:[%s366 + $0x1e8] sm:$0xff]
        %v448 = vld [vmem:[%s366 + $0x1f0] sm:$0xff]
        %v449 = vld [vmem:[%s366 + $0x1f8] sm:$0xff]
        %v450 = vstv %s385
        %v451 = vmul.f32 %v450, %v386
        %v452 = vmul.f32 %v450, %v387
        %v453 = vmul.f32 %v450, %v388
        %v454 = vmul.f32 %v450, %v389
        %v455 = vmul.f32 %v450, %v390
        %v456 = vmul.f32 %v450, %v391
        %v457 = vmul.f32 %v450, %v392
        %v458 = vmul.f32 %v450, %v393
        %v459 = vmul.f32 %v450, %v394
        %v460 = vmul.f32 %v450, %v395
        %v461 = vmul.f32 %v450, %v396
        %v462 = vmul.f32 %v450, %v397
        %v463 = vmul.f32 %v450, %v398
        %v464 = vmul.f32 %v450, %v399
        %v465 = vmul.f32 %v450, %v400
        %v466 = vmul.f32 %v450, %v401
        %v467 = vmul.f32 %v450, %v402
        %v468 = vmul.f32 %v450, %v403
        %v469 = vmul.f32 %v450, %v404
        %v470 = vmul.f32 %v450, %v405
        %v471 = vmul.f32 %v450, %v406
        %v472 = vmul.f32 %v450, %v407
        %v473 = vmul.f32 %v450, %v408
        %v474 = vmul.f32 %v450, %v409
        %v475 = vmul.f32 %v450, %v410
        %v476 = vmul.f32 %v450, %v411
        %v477 = vmul.f32 %v450, %v412
        %v478 = vmul.f32 %v450, %v413
        %v479 = vmul.f32 %v450, %v414
        %v480 = vmul.f32 %v450, %v415
        %v481 = vmul.f32 %v450, %v416
        %v482 = vmul.f32 %v450, %v417
        %v483 = vmul.f32 %v450, %v418
        %v484 = vmul.f32 %v450, %v419
        %v485 = vmul.f32 %v450, %v420
        %v486 = vmul.f32 %v450, %v421
        %v487 = vmul.f32 %v450, %v422
        %v488 = vmul.f32 %v450, %v423
        %v489 = vmul.f32 %v450, %v424
        %v490 = vmul.f32 %v450, %v425
        %v491 = vmul.f32 %v450, %v426
        %v492 = vmul.f32 %v450, %v427
        %v493 = vmul.f32 %v450, %v428
        %v494 = vmul.f32 %v450, %v429
        %v495 = vmul.f32 %v450, %v430
        %v496 = vmul.f32 %v450, %v431
        %v497 = vmul.f32 %v450, %v432
        %v498 = vmul.f32 %v450, %v433
        %v499 = vmul.f32 %v450, %v434
        %v500 = vmul.f32 %v450, %v435
        %v501 = vmul.f32 %v450, %v436
        %v502 = vmul.f32 %v450, %v437
        %v503 = vmul.f32 %v450, %v438
        %v504 = vmul.f32 %v450, %v439
        %v505 = vmul.f32 %v450, %v440
        %v506 = vmul.f32 %v450, %v441
        %v507 = vmul.f32 %v450, %v442
        %v508 = vmul.f32 %v450, %v443
        %v509 = vmul.f32 %v450, %v444
        %v510 = vmul.f32 %v450, %v445
        %v511 = vmul.f32 %v450, %v446
        %v512 = vmul.f32 %v450, %v447
        %v513 = vmul.f32 %v450, %v448
        %v514 = vmul.f32 %v450, %v449
        %515 = vst [vmem:[#allocation2] sm:$0xff] %v451
        %516 = vst [vmem:[#allocation2 + $0x8] sm:$0xff] %v452
        %517 = vst [vmem:[#allocation2 + $0x10] sm:$0xff] %v453
        %518 = vst [vmem:[#allocation2 + $0x18] sm:$0xff] %v454
        %519 = vst [vmem:[#allocation2 + $0x20] sm:$0xff] %v455
        %520 = vst [vmem:[#allocation2 + $0x28] sm:$0xff] %v456
        %521 = vst [vmem:[#allocation2 + $0x30] sm:$0xff] %v457
        %522 = vst [vmem:[#allocation2 + $0x38] sm:$0xff] %v458
        %523 = vst [vmem:[#allocation2 + $0x40] sm:$0xff] %v459
        %524 = vst [vmem:[#allocation2 + $0x48] sm:$0xff] %v460
        %525 = vst [vmem:[#allocation2 + $0x50] sm:$0xff] %v461
        %526 = vst [vmem:[#allocation2 + $0x58] sm:$0xff] %v462
        %527 = vst [vmem:[#allocation2 + $0x60] sm:$0xff] %v463
        %528 = vst [vmem:[#allocation2 + $0x68] sm:$0xff] %v464
        %529 = vst [vmem:[#allocation2 + $0x70] sm:$0xff] %v465
        %530 = vst [vmem:[#allocation2 + $0x78] sm:$0xff] %v466
        %531 = vst [vmem:[#allocation2 + $0x80] sm:$0xff] %v467
        %532 = vst [vmem:[#allocation2 + $0x88] sm:$0xff] %v468
        %533 = vst [vmem:[#allocation2 + $0x90] sm:$0xff] %v469
        %534 = vst [vmem:[#allocation2 + $0x98] sm:$0xff] %v470
        %535 = vst [vmem:[#allocation2 + $0xa0] sm:$0xff] %v471
        %536 = vst [vmem:[#allocation2 + $0xa8] sm:$0xff] %v472
        %537 = vst [vmem:[#allocation2 + $0xb0] sm:$0xff] %v473
        %538 = vst [vmem:[#allocation2 + $0xb8] sm:$0xff] %v474
        %539 = vst [vmem:[#allocation2 + $0xc0] sm:$0xff] %v475
        %540 = vst [vmem:[#allocation2 + $0xc8] sm:$0xff] %v476
        %541 = vst [vmem:[#allocation2 + $0xd0] sm:$0xff] %v477
        %542 = vst [vmem:[#allocation2 + $0xd8] sm:$0xff] %v478
        %543 = vst [vmem:[#allocation2 + $0xe0] sm:$0xff] %v479
        %544 = vst [vmem:[#allocation2 + $0xe8] sm:$0xff] %v480
        %545 = vst [vmem:[#allocation2 + $0xf0] sm:$0xff] %v481
        %546 = vst [vmem:[#allocation2 + $0xf8] sm:$0xff] %v482
        %547 = vst [vmem:[#allocation2 + $0x100] sm:$0xff] %v483
        %548 = vst [vmem:[#allocation2 + $0x108] sm:$0xff] %v484
        %549 = vst [vmem:[#allocation2 + $0x110] sm:$0xff] %v485
        %550 = vst [vmem:[#allocation2 + $0x118] sm:$0xff] %v486
        %551 = vst [vmem:[#allocation2 + $0x120] sm:$0xff] %v487
        %552 = vst [vmem:[#allocation2 + $0x128] sm:$0xff] %v488
        %553 = vst [vmem:[#allocation2 + $0x130] sm:$0xff] %v489
        %554 = vst [vmem:[#allocation2 + $0x138] sm:$0xff] %v490
        %555 = vst [vmem:[#allocation2 + $0x140] sm:$0xff] %v491
        %556 = vst [vmem:[#allocation2 + $0x148] sm:$0xff] %v492
        %557 = vst [vmem:[#allocation2 + $0x150] sm:$0xff] %v493
        %558 = vst [vmem:[#allocation2 + $0x158] sm:$0xff] %v494
        %559 = vst [vmem:[#allocation2 + $0x160] sm:$0xff] %v495
        %560 = vst [vmem:[#allocation2 + $0x168] sm:$0xff] %v496
        %561 = vst [vmem:[#allocation2 + $0x170] sm:$0xff] %v497
        %562 = vst [vmem:[#allocation2 + $0x178] sm:$0xff] %v498
        %563 = vst [vmem:[#allocation2 + $0x180] sm:$0xff] %v499
        %564 = vst [vmem:[#allocation2 + $0x188] sm:$0xff] %v500
        %565 = vst [vmem:[#allocation2 + $0x190] sm:$0xff] %v501
        %566 = vst [vmem:[#allocation2 + $0x198] sm:$0xff] %v502
        %567 = vst [vmem:[#allocation2 + $0x1a0] sm:$0xff] %v503
        %568 = vst [vmem:[#allocation2 + $0x1a8] sm:$0xff] %v504
        %569 = vst [vmem:[#allocation2 + $0x1b0] sm:$0xff] %v505
        %570 = vst [vmem:[#allocation2 + $0x1b8] sm:$0xff] %v506
        %571 = vst [vmem:[#allocation2 + $0x1c0] sm:$0xff] %v507
        %572 = vst [vmem:[#allocation2 + $0x1c8] sm:$0xff] %v508
        %573 = vst [vmem:[#allocation2 + $0x1d0] sm:$0xff] %v509
        %574 = vst [vmem:[#allocation2 + $0x1d8] sm:$0xff] %v510
        %575 = vst [vmem:[#allocation2 + $0x1e0] sm:$0xff] %v511
        %576 = vst [vmem:[#allocation2 + $0x1e8] sm:$0xff] %v512
        %577 = vst [vmem:[#allocation2 + $0x1f0] sm:$0xff] %v513
        %578 = vst [vmem:[#allocation2 + $0x1f8] sm:$0xff] %v514
      $region48: #{mpnn_conv_forward.7} parent=43 // pred_fallthru
        _
      %s579 = smul.u32 %s25, 512
      %v580 = vlaneseq
      %v581 = vshrl.u32 %v580, 7
      %v582 = vadd.s32 %v581, 8
      %v583 = vadd.s32 %v581, 16
      %v584 = vadd.s32 %v581, 24
      %v585 = vadd.s32 %v581, 32
      %v586 = vadd.s32 %v581, 40
      %v587 = vadd.s32 %v581, 48
      %v588 = vadd.s32 %v581, 56
      %v589 = vadd.s32 %v581, 64
      %v590 = vadd.s32 %v581, 72
      %v591 = vadd.s32 %v581, 80
      %v592 = vadd.s32 %v581, 88
      %v593 = vadd.s32 %v581, 96
      %v594 = vadd.s32 %v581, 104
      %v595 = vadd.s32 %v581, 112
      %v596 = vadd.s32 %v581, 120
      %v597 = vadd.s32 %v581, 128
      %v598 = vadd.s32 %v581, 136
      %v599 = vadd.s32 %v581, 144
      %v600 = vadd.s32 %v581, 152
      %v601 = vadd.s32 %v581, 160
      %v602 = vadd.s32 %v581, 168
      %v603 = vadd.s32 %v581, 176
      %v604 = vadd.s32 %v581, 184
      %v605 = vadd.s32 %v581, 192
      %v606 = vadd.s32 %v581, 200
      %v607 = vadd.s32 %v581, 208
      %v608 = vadd.s32 %v581, 216
      %v609 = vadd.s32 %v581, 224
      %v610 = vadd.s32 %v581, 232
      %v611 = vadd.s32 %v581, 240
      %v612 = vadd.s32 %v581, 248
      %v613 = vadd.s32 %v581, 256
      %v614 = vadd.s32 %v581, 264
      %v615 = vadd.s32 %v581, 272
      %v616 = vadd.s32 %v581, 280
      %v617 = vadd.s32 %v581, 288
      %v618 = vadd.s32 %v581, 296
      %v619 = vadd.s32 %v581, 304
      %v620 = vadd.s32 %v581, 312
      %v621 = vadd.s32 %v581, 320
      %v622 = vadd.s32 %v581, 328
      %v623 = vadd.s32 %v581, 336
      %v624 = vadd.s32 %v581, 344
      %v625 = vadd.s32 %v581, 352
      %v626 = vadd.s32 %v581, 360
      %v627 = vadd.s32 %v581, 368
      %v628 = vadd.s32 %v581, 376
      %v629 = vadd.s32 %v581, 384
      %v630 = vadd.s32 %v581, 392
      %v631 = vadd.s32 %v581, 400
      %v632 = vadd.s32 %v581, 408
      %v633 = vadd.s32 %v581, 416
      %v634 = vadd.s32 %v581, 424
      %v635 = vadd.s32 %v581, 432
      %v636 = vadd.s32 %v581, 440
      %v637 = vadd.s32 %v581, 448
      %v638 = vadd.s32 %v581, 456
      %v639 = vadd.s32 %v581, 464
      %v640 = vadd.s32 %v581, 472
      %v641 = vadd.s32 %v581, 480
      %v642 = vadd.s32 %v581, 488
      %v643 = vadd.s32 %v581, 496
      %v644 = vadd.s32 %v581, 504
      %v645 = vstv %s579
      %v646 = vadd.s32 %v645, %v581
      %v647 = vadd.s32 %v645, %v582
      %v648 = vadd.s32 %v645, %v583
      %v649 = vadd.s32 %v645, %v584
      %v650 = vadd.s32 %v645, %v585
      %v651 = vadd.s32 %v645, %v586
      %v652 = vadd.s32 %v645, %v587
      %v653 = vadd.s32 %v645, %v588
      %v654 = vadd.s32 %v645, %v589
      %v655 = vadd.s32 %v645, %v590
      %v656 = vadd.s32 %v645, %v591
      %v657 = vadd.s32 %v645, %v592
      %v658 = vadd.s32 %v645, %v593
      %v659 = vadd.s32 %v645, %v594
      %v660 = vadd.s32 %v645, %v595
      %v661 = vadd.s32 %v645, %v596
      %v662 = vadd.s32 %v645, %v597
      %v663 = vadd.s32 %v645, %v598
      %v664 = vadd.s32 %v645, %v599
      %v665 = vadd.s32 %v645, %v600
      %v666 = vadd.s32 %v645, %v601
      %v667 = vadd.s32 %v645, %v602
      %v668 = vadd.s32 %v645, %v603
      %v669 = vadd.s32 %v645, %v604
      %v670 = vadd.s32 %v645, %v605
      %v671 = vadd.s32 %v645, %v606
      %v672 = vadd.s32 %v645, %v607
      %v673 = vadd.s32 %v645, %v608
      %v674 = vadd.s32 %v645, %v609
      %v675 = vadd.s32 %v645, %v610
      %v676 = vadd.s32 %v645, %v611
      %v677 = vadd.s32 %v645, %v612
      %v678 = vadd.s32 %v645, %v613
      %v679 = vadd.s32 %v645, %v614
      %v680 = vadd.s32 %v645, %v615
      %v681 = vadd.s32 %v645, %v616
      %v682 = vadd.s32 %v645, %v617
      %v683 = vadd.s32 %v645, %v618
      %v684 = vadd.s32 %v645, %v619
      %v685 = vadd.s32 %v645, %v620
      %v686 = vadd.s32 %v645, %v621
      %v687 = vadd.s32 %v645, %v622
      %v688 = vadd.s32 %v645, %v623
      %v689 = vadd.s32 %v645, %v624
      %v690 = vadd.s32 %v645, %v625
      %v691 = vadd.s32 %v645, %v626
      %v692 = vadd.s32 %v645, %v627
      %v693 = vadd.s32 %v645, %v628
      %v694 = vadd.s32 %v645, %v629
      %v695 = vadd.s32 %v645, %v630
      %v696 = vadd.s32 %v645, %v631
      %v697 = vadd.s32 %v645, %v632
      %v698 = vadd.s32 %v645, %v633
      %v699 = vadd.s32 %v645, %v634
      %v700 = vadd.s32 %v645, %v635
      %v701 = vadd.s32 %v645, %v636
      %v702 = vadd.s32 %v645, %v637
      %v703 = vadd.s32 %v645, %v638
      %v704 = vadd.s32 %v645, %v639
      %v705 = vadd.s32 %v645, %v640
      %v706 = vadd.s32 %v645, %v641
      %v707 = vadd.s32 %v645, %v642
      %v708 = vadd.s32 %v645, %v643
      %v709 = vadd.s32 %v645, %v644
      %v710 = vld [vmem:[%s354] sm:$0xf]
      %v711 = vlaneseq
      %v712 = vshrl.u32 %v711, 7
      %v713 = vsub.s32 0, %v712
      %v714 = vrot.slane %v710, %v713
      %v715 = vlaneseq
      %v716 = vshrl.u32 %v715, 7
      %v717 = vsub.s32 1, %v716
      %v718 = vrot.slane %v710, %v717
      %v719 = vlaneseq
      %v720 = vshrl.u32 %v719, 7
      %v721 = vsub.s32 2, %v720
      %v722 = vrot.slane %v710, %v721
      %v723 = vlaneseq
      %v724 = vshrl.u32 %v723, 7
      %v725 = vsub.s32 3, %v724
      %v726 = vrot.slane %v710, %v725
      %vm727 = vcmp.eq.s32.totalorder %v646, %v714
      %vm728 = vcmp.eq.s32.totalorder %v646, %v718
      %vm729 = vcmp.eq.s32.totalorder %v646, %v722
      %vm730 = vcmp.eq.s32.totalorder %v646, %v726
      %vm731 = vcmp.eq.s32.totalorder %v647, %v714
      %vm732 = vcmp.eq.s32.totalorder %v647, %v718
      %vm733 = vcmp.eq.s32.totalorder %v647, %v722
      %vm734 = vcmp.eq.s32.totalorder %v647, %v726
      %vm735 = vcmp.eq.s32.totalorder %v648, %v714
      %vm736 = vcmp.eq.s32.totalorder %v648, %v718
      %vm737 = vcmp.eq.s32.totalorder %v648, %v722
      %vm738 = vcmp.eq.s32.totalorder %v648, %v726
      %vm739 = vcmp.eq.s32.totalorder %v649, %v714
      %vm740 = vcmp.eq.s32.totalorder %v649, %v718
      %vm741 = vcmp.eq.s32.totalorder %v649, %v722
      %vm742 = vcmp.eq.s32.totalorder %v649, %v726
      %vm743 = vcmp.eq.s32.totalorder %v650, %v714
      %vm744 = vcmp.eq.s32.totalorder %v650, %v718
      %vm745 = vcmp.eq.s32.totalorder %v650, %v722
      %vm746 = vcmp.eq.s32.totalorder %v650, %v726
      %vm747 = vcmp.eq.s32.totalorder %v651, %v714
      %vm748 = vcmp.eq.s32.totalorder %v651, %v718
      %vm749 = vcmp.eq.s32.totalorder %v651, %v722
      %vm750 = vcmp.eq.s32.totalorder %v651, %v726
      %vm751 = vcmp.eq.s32.totalorder %v652, %v714
      %vm752 = vcmp.eq.s32.totalorder %v652, %v718
      %vm753 = vcmp.eq.s32.totalorder %v652, %v722
      %vm754 = vcmp.eq.s32.totalorder %v652, %v726
      %vm755 = vcmp.eq.s32.totalorder %v653, %v714
      %vm756 = vcmp.eq.s32.totalorder %v653, %v718
      %vm757 = vcmp.eq.s32.totalorder %v653, %v722
      %vm758 = vcmp.eq.s32.totalorder %v653, %v726
      %vm759 = vcmp.eq.s32.totalorder %v654, %v714
      %vm760 = vcmp.eq.s32.totalorder %v654, %v718
      %vm761 = vcmp.eq.s32.totalorder %v654, %v722
      %vm762 = vcmp.eq.s32.totalorder %v654, %v726
      %vm763 = vcmp.eq.s32.totalorder %v655, %v714
      %vm764 = vcmp.eq.s32.totalorder %v655, %v718
      %vm765 = vcmp.eq.s32.totalorder %v655, %v722
      %vm766 = vcmp.eq.s32.totalorder %v655, %v726
      %vm767 = vcmp.eq.s32.totalorder %v656, %v714
      %vm768 = vcmp.eq.s32.totalorder %v656, %v718
      %vm769 = vcmp.eq.s32.totalorder %v656, %v722
      %vm770 = vcmp.eq.s32.totalorder %v656, %v726
      %vm771 = vcmp.eq.s32.totalorder %v657, %v714
      %vm772 = vcmp.eq.s32.totalorder %v657, %v718
      %vm773 = vcmp.eq.s32.totalorder %v657, %v722
      %vm774 = vcmp.eq.s32.totalorder %v657, %v726
      %vm775 = vcmp.eq.s32.totalorder %v658, %v714
      %vm776 = vcmp.eq.s32.totalorder %v658, %v718
      %vm777 = vcmp.eq.s32.totalorder %v658, %v722
      %vm778 = vcmp.eq.s32.totalorder %v658, %v726
      %vm779 = vcmp.eq.s32.totalorder %v659, %v714
      %vm780 = vcmp.eq.s32.totalorder %v659, %v718
      %vm781 = vcmp.eq.s32.totalorder %v659, %v722
      %vm782 = vcmp.eq.s32.totalorder %v659, %v726
      %vm783 = vcmp.eq.s32.totalorder %v660, %v714
      %vm784 = vcmp.eq.s32.totalorder %v660, %v718
      %vm785 = vcmp.eq.s32.totalorder %v660, %v722
      %vm786 = vcmp.eq.s32.totalorder %v660, %v726
      %vm787 = vcmp.eq.s32.totalorder %v661, %v714
      %vm788 = vcmp.eq.s32.totalorder %v661, %v718
      %vm789 = vcmp.eq.s32.totalorder %v661, %v722
      %vm790 = vcmp.eq.s32.totalorder %v661, %v726
      %vm791 = vcmp.eq.s32.totalorder %v662, %v714
      %vm792 = vcmp.eq.s32.totalorder %v662, %v718
      %vm793 = vcmp.eq.s32.totalorder %v662, %v722
      %vm794 = vcmp.eq.s32.totalorder %v662, %v726
      %vm795 = vcmp.eq.s32.totalorder %v663, %v714
      %vm796 = vcmp.eq.s32.totalorder %v663, %v718
      %vm797 = vcmp.eq.s32.totalorder %v663, %v722
      %vm798 = vcmp.eq.s32.totalorder %v663, %v726
      %vm799 = vcmp.eq.s32.totalorder %v664, %v714
      %vm800 = vcmp.eq.s32.totalorder %v664, %v718
      %vm801 = vcmp.eq.s32.totalorder %v664, %v722
      %vm802 = vcmp.eq.s32.totalorder %v664, %v726
      %vm803 = vcmp.eq.s32.totalorder %v665, %v714
      %vm804 = vcmp.eq.s32.totalorder %v665, %v718
      %vm805 = vcmp.eq.s32.totalorder %v665, %v722
      %vm806 = vcmp.eq.s32.totalorder %v665, %v726
      %vm807 = vcmp.eq.s32.totalorder %v666, %v714
      %vm808 = vcmp.eq.s32.totalorder %v666, %v718
      %vm809 = vcmp.eq.s32.totalorder %v666, %v722
      %vm810 = vcmp.eq.s32.totalorder %v666, %v726
      %vm811 = vcmp.eq.s32.totalorder %v667, %v714
      %vm812 = vcmp.eq.s32.totalorder %v667, %v718
      %vm813 = vcmp.eq.s32.totalorder %v667, %v722
      %vm814 = vcmp.eq.s32.totalorder %v667, %v726
      %vm815 = vcmp.eq.s32.totalorder %v668, %v714
      %vm816 = vcmp.eq.s32.totalorder %v668, %v718
      %vm817 = vcmp.eq.s32.totalorder %v668, %v722
      %vm818 = vcmp.eq.s32.totalorder %v668, %v726
      %vm819 = vcmp.eq.s32.totalorder %v669, %v714
      %vm820 = vcmp.eq.s32.totalorder %v669, %v718
      %vm821 = vcmp.eq.s32.totalorder %v669, %v722
      %vm822 = vcmp.eq.s32.totalorder %v669, %v726
      %vm823 = vcmp.eq.s32.totalorder %v670, %v714
      %vm824 = vcmp.eq.s32.totalorder %v670, %v718
      %vm825 = vcmp.eq.s32.totalorder %v670, %v722
      %vm826 = vcmp.eq.s32.totalorder %v670, %v726
      %vm827 = vcmp.eq.s32.totalorder %v671, %v714
      %vm828 = vcmp.eq.s32.totalorder %v671, %v718
      %vm829 = vcmp.eq.s32.totalorder %v671, %v722
      %vm830 = vcmp.eq.s32.totalorder %v671, %v726
      %vm831 = vcmp.eq.s32.totalorder %v672, %v714
      %vm832 = vcmp.eq.s32.totalorder %v672, %v718
      %vm833 = vcmp.eq.s32.totalorder %v672, %v722
      %vm834 = vcmp.eq.s32.totalorder %v672, %v726
      %vm835 = vcmp.eq.s32.totalorder %v673, %v714
      %vm836 = vcmp.eq.s32.totalorder %v673, %v718
      %vm837 = vcmp.eq.s32.totalorder %v673, %v722
      %vm838 = vcmp.eq.s32.totalorder %v673, %v726
      %vm839 = vcmp.eq.s32.totalorder %v674, %v714
      %vm840 = vcmp.eq.s32.totalorder %v674, %v718
      %vm841 = vcmp.eq.s32.totalorder %v674, %v722
      %vm842 = vcmp.eq.s32.totalorder %v674, %v726
      %vm843 = vcmp.eq.s32.totalorder %v675, %v714
      %vm844 = vcmp.eq.s32.totalorder %v675, %v718
      %vm845 = vcmp.eq.s32.totalorder %v675, %v722
      %vm846 = vcmp.eq.s32.totalorder %v675, %v726
      %vm847 = vcmp.eq.s32.totalorder %v676, %v714
      %vm848 = vcmp.eq.s32.totalorder %v676, %v718
      %vm849 = vcmp.eq.s32.totalorder %v676, %v722
      %vm850 = vcmp.eq.s32.totalorder %v676, %v726
      %vm851 = vcmp.eq.s32.totalorder %v677, %v714
      %vm852 = vcmp.eq.s32.totalorder %v677, %v718
      %vm853 = vcmp.eq.s32.totalorder %v677, %v722
      %vm854 = vcmp.eq.s32.totalorder %v677, %v726
      %vm855 = vcmp.eq.s32.totalorder %v678, %v714
      %vm856 = vcmp.eq.s32.totalorder %v678, %v718
      %vm857 = vcmp.eq.s32.totalorder %v678, %v722
      %vm858 = vcmp.eq.s32.totalorder %v678, %v726
      %vm859 = vcmp.eq.s32.totalorder %v679, %v714
      %vm860 = vcmp.eq.s32.totalorder %v679, %v718
      %vm861 = vcmp.eq.s32.totalorder %v679, %v722
      %vm862 = vcmp.eq.s32.totalorder %v679, %v726
      %vm863 = vcmp.eq.s32.totalorder %v680, %v714
      %vm864 = vcmp.eq.s32.totalorder %v680, %v718
      %vm865 = vcmp.eq.s32.totalorder %v680, %v722
      %vm866 = vcmp.eq.s32.totalorder %v680, %v726
      %vm867 = vcmp.eq.s32.totalorder %v681, %v714
      %vm868 = vcmp.eq.s32.totalorder %v681, %v718
      %vm869 = vcmp.eq.s32.totalorder %v681, %v722
      %vm870 = vcmp.eq.s32.totalorder %v681, %v726
      %vm871 = vcmp.eq.s32.totalorder %v682, %v714
      %vm872 = vcmp.eq.s32.totalorder %v682, %v718
      %vm873 = vcmp.eq.s32.totalorder %v682, %v722
      %vm874 = vcmp.eq.s32.totalorder %v682, %v726
      %vm875 = vcmp.eq.s32.totalorder %v683, %v714
      %vm876 = vcmp.eq.s32.totalorder %v683, %v718
      %vm877 = vcmp.eq.s32.totalorder %v683, %v722
      %vm878 = vcmp.eq.s32.totalorder %v683, %v726
      %vm879 = vcmp.eq.s32.totalorder %v684, %v714
      %vm880 = vcmp.eq.s32.totalorder %v684, %v718
      %vm881 = vcmp.eq.s32.totalorder %v684, %v722
      %vm882 = vcmp.eq.s32.totalorder %v684, %v726
      %vm883 = vcmp.eq.s32.totalorder %v685, %v714
      %vm884 = vcmp.eq.s32.totalorder %v685, %v718
      %vm885 = vcmp.eq.s32.totalorder %v685, %v722
      %vm886 = vcmp.eq.s32.totalorder %v685, %v726
      %vm887 = vcmp.eq.s32.totalorder %v686, %v714
      %vm888 = vcmp.eq.s32.totalorder %v686, %v718
      %vm889 = vcmp.eq.s32.totalorder %v686, %v722
      %vm890 = vcmp.eq.s32.totalorder %v686, %v726
      %vm891 = vcmp.eq.s32.totalorder %v687, %v714
      %vm892 = vcmp.eq.s32.totalorder %v687, %v718
      %vm893 = vcmp.eq.s32.totalorder %v687, %v722
      %vm894 = vcmp.eq.s32.totalorder %v687, %v726
      %vm895 = vcmp.eq.s32.totalorder %v688, %v714
      %vm896 = vcmp.eq.s32.totalorder %v688, %v718
      %vm897 = vcmp.eq.s32.totalorder %v688, %v722
      %vm898 = vcmp.eq.s32.totalorder %v688, %v726
      %vm899 = vcmp.eq.s32.totalorder %v689, %v714
      %vm900 = vcmp.eq.s32.totalorder %v689, %v718
      %vm901 = vcmp.eq.s32.totalorder %v689, %v722
      %vm902 = vcmp.eq.s32.totalorder %v689, %v726
      %vm903 = vcmp.eq.s32.totalorder %v690, %v714
      %vm904 = vcmp.eq.s32.totalorder %v690, %v718
      %vm905 = vcmp.eq.s32.totalorder %v690, %v722
      %vm906 = vcmp.eq.s32.totalorder %v690, %v726
      %vm907 = vcmp.eq.s32.totalorder %v691, %v714
      %vm908 = vcmp.eq.s32.totalorder %v691, %v718
      %vm909 = vcmp.eq.s32.totalorder %v691, %v722
      %vm910 = vcmp.eq.s32.totalorder %v691, %v726
      %vm911 = vcmp.eq.s32.totalorder %v692, %v714
      %vm912 = vcmp.eq.s32.totalorder %v692, %v718
      %vm913 = vcmp.eq.s32.totalorder %v692, %v722
      %vm914 = vcmp.eq.s32.totalorder %v692, %v726
      %vm915 = vcmp.eq.s32.totalorder %v693, %v714
      %vm916 = vcmp.eq.s32.totalorder %v693, %v718
      %vm917 = vcmp.eq.s32.totalorder %v693, %v722
      %vm918 = vcmp.eq.s32.totalorder %v693, %v726
      %vm919 = vcmp.eq.s32.totalorder %v694, %v714
      %vm920 = vcmp.eq.s32.totalorder %v694, %v718
      %vm921 = vcmp.eq.s32.totalorder %v694, %v722
      %vm922 = vcmp.eq.s32.totalorder %v694, %v726
      %vm923 = vcmp.eq.s32.totalorder %v695, %v714
      %vm924 = vcmp.eq.s32.totalorder %v695, %v718
      %vm925 = vcmp.eq.s32.totalorder %v695, %v722
      %vm926 = vcmp.eq.s32.totalorder %v695, %v726
      %vm927 = vcmp.eq.s32.totalorder %v696, %v714
      %vm928 = vcmp.eq.s32.totalorder %v696, %v718
      %vm929 = vcmp.eq.s32.totalorder %v696, %v722
      %vm930 = vcmp.eq.s32.totalorder %v696, %v726
      %vm931 = vcmp.eq.s32.totalorder %v697, %v714
      %vm932 = vcmp.eq.s32.totalorder %v697, %v718
      %vm933 = vcmp.eq.s32.totalorder %v697, %v722
      %vm934 = vcmp.eq.s32.totalorder %v697, %v726
      %vm935 = vcmp.eq.s32.totalorder %v698, %v714
      %vm936 = vcmp.eq.s32.totalorder %v698, %v718
      %vm937 = vcmp.eq.s32.totalorder %v698, %v722
      %vm938 = vcmp.eq.s32.totalorder %v698, %v726
      %vm939 = vcmp.eq.s32.totalorder %v699, %v714
      %vm940 = vcmp.eq.s32.totalorder %v699, %v718
      %vm941 = vcmp.eq.s32.totalorder %v699, %v722
      %vm942 = vcmp.eq.s32.totalorder %v699, %v726
      %vm943 = vcmp.eq.s32.totalorder %v700, %v714
      %vm944 = vcmp.eq.s32.totalorder %v700, %v718
      %vm945 = vcmp.eq.s32.totalorder %v700, %v722
      %vm946 = vcmp.eq.s32.totalorder %v700, %v726
      %vm947 = vcmp.eq.s32.totalorder %v701, %v714
      %vm948 = vcmp.eq.s32.totalorder %v701, %v718
      %vm949 = vcmp.eq.s32.totalorder %v701, %v722
      %vm950 = vcmp.eq.s32.totalorder %v701, %v726
      %vm951 = vcmp.eq.s32.totalorder %v702, %v714
      %vm952 = vcmp.eq.s32.totalorder %v702, %v718
      %vm953 = vcmp.eq.s32.totalorder %v702, %v722
      %vm954 = vcmp.eq.s32.totalorder %v702, %v726
      %vm955 = vcmp.eq.s32.totalorder %v703, %v714
      %vm956 = vcmp.eq.s32.totalorder %v703, %v718
      %vm957 = vcmp.eq.s32.totalorder %v703, %v722
      %vm958 = vcmp.eq.s32.totalorder %v703, %v726
      %vm959 = vcmp.eq.s32.totalorder %v704, %v714
      %vm960 = vcmp.eq.s32.totalorder %v704, %v718
      %vm961 = vcmp.eq.s32.totalorder %v704, %v722
      %vm962 = vcmp.eq.s32.totalorder %v704, %v726
      %vm963 = vcmp.eq.s32.totalorder %v705, %v714
      %vm964 = vcmp.eq.s32.totalorder %v705, %v718
      %vm965 = vcmp.eq.s32.totalorder %v705, %v722
      %vm966 = vcmp.eq.s32.totalorder %v705, %v726
      %vm967 = vcmp.eq.s32.totalorder %v706, %v714
      %vm968 = vcmp.eq.s32.totalorder %v706, %v718
      %vm969 = vcmp.eq.s32.totalorder %v706, %v722
      %vm970 = vcmp.eq.s32.totalorder %v706, %v726
      %vm971 = vcmp.eq.s32.totalorder %v707, %v714
      %vm972 = vcmp.eq.s32.totalorder %v707, %v718
      %vm973 = vcmp.eq.s32.totalorder %v707, %v722
      %vm974 = vcmp.eq.s32.totalorder %v707, %v726
      %vm975 = vcmp.eq.s32.totalorder %v708, %v714
      %vm976 = vcmp.eq.s32.totalorder %v708, %v718
      %vm977 = vcmp.eq.s32.totalorder %v708, %v722
      %vm978 = vcmp.eq.s32.totalorder %v708, %v726
      %vm979 = vcmp.eq.s32.totalorder %v709, %v714
      %vm980 = vcmp.eq.s32.totalorder %v709, %v718
      %vm981 = vcmp.eq.s32.totalorder %v709, %v722
      %vm982 = vcmp.eq.s32.totalorder %v709, %v726
      %v983 = vsel %vm727, 1, 0
      %v984 = vsel %vm728, 1, 0
      %v985 = vsel %vm729, 1, 0
      %v986 = vsel %vm730, 1, 0
      %v987 = vsel %vm731, 1, 0
      %v988 = vsel %vm732, 1, 0
      %v989 = vsel %vm733, 1, 0
      %v990 = vsel %vm734, 1, 0
      %v991 = vsel %vm735, 1, 0
      %v992 = vsel %vm736, 1, 0
      %v993 = vsel %vm737, 1, 0
      %v994 = vsel %vm738, 1, 0
      %v995 = vsel %vm739, 1, 0
      %v996 = vsel %vm740, 1, 0
      %v997 = vsel %vm741, 1, 0
      %v998 = vsel %vm742, 1, 0
      %v999 = vsel %vm743, 1, 0
      %v1000 = vsel %vm744, 1, 0
      %v1001 = vsel %vm745, 1, 0
      %v1002 = vsel %vm746, 1, 0
      %v1003 = vsel %vm747, 1, 0
      %v1004 = vsel %vm748, 1, 0
      %v1005 = vsel %vm749, 1, 0
      %v1006 = vsel %vm750, 1, 0
      %v1007 = vsel %vm751, 1, 0
      %v1008 = vsel %vm752, 1, 0
      %v1009 = vsel %vm753, 1, 0
      %v1010 = vsel %vm754, 1, 0
      %v1011 = vsel %vm755, 1, 0
      %v1012 = vsel %vm756, 1, 0
      %v1013 = vsel %vm757, 1, 0
      %v1014 = vsel %vm758, 1, 0
      %v1015 = vsel %vm759, 1, 0
      %v1016 = vsel %vm760, 1, 0
      %v1017 = vsel %vm761, 1, 0
      %v1018 = vsel %vm762, 1, 0
      %v1019 = vsel %vm763, 1, 0
      %v1020 = vsel %vm764, 1, 0
      %v1021 = vsel %vm765, 1, 0
      %v1022 = vsel %vm766, 1, 0
      %v1023 = vsel %vm767, 1, 0
      %v1024 = vsel %vm768, 1, 0
      %v1025 = vsel %vm769, 1, 0
      %v1026 = vsel %vm770, 1, 0
      %v1027 = vsel %vm771, 1, 0
      %v1028 = vsel %vm772, 1, 0
      %v1029 = vsel %vm773, 1, 0
      %v1030 = vsel %vm774, 1, 0
      %v1031 = vsel %vm775, 1, 0
      %v1032 = vsel %vm776, 1, 0
      %v1033 = vsel %vm777, 1, 0
      %v1034 = vsel %vm778, 1, 0
      %v1035 = vsel %vm779, 1, 0
      %v1036 = vsel %vm780, 1, 0
      %v1037 = vsel %vm781, 1, 0
      %v1038 = vsel %vm782, 1, 0
      %v1039 = vsel %vm783, 1, 0
      %v1040 = vsel %vm784, 1, 0
      %v1041 = vsel %vm785, 1, 0
      %v1042 = vsel %vm786, 1, 0
      %v1043 = vsel %vm787, 1, 0
      %v1044 = vsel %vm788, 1, 0
      %v1045 = vsel %vm789, 1, 0
      %v1046 = vsel %vm790, 1, 0
      %v1047 = vsel %vm791, 1, 0
      %v1048 = vsel %vm792, 1, 0
      %v1049 = vsel %vm793, 1, 0
      %v1050 = vsel %vm794, 1, 0
      %v1051 = vsel %vm795, 1, 0
      %v1052 = vsel %vm796, 1, 0
      %v1053 = vsel %vm797, 1, 0
      %v1054 = vsel %vm798, 1, 0
      %v1055 = vsel %vm799, 1, 0
      %v1056 = vsel %vm800, 1, 0
      %v1057 = vsel %vm801, 1, 0
      %v1058 = vsel %vm802, 1, 0
      %v1059 = vsel %vm803, 1, 0
      %v1060 = vsel %vm804, 1, 0
      %v1061 = vsel %vm805, 1, 0
      %v1062 = vsel %vm806, 1, 0
      %v1063 = vsel %vm807, 1, 0
      %v1064 = vsel %vm808, 1, 0
      %v1065 = vsel %vm809, 1, 0
      %v1066 = vsel %vm810, 1, 0
      %v1067 = vsel %vm811, 1, 0
      %v1068 = vsel %vm812, 1, 0
      %v1069 = vsel %vm813, 1, 0
      %v1070 = vsel %vm814, 1, 0
      %v1071 = vsel %vm815, 1, 0
      %v1072 = vsel %vm816, 1, 0
      %v1073 = vsel %vm817, 1, 0
      %v1074 = vsel %vm818, 1, 0
      %v1075 = vsel %vm819, 1, 0
      %v1076 = vsel %vm820, 1, 0
      %v1077 = vsel %vm821, 1, 0
      %v1078 = vsel %vm822, 1, 0
      %v1079 = vsel %vm823, 1, 0
      %v1080 = vsel %vm824, 1, 0
      %v1081 = vsel %vm825, 1, 0
      %v1082 = vsel %vm826, 1, 0
      %v1083 = vsel %vm827, 1, 0
      %v1084 = vsel %vm828, 1, 0
      %v1085 = vsel %vm829, 1, 0
      %v1086 = vsel %vm830, 1, 0
      %v1087 = vsel %vm831, 1, 0
      %v1088 = vsel %vm832, 1, 0
      %v1089 = vsel %vm833, 1, 0
      %v1090 = vsel %vm834, 1, 0
      %v1091 = vsel %vm835, 1, 0
      %v1092 = vsel %vm836, 1, 0
      %v1093 = vsel %vm837, 1, 0
      %v1094 = vsel %vm838, 1, 0
      %v1095 = vsel %vm839, 1, 0
      %v1096 = vsel %vm840, 1, 0
      %v1097 = vsel %vm841, 1, 0
      %v1098 = vsel %vm842, 1, 0
      %v1099 = vsel %vm843, 1, 0
      %v1100 = vsel %vm844, 1, 0
      %v1101 = vsel %vm845, 1, 0
      %v1102 = vsel %vm846, 1, 0
      %v1103 = vsel %vm847, 1, 0
      %v1104 = vsel %vm848, 1, 0
      %v1105 = vsel %vm849, 1, 0
      %v1106 = vsel %vm850, 1, 0
      %v1107 = vsel %vm851, 1, 0
      %v1108 = vsel %vm852, 1, 0
      %v1109 = vsel %vm853, 1, 0
      %v1110 = vsel %vm854, 1, 0
      %v1111 = vsel %vm855, 1, 0
      %v1112 = vsel %vm856, 1, 0
      %v1113 = vsel %vm857, 1, 0
      %v1114 = vsel %vm858, 1, 0
      %v1115 = vsel %vm859, 1, 0
      %v1116 = vsel %vm860, 1, 0
      %v1117 = vsel %vm861, 1, 0
      %v1118 = vsel %vm862, 1, 0
      %v1119 = vsel %vm863, 1, 0
      %v1120 = vsel %vm864, 1, 0
      %v1121 = vsel %vm865, 1, 0
      %v1122 = vsel %vm866, 1, 0
      %v1123 = vsel %vm867, 1, 0
      %v1124 = vsel %vm868, 1, 0
      %v1125 = vsel %vm869, 1, 0
      %v1126 = vsel %vm870, 1, 0
      %v1127 = vsel %vm871, 1, 0
      %v1128 = vsel %vm872, 1, 0
      %v1129 = vsel %vm873, 1, 0
      %v1130 = vsel %vm874, 1, 0
      %v1131 = vsel %vm875, 1, 0
      %v1132 = vsel %vm876, 1, 0
      %v1133 = vsel %vm877, 1, 0
      %v1134 = vsel %vm878, 1, 0
      %v1135 = vsel %vm879, 1, 0
      %v1136 = vsel %vm880, 1, 0
      %v1137 = vsel %vm881, 1, 0
      %v1138 = vsel %vm882, 1, 0
      %v1139 = vsel %vm883, 1, 0
      %v1140 = vsel %vm884, 1, 0
      %v1141 = vsel %vm885, 1, 0
      %v1142 = vsel %vm886, 1, 0
      %v1143 = vsel %vm887, 1, 0
      %v1144 = vsel %vm888, 1, 0
      %v1145 = vsel %vm889, 1, 0
      %v1146 = vsel %vm890, 1, 0
      %v1147 = vsel %vm891, 1, 0
      %v1148 = vsel %vm892, 1, 0
      %v1149 = vsel %vm893, 1, 0
      %v1150 = vsel %vm894, 1, 0
      %v1151 = vsel %vm895, 1, 0
      %v1152 = vsel %vm896, 1, 0
      %v1153 = vsel %vm897, 1, 0
      %v1154 = vsel %vm898, 1, 0
      %v1155 = vsel %vm899, 1, 0
      %v1156 = vsel %vm900, 1, 0
      %v1157 = vsel %vm901, 1, 0
      %v1158 = vsel %vm902, 1, 0
      %v1159 = vsel %vm903, 1, 0
      %v1160 = vsel %vm904, 1, 0
      %v1161 = vsel %vm905, 1, 0
      %v1162 = vsel %vm906, 1, 0
      %v1163 = vsel %vm907, 1, 0
      %v1164 = vsel %vm908, 1, 0
      %v1165 = vsel %vm909, 1, 0
      %v1166 = vsel %vm910, 1, 0
      %v1167 = vsel %vm911, 1, 0
      %v1168 = vsel %vm912, 1, 0
      %v1169 = vsel %vm913, 1, 0
      %v1170 = vsel %vm914, 1, 0
      %v1171 = vsel %vm915, 1, 0
      %v1172 = vsel %vm916, 1, 0
      %v1173 = vsel %vm917, 1, 0
      %v1174 = vsel %vm918, 1, 0
      %v1175 = vsel %vm919, 1, 0
      %v1176 = vsel %vm920, 1, 0
      %v1177 = vsel %vm921, 1, 0
      %v1178 = vsel %vm922, 1, 0
      %v1179 = vsel %vm923, 1, 0
      %v1180 = vsel %vm924, 1, 0
      %v1181 = vsel %vm925, 1, 0
      %v1182 = vsel %vm926, 1, 0
      %v1183 = vsel %vm927, 1, 0
      %v1184 = vsel %vm928, 1, 0
      %v1185 = vsel %vm929, 1, 0
      %v1186 = vsel %vm930, 1, 0
      %v1187 = vsel %vm931, 1, 0
      %v1188 = vsel %vm932, 1, 0
      %v1189 = vsel %vm933, 1, 0
      %v1190 = vsel %vm934, 1, 0
      %v1191 = vsel %vm935, 1, 0
      %v1192 = vsel %vm936, 1, 0
      %v1193 = vsel %vm937, 1, 0
      %v1194 = vsel %vm938, 1, 0
      %v1195 = vsel %vm939, 1, 0
      %v1196 = vsel %vm940, 1, 0
      %v1197 = vsel %vm941, 1, 0
      %v1198 = vsel %vm942, 1, 0
      %v1199 = vsel %vm943, 1, 0
      %v1200 = vsel %vm944, 1, 0
      %v1201 = vsel %vm945, 1, 0
      %v1202 = vsel %vm946, 1, 0
      %v1203 = vsel %vm947, 1, 0
      %v1204 = vsel %vm948, 1, 0
      %v1205 = vsel %vm949, 1, 0
      %v1206 = vsel %vm950, 1, 0
      %v1207 = vsel %vm951, 1, 0
      %v1208 = vsel %vm952, 1, 0
      %v1209 = vsel %vm953, 1, 0
      %v1210 = vsel %vm954, 1, 0
      %v1211 = vsel %vm955, 1, 0
      %v1212 = vsel %vm956, 1, 0
      %v1213 = vsel %vm957, 1, 0
      %v1214 = vsel %vm958, 1, 0
      %v1215 = vsel %vm959, 1, 0
      %v1216 = vsel %vm960, 1, 0
      %v1217 = vsel %vm961, 1, 0
      %v1218 = vsel %vm962, 1, 0
      %v1219 = vsel %vm963, 1, 0
      %v1220 = vsel %vm964, 1, 0
      %v1221 = vsel %vm965, 1, 0
      %v1222 = vsel %vm966, 1, 0
      %v1223 = vsel %vm967, 1, 0
      %v1224 = vsel %vm968, 1, 0
      %v1225 = vsel %vm969, 1, 0
      %v1226 = vsel %vm970, 1, 0
      %v1227 = vsel %vm971, 1, 0
      %v1228 = vsel %vm972, 1, 0
      %v1229 = vsel %vm973, 1, 0
      %v1230 = vsel %vm974, 1, 0
      %v1231 = vsel %vm975, 1, 0
      %v1232 = vsel %vm976, 1, 0
      %v1233 = vsel %vm977, 1, 0
      %v1234 = vsel %vm978, 1, 0
      %v1235 = vsel %vm979, 1, 0
      %v1236 = vsel %vm980, 1, 0
      %v1237 = vsel %vm981, 1, 0
      %v1238 = vsel %vm982, 1, 0
      %v1239 = vcvt.s32.f32 %v983
      %v1240 = vcvt.s32.f32 %v984
      %v1241 = vcvt.s32.f32 %v985
      %v1242 = vcvt.s32.f32 %v986
      %v1243 = vcvt.s32.f32 %v987
      %v1244 = vcvt.s32.f32 %v988
      %v1245 = vcvt.s32.f32 %v989
      %v1246 = vcvt.s32.f32 %v990
      %v1247 = vcvt.s32.f32 %v991
      %v1248 = vcvt.s32.f32 %v992
      %v1249 = vcvt.s32.f32 %v993
      %v1250 = vcvt.s32.f32 %v994
      %v1251 = vcvt.s32.f32 %v995
      %v1252 = vcvt.s32.f32 %v996
      %v1253 = vcvt.s32.f32 %v997
      %v1254 = vcvt.s32.f32 %v998
      %v1255 = vcvt.s32.f32 %v999
      %v1256 = vcvt.s32.f32 %v1000
      %v1257 = vcvt.s32.f32 %v1001
      %v1258 = vcvt.s32.f32 %v1002
      %v1259 = vcvt.s32.f32 %v1003
      %v1260 = vcvt.s32.f32 %v1004
      %v1261 = vcvt.s32.f32 %v1005
      %v1262 = vcvt.s32.f32 %v1006
      %v1263 = vcvt.s32.f32 %v1007
      %v1264 = vcvt.s32.f32 %v1008
      %v1265 = vcvt.s32.f32 %v1009
      %v1266 = vcvt.s32.f32 %v1010
      %v1267 = vcvt.s32.f32 %v1011
      %v1268 = vcvt.s32.f32 %v1012
      %v1269 = vcvt.s32.f32 %v1013
      %v1270 = vcvt.s32.f32 %v1014
      %v1271 = vcvt.s32.f32 %v1015
      %v1272 = vcvt.s32.f32 %v1016
      %v1273 = vcvt.s32.f32 %v1017
      %v1274 = vcvt.s32.f32 %v1018
      %v1275 = vcvt.s32.f32 %v1019
      %v1276 = vcvt.s32.f32 %v1020
      %v1277 = vcvt.s32.f32 %v1021
      %v1278 = vcvt.s32.f32 %v1022
      %v1279 = vcvt.s32.f32 %v1023
      %v1280 = vcvt.s32.f32 %v1024
      %v1281 = vcvt.s32.f32 %v1025
      %v1282 = vcvt.s32.f32 %v1026
      %v1283 = vcvt.s32.f32 %v1027
      %v1284 = vcvt.s32.f32 %v1028
      %v1285 = vcvt.s32.f32 %v1029
      %v1286 = vcvt.s32.f32 %v1030
      %v1287 = vcvt.s32.f32 %v1031
      %v1288 = vcvt.s32.f32 %v1032
      %v1289 = vcvt.s32.f32 %v1033
      %v1290 = vcvt.s32.f32 %v1034
      %v1291 = vcvt.s32.f32 %v1035
      %v1292 = vcvt.s32.f32 %v1036
      %v1293 = vcvt.s32.f32 %v1037
      %v1294 = vcvt.s32.f32 %v1038
      %v1295 = vcvt.s32.f32 %v1039
      %v1296 = vcvt.s32.f32 %v1040
      %v1297 = vcvt.s32.f32 %v1041
      %v1298 = vcvt.s32.f32 %v1042
      %v1299 = vcvt.s32.f32 %v1043
      %v1300 = vcvt.s32.f32 %v1044
      %v1301 = vcvt.s32.f32 %v1045
      %v1302 = vcvt.s32.f32 %v1046
      %v1303 = vcvt.s32.f32 %v1047
      %v1304 = vcvt.s32.f32 %v1048
      %v1305 = vcvt.s32.f32 %v1049
      %v1306 = vcvt.s32.f32 %v1050
      %v1307 = vcvt.s32.f32 %v1051
      %v1308 = vcvt.s32.f32 %v1052
      %v1309 = vcvt.s32.f32 %v1053
      %v1310 = vcvt.s32.f32 %v1054
      %v1311 = vcvt.s32.f32 %v1055
      %v1312 = vcvt.s32.f32 %v1056
      %v1313 = vcvt.s32.f32 %v1057
      %v1314 = vcvt.s32.f32 %v1058
      %v1315 = vcvt.s32.f32 %v1059
      %v1316 = vcvt.s32.f32 %v1060
      %v1317 = vcvt.s32.f32 %v1061
      %v1318 = vcvt.s32.f32 %v1062
      %v1319 = vcvt.s32.f32 %v1063
      %v1320 = vcvt.s32.f32 %v1064
      %v1321 = vcvt.s32.f32 %v1065
      %v1322 = vcvt.s32.f32 %v1066
      %v1323 = vcvt.s32.f32 %v1067
      %v1324 = vcvt.s32.f32 %v1068
      %v1325 = vcvt.s32.f32 %v1069
      %v1326 = vcvt.s32.f32 %v1070
      %v1327 = vcvt.s32.f32 %v1071
      %v1328 = vcvt.s32.f32 %v1072
      %v1329 = vcvt.s32.f32 %v1073
      %v1330 = vcvt.s32.f32 %v1074
      %v1331 = vcvt.s32.f32 %v1075
      %v1332 = vcvt.s32.f32 %v1076
      %v1333 = vcvt.s32.f32 %v1077
      %v1334 = vcvt.s32.f32 %v1078
      %v1335 = vcvt.s32.f32 %v1079
      %v1336 = vcvt.s32.f32 %v1080
      %v1337 = vcvt.s32.f32 %v1081
      %v1338 = vcvt.s32.f32 %v1082
      %v1339 = vcvt.s32.f32 %v1083
      %v1340 = vcvt.s32.f32 %v1084
      %v1341 = vcvt.s32.f32 %v1085
      %v1342 = vcvt.s32.f32 %v1086
      %v1343 = vcvt.s32.f32 %v1087
      %v1344 = vcvt.s32.f32 %v1088
      %v1345 = vcvt.s32.f32 %v1089
      %v1346 = vcvt.s32.f32 %v1090
      %v1347 = vcvt.s32.f32 %v1091
      %v1348 = vcvt.s32.f32 %v1092
      %v1349 = vcvt.s32.f32 %v1093
      %v1350 = vcvt.s32.f32 %v1094
      %v1351 = vcvt.s32.f32 %v1095
      %v1352 = vcvt.s32.f32 %v1096
      %v1353 = vcvt.s32.f32 %v1097
      %v1354 = vcvt.s32.f32 %v1098
      %v1355 = vcvt.s32.f32 %v1099
      %v1356 = vcvt.s32.f32 %v1100
      %v1357 = vcvt.s32.f32 %v1101
      %v1358 = vcvt.s32.f32 %v1102
      %v1359 = vcvt.s32.f32 %v1103
      %v1360 = vcvt.s32.f32 %v1104
      %v1361 = vcvt.s32.f32 %v1105
      %v1362 = vcvt.s32.f32 %v1106
      %v1363 = vcvt.s32.f32 %v1107
      %v1364 = vcvt.s32.f32 %v1108
      %v1365 = vcvt.s32.f32 %v1109
      %v1366 = vcvt.s32.f32 %v1110
      %v1367 = vcvt.s32.f32 %v1111
      %v1368 = vcvt.s32.f32 %v1112
      %v1369 = vcvt.s32.f32 %v1113
      %v1370 = vcvt.s32.f32 %v1114
      %v1371 = vcvt.s32.f32 %v1115
      %v1372 = vcvt.s32.f32 %v1116
      %v1373 = vcvt.s32.f32 %v1117
      %v1374 = vcvt.s32.f32 %v1118
      %v1375 = vcvt.s32.f32 %v1119
      %v1376 = vcvt.s32.f32 %v1120
      %v1377 = vcvt.s32.f32 %v1121
      %v1378 = vcvt.s32.f32 %v1122
      %v1379 = vcvt.s32.f32 %v1123
      %v1380 = vcvt.s32.f32 %v1124
      %v1381 = vcvt.s32.f32 %v1125
      %v1382 = vcvt.s32.f32 %v1126
      %v1383 = vcvt.s32.f32 %v1127
      %v1384 = vcvt.s32.f32 %v1128
      %v1385 = vcvt.s32.f32 %v1129
      %v1386 = vcvt.s32.f32 %v1130
      %v1387 = vcvt.s32.f32 %v1131
      %v1388 = vcvt.s32.f32 %v1132
      %v1389 = vcvt.s32.f32 %v1133
      %v1390 = vcvt.s32.f32 %v1134
      %v1391 = vcvt.s32.f32 %v1135
      %v1392 = vcvt.s32.f32 %v1136
      %v1393 = vcvt.s32.f32 %v1137
      %v1394 = vcvt.s32.f32 %v1138
      %v1395 = vcvt.s32.f32 %v1139
      %v1396 = vcvt.s32.f32 %v1140
      %v1397 = vcvt.s32.f32 %v1141
      %v1398 = vcvt.s32.f32 %v1142
      %v1399 = vcvt.s32.f32 %v1143
      %v1400 = vcvt.s32.f32 %v1144
      %v1401 = vcvt.s32.f32 %v1145
      %v1402 = vcvt.s32.f32 %v1146
      %v1403 = vcvt.s32.f32 %v1147
      %v1404 = vcvt.s32.f32 %v1148
      %v1405 = vcvt.s32.f32 %v1149
      %v1406 = vcvt.s32.f32 %v1150
      %v1407 = vcvt.s32.f32 %v1151
      %v1408 = vcvt.s32.f32 %v1152
      %v1409 = vcvt.s32.f32 %v1153
      %v1410 = vcvt.s32.f32 %v1154
      %v1411 = vcvt.s32.f32 %v1155
      %v1412 = vcvt.s32.f32 %v1156
      %v1413 = vcvt.s32.f32 %v1157
      %v1414 = vcvt.s32.f32 %v1158
      %v1415 = vcvt.s32.f32 %v1159
      %v1416 = vcvt.s32.f32 %v1160
      %v1417 = vcvt.s32.f32 %v1161
      %v1418 = vcvt.s32.f32 %v1162
      %v1419 = vcvt.s32.f32 %v1163
      %v1420 = vcvt.s32.f32 %v1164
      %v1421 = vcvt.s32.f32 %v1165
      %v1422 = vcvt.s32.f32 %v1166
      %v1423 = vcvt.s32.f32 %v1167
      %v1424 = vcvt.s32.f32 %v1168
      %v1425 = vcvt.s32.f32 %v1169
      %v1426 = vcvt.s32.f32 %v1170
      %v1427 = vcvt.s32.f32 %v1171
      %v1428 = vcvt.s32.f32 %v1172
      %v1429 = vcvt.s32.f32 %v1173
      %v1430 = vcvt.s32.f32 %v1174
      %v1431 = vcvt.s32.f32 %v1175
      %v1432 = vcvt.s32.f32 %v1176
      %v1433 = vcvt.s32.f32 %v1177
      %v1434 = vcvt.s32.f32 %v1178
      %v1435 = vcvt.s32.f32 %v1179
      %v1436 = vcvt.s32.f32 %v1180
      %v1437 = vcvt.s32.f32 %v1181
      %v1438 = vcvt.s32.f32 %v1182
      %v1439 = vcvt.s32.f32 %v1183
      %v1440 = vcvt.s32.f32 %v1184
      %v1441 = vcvt.s32.f32 %v1185
      %v1442 = vcvt.s32.f32 %v1186
      %v1443 = vcvt.s32.f32 %v1187
      %v1444 = vcvt.s32.f32 %v1188
      %v1445 = vcvt.s32.f32 %v1189
      %v1446 = vcvt.s32.f32 %v1190
      %v1447 = vcvt.s32.f32 %v1191
      %v1448 = vcvt.s32.f32 %v1192
      %v1449 = vcvt.s32.f32 %v1193
      %v1450 = vcvt.s32.f32 %v1194
      %v1451 = vcvt.s32.f32 %v1195
      %v1452 = vcvt.s32.f32 %v1196
      %v1453 = vcvt.s32.f32 %v1197
      %v1454 = vcvt.s32.f32 %v1198
      %v1455 = vcvt.s32.f32 %v1199
      %v1456 = vcvt.s32.f32 %v1200
      %v1457 = vcvt.s32.f32 %v1201
      %v1458 = vcvt.s32.f32 %v1202
      %v1459 = vcvt.s32.f32 %v1203
      %v1460 = vcvt.s32.f32 %v1204
      %v1461 = vcvt.s32.f32 %v1205
      %v1462 = vcvt.s32.f32 %v1206
      %v1463 = vcvt.s32.f32 %v1207
      %v1464 = vcvt.s32.f32 %v1208
      %v1465 = vcvt.s32.f32 %v1209
      %v1466 = vcvt.s32.f32 %v1210
      %v1467 = vcvt.s32.f32 %v1211
      %v1468 = vcvt.s32.f32 %v1212
      %v1469 = vcvt.s32.f32 %v1213
      %v1470 = vcvt.s32.f32 %v1214
      %v1471 = vcvt.s32.f32 %v1215
      %v1472 = vcvt.s32.f32 %v1216
      %v1473 = vcvt.s32.f32 %v1217
      %v1474 = vcvt.s32.f32 %v1218
      %v1475 = vcvt.s32.f32 %v1219
      %v1476 = vcvt.s32.f32 %v1220
      %v1477 = vcvt.s32.f32 %v1221
      %v1478 = vcvt.s32.f32 %v1222
      %v1479 = vcvt.s32.f32 %v1223
      %v1480 = vcvt.s32.f32 %v1224
      %v1481 = vcvt.s32.f32 %v1225
      %v1482 = vcvt.s32.f32 %v1226
      %v1483 = vcvt.s32.f32 %v1227
      %v1484 = vcvt.s32.f32 %v1228
      %v1485 = vcvt.s32.f32 %v1229
      %v1486 = vcvt.s32.f32 %v1230
      %v1487 = vcvt.s32.f32 %v1231
      %v1488 = vcvt.s32.f32 %v1232
      %v1489 = vcvt.s32.f32 %v1233
      %v1490 = vcvt.s32.f32 %v1234
      %v1491 = vcvt.s32.f32 %v1235
      %v1492 = vcvt.s32.f32 %v1236
      %v1493 = vcvt.s32.f32 %v1237
      %v1494 = vcvt.s32.f32 %v1238
      %v1495 = vld [vmem:[#allocation2] sm:$0xff]
      %v1496 = vld [vmem:[#allocation2 + $0x8] sm:$0xff]
      %v1497 = vld [vmem:[#allocation2 + $0x10] sm:$0xff]
      %v1498 = vld [vmem:[#allocation2 + $0x18] sm:$0xff]
      %v1499 = vld [vmem:[#allocation2 + $0x20] sm:$0xff]
      %v1500 = vld [vmem:[#allocation2 + $0x28] sm:$0xff]
      %v1501 = vld [vmem:[#allocation2 + $0x30] sm:$0xff]
      %v1502 = vld [vmem:[#allocation2 + $0x38] sm:$0xff]
      %v1503 = vld [vmem:[#allocation2 + $0x40] sm:$0xff]
      %v1504 = vld [vmem:[#allocation2 + $0x48] sm:$0xff]
      %v1505 = vld [vmem:[#allocation2 + $0x50] sm:$0xff]
      %v1506 = vld [vmem:[#allocation2 + $0x58] sm:$0xff]
      %v1507 = vld [vmem:[#allocation2 + $0x60] sm:$0xff]
      %v1508 = vld [vmem:[#allocation2 + $0x68] sm:$0xff]
      %v1509 = vld [vmem:[#allocation2 + $0x70] sm:$0xff]
      %v1510 = vld [vmem:[#allocation2 + $0x78] sm:$0xff]
      %v1511 = vld [vmem:[#allocation2 + $0x80] sm:$0xff]
      %v1512 = vld [vmem:[#allocation2 + $0x88] sm:$0xff]
      %v1513 = vld [vmem:[#allocation2 + $0x90] sm:$0xff]
      %v1514 = vld [vmem:[#allocation2 + $0x98] sm:$0xff]
      %v1515 = vld [vmem:[#allocation2 + $0xa0] sm:$0xff]
      %v1516 = vld [vmem:[#allocation2 + $0xa8] sm:$0xff]
      %v1517 = vld [vmem:[#allocation2 + $0xb0] sm:$0xff]
      %v1518 = vld [vmem:[#allocation2 + $0xb8] sm:$0xff]
      %v1519 = vld [vmem:[#allocation2 + $0xc0] sm:$0xff]
      %v1520 = vld [vmem:[#allocation2 + $0xc8] sm:$0xff]
      %v1521 = vld [vmem:[#allocation2 + $0xd0] sm:$0xff]
      %v1522 = vld [vmem:[#allocation2 + $0xd8] sm:$0xff]
      %v1523 = vld [vmem:[#allocation2 + $0xe0] sm:$0xff]
      %v1524 = vld [vmem:[#allocation2 + $0xe8] sm:$0xff]
      %v1525 = vld [vmem:[#allocation2 + $0xf0] sm:$0xff]
      %v1526 = vld [vmem:[#allocation2 + $0xf8] sm:$0xff]
      %v1527 = vld [vmem:[#allocation2 + $0x100] sm:$0xff]
      %v1528 = vld [vmem:[#allocation2 + $0x108] sm:$0xff]
      %v1529 = vld [vmem:[#allocation2 + $0x110] sm:$0xff]
      %v1530 = vld [vmem:[#allocation2 + $0x118] sm:$0xff]
      %v1531 = vld [vmem:[#allocation2 + $0x120] sm:$0xff]
      %v1532 = vld [vmem:[#allocation2 + $0x128] sm:$0xff]
      %v1533 = vld [vmem:[#allocation2 + $0x130] sm:$0xff]
      %v1534 = vld [vmem:[#allocation2 + $0x138] sm:$0xff]
      %v1535 = vld [vmem:[#allocation2 + $0x140] sm:$0xff]
      %v1536 = vld [vmem:[#allocation2 + $0x148] sm:$0xff]
      %v1537 = vld [vmem:[#allocation2 + $0x150] sm:$0xff]
      %v1538 = vld [vmem:[#allocation2 + $0x158] sm:$0xff]
      %v1539 = vld [vmem:[#allocation2 + $0x160] sm:$0xff]
      %v1540 = vld [vmem:[#allocation2 + $0x168] sm:$0xff]
      %v1541 = vld [vmem:[#allocation2 + $0x170] sm:$0xff]
      %v1542 = vld [vmem:[#allocation2 + $0x178] sm:$0xff]
      %v1543 = vld [vmem:[#allocation2 + $0x180] sm:$0xff]
      %v1544 = vld [vmem:[#allocation2 + $0x188] sm:$0xff]
      %v1545 = vld [vmem:[#allocation2 + $0x190] sm:$0xff]
      %v1546 = vld [vmem:[#allocation2 + $0x198] sm:$0xff]
      %v1547 = vld [vmem:[#allocation2 + $0x1a0] sm:$0xff]
      %v1548 = vld [vmem:[#allocation2 + $0x1a8] sm:$0xff]
      %v1549 = vld [vmem:[#allocation2 + $0x1b0] sm:$0xff]
      %v1550 = vld [vmem:[#allocation2 + $0x1b8] sm:$0xff]
      %v1551 = vld [vmem:[#allocation2 + $0x1c0] sm:$0xff]
      %v1552 = vld [vmem:[#allocation2 + $0x1c8] sm:$0xff]
      %v1553 = vld [vmem:[#allocation2 + $0x1d0] sm:$0xff]
      %v1554 = vld [vmem:[#allocation2 + $0x1d8] sm:$0xff]
      %v1555 = vld [vmem:[#allocation2 + $0x1e0] sm:$0xff]
      %v1556 = vld [vmem:[#allocation2 + $0x1e8] sm:$0xff]
      %v1557 = vld [vmem:[#allocation2 + $0x1f0] sm:$0xff]
      %v1558 = vld [vmem:[#allocation2 + $0x1f8] sm:$0xff]
      %v1559 = vld [vmem:[%s360] sm:$0xff]
      %v1560 = vld [vmem:[%s360 + $0x8] sm:$0xff]
      %v1561 = vld [vmem:[%s360 + $0x10] sm:$0xff]
      %v1562 = vld [vmem:[%s360 + $0x18] sm:$0xff]
      %v1563 = vld [vmem:[%s360 + $0x20] sm:$0xff]
      %v1564 = vld [vmem:[%s360 + $0x28] sm:$0xff]
      %v1565 = vld [vmem:[%s360 + $0x30] sm:$0xff]
      %v1566 = vld [vmem:[%s360 + $0x38] sm:$0xff]
      %v1567 = vld [vmem:[%s360 + $0x40] sm:$0xff]
      %v1568 = vld [vmem:[%s360 + $0x48] sm:$0xff]
      %v1569 = vld [vmem:[%s360 + $0x50] sm:$0xff]
      %v1570 = vld [vmem:[%s360 + $0x58] sm:$0xff]
      %v1571 = vld [vmem:[%s360 + $0x60] sm:$0xff]
      %v1572 = vld [vmem:[%s360 + $0x68] sm:$0xff]
      %v1573 = vld [vmem:[%s360 + $0x70] sm:$0xff]
      %v1574 = vld [vmem:[%s360 + $0x78] sm:$0xff]
      %v1575 = vld [vmem:[%s360 + $0x80] sm:$0xff]
      %v1576 = vld [vmem:[%s360 + $0x88] sm:$0xff]
      %v1577 = vld [vmem:[%s360 + $0x90] sm:$0xff]
      %v1578 = vld [vmem:[%s360 + $0x98] sm:$0xff]
      %v1579 = vld [vmem:[%s360 + $0xa0] sm:$0xff]
      %v1580 = vld [vmem:[%s360 + $0xa8] sm:$0xff]
      %v1581 = vld [vmem:[%s360 + $0xb0] sm:$0xff]
      %v1582 = vld [vmem:[%s360 + $0xb8] sm:$0xff]
      %v1583 = vld [vmem:[%s360 + $0xc0] sm:$0xff]
      %v1584 = vld [vmem:[%s360 + $0xc8] sm:$0xff]
      %v1585 = vld [vmem:[%s360 + $0xd0] sm:$0xff]
      %v1586 = vld [vmem:[%s360 + $0xd8] sm:$0xff]
      %v1587 = vld [vmem:[%s360 + $0xe0] sm:$0xff]
      %v1588 = vld [vmem:[%s360 + $0xe8] sm:$0xff]
      %v1589 = vld [vmem:[%s360 + $0xf0] sm:$0xff]
      %v1590 = vld [vmem:[%s360 + $0xf8] sm:$0xff]
      %v1591 = vld [vmem:[%s360 + $0x100] sm:$0xff]
      %v1592 = vld [vmem:[%s360 + $0x108] sm:$0xff]
      %v1593 = vld [vmem:[%s360 + $0x110] sm:$0xff]
      %v1594 = vld [vmem:[%s360 + $0x118] sm:$0xff]
      %v1595 = vld [vmem:[%s360 + $0x120] sm:$0xff]
      %v1596 = vld [vmem:[%s360 + $0x128] sm:$0xff]
      %v1597 = vld [vmem:[%s360 + $0x130] sm:$0xff]
      %v1598 = vld [vmem:[%s360 + $0x138] sm:$0xff]
      %v1599 = vld [vmem:[%s360 + $0x140] sm:$0xff]
      %v1600 = vld [vmem:[%s360 + $0x148] sm:$0xff]
      %v1601 = vld [vmem:[%s360 + $0x150] sm:$0xff]
      %v1602 = vld [vmem:[%s360 + $0x158] sm:$0xff]
      %v1603 = vld [vmem:[%s360 + $0x160] sm:$0xff]
      %v1604 = vld [vmem:[%s360 + $0x168] sm:$0xff]
      %v1605 = vld [vmem:[%s360 + $0x170] sm:$0xff]
      %v1606 = vld [vmem:[%s360 + $0x178] sm:$0xff]
      %v1607 = vld [vmem:[%s360 + $0x180] sm:$0xff]
      %v1608 = vld [vmem:[%s360 + $0x188] sm:$0xff]
      %v1609 = vld [vmem:[%s360 + $0x190] sm:$0xff]
      %v1610 = vld [vmem:[%s360 + $0x198] sm:$0xff]
      %v1611 = vld [vmem:[%s360 + $0x1a0] sm:$0xff]
      %v1612 = vld [vmem:[%s360 + $0x1a8] sm:$0xff]
      %v1613 = vld [vmem:[%s360 + $0x1b0] sm:$0xff]
      %v1614 = vld [vmem:[%s360 + $0x1b8] sm:$0xff]
      %v1615 = vld [vmem:[%s360 + $0x1c0] sm:$0xff]
      %v1616 = vld [vmem:[%s360 + $0x1c8] sm:$0xff]
      %v1617 = vld [vmem:[%s360 + $0x1d0] sm:$0xff]
      %v1618 = vld [vmem:[%s360 + $0x1d8] sm:$0xff]
      %v1619 = vld [vmem:[%s360 + $0x1e0] sm:$0xff]
      %v1620 = vld [vmem:[%s360 + $0x1e8] sm:$0xff]
      %v1621 = vld [vmem:[%s360 + $0x1f0] sm:$0xff]
      %v1622 = vld [vmem:[%s360 + $0x1f8] sm:$0xff]
      %1623 = vmatprep.subr.mxu0 0.0
      %1624 = vmatpush1.msra.mxu0 %v1574
      %1625 = vmatprep.subr.mxu0 0.0
      %1626 = vmatpush1.msra.mxu0 %v1573
      %1627 = vmatprep.subr.mxu0 0.0
      %1628 = vmatpush1.msra.mxu0 %v1572
      %1629 = vmatprep.subr.mxu0 0.0
      %1630 = vmatpush1.msra.mxu0 %v1571
      %1631 = vmatprep.subr.mxu0 0.0
      %1632 = vmatpush1.msra.mxu0 %v1570
      %1633 = vmatprep.subr.mxu0 0.0
      %1634 = vmatpush1.msra.mxu0 %v1569
      %1635 = vmatprep.subr.mxu0 0.0
      %1636 = vmatpush1.msra.mxu0 %v1568
      %1637 = vmatprep.subr.mxu0 0.0
      %1638 = vmatpush1.msra.mxu0 %v1567
      %1639 = vmatprep.subr.mxu0 0.0
      %1640 = vmatpush1.msra.mxu0 %v1566
      %1641 = vmatprep.subr.mxu0 0.0
      %1642 = vmatpush1.msra.mxu0 %v1565
      %1643 = vmatprep.subr.mxu0 0.0
      %1644 = vmatpush1.msra.mxu0 %v1564
      %1645 = vmatprep.subr.mxu0 0.0
      %1646 = vmatpush1.msra.mxu0 %v1563
      %1647 = vmatprep.subr.mxu0 0.0
      %1648 = vmatpush1.msra.mxu0 %v1562
      %1649 = vmatprep.subr.mxu0 0.0
      %1650 = vmatpush1.msra.mxu0 %v1561
      %1651 = vmatprep.subr.mxu0 0.0
      %1652 = vmatpush1.msra.mxu0 %v1560
      %1653 = vmatprep.subr.mxu0 0.0
      %1654 = vmatpush1.msra.mxu0 %v1559
      %1655 = vmatprep.subr.mxu0 0.0
      %1656 = vmatpush2.msra.mxu0 %v1590
      %1657 = vmatprep.subr.mxu0 0.0
      %1658 = vmatpush2.msra.mxu0 %v1589
      %1659 = vmatprep.subr.mxu0 0.0
      %1660 = vmatpush2.msra.mxu0 %v1588
      %1661 = vmatprep.subr.mxu0 0.0
      %1662 = vmatpush2.msra.mxu0 %v1587
      %1663 = vmatprep.subr.mxu0 0.0
      %1664 = vmatpush2.msra.mxu0 %v1586
      %1665 = vmatprep.subr.mxu0 0.0
      %1666 = vmatpush2.msra.mxu0 %v1585
      %1667 = vmatprep.subr.mxu0 0.0
      %1668 = vmatpush2.msra.mxu0 %v1584
      %1669 = vmatprep.subr.mxu0 0.0
      %1670 = vmatpush2.msra.mxu0 %v1583
      %1671 = vmatprep.subr.mxu0 0.0
      %1672 = vmatpush2.msra.mxu0 %v1582
      %1673 = vmatprep.subr.mxu0 0.0
      %1674 = vmatpush2.msra.mxu0 %v1581
      %1675 = vmatprep.subr.mxu0 0.0
      %1676 = vmatpush2.msra.mxu0 %v1580
      %1677 = vmatprep.subr.mxu0 0.0
      %1678 = vmatpush2.msra.mxu0 %v1579
      %1679 = vmatprep.subr.mxu0 0.0
      %1680 = vmatpush2.msra.mxu0 %v1578
      %1681 = vmatprep.subr.mxu0 0.0
      %1682 = vmatpush2.msra.mxu0 %v1577
      %1683 = vmatprep.subr.mxu0 0.0
      %1684 = vmatpush2.msra.mxu0 %v1576
      %1685 = vmatprep.subr.mxu0 0.0
      %1686 = vmatpush2.msra.mxu0 %v1575
      %1687 = vmatprep.mubr.f32.mxu0 %v1240
      %1688 = vmatmul.mubr.f32.gmra.mxu0 %v1239
      %v1689 = vpop.f32.mrf.mxu0
      %v1690 = vadd.f32 0.0, %v1689
      %v1691 = vpop.f32.mrf.mxu0
      %1692 = vmatprep.mubr.f32.mxu0 %v1244
      %1693 = vmatmul.mubr.f32.gmra.mxu0 %v1243
      %v1694 = vpop.f32.mrf.mxu0
      %v1695 = vadd.f32 0.0, %v1694
      %v1696 = vpop.f32.mrf.mxu0
      %1697 = vmatprep.mubr.f32.mxu0 %v1248
      %1698 = vmatmul.mubr.f32.gmra.mxu0 %v1247
      %v1699 = vpop.f32.mrf.mxu0
      %v1700 = vadd.f32 0.0, %v1699
      %v1701 = vpop.f32.mrf.mxu0
      %1702 = vmatprep.mubr.f32.mxu0 %v1252
      %1703 = vmatmul.mubr.f32.gmra.mxu0 %v1251
      %v1704 = vpop.f32.mrf.mxu0
      %v1705 = vadd.f32 0.0, %v1704
      %v1706 = vpop.f32.mrf.mxu0
      %1707 = vmatprep.mubr.f32.mxu0 %v1256
      %1708 = vmatmul.mubr.f32.gmra.mxu0 %v1255
      %v1709 = vpop.f32.mrf.mxu0
      %v1710 = vadd.f32 0.0, %v1709
      %v1711 = vpop.f32.mrf.mxu0
      %1712 = vmatprep.mubr.f32.mxu0 %v1260
      %1713 = vmatmul.mubr.f32.gmra.mxu0 %v1259
      %v1714 = vpop.f32.mrf.mxu0
      %v1715 = vadd.f32 0.0, %v1714
      %v1716 = vpop.f32.mrf.mxu0
      %1717 = vmatprep.mubr.f32.mxu0 %v1264
      %1718 = vmatmul.mubr.f32.gmra.mxu0 %v1263
      %v1719 = vpop.f32.mrf.mxu0
      %v1720 = vadd.f32 0.0, %v1719
      %v1721 = vpop.f32.mrf.mxu0
      %1722 = vmatprep.mubr.f32.mxu0 %v1268
      %1723 = vmatmul.mubr.f32.gmra.mxu0 %v1267
      %v1724 = vpop.f32.mrf.mxu0
      %v1725 = vadd.f32 0.0, %v1724
      %v1726 = vpop.f32.mrf.mxu0
      %1727 = vmatprep.mubr.f32.mxu0 %v1272
      %1728 = vmatmul.mubr.f32.gmra.mxu0 %v1271
      %v1729 = vpop.f32.mrf.mxu0
      %v1730 = vadd.f32 0.0, %v1729
      %v1731 = vpop.f32.mrf.mxu0
      %1732 = vmatprep.mubr.f32.mxu0 %v1276
      %1733 = vmatmul.mubr.f32.gmra.mxu0 %v1275
      %v1734 = vpop.f32.mrf.mxu0
      %v1735 = vadd.f32 0.0, %v1734
      %v1736 = vpop.f32.mrf.mxu0
      %1737 = vmatprep.mubr.f32.mxu0 %v1280
      %1738 = vmatmul.mubr.f32.gmra.mxu0 %v1279
      %v1739 = vpop.f32.mrf.mxu0
      %v1740 = vadd.f32 0.0, %v1739
      %v1741 = vpop.f32.mrf.mxu0
      %1742 = vmatprep.mubr.f32.mxu0 %v1284
      %1743 = vmatmul.mubr.f32.gmra.mxu0 %v1283
      %v1744 = vpop.f32.mrf.mxu0
      %v1745 = vadd.f32 0.0, %v1744
      %v1746 = vpop.f32.mrf.mxu0
      %1747 = vmatprep.mubr.f32.mxu0 %v1288
      %1748 = vmatmul.mubr.f32.gmra.mxu0 %v1287
      %v1749 = vpop.f32.mrf.mxu0
      %v1750 = vadd.f32 0.0, %v1749
      %v1751 = vpop.f32.mrf.mxu0
      %1752 = vmatprep.mubr.f32.mxu0 %v1292
      %1753 = vmatmul.mubr.f32.gmra.mxu0 %v1291
      %v1754 = vpop.f32.mrf.mxu0
      %v1755 = vadd.f32 0.0, %v1754
      %v1756 = vpop.f32.mrf.mxu0
      %1757 = vmatprep.mubr.f32.mxu0 %v1296
      %1758 = vmatmul.mubr.f32.gmra.mxu0 %v1295
      %v1759 = vpop.f32.mrf.mxu0
      %v1760 = vadd.f32 0.0, %v1759
      %v1761 = vpop.f32.mrf.mxu0
      %1762 = vmatprep.mubr.f32.mxu0 %v1300
      %1763 = vmatmul.mubr.f32.gmra.mxu0 %v1299
      %v1764 = vpop.f32.mrf.mxu0
      %v1765 = vadd.f32 0.0, %v1764
      %v1766 = vpop.f32.mrf.mxu0
      %1767 = vmatprep.mubr.f32.mxu0 %v1304
      %1768 = vmatmul.mubr.f32.gmra.mxu0 %v1303
      %v1769 = vpop.f32.mrf.mxu0
      %v1770 = vadd.f32 0.0, %v1769
      %v1771 = vpop.f32.mrf.mxu0
      %1772 = vmatprep.mubr.f32.mxu0 %v1308
      %1773 = vmatmul.mubr.f32.gmra.mxu0 %v1307
      %v1774 = vpop.f32.mrf.mxu0
      %v1775 = vadd.f32 0.0, %v1774
      %v1776 = vpop.f32.mrf.mxu0
      %1777 = vmatprep.mubr.f32.mxu0 %v1312
      %1778 = vmatmul.mubr.f32.gmra.mxu0 %v1311
      %v1779 = vpop.f32.mrf.mxu0
      %v1780 = vadd.f32 0.0, %v1779
      %v1781 = vpop.f32.mrf.mxu0
      %1782 = vmatprep.mubr.f32.mxu0 %v1316
      %1783 = vmatmul.mubr.f32.gmra.mxu0 %v1315
      %v1784 = vpop.f32.mrf.mxu0
      %v1785 = vadd.f32 0.0, %v1784
      %v1786 = vpop.f32.mrf.mxu0
      %1787 = vmatprep.mubr.f32.mxu0 %v1320
      %1788 = vmatmul.mubr.f32.gmra.mxu0 %v1319
      %v1789 = vpop.f32.mrf.mxu0
      %v1790 = vadd.f32 0.0, %v1789
      %v1791 = vpop.f32.mrf.mxu0
      %1792 = vmatprep.mubr.f32.mxu0 %v1324
      %1793 = vmatmul.mubr.f32.gmra.mxu0 %v1323
      %v1794 = vpop.f32.mrf.mxu0
      %v1795 = vadd.f32 0.0, %v1794
      %v1796 = vpop.f32.mrf.mxu0
      %1797 = vmatprep.mubr.f32.mxu0 %v1328
      %1798 = vmatmul.mubr.f32.gmra.mxu0 %v1327
      %v1799 = vpop.f32.mrf.mxu0
      %v1800 = vadd.f32 0.0, %v1799
      %v1801 = vpop.f32.mrf.mxu0
      %1802 = vmatprep.mubr.f32.mxu0 %v1332
      %1803 = vmatmul.mubr.f32.gmra.mxu0 %v1331
      %v1804 = vpop.f32.mrf.mxu0
      %v1805 = vadd.f32 0.0, %v1804
      %v1806 = vpop.f32.mrf.mxu0
      %1807 = vmatprep.mubr.f32.mxu0 %v1336
      %1808 = vmatmul.mubr.f32.gmra.mxu0 %v1335
      %v1809 = vpop.f32.mrf.mxu0
      %v1810 = vadd.f32 0.0, %v1809
      %v1811 = vpop.f32.mrf.mxu0
      %1812 = vmatprep.mubr.f32.mxu0 %v1340
      %1813 = vmatmul.mubr.f32.gmra.mxu0 %v1339
      %v1814 = vpop.f32.mrf.mxu0
      %v1815 = vadd.f32 0.0, %v1814
      %v1816 = vpop.f32.mrf.mxu0
      %1817 = vmatprep.mubr.f32.mxu0 %v1344
      %1818 = vmatmul.mubr.f32.gmra.mxu0 %v1343
      %v1819 = vpop.f32.mrf.mxu0
      %v1820 = vadd.f32 0.0, %v1819
      %v1821 = vpop.f32.mrf.mxu0
      %1822 = vmatprep.mubr.f32.mxu0 %v1348
      %1823 = vmatmul.mubr.f32.gmra.mxu0 %v1347
      %v1824 = vpop.f32.mrf.mxu0
      %v1825 = vadd.f32 0.0, %v1824
      %v1826 = vpop.f32.mrf.mxu0
      %1827 = vmatprep.mubr.f32.mxu0 %v1352
      %1828 = vmatmul.mubr.f32.gmra.mxu0 %v1351
      %v1829 = vpop.f32.mrf.mxu0
      %v1830 = vadd.f32 0.0, %v1829
      %v1831 = vpop.f32.mrf.mxu0
      %1832 = vmatprep.mubr.f32.mxu0 %v1356
      %1833 = vmatmul.mubr.f32.gmra.mxu0 %v1355
      %v1834 = vpop.f32.mrf.mxu0
      %v1835 = vadd.f32 0.0, %v1834
      %v1836 = vpop.f32.mrf.mxu0
      %1837 = vmatprep.mubr.f32.mxu0 %v1360
      %1838 = vmatmul.mubr.f32.gmra.mxu0 %v1359
      %v1839 = vpop.f32.mrf.mxu0
      %v1840 = vadd.f32 0.0, %v1839
      %v1841 = vpop.f32.mrf.mxu0
      %1842 = vmatprep.mubr.f32.mxu0 %v1364
      %1843 = vmatmul.mubr.f32.gmra.mxu0 %v1363
      %v1844 = vpop.f32.mrf.mxu0
      %v1845 = vadd.f32 0.0, %v1844
      %v1846 = vpop.f32.mrf.mxu0
      %1847 = vmatprep.mubr.f32.mxu0 %v1368
      %1848 = vmatmul.mubr.f32.gmra.mxu0 %v1367
      %v1849 = vpop.f32.mrf.mxu0
      %v1850 = vadd.f32 0.0, %v1849
      %v1851 = vpop.f32.mrf.mxu0
      %1852 = vmatprep.mubr.f32.mxu0 %v1372
      %1853 = vmatmul.mubr.f32.gmra.mxu0 %v1371
      %v1854 = vpop.f32.mrf.mxu0
      %v1855 = vadd.f32 0.0, %v1854
      %v1856 = vpop.f32.mrf.mxu0
      %1857 = vmatprep.mubr.f32.mxu0 %v1376
      %1858 = vmatmul.mubr.f32.gmra.mxu0 %v1375
      %v1859 = vpop.f32.mrf.mxu0
      %v1860 = vadd.f32 0.0, %v1859
      %v1861 = vpop.f32.mrf.mxu0
      %1862 = vmatprep.mubr.f32.mxu0 %v1380
      %1863 = vmatmul.mubr.f32.gmra.mxu0 %v1379
      %v1864 = vpop.f32.mrf.mxu0
      %v1865 = vadd.f32 0.0, %v1864
      %v1866 = vpop.f32.mrf.mxu0
      %1867 = vmatprep.mubr.f32.mxu0 %v1384
      %1868 = vmatmul.mubr.f32.gmra.mxu0 %v1383
      %v1869 = vpop.f32.mrf.mxu0
      %v1870 = vadd.f32 0.0, %v1869
      %v1871 = vpop.f32.mrf.mxu0
      %1872 = vmatprep.mubr.f32.mxu0 %v1388
      %1873 = vmatmul.mubr.f32.gmra.mxu0 %v1387
      %v1874 = vpop.f32.mrf.mxu0
      %v1875 = vadd.f32 0.0, %v1874
      %v1876 = vpop.f32.mrf.mxu0
      %1877 = vmatprep.mubr.f32.mxu0 %v1392
      %1878 = vmatmul.mubr.f32.gmra.mxu0 %v1391
      %v1879 = vpop.f32.mrf.mxu0
      %v1880 = vadd.f32 0.0, %v1879
      %v1881 = vpop.f32.mrf.mxu0
      %1882 = vmatprep.mubr.f32.mxu0 %v1396
      %1883 = vmatmul.mubr.f32.gmra.mxu0 %v1395
      %v1884 = vpop.f32.mrf.mxu0
      %v1885 = vadd.f32 0.0, %v1884
      %v1886 = vpop.f32.mrf.mxu0
      %1887 = vmatprep.mubr.f32.mxu0 %v1400
      %1888 = vmatmul.mubr.f32.gmra.mxu0 %v1399
      %v1889 = vpop.f32.mrf.mxu0
      %v1890 = vadd.f32 0.0, %v1889
      %v1891 = vpop.f32.mrf.mxu0
      %1892 = vmatprep.mubr.f32.mxu0 %v1404
      %1893 = vmatmul.mubr.f32.gmra.mxu0 %v1403
      %v1894 = vpop.f32.mrf.mxu0
      %v1895 = vadd.f32 0.0, %v1894
      %v1896 = vpop.f32.mrf.mxu0
      %1897 = vmatprep.mubr.f32.mxu0 %v1408
      %1898 = vmatmul.mubr.f32.gmra.mxu0 %v1407
      %v1899 = vpop.f32.mrf.mxu0
      %v1900 = vadd.f32 0.0, %v1899
      %v1901 = vpop.f32.mrf.mxu0
      %1902 = vmatprep.mubr.f32.mxu0 %v1412
      %1903 = vmatmul.mubr.f32.gmra.mxu0 %v1411
      %v1904 = vpop.f32.mrf.mxu0
      %v1905 = vadd.f32 0.0, %v1904
      %v1906 = vpop.f32.mrf.mxu0
      %1907 = vmatprep.mubr.f32.mxu0 %v1416
      %1908 = vmatmul.mubr.f32.gmra.mxu0 %v1415
      %v1909 = vpop.f32.mrf.mxu0
      %v1910 = vadd.f32 0.0, %v1909
      %v1911 = vpop.f32.mrf.mxu0
      %1912 = vmatprep.mubr.f32.mxu0 %v1420
      %1913 = vmatmul.mubr.f32.gmra.mxu0 %v1419
      %v1914 = vpop.f32.mrf.mxu0
      %v1915 = vadd.f32 0.0, %v1914
      %v1916 = vpop.f32.mrf.mxu0
      %1917 = vmatprep.mubr.f32.mxu0 %v1424
      %1918 = vmatmul.mubr.f32.gmra.mxu0 %v1423
      %v1919 = vpop.f32.mrf.mxu0
      %v1920 = vadd.f32 0.0, %v1919
      %v1921 = vpop.f32.mrf.mxu0
      %1922 = vmatprep.mubr.f32.mxu0 %v1428
      %1923 = vmatmul.mubr.f32.gmra.mxu0 %v1427
      %v1924 = vpop.f32.mrf.mxu0
      %v1925 = vadd.f32 0.0, %v1924
      %v1926 = vpop.f32.mrf.mxu0
      %1927 = vmatprep.mubr.f32.mxu0 %v1432
      %1928 = vmatmul.mubr.f32.gmra.mxu0 %v1431
      %v1929 = vpop.f32.mrf.mxu0
      %v1930 = vadd.f32 0.0, %v1929
      %v1931 = vpop.f32.mrf.mxu0
      %1932 = vmatprep.mubr.f32.mxu0 %v1436
      %1933 = vmatmul.mubr.f32.gmra.mxu0 %v1435
      %v1934 = vpop.f32.mrf.mxu0
      %v1935 = vadd.f32 0.0, %v1934
      %v1936 = vpop.f32.mrf.mxu0
      %1937 = vmatprep.mubr.f32.mxu0 %v1440
      %1938 = vmatmul.mubr.f32.gmra.mxu0 %v1439
      %v1939 = vpop.f32.mrf.mxu0
      %v1940 = vadd.f32 0.0, %v1939
      %v1941 = vpop.f32.mrf.mxu0
      %1942 = vmatprep.mubr.f32.mxu0 %v1444
      %1943 = vmatmul.mubr.f32.gmra.mxu0 %v1443
      %v1944 = vpop.f32.mrf.mxu0
      %v1945 = vadd.f32 0.0, %v1944
      %v1946 = vpop.f32.mrf.mxu0
      %1947 = vmatprep.mubr.f32.mxu0 %v1448
      %1948 = vmatmul.mubr.f32.gmra.mxu0 %v1447
      %v1949 = vpop.f32.mrf.mxu0
      %v1950 = vadd.f32 0.0, %v1949
      %v1951 = vpop.f32.mrf.mxu0
      %1952 = vmatprep.mubr.f32.mxu0 %v1452
      %1953 = vmatmul.mubr.f32.gmra.mxu0 %v1451
      %v1954 = vpop.f32.mrf.mxu0
      %v1955 = vadd.f32 0.0, %v1954
      %v1956 = vpop.f32.mrf.mxu0
      %1957 = vmatprep.mubr.f32.mxu0 %v1456
      %1958 = vmatmul.mubr.f32.gmra.mxu0 %v1455
      %v1959 = vpop.f32.mrf.mxu0
      %v1960 = vadd.f32 0.0, %v1959
      %v1961 = vpop.f32.mrf.mxu0
      %1962 = vmatprep.mubr.f32.mxu0 %v1460
      %1963 = vmatmul.mubr.f32.gmra.mxu0 %v1459
      %v1964 = vpop.f32.mrf.mxu0
      %v1965 = vadd.f32 0.0, %v1964
      %v1966 = vpop.f32.mrf.mxu0
      %1967 = vmatprep.mubr.f32.mxu0 %v1464
      %1968 = vmatmul.mubr.f32.gmra.mxu0 %v1463
      %v1969 = vpop.f32.mrf.mxu0
      %v1970 = vadd.f32 0.0, %v1969
      %v1971 = vpop.f32.mrf.mxu0
      %1972 = vmatprep.mubr.f32.mxu0 %v1468
      %1973 = vmatmul.mubr.f32.gmra.mxu0 %v1467
      %v1974 = vpop.f32.mrf.mxu0
      %v1975 = vadd.f32 0.0, %v1974
      %v1976 = vpop.f32.mrf.mxu0
      %1977 = vmatprep.mubr.f32.mxu0 %v1472
      %1978 = vmatmul.mubr.f32.gmra.mxu0 %v1471
      %v1979 = vpop.f32.mrf.mxu0
      %v1980 = vadd.f32 0.0, %v1979
      %v1981 = vpop.f32.mrf.mxu0
      %1982 = vmatprep.mubr.f32.mxu0 %v1476
      %1983 = vmatmul.mubr.f32.gmra.mxu0 %v1475
      %v1984 = vpop.f32.mrf.mxu0
      %v1985 = vadd.f32 0.0, %v1984
      %v1986 = vpop.f32.mrf.mxu0
      %1987 = vmatprep.mubr.f32.mxu0 %v1480
      %1988 = vmatmul.mubr.f32.gmra.mxu0 %v1479
      %v1989 = vpop.f32.mrf.mxu0
      %v1990 = vadd.f32 0.0, %v1989
      %v1991 = vpop.f32.mrf.mxu0
      %1992 = vmatprep.mubr.f32.mxu0 %v1484
      %1993 = vmatmul.mubr.f32.gmra.mxu0 %v1483
      %v1994 = vpop.f32.mrf.mxu0
      %v1995 = vadd.f32 0.0, %v1994
      %v1996 = vpop.f32.mrf.mxu0
      %1997 = vmatprep.mubr.f32.mxu0 %v1488
      %1998 = vmatmul.mubr.f32.gmra.mxu0 %v1487
      %v1999 = vpop.f32.mrf.mxu0
      %v2000 = vadd.f32 0.0, %v1999
      %v2001 = vpop.f32.mrf.mxu0
      %2002 = vmatprep.mubr.f32.mxu0 %v1492
      %2003 = vmatmul.mubr.f32.gmra.mxu0 %v1491
      %v2004 = vpop.f32.mrf.mxu0
      %v2005 = vadd.f32 0.0, %v2004
      %v2006 = vpop.f32.mrf.mxu0
      %2007 = vdwg.mxu0
      %2008 = vmatprep.subr.mxu0 0.0
      %2009 = vmatpush1.msra.mxu0 %v1606
      %2010 = vmatprep.subr.mxu0 0.0
      %2011 = vmatpush1.msra.mxu0 %v1605
      %2012 = vmatprep.subr.mxu0 0.0
      %2013 = vmatpush1.msra.mxu0 %v1604
      %2014 = vmatprep.subr.mxu0 0.0
      %2015 = vmatpush1.msra.mxu0 %v1603
      %2016 = vmatprep.subr.mxu0 0.0
      %2017 = vmatpush1.msra.mxu0 %v1602
      %2018 = vmatprep.subr.mxu0 0.0
      %2019 = vmatpush1.msra.mxu0 %v1601
      %2020 = vmatprep.subr.mxu0 0.0
      %2021 = vmatpush1.msra.mxu0 %v1600
      %2022 = vmatprep.subr.mxu0 0.0
      %2023 = vmatpush1.msra.mxu0 %v1599
      %2024 = vmatprep.subr.mxu0 0.0
      %2025 = vmatpush1.msra.mxu0 %v1598
      %2026 = vmatprep.subr.mxu0 0.0
      %2027 = vmatpush1.msra.mxu0 %v1597
      %2028 = vmatprep.subr.mxu0 0.0
      %2029 = vmatpush1.msra.mxu0 %v1596
      %2030 = vmatprep.subr.mxu0 0.0
      %2031 = vmatpush1.msra.mxu0 %v1595
      %2032 = vmatprep.subr.mxu0 0.0
      %2033 = vmatpush1.msra.mxu0 %v1594
      %2034 = vmatprep.subr.mxu0 0.0
      %2035 = vmatpush1.msra.mxu0 %v1593
      %2036 = vmatprep.subr.mxu0 0.0
      %2037 = vmatpush1.msra.mxu0 %v1592
      %2038 = vmatprep.subr.mxu0 0.0
      %2039 = vmatpush1.msra.mxu0 %v1591
      %2040 = vmatprep.subr.mxu0 0.0
      %2041 = vmatpush2.msra.mxu0 %v1622
      %2042 = vmatprep.subr.mxu0 0.0
      %2043 = vmatpush2.msra.mxu0 %v1621
      %2044 = vmatprep.subr.mxu0 0.0
      %2045 = vmatpush2.msra.mxu0 %v1620
      %2046 = vmatprep.subr.mxu0 0.0
      %2047 = vmatpush2.msra.mxu0 %v1619
      %2048 = vmatprep.subr.mxu0 0.0
      %2049 = vmatpush2.msra.mxu0 %v1618
      %2050 = vmatprep.subr.mxu0 0.0
      %2051 = vmatpush2.msra.mxu0 %v1617
      %2052 = vmatprep.subr.mxu0 0.0
      %2053 = vmatpush2.msra.mxu0 %v1616
      %2054 = vmatprep.subr.mxu0 0.0
      %2055 = vmatpush2.msra.mxu0 %v1615
      %2056 = vmatprep.subr.mxu0 0.0
      %2057 = vmatpush2.msra.mxu0 %v1614
      %2058 = vmatprep.subr.mxu0 0.0
      %2059 = vmatpush2.msra.mxu0 %v1613
      %2060 = vmatprep.subr.mxu0 0.0
      %2061 = vmatpush2.msra.mxu0 %v1612
      %2062 = vmatprep.subr.mxu0 0.0
      %2063 = vmatpush2.msra.mxu0 %v1611
      %2064 = vmatprep.subr.mxu0 0.0
      %2065 = vmatpush2.msra.mxu0 %v1610
      %2066 = vmatprep.subr.mxu0 0.0
      %2067 = vmatpush2.msra.mxu0 %v1609
      %2068 = vmatprep.subr.mxu0 0.0
      %2069 = vmatpush2.msra.mxu0 %v1608
      %2070 = vmatprep.subr.mxu0 0.0
      %2071 = vmatpush2.msra.mxu0 %v1607
      %2072 = vmatprep.mubr.f32.mxu0 %v1242
      %2073 = vmatmul.mubr.f32.gmra.mxu0 %v1241
      %v2074 = vpop.f32.mrf.mxu0
      %v2075 = vadd.f32 %v1690, %v2074
      %v2076 = vpop.f32.mrf.mxu0
      %2077 = vmatprep.mubr.f32.mxu0 %v1246
      %2078 = vmatmul.mubr.f32.gmra.mxu0 %v1245
      %v2079 = vpop.f32.mrf.mxu0
      %v2080 = vadd.f32 %v1695, %v2079
      %v2081 = vpop.f32.mrf.mxu0
      %2082 = vmatprep.mubr.f32.mxu0 %v1250
      %2083 = vmatmul.mubr.f32.gmra.mxu0 %v1249
      %v2084 = vpop.f32.mrf.mxu0
      %v2085 = vadd.f32 %v1700, %v2084
      %v2086 = vpop.f32.mrf.mxu0
      %2087 = vmatprep.mubr.f32.mxu0 %v1254
      %2088 = vmatmul.mubr.f32.gmra.mxu0 %v1253
      %v2089 = vpop.f32.mrf.mxu0
      %v2090 = vadd.f32 %v1705, %v2089
      %v2091 = vpop.f32.mrf.mxu0
      %2092 = vmatprep.mubr.f32.mxu0 %v1258
      %2093 = vmatmul.mubr.f32.gmra.mxu0 %v1257
      %v2094 = vpop.f32.mrf.mxu0
      %v2095 = vadd.f32 %v1710, %v2094
      %v2096 = vpop.f32.mrf.mxu0
      %2097 = vmatprep.mubr.f32.mxu0 %v1262
      %2098 = vmatmul.mubr.f32.gmra.mxu0 %v1261
      %v2099 = vpop.f32.mrf.mxu0
      %v2100 = vadd.f32 %v1715, %v2099
      %v2101 = vpop.f32.mrf.mxu0
      %2102 = vmatprep.mubr.f32.mxu0 %v1266
      %2103 = vmatmul.mubr.f32.gmra.mxu0 %v1265
      %v2104 = vpop.f32.mrf.mxu0
      %v2105 = vadd.f32 %v1720, %v2104
      %v2106 = vpop.f32.mrf.mxu0
      %2107 = vmatprep.mubr.f32.mxu0 %v1270
      %2108 = vmatmul.mubr.f32.gmra.mxu0 %v1269
      %v2109 = vpop.f32.mrf.mxu0
      %v2110 = vadd.f32 %v1725, %v2109
      %v2111 = vpop.f32.mrf.mxu0
      %2112 = vmatprep.mubr.f32.mxu0 %v1274
      %2113 = vmatmul.mubr.f32.gmra.mxu0 %v1273
      %v2114 = vpop.f32.mrf.mxu0
      %v2115 = vadd.f32 %v1730, %v2114
      %v2116 = vpop.f32.mrf.mxu0
      %2117 = vmatprep.mubr.f32.mxu0 %v1278
      %2118 = vmatmul.mubr.f32.gmra.mxu0 %v1277
      %v2119 = vpop.f32.mrf.mxu0
      %v2120 = vadd.f32 %v1735, %v2119
      %v2121 = vpop.f32.mrf.mxu0
      %2122 = vmatprep.mubr.f32.mxu0 %v1282
      %2123 = vmatmul.mubr.f32.gmra.mxu0 %v1281
      %v2124 = vpop.f32.mrf.mxu0
      %v2125 = vadd.f32 %v1740, %v2124
      %v2126 = vpop.f32.mrf.mxu0
      %2127 = vmatprep.mubr.f32.mxu0 %v1286
      %2128 = vmatmul.mubr.f32.gmra.mxu0 %v1285
      %v2129 = vpop.f32.mrf.mxu0
      %v2130 = vadd.f32 %v1745, %v2129
      %v2131 = vpop.f32.mrf.mxu0
      %2132 = vmatprep.mubr.f32.mxu0 %v1290
      %2133 = vmatmul.mubr.f32.gmra.mxu0 %v1289
      %v2134 = vpop.f32.mrf.mxu0
      %v2135 = vadd.f32 %v1750, %v2134
      %v2136 = vpop.f32.mrf.mxu0
      %2137 = vmatprep.mubr.f32.mxu0 %v1294
      %2138 = vmatmul.mubr.f32.gmra.mxu0 %v1293
      %v2139 = vpop.f32.mrf.mxu0
      %v2140 = vadd.f32 %v1755, %v2139
      %v2141 = vpop.f32.mrf.mxu0
      %2142 = vmatprep.mubr.f32.mxu0 %v1298
      %2143 = vmatmul.mubr.f32.gmra.mxu0 %v1297
      %v2144 = vpop.f32.mrf.mxu0
      %v2145 = vadd.f32 %v1760, %v2144
      %v2146 = vpop.f32.mrf.mxu0
      %2147 = vmatprep.mubr.f32.mxu0 %v1302
      %2148 = vmatmul.mubr.f32.gmra.mxu0 %v1301
      %v2149 = vpop.f32.mrf.mxu0
      %v2150 = vadd.f32 %v1765, %v2149
      %v2151 = vpop.f32.mrf.mxu0
      %2152 = vmatprep.mubr.f32.mxu0 %v1306
      %2153 = vmatmul.mubr.f32.gmra.mxu0 %v1305
      %v2154 = vpop.f32.mrf.mxu0
      %v2155 = vadd.f32 %v1770, %v2154
      %v2156 = vpop.f32.mrf.mxu0
      %2157 = vmatprep.mubr.f32.mxu0 %v1310
      %2158 = vmatmul.mubr.f32.gmra.mxu0 %v1309
      %v2159 = vpop.f32.mrf.mxu0
      %v2160 = vadd.f32 %v1775, %v2159
      %v2161 = vpop.f32.mrf.mxu0
      %2162 = vmatprep.mubr.f32.mxu0 %v1314
      %2163 = vmatmul.mubr.f32.gmra.mxu0 %v1313
      %v2164 = vpop.f32.mrf.mxu0
      %v2165 = vadd.f32 %v1780, %v2164
      %v2166 = vpop.f32.mrf.mxu0
      %2167 = vmatprep.mubr.f32.mxu0 %v1318
      %2168 = vmatmul.mubr.f32.gmra.mxu0 %v1317
      %v2169 = vpop.f32.mrf.mxu0
      %v2170 = vadd.f32 %v1785, %v2169
      %v2171 = vpop.f32.mrf.mxu0
      %2172 = vmatprep.mubr.f32.mxu0 %v1322
      %2173 = vmatmul.mubr.f32.gmra.mxu0 %v1321
      %v2174 = vpop.f32.mrf.mxu0
      %v2175 = vadd.f32 %v1790, %v2174
      %v2176 = vpop.f32.mrf.mxu0
      %2177 = vmatprep.mubr.f32.mxu0 %v1326
      %2178 = vmatmul.mubr.f32.gmra.mxu0 %v1325
      %v2179 = vpop.f32.mrf.mxu0
      %v2180 = vadd.f32 %v1795, %v2179
      %v2181 = vpop.f32.mrf.mxu0
      %2182 = vmatprep.mubr.f32.mxu0 %v1330
      %2183 = vmatmul.mubr.f32.gmra.mxu0 %v1329
      %v2184 = vpop.f32.mrf.mxu0
      %v2185 = vadd.f32 %v1800, %v2184
      %v2186 = vpop.f32.mrf.mxu0
      %2187 = vmatprep.mubr.f32.mxu0 %v1334
      %2188 = vmatmul.mubr.f32.gmra.mxu0 %v1333
      %v2189 = vpop.f32.mrf.mxu0
      %v2190 = vadd.f32 %v1805, %v2189
      %v2191 = vpop.f32.mrf.mxu0
      %2192 = vmatprep.mubr.f32.mxu0 %v1338
      %2193 = vmatmul.mubr.f32.gmra.mxu0 %v1337
      %v2194 = vpop.f32.mrf.mxu0
      %v2195 = vadd.f32 %v1810, %v2194
      %v2196 = vpop.f32.mrf.mxu0
      %2197 = vmatprep.mubr.f32.mxu0 %v1342
      %2198 = vmatmul.mubr.f32.gmra.mxu0 %v1341
      %v2199 = vpop.f32.mrf.mxu0
      %v2200 = vadd.f32 %v1815, %v2199
      %v2201 = vpop.f32.mrf.mxu0
      %2202 = vmatprep.mubr.f32.mxu0 %v1346
      %2203 = vmatmul.mubr.f32.gmra.mxu0 %v1345
      %v2204 = vpop.f32.mrf.mxu0
      %v2205 = vadd.f32 %v1820, %v2204
      %v2206 = vpop.f32.mrf.mxu0
      %2207 = vmatprep.mubr.f32.mxu0 %v1350
      %2208 = vmatmul.mubr.f32.gmra.mxu0 %v1349
      %v2209 = vpop.f32.mrf.mxu0
      %v2210 = vadd.f32 %v1825, %v2209
      %v2211 = vpop.f32.mrf.mxu0
      %2212 = vmatprep.mubr.f32.mxu0 %v1354
      %2213 = vmatmul.mubr.f32.gmra.mxu0 %v1353
      %v2214 = vpop.f32.mrf.mxu0
      %v2215 = vadd.f32 %v1830, %v2214
      %v2216 = vpop.f32.mrf.mxu0
      %2217 = vmatprep.mubr.f32.mxu0 %v1358
      %2218 = vmatmul.mubr.f32.gmra.mxu0 %v1357
      %v2219 = vpop.f32.mrf.mxu0
      %v2220 = vadd.f32 %v1835, %v2219
      %v2221 = vpop.f32.mrf.mxu0
      %2222 = vmatprep.mubr.f32.mxu0 %v1362
      %2223 = vmatmul.mubr.f32.gmra.mxu0 %v1361
      %v2224 = vpop.f32.mrf.mxu0
      %v2225 = vadd.f32 %v1840, %v2224
      %v2226 = vpop.f32.mrf.mxu0
      %2227 = vmatprep.mubr.f32.mxu0 %v1366
      %2228 = vmatmul.mubr.f32.gmra.mxu0 %v1365
      %v2229 = vpop.f32.mrf.mxu0
      %v2230 = vadd.f32 %v1845, %v2229
      %v2231 = vpop.f32.mrf.mxu0
      %2232 = vmatprep.mubr.f32.mxu0 %v1370
      %2233 = vmatmul.mubr.f32.gmra.mxu0 %v1369
      %v2234 = vpop.f32.mrf.mxu0
      %v2235 = vadd.f32 %v1850, %v2234
      %v2236 = vpop.f32.mrf.mxu0
      %2237 = vmatprep.mubr.f32.mxu0 %v1374
      %2238 = vmatmul.mubr.f32.gmra.mxu0 %v1373
      %v2239 = vpop.f32.mrf.mxu0
      %v2240 = vadd.f32 %v1855, %v2239
      %v2241 = vpop.f32.mrf.mxu0
      %2242 = vmatprep.mubr.f32.mxu0 %v1378
      %2243 = vmatmul.mubr.f32.gmra.mxu0 %v1377
      %v2244 = vpop.f32.mrf.mxu0
      %v2245 = vadd.f32 %v1860, %v2244
      %v2246 = vpop.f32.mrf.mxu0
      %2247 = vmatprep.mubr.f32.mxu0 %v1382
      %2248 = vmatmul.mubr.f32.gmra.mxu0 %v1381
      %v2249 = vpop.f32.mrf.mxu0
      %v2250 = vadd.f32 %v1865, %v2249
      %v2251 = vpop.f32.mrf.mxu0
      %2252 = vmatprep.mubr.f32.mxu0 %v1386
      %2253 = vmatmul.mubr.f32.gmra.mxu0 %v1385
      %v2254 = vpop.f32.mrf.mxu0
      %v2255 = vadd.f32 %v1870, %v2254
      %v2256 = vpop.f32.mrf.mxu0
      %2257 = vmatprep.mubr.f32.mxu0 %v1390
      %2258 = vmatmul.mubr.f32.gmra.mxu0 %v1389
      %v2259 = vpop.f32.mrf.mxu0
      %v2260 = vadd.f32 %v1875, %v2259
      %v2261 = vpop.f32.mrf.mxu0
      %2262 = vmatprep.mubr.f32.mxu0 %v1394
      %2263 = vmatmul.mubr.f32.gmra.mxu0 %v1393
      %v2264 = vpop.f32.mrf.mxu0
      %v2265 = vadd.f32 %v1880, %v2264
      %v2266 = vpop.f32.mrf.mxu0
      %2267 = vmatprep.mubr.f32.mxu0 %v1398
      %2268 = vmatmul.mubr.f32.gmra.mxu0 %v1397
      %v2269 = vpop.f32.mrf.mxu0
      %v2270 = vadd.f32 %v1885, %v2269
      %v2271 = vpop.f32.mrf.mxu0
      %2272 = vmatprep.mubr.f32.mxu0 %v1402
      %2273 = vmatmul.mubr.f32.gmra.mxu0 %v1401
      %v2274 = vpop.f32.mrf.mxu0
      %v2275 = vadd.f32 %v1890, %v2274
      %v2276 = vpop.f32.mrf.mxu0
      %2277 = vmatprep.mubr.f32.mxu0 %v1406
      %2278 = vmatmul.mubr.f32.gmra.mxu0 %v1405
      %v2279 = vpop.f32.mrf.mxu0
      %v2280 = vadd.f32 %v1895, %v2279
      %v2281 = vpop.f32.mrf.mxu0
      %2282 = vmatprep.mubr.f32.mxu0 %v1410
      %2283 = vmatmul.mubr.f32.gmra.mxu0 %v1409
      %v2284 = vpop.f32.mrf.mxu0
      %v2285 = vadd.f32 %v1900, %v2284
      %v2286 = vpop.f32.mrf.mxu0
      %2287 = vmatprep.mubr.f32.mxu0 %v1414
      %2288 = vmatmul.mubr.f32.gmra.mxu0 %v1413
      %v2289 = vpop.f32.mrf.mxu0
      %v2290 = vadd.f32 %v1905, %v2289
      %v2291 = vpop.f32.mrf.mxu0
      %2292 = vmatprep.mubr.f32.mxu0 %v1418
      %2293 = vmatmul.mubr.f32.gmra.mxu0 %v1417
      %v2294 = vpop.f32.mrf.mxu0
      %v2295 = vadd.f32 %v1910, %v2294
      %v2296 = vpop.f32.mrf.mxu0
      %2297 = vmatprep.mubr.f32.mxu0 %v1422
      %2298 = vmatmul.mubr.f32.gmra.mxu0 %v1421
      %v2299 = vpop.f32.mrf.mxu0
      %v2300 = vadd.f32 %v1915, %v2299
      %v2301 = vpop.f32.mrf.mxu0
      %2302 = vmatprep.mubr.f32.mxu0 %v1426
      %2303 = vmatmul.mubr.f32.gmra.mxu0 %v1425
      %v2304 = vpop.f32.mrf.mxu0
      %v2305 = vadd.f32 %v1920, %v2304
      %v2306 = vpop.f32.mrf.mxu0
      %2307 = vmatprep.mubr.f32.mxu0 %v1430
      %2308 = vmatmul.mubr.f32.gmra.mxu0 %v1429
      %v2309 = vpop.f32.mrf.mxu0
      %v2310 = vadd.f32 %v1925, %v2309
      %v2311 = vpop.f32.mrf.mxu0
      %2312 = vmatprep.mubr.f32.mxu0 %v1434
      %2313 = vmatmul.mubr.f32.gmra.mxu0 %v1433
      %v2314 = vpop.f32.mrf.mxu0
      %v2315 = vadd.f32 %v1930, %v2314
      %v2316 = vpop.f32.mrf.mxu0
      %2317 = vmatprep.mubr.f32.mxu0 %v1438
      %2318 = vmatmul.mubr.f32.gmra.mxu0 %v1437
      %v2319 = vpop.f32.mrf.mxu0
      %v2320 = vadd.f32 %v1935, %v2319
      %v2321 = vpop.f32.mrf.mxu0
      %2322 = vmatprep.mubr.f32.mxu0 %v1442
      %2323 = vmatmul.mubr.f32.gmra.mxu0 %v1441
      %v2324 = vpop.f32.mrf.mxu0
      %v2325 = vadd.f32 %v1940, %v2324
      %v2326 = vpop.f32.mrf.mxu0
      %2327 = vmatprep.mubr.f32.mxu0 %v1446
      %2328 = vmatmul.mubr.f32.gmra.mxu0 %v1445
      %v2329 = vpop.f32.mrf.mxu0
      %v2330 = vadd.f32 %v1945, %v2329
      %v2331 = vpop.f32.mrf.mxu0
      %2332 = vmatprep.mubr.f32.mxu0 %v1450
      %2333 = vmatmul.mubr.f32.gmra.mxu0 %v1449
      %v2334 = vpop.f32.mrf.mxu0
      %v2335 = vadd.f32 %v1950, %v2334
      %v2336 = vpop.f32.mrf.mxu0
      %2337 = vmatprep.mubr.f32.mxu0 %v1454
      %2338 = vmatmul.mubr.f32.gmra.mxu0 %v1453
      %v2339 = vpop.f32.mrf.mxu0
      %v2340 = vadd.f32 %v1955, %v2339
      %v2341 = vpop.f32.mrf.mxu0
      %2342 = vmatprep.mubr.f32.mxu0 %v1458
      %2343 = vmatmul.mubr.f32.gmra.mxu0 %v1457
      %v2344 = vpop.f32.mrf.mxu0
      %v2345 = vadd.f32 %v1960, %v2344
      %v2346 = vpop.f32.mrf.mxu0
      %2347 = vmatprep.mubr.f32.mxu0 %v1462
      %2348 = vmatmul.mubr.f32.gmra.mxu0 %v1461
      %v2349 = vpop.f32.mrf.mxu0
      %v2350 = vadd.f32 %v1965, %v2349
      %v2351 = vpop.f32.mrf.mxu0
      %2352 = vmatprep.mubr.f32.mxu0 %v1466
      %2353 = vmatmul.mubr.f32.gmra.mxu0 %v1465
      %v2354 = vpop.f32.mrf.mxu0
      %v2355 = vadd.f32 %v1970, %v2354
      %v2356 = vpop.f32.mrf.mxu0
      %2357 = vmatprep.mubr.f32.mxu0 %v1470
      %2358 = vmatmul.mubr.f32.gmra.mxu0 %v1469
      %v2359 = vpop.f32.mrf.mxu0
      %v2360 = vadd.f32 %v1975, %v2359
      %v2361 = vpop.f32.mrf.mxu0
      %2362 = vmatprep.mubr.f32.mxu0 %v1474
      %2363 = vmatmul.mubr.f32.gmra.mxu0 %v1473
      %v2364 = vpop.f32.mrf.mxu0
      %v2365 = vadd.f32 %v1980, %v2364
      %v2366 = vpop.f32.mrf.mxu0
      %2367 = vmatprep.mubr.f32.mxu0 %v1478
      %2368 = vmatmul.mubr.f32.gmra.mxu0 %v1477
      %v2369 = vpop.f32.mrf.mxu0
      %v2370 = vadd.f32 %v1985, %v2369
      %v2371 = vpop.f32.mrf.mxu0
      %2372 = vmatprep.mubr.f32.mxu0 %v1482
      %2373 = vmatmul.mubr.f32.gmra.mxu0 %v1481
      %v2374 = vpop.f32.mrf.mxu0
      %v2375 = vadd.f32 %v1990, %v2374
      %v2376 = vpop.f32.mrf.mxu0
      %2377 = vmatprep.mubr.f32.mxu0 %v1486
      %2378 = vmatmul.mubr.f32.gmra.mxu0 %v1485
      %v2379 = vpop.f32.mrf.mxu0
      %v2380 = vadd.f32 %v1995, %v2379
      %v2381 = vpop.f32.mrf.mxu0
      %2382 = vmatprep.mubr.f32.mxu0 %v1490
      %2383 = vmatmul.mubr.f32.gmra.mxu0 %v1489
      %v2384 = vpop.f32.mrf.mxu0
      %v2385 = vadd.f32 %v2000, %v2384
      %v2386 = vpop.f32.mrf.mxu0
      %2387 = vmatprep.mubr.f32.mxu0 %v1494
      %2388 = vmatmul.mubr.f32.gmra.mxu0 %v1493
      %v2389 = vpop.f32.mrf.mxu0
      %v2390 = vadd.f32 %v2005, %v2389
      %v2391 = vpop.f32.mrf.mxu0
      %2392 = vdwg.mxu0
      %v2393 = vadd.f32 %v1495, %v2075
      %v2394 = vadd.f32 %v1496, %v2080
      %v2395 = vadd.f32 %v1497, %v2085
      %v2396 = vadd.f32 %v1498, %v2090
      %v2397 = vadd.f32 %v1499, %v2095
      %v2398 = vadd.f32 %v1500, %v2100
      %v2399 = vadd.f32 %v1501, %v2105
      %v2400 = vadd.f32 %v1502, %v2110
      %v2401 = vadd.f32 %v1503, %v2115
      %v2402 = vadd.f32 %v1504, %v2120
      %v2403 = vadd.f32 %v1505, %v2125
      %v2404 = vadd.f32 %v1506, %v2130
      %v2405 = vadd.f32 %v1507, %v2135
      %v2406 = vadd.f32 %v1508, %v2140
      %v2407 = vadd.f32 %v1509, %v2145
      %v2408 = vadd.f32 %v1510, %v2150
      %v2409 = vadd.f32 %v1511, %v2155
      %v2410 = vadd.f32 %v1512, %v2160
      %v2411 = vadd.f32 %v1513, %v2165
      %v2412 = vadd.f32 %v1514, %v2170
      %v2413 = vadd.f32 %v1515, %v2175
      %v2414 = vadd.f32 %v1516, %v2180
      %v2415 = vadd.f32 %v1517, %v2185
      %v2416 = vadd.f32 %v1518, %v2190
      %v2417 = vadd.f32 %v1519, %v2195
      %v2418 = vadd.f32 %v1520, %v2200
      %v2419 = vadd.f32 %v1521, %v2205
      %v2420 = vadd.f32 %v1522, %v2210
      %v2421 = vadd.f32 %v1523, %v2215
      %v2422 = vadd.f32 %v1524, %v2220
      %v2423 = vadd.f32 %v1525, %v2225
      %v2424 = vadd.f32 %v1526, %v2230
      %v2425 = vadd.f32 %v1527, %v2235
      %v2426 = vadd.f32 %v1528, %v2240
      %v2427 = vadd.f32 %v1529, %v2245
      %v2428 = vadd.f32 %v1530, %v2250
      %v2429 = vadd.f32 %v1531, %v2255
      %v2430 = vadd.f32 %v1532, %v2260
      %v2431 = vadd.f32 %v1533, %v2265
      %v2432 = vadd.f32 %v1534, %v2270
      %v2433 = vadd.f32 %v1535, %v2275
      %v2434 = vadd.f32 %v1536, %v2280
      %v2435 = vadd.f32 %v1537, %v2285
      %v2436 = vadd.f32 %v1538, %v2290
      %v2437 = vadd.f32 %v1539, %v2295
      %v2438 = vadd.f32 %v1540, %v2300
      %v2439 = vadd.f32 %v1541, %v2305
      %v2440 = vadd.f32 %v1542, %v2310
      %v2441 = vadd.f32 %v1543, %v2315
      %v2442 = vadd.f32 %v1544, %v2320
      %v2443 = vadd.f32 %v1545, %v2325
      %v2444 = vadd.f32 %v1546, %v2330
      %v2445 = vadd.f32 %v1547, %v2335
      %v2446 = vadd.f32 %v1548, %v2340
      %v2447 = vadd.f32 %v1549, %v2345
      %v2448 = vadd.f32 %v1550, %v2350
      %v2449 = vadd.f32 %v1551, %v2355
      %v2450 = vadd.f32 %v1552, %v2360
      %v2451 = vadd.f32 %v1553, %v2365
      %v2452 = vadd.f32 %v1554, %v2370
      %v2453 = vadd.f32 %v1555, %v2375
      %v2454 = vadd.f32 %v1556, %v2380
      %v2455 = vadd.f32 %v1557, %v2385
      %v2456 = vadd.f32 %v1558, %v2390
      %2457 = vst [vmem:[#allocation2] sm:$0xff] %v2393
      %2458 = vst [vmem:[#allocation2 + $0x8] sm:$0xff] %v2394
      %2459 = vst [vmem:[#allocation2 + $0x10] sm:$0xff] %v2395
      %2460 = vst [vmem:[#allocation2 + $0x18] sm:$0xff] %v2396
      %2461 = vst [vmem:[#allocation2 + $0x20] sm:$0xff] %v2397
      %2462 = vst [vmem:[#allocation2 + $0x28] sm:$0xff] %v2398
      %2463 = vst [vmem:[#allocation2 + $0x30] sm:$0xff] %v2399
      %2464 = vst [vmem:[#allocation2 + $0x38] sm:$0xff] %v2400
      %2465 = vst [vmem:[#allocation2 + $0x40] sm:$0xff] %v2401
      %2466 = vst [vmem:[#allocation2 + $0x48] sm:$0xff] %v2402
      %2467 = vst [vmem:[#allocation2 + $0x50] sm:$0xff] %v2403
      %2468 = vst [vmem:[#allocation2 + $0x58] sm:$0xff] %v2404
      %2469 = vst [vmem:[#allocation2 + $0x60] sm:$0xff] %v2405
      %2470 = vst [vmem:[#allocation2 + $0x68] sm:$0xff] %v2406
      %2471 = vst [vmem:[#allocation2 + $0x70] sm:$0xff] %v2407
      %2472 = vst [vmem:[#allocation2 + $0x78] sm:$0xff] %v2408
      %2473 = vst [vmem:[#allocation2 + $0x80] sm:$0xff] %v2409
      %2474 = vst [vmem:[#allocation2 + $0x88] sm:$0xff] %v2410
      %2475 = vst [vmem:[#allocation2 + $0x90] sm:$0xff] %v2411
      %2476 = vst [vmem:[#allocation2 + $0x98] sm:$0xff] %v2412
      %2477 = vst [vmem:[#allocation2 + $0xa0] sm:$0xff] %v2413
      %2478 = vst [vmem:[#allocation2 + $0xa8] sm:$0xff] %v2414
      %2479 = vst [vmem:[#allocation2 + $0xb0] sm:$0xff] %v2415
      %2480 = vst [vmem:[#allocation2 + $0xb8] sm:$0xff] %v2416
      %2481 = vst [vmem:[#allocation2 + $0xc0] sm:$0xff] %v2417
      %2482 = vst [vmem:[#allocation2 + $0xc8] sm:$0xff] %v2418
      %2483 = vst [vmem:[#allocation2 + $0xd0] sm:$0xff] %v2419
      %2484 = vst [vmem:[#allocation2 + $0xd8] sm:$0xff] %v2420
      %2485 = vst [vmem:[#allocation2 + $0xe0] sm:$0xff] %v2421
      %2486 = vst [vmem:[#allocation2 + $0xe8] sm:$0xff] %v2422
      %2487 = vst [vmem:[#allocation2 + $0xf0] sm:$0xff] %v2423
      %2488 = vst [vmem:[#allocation2 + $0xf8] sm:$0xff] %v2424
      %2489 = vst [vmem:[#allocation2 + $0x100] sm:$0xff] %v2425
      %2490 = vst [vmem:[#allocation2 + $0x108] sm:$0xff] %v2426
      %2491 = vst [vmem:[#allocation2 + $0x110] sm:$0xff] %v2427
      %2492 = vst [vmem:[#allocation2 + $0x118] sm:$0xff] %v2428
      %2493 = vst [vmem:[#allocation2 + $0x120] sm:$0xff] %v2429
      %2494 = vst [vmem:[#allocation2 + $0x128] sm:$0xff] %v2430
      %2495 = vst [vmem:[#allocation2 + $0x130] sm:$0xff] %v2431
      %2496 = vst [vmem:[#allocation2 + $0x138] sm:$0xff] %v2432
      %2497 = vst [vmem:[#allocation2 + $0x140] sm:$0xff] %v2433
      %2498 = vst [vmem:[#allocation2 + $0x148] sm:$0xff] %v2434
      %2499 = vst [vmem:[#allocation2 + $0x150] sm:$0xff] %v2435
      %2500 = vst [vmem:[#allocation2 + $0x158] sm:$0xff] %v2436
      %2501 = vst [vmem:[#allocation2 + $0x160] sm:$0xff] %v2437
      %2502 = vst [vmem:[#allocation2 + $0x168] sm:$0xff] %v2438
      %2503 = vst [vmem:[#allocation2 + $0x170] sm:$0xff] %v2439
      %2504 = vst [vmem:[#allocation2 + $0x178] sm:$0xff] %v2440
      %2505 = vst [vmem:[#allocation2 + $0x180] sm:$0xff] %v2441
      %2506 = vst [vmem:[#allocation2 + $0x188] sm:$0xff] %v2442
      %2507 = vst [vmem:[#allocation2 + $0x190] sm:$0xff] %v2443
      %2508 = vst [vmem:[#allocation2 + $0x198] sm:$0xff] %v2444
      %2509 = vst [vmem:[#allocation2 + $0x1a0] sm:$0xff] %v2445
      %2510 = vst [vmem:[#allocation2 + $0x1a8] sm:$0xff] %v2446
      %2511 = vst [vmem:[#allocation2 + $0x1b0] sm:$0xff] %v2447
      %2512 = vst [vmem:[#allocation2 + $0x1b8] sm:$0xff] %v2448
      %2513 = vst [vmem:[#allocation2 + $0x1c0] sm:$0xff] %v2449
      %2514 = vst [vmem:[#allocation2 + $0x1c8] sm:$0xff] %v2450
      %2515 = vst [vmem:[#allocation2 + $0x1d0] sm:$0xff] %v2451
      %2516 = vst [vmem:[#allocation2 + $0x1d8] sm:$0xff] %v2452
      %2517 = vst [vmem:[#allocation2 + $0x1e0] sm:$0xff] %v2453
      %2518 = vst [vmem:[#allocation2 + $0x1e8] sm:$0xff] %v2454
      %2519 = vst [vmem:[#allocation2 + $0x1f0] sm:$0xff] %v2455
      %2520 = vst [vmem:[#allocation2 + $0x1f8] sm:$0xff] %v2456
      %p2521 = scmp.eq.s32.totalorder %s26, 2
      // Predicated region
      $region49: #{mpnn_conv_forward.7} parent=43 // pred_check
        %p2522 = pneg %p2521
      $region50: #{mpnn_conv_forward.7} parent=43 // pred_check_branch
        %2524 = sbr.rel (%p2522) target = $region52
      $region51: #{mpnn_conv_forward.7} parent=43 // pred_region
        %v2525 = vld [vmem:[#allocation2] sm:$0xff]
        %v2526 = vld [vmem:[#allocation2 + $0x8] sm:$0xff]
        %v2527 = vld [vmem:[#allocation2 + $0x10] sm:$0xff]
        %v2528 = vld [vmem:[#allocation2 + $0x18] sm:$0xff]
        %v2529 = vld [vmem:[#allocation2 + $0x20] sm:$0xff]
        %v2530 = vld [vmem:[#allocation2 + $0x28] sm:$0xff]
        %v2531 = vld [vmem:[#allocation2 + $0x30] sm:$0xff]
        %v2532 = vld [vmem:[#allocation2 + $0x38] sm:$0xff]
        %v2533 = vld [vmem:[#allocation2 + $0x40] sm:$0xff]
        %v2534 = vld [vmem:[#allocation2 + $0x48] sm:$0xff]
        %v2535 = vld [vmem:[#allocation2 + $0x50] sm:$0xff]
        %v2536 = vld [vmem:[#allocation2 + $0x58] sm:$0xff]
        %v2537 = vld [vmem:[#allocation2 + $0x60] sm:$0xff]
        %v2538 = vld [vmem:[#allocation2 + $0x68] sm:$0xff]
        %v2539 = vld [vmem:[#allocation2 + $0x70] sm:$0xff]
        %v2540 = vld [vmem:[#allocation2 + $0x78] sm:$0xff]
        %v2541 = vld [vmem:[#allocation2 + $0x80] sm:$0xff]
        %v2542 = vld [vmem:[#allocation2 + $0x88] sm:$0xff]
        %v2543 = vld [vmem:[#allocation2 + $0x90] sm:$0xff]
        %v2544 = vld [vmem:[#allocation2 + $0x98] sm:$0xff]
        %v2545 = vld [vmem:[#allocation2 + $0xa0] sm:$0xff]
        %v2546 = vld [vmem:[#allocation2 + $0xa8] sm:$0xff]
        %v2547 = vld [vmem:[#allocation2 + $0xb0] sm:$0xff]
        %v2548 = vld [vmem:[#allocation2 + $0xb8] sm:$0xff]
        %v2549 = vld [vmem:[#allocation2 + $0xc0] sm:$0xff]
        %v2550 = vld [vmem:[#allocation2 + $0xc8] sm:$0xff]
        %v2551 = vld [vmem:[#allocation2 + $0xd0] sm:$0xff]
        %v2552 = vld [vmem:[#allocation2 + $0xd8] sm:$0xff]
        %v2553 = vld [vmem:[#allocation2 + $0xe0] sm:$0xff]
        %v2554 = vld [vmem:[#allocation2 + $0xe8] sm:$0xff]
        %v2555 = vld [vmem:[#allocation2 + $0xf0] sm:$0xff]
        %v2556 = vld [vmem:[#allocation2 + $0xf8] sm:$0xff]
        %v2557 = vld [vmem:[#allocation2 + $0x100] sm:$0xff]
        %v2558 = vld [vmem:[#allocation2 + $0x108] sm:$0xff]
        %v2559 = vld [vmem:[#allocation2 + $0x110] sm:$0xff]
        %v2560 = vld [vmem:[#allocation2 + $0x118] sm:$0xff]
        %v2561 = vld [vmem:[#allocation2 + $0x120] sm:$0xff]
        %v2562 = vld [vmem:[#allocation2 + $0x128] sm:$0xff]
        %v2563 = vld [vmem:[#allocation2 + $0x130] sm:$0xff]
        %v2564 = vld [vmem:[#allocation2 + $0x138] sm:$0xff]
        %v2565 = vld [vmem:[#allocation2 + $0x140] sm:$0xff]
        %v2566 = vld [vmem:[#allocation2 + $0x148] sm:$0xff]
        %v2567 = vld [vmem:[#allocation2 + $0x150] sm:$0xff]
        %v2568 = vld [vmem:[#allocation2 + $0x158] sm:$0xff]
        %v2569 = vld [vmem:[#allocation2 + $0x160] sm:$0xff]
        %v2570 = vld [vmem:[#allocation2 + $0x168] sm:$0xff]
        %v2571 = vld [vmem:[#allocation2 + $0x170] sm:$0xff]
        %v2572 = vld [vmem:[#allocation2 + $0x178] sm:$0xff]
        %v2573 = vld [vmem:[#allocation2 + $0x180] sm:$0xff]
        %v2574 = vld [vmem:[#allocation2 + $0x188] sm:$0xff]
        %v2575 = vld [vmem:[#allocation2 + $0x190] sm:$0xff]
        %v2576 = vld [vmem:[#allocation2 + $0x198] sm:$0xff]
        %v2577 = vld [vmem:[#allocation2 + $0x1a0] sm:$0xff]
        %v2578 = vld [vmem:[#allocation2 + $0x1a8] sm:$0xff]
        %v2579 = vld [vmem:[#allocation2 + $0x1b0] sm:$0xff]
        %v2580 = vld [vmem:[#allocation2 + $0x1b8] sm:$0xff]
        %v2581 = vld [vmem:[#allocation2 + $0x1c0] sm:$0xff]
        %v2582 = vld [vmem:[#allocation2 + $0x1c8] sm:$0xff]
        %v2583 = vld [vmem:[#allocation2 + $0x1d0] sm:$0xff]
        %v2584 = vld [vmem:[#allocation2 + $0x1d8] sm:$0xff]
        %v2585 = vld [vmem:[#allocation2 + $0x1e0] sm:$0xff]
        %v2586 = vld [vmem:[#allocation2 + $0x1e8] sm:$0xff]
        %v2587 = vld [vmem:[#allocation2 + $0x1f0] sm:$0xff]
        %v2588 = vld [vmem:[#allocation2 + $0x1f8] sm:$0xff]
        %v2589 = vld [vmem:[%s3] sm:$0xff]
        %v2590 = vld [vmem:[%s3 + $0x8] sm:$0xff]
        %v2591 = vld [vmem:[%s3 + $0x10] sm:$0xff]
        %v2592 = vld [vmem:[%s3 + $0x18] sm:$0xff]
        %v2593 = vld [vmem:[%s3 + $0x20] sm:$0xff]
        %v2594 = vld [vmem:[%s3 + $0x28] sm:$0xff]
        %v2595 = vld [vmem:[%s3 + $0x30] sm:$0xff]
        %v2596 = vld [vmem:[%s3 + $0x38] sm:$0xff]
        %v2597 = vld [vmem:[%s3 + $0x40] sm:$0xff]
        %v2598 = vld [vmem:[%s3 + $0x48] sm:$0xff]
        %v2599 = vld [vmem:[%s3 + $0x50] sm:$0xff]
        %v2600 = vld [vmem:[%s3 + $0x58] sm:$0xff]
        %v2601 = vld [vmem:[%s3 + $0x60] sm:$0xff]
        %v2602 = vld [vmem:[%s3 + $0x68] sm:$0xff]
        %v2603 = vld [vmem:[%s3 + $0x70] sm:$0xff]
        %v2604 = vld [vmem:[%s3 + $0x78] sm:$0xff]
        %v2605 = vld [vmem:[%s4] sm:$0x1]
        %v2607 = vlaneseq
        %v2608 = vshrl.u32 %v2607, 7
        %v2609 = vsub.s32 0, %v2608
        %v2610 = vrot.slane %v2605, %v2609
        %2612 = vmatprep.subr.mxu0 0.0
        %2613 = vmatpush1.msra.mxu0 %v2604
        %2614 = vmatprep.subr.mxu0 0.0
        %2615 = vmatpush1.msra.mxu0 %v2603
        %2616 = vmatprep.subr.mxu0 0.0
        %2617 = vmatpush1.msra.mxu0 %v2602
        %2618 = vmatprep.subr.mxu0 0.0
        %2619 = vmatpush1.msra.mxu0 %v2601
        %2620 = vmatprep.subr.mxu0 0.0
        %2621 = vmatpush1.msra.mxu0 %v2600
        %2622 = vmatprep.subr.mxu0 0.0
        %2623 = vmatpush1.msra.mxu0 %v2599
        %2624 = vmatprep.subr.mxu0 0.0
        %2625 = vmatpush1.msra.mxu0 %v2598
        %2626 = vmatprep.subr.mxu0 0.0
        %2627 = vmatpush1.msra.mxu0 %v2597
        %2628 = vmatprep.subr.mxu0 0.0
        %2629 = vmatpush1.msra.mxu0 %v2596
        %2630 = vmatprep.subr.mxu0 0.0
        %2631 = vmatpush1.msra.mxu0 %v2595
        %2632 = vmatprep.subr.mxu0 0.0
        %2633 = vmatpush1.msra.mxu0 %v2594
        %2634 = vmatprep.subr.mxu0 0.0
        %2635 = vmatpush1.msra.mxu0 %v2593
        %2636 = vmatprep.subr.mxu0 0.0
        %2637 = vmatpush1.msra.mxu0 %v2592
        %2638 = vmatprep.subr.mxu0 0.0
        %2639 = vmatpush1.msra.mxu0 %v2591
        %2640 = vmatprep.subr.mxu0 0.0
        %2641 = vmatpush1.msra.mxu0 %v2590
        %2642 = vmatprep.subr.mxu0 0.0
        %2643 = vmatpush1.msra.mxu0 %v2589
        %2644 = vmatprep.subr.mxu0 0.0
        %2645 = vmatpush2.msra.mxu0 0.0
        %2646 = vmatprep.subr.mxu0 0.0
        %2647 = vmatpush2.msra.mxu0 0.0
        %2648 = vmatprep.subr.mxu0 0.0
        %2649 = vmatpush2.msra.mxu0 0.0
        %2650 = vmatprep.subr.mxu0 0.0
        %2651 = vmatpush2.msra.mxu0 0.0
        %2652 = vmatprep.subr.mxu0 0.0
        %2653 = vmatpush2.msra.mxu0 0.0
        %2654 = vmatprep.subr.mxu0 0.0
        %2655 = vmatpush2.msra.mxu0 0.0
        %2656 = vmatprep.subr.mxu0 0.0
        %2657 = vmatpush2.msra.mxu0 0.0
        %2658 = vmatprep.subr.mxu0 0.0
        %2659 = vmatpush2.msra.mxu0 0.0
        %2660 = vmatprep.subr.mxu0 0.0
        %2661 = vmatpush2.msra.mxu0 0.0
        %2662 = vmatprep.subr.mxu0 0.0
        %2663 = vmatpush2.msra.mxu0 0.0
        %2664 = vmatprep.subr.mxu0 0.0
        %2665 = vmatpush2.msra.mxu0 0.0
        %2666 = vmatprep.subr.mxu0 0.0
        %2667 = vmatpush2.msra.mxu0 0.0
        %2668 = vmatprep.subr.mxu0 0.0
        %2669 = vmatpush2.msra.mxu0 0.0
        %2670 = vmatprep.subr.mxu0 0.0
        %2671 = vmatpush2.msra.mxu0 0.0
        %2672 = vmatprep.subr.mxu0 0.0
        %2673 = vmatpush2.msra.mxu0 0.0
        %2674 = vmatprep.subr.mxu0 0.0
        %2675 = vmatpush2.msra.mxu0 0.0
        %2676 = vmatprep.mubr.f32.mxu0 0.0
        %2677 = vmatmul.mubr.f32.gmra.mxu0 %v2525
        %v2678 = vpop.f32.mrf.mxu0
        %v2679 = vadd.f32 %v2610, %v2678
        %v2680 = vpop.f32.mrf.mxu0
        %2681 = vmatprep.mubr.f32.mxu0 0.0
        %2682 = vmatmul.mubr.f32.gmra.mxu0 %v2526
        %v2683 = vpop.f32.mrf.mxu0
        %v2684 = vadd.f32 %v2610, %v2683
        %v2685 = vpop.f32.mrf.mxu0
        %2686 = vmatprep.mubr.f32.mxu0 0.0
        %2687 = vmatmul.mubr.f32.gmra.mxu0 %v2527
        %v2688 = vpop.f32.mrf.mxu0
        %v2689 = vadd.f32 %v2610, %v2688
        %v2690 = vpop.f32.mrf.mxu0
        %2691 = vmatprep.mubr.f32.mxu0 0.0
        %2692 = vmatmul.mubr.f32.gmra.mxu0 %v2528
        %v2693 = vpop.f32.mrf.mxu0
        %v2694 = vadd.f32 %v2610, %v2693
        %v2695 = vpop.f32.mrf.mxu0
        %2696 = vmatprep.mubr.f32.mxu0 0.0
        %2697 = vmatmul.mubr.f32.gmra.mxu0 %v2529
        %v2698 = vpop.f32.mrf.mxu0
        %v2699 = vadd.f32 %v2610, %v2698
        %v2700 = vpop.f32.mrf.mxu0
        %2701 = vmatprep.mubr.f32.mxu0 0.0
        %2702 = vmatmul.mubr.f32.gmra.mxu0 %v2530
        %v2703 = vpop.f32.mrf.mxu0
        %v2704 = vadd.f32 %v2610, %v2703
        %v2705 = vpop.f32.mrf.mxu0
        %2706 = vmatprep.mubr.f32.mxu0 0.0
        %2707 = vmatmul.mubr.f32.gmra.mxu0 %v2531
        %v2708 = vpop.f32.mrf.mxu0
        %v2709 = vadd.f32 %v2610, %v2708
        %v2710 = vpop.f32.mrf.mxu0
        %2711 = vmatprep.mubr.f32.mxu0 0.0
        %2712 = vmatmul.mubr.f32.gmra.mxu0 %v2532
        %v2713 = vpop.f32.mrf.mxu0
        %v2714 = vadd.f32 %v2610, %v2713
        %v2715 = vpop.f32.mrf.mxu0
        %2716 = vmatprep.mubr.f32.mxu0 0.0
        %2717 = vmatmul.mubr.f32.gmra.mxu0 %v2533
        %v2718 = vpop.f32.mrf.mxu0
        %v2719 = vadd.f32 %v2610, %v2718
        %v2720 = vpop.f32.mrf.mxu0
        %2721 = vmatprep.mubr.f32.mxu0 0.0
        %2722 = vmatmul.mubr.f32.gmra.mxu0 %v2534
        %v2723 = vpop.f32.mrf.mxu0
        %v2724 = vadd.f32 %v2610, %v2723
        %v2725 = vpop.f32.mrf.mxu0
        %2726 = vmatprep.mubr.f32.mxu0 0.0
        %2727 = vmatmul.mubr.f32.gmra.mxu0 %v2535
        %v2728 = vpop.f32.mrf.mxu0
        %v2729 = vadd.f32 %v2610, %v2728
        %v2730 = vpop.f32.mrf.mxu0
        %2731 = vmatprep.mubr.f32.mxu0 0.0
        %2732 = vmatmul.mubr.f32.gmra.mxu0 %v2536
        %v2733 = vpop.f32.mrf.mxu0
        %v2734 = vadd.f32 %v2610, %v2733
        %v2735 = vpop.f32.mrf.mxu0
        %2736 = vmatprep.mubr.f32.mxu0 0.0
        %2737 = vmatmul.mubr.f32.gmra.mxu0 %v2537
        %v2738 = vpop.f32.mrf.mxu0
        %v2739 = vadd.f32 %v2610, %v2738
        %v2740 = vpop.f32.mrf.mxu0
        %2741 = vmatprep.mubr.f32.mxu0 0.0
        %2742 = vmatmul.mubr.f32.gmra.mxu0 %v2538
        %v2743 = vpop.f32.mrf.mxu0
        %v2744 = vadd.f32 %v2610, %v2743
        %v2745 = vpop.f32.mrf.mxu0
        %2746 = vmatprep.mubr.f32.mxu0 0.0
        %2747 = vmatmul.mubr.f32.gmra.mxu0 %v2539
        %v2748 = vpop.f32.mrf.mxu0
        %v2749 = vadd.f32 %v2610, %v2748
        %v2750 = vpop.f32.mrf.mxu0
        %2751 = vmatprep.mubr.f32.mxu0 0.0
        %2752 = vmatmul.mubr.f32.gmra.mxu0 %v2540
        %v2753 = vpop.f32.mrf.mxu0
        %v2754 = vadd.f32 %v2610, %v2753
        %v2755 = vpop.f32.mrf.mxu0
        %2756 = vmatprep.mubr.f32.mxu0 0.0
        %2757 = vmatmul.mubr.f32.gmra.mxu0 %v2541
        %v2758 = vpop.f32.mrf.mxu0
        %v2759 = vadd.f32 %v2610, %v2758
        %v2760 = vpop.f32.mrf.mxu0
        %2761 = vmatprep.mubr.f32.mxu0 0.0
        %2762 = vmatmul.mubr.f32.gmra.mxu0 %v2542
        %v2763 = vpop.f32.mrf.mxu0
        %v2764 = vadd.f32 %v2610, %v2763
        %v2765 = vpop.f32.mrf.mxu0
        %2766 = vmatprep.mubr.f32.mxu0 0.0
        %2767 = vmatmul.mubr.f32.gmra.mxu0 %v2543
        %v2768 = vpop.f32.mrf.mxu0
        %v2769 = vadd.f32 %v2610, %v2768
        %v2770 = vpop.f32.mrf.mxu0
        %2771 = vmatprep.mubr.f32.mxu0 0.0
        %2772 = vmatmul.mubr.f32.gmra.mxu0 %v2544
        %v2773 = vpop.f32.mrf.mxu0
        %v2774 = vadd.f32 %v2610, %v2773
        %v2775 = vpop.f32.mrf.mxu0
        %2776 = vmatprep.mubr.f32.mxu0 0.0
        %2777 = vmatmul.mubr.f32.gmra.mxu0 %v2545
        %v2778 = vpop.f32.mrf.mxu0
        %v2779 = vadd.f32 %v2610, %v2778
        %v2780 = vpop.f32.mrf.mxu0
        %2781 = vmatprep.mubr.f32.mxu0 0.0
        %2782 = vmatmul.mubr.f32.gmra.mxu0 %v2546
        %v2783 = vpop.f32.mrf.mxu0
        %v2784 = vadd.f32 %v2610, %v2783
        %v2785 = vpop.f32.mrf.mxu0
        %2786 = vmatprep.mubr.f32.mxu0 0.0
        %2787 = vmatmul.mubr.f32.gmra.mxu0 %v2547
        %v2788 = vpop.f32.mrf.mxu0
        %v2789 = vadd.f32 %v2610, %v2788
        %v2790 = vpop.f32.mrf.mxu0
        %2791 = vmatprep.mubr.f32.mxu0 0.0
        %2792 = vmatmul.mubr.f32.gmra.mxu0 %v2548
        %v2793 = vpop.f32.mrf.mxu0
        %v2794 = vadd.f32 %v2610, %v2793
        %v2795 = vpop.f32.mrf.mxu0
        %2796 = vmatprep.mubr.f32.mxu0 0.0
        %2797 = vmatmul.mubr.f32.gmra.mxu0 %v2549
        %v2798 = vpop.f32.mrf.mxu0
        %v2799 = vadd.f32 %v2610, %v2798
        %v2800 = vpop.f32.mrf.mxu0
        %2801 = vmatprep.mubr.f32.mxu0 0.0
        %2802 = vmatmul.mubr.f32.gmra.mxu0 %v2550
        %v2803 = vpop.f32.mrf.mxu0
        %v2804 = vadd.f32 %v2610, %v2803
        %v2805 = vpop.f32.mrf.mxu0
        %2806 = vmatprep.mubr.f32.mxu0 0.0
        %2807 = vmatmul.mubr.f32.gmra.mxu0 %v2551
        %v2808 = vpop.f32.mrf.mxu0
        %v2809 = vadd.f32 %v2610, %v2808
        %v2810 = vpop.f32.mrf.mxu0
        %2811 = vmatprep.mubr.f32.mxu0 0.0
        %2812 = vmatmul.mubr.f32.gmra.mxu0 %v2552
        %v2813 = vpop.f32.mrf.mxu0
        %v2814 = vadd.f32 %v2610, %v2813
        %v2815 = vpop.f32.mrf.mxu0
        %2816 = vmatprep.mubr.f32.mxu0 0.0
        %2817 = vmatmul.mubr.f32.gmra.mxu0 %v2553
        %v2818 = vpop.f32.mrf.mxu0
        %v2819 = vadd.f32 %v2610, %v2818
        %v2820 = vpop.f32.mrf.mxu0
        %2821 = vmatprep.mubr.f32.mxu0 0.0
        %2822 = vmatmul.mubr.f32.gmra.mxu0 %v2554
        %v2823 = vpop.f32.mrf.mxu0
        %v2824 = vadd.f32 %v2610, %v2823
        %v2825 = vpop.f32.mrf.mxu0
        %2826 = vmatprep.mubr.f32.mxu0 0.0
        %2827 = vmatmul.mubr.f32.gmra.mxu0 %v2555
        %v2828 = vpop.f32.mrf.mxu0
        %v2829 = vadd.f32 %v2610, %v2828
        %v2830 = vpop.f32.mrf.mxu0
        %2831 = vmatprep.mubr.f32.mxu0 0.0
        %2832 = vmatmul.mubr.f32.gmra.mxu0 %v2556
        %v2833 = vpop.f32.mrf.mxu0
        %v2834 = vadd.f32 %v2610, %v2833
        %v2835 = vpop.f32.mrf.mxu0
        %2836 = vmatprep.mubr.f32.mxu0 0.0
        %2837 = vmatmul.mubr.f32.gmra.mxu0 %v2557
        %v2838 = vpop.f32.mrf.mxu0
        %v2839 = vadd.f32 %v2610, %v2838
        %v2840 = vpop.f32.mrf.mxu0
        %2841 = vmatprep.mubr.f32.mxu0 0.0
        %2842 = vmatmul.mubr.f32.gmra.mxu0 %v2558
        %v2843 = vpop.f32.mrf.mxu0
        %v2844 = vadd.f32 %v2610, %v2843
        %v2845 = vpop.f32.mrf.mxu0
        %2846 = vmatprep.mubr.f32.mxu0 0.0
        %2847 = vmatmul.mubr.f32.gmra.mxu0 %v2559
        %v2848 = vpop.f32.mrf.mxu0
        %v2849 = vadd.f32 %v2610, %v2848
        %v2850 = vpop.f32.mrf.mxu0
        %2851 = vmatprep.mubr.f32.mxu0 0.0
        %2852 = vmatmul.mubr.f32.gmra.mxu0 %v2560
        %v2853 = vpop.f32.mrf.mxu0
        %v2854 = vadd.f32 %v2610, %v2853
        %v2855 = vpop.f32.mrf.mxu0
        %2856 = vmatprep.mubr.f32.mxu0 0.0
        %2857 = vmatmul.mubr.f32.gmra.mxu0 %v2561
        %v2858 = vpop.f32.mrf.mxu0
        %v2859 = vadd.f32 %v2610, %v2858
        %v2860 = vpop.f32.mrf.mxu0
        %2861 = vmatprep.mubr.f32.mxu0 0.0
        %2862 = vmatmul.mubr.f32.gmra.mxu0 %v2562
        %v2863 = vpop.f32.mrf.mxu0
        %v2864 = vadd.f32 %v2610, %v2863
        %v2865 = vpop.f32.mrf.mxu0
        %2866 = vmatprep.mubr.f32.mxu0 0.0
        %2867 = vmatmul.mubr.f32.gmra.mxu0 %v2563
        %v2868 = vpop.f32.mrf.mxu0
        %v2869 = vadd.f32 %v2610, %v2868
        %v2870 = vpop.f32.mrf.mxu0
        %2871 = vmatprep.mubr.f32.mxu0 0.0
        %2872 = vmatmul.mubr.f32.gmra.mxu0 %v2564
        %v2873 = vpop.f32.mrf.mxu0
        %v2874 = vadd.f32 %v2610, %v2873
        %v2875 = vpop.f32.mrf.mxu0
        %2876 = vmatprep.mubr.f32.mxu0 0.0
        %2877 = vmatmul.mubr.f32.gmra.mxu0 %v2565
        %v2878 = vpop.f32.mrf.mxu0
        %v2879 = vadd.f32 %v2610, %v2878
        %v2880 = vpop.f32.mrf.mxu0
        %2881 = vmatprep.mubr.f32.mxu0 0.0
        %2882 = vmatmul.mubr.f32.gmra.mxu0 %v2566
        %v2883 = vpop.f32.mrf.mxu0
        %v2884 = vadd.f32 %v2610, %v2883
        %v2885 = vpop.f32.mrf.mxu0
        %2886 = vmatprep.mubr.f32.mxu0 0.0
        %2887 = vmatmul.mubr.f32.gmra.mxu0 %v2567
        %v2888 = vpop.f32.mrf.mxu0
        %v2889 = vadd.f32 %v2610, %v2888
        %v2890 = vpop.f32.mrf.mxu0
        %2891 = vmatprep.mubr.f32.mxu0 0.0
        %2892 = vmatmul.mubr.f32.gmra.mxu0 %v2568
        %v2893 = vpop.f32.mrf.mxu0
        %v2894 = vadd.f32 %v2610, %v2893
        %v2895 = vpop.f32.mrf.mxu0
        %2896 = vmatprep.mubr.f32.mxu0 0.0
        %2897 = vmatmul.mubr.f32.gmra.mxu0 %v2569
        %v2898 = vpop.f32.mrf.mxu0
        %v2899 = vadd.f32 %v2610, %v2898
        %v2900 = vpop.f32.mrf.mxu0
        %2901 = vmatprep.mubr.f32.mxu0 0.0
        %2902 = vmatmul.mubr.f32.gmra.mxu0 %v2570
        %v2903 = vpop.f32.mrf.mxu0
        %v2904 = vadd.f32 %v2610, %v2903
        %v2905 = vpop.f32.mrf.mxu0
        %2906 = vmatprep.mubr.f32.mxu0 0.0
        %2907 = vmatmul.mubr.f32.gmra.mxu0 %v2571
        %v2908 = vpop.f32.mrf.mxu0
        %v2909 = vadd.f32 %v2610, %v2908
        %v2910 = vpop.f32.mrf.mxu0
        %2911 = vmatprep.mubr.f32.mxu0 0.0
        %2912 = vmatmul.mubr.f32.gmra.mxu0 %v2572
        %v2913 = vpop.f32.mrf.mxu0
        %v2914 = vadd.f32 %v2610, %v2913
        %v2915 = vpop.f32.mrf.mxu0
        %2916 = vmatprep.mubr.f32.mxu0 0.0
        %2917 = vmatmul.mubr.f32.gmra.mxu0 %v2573
        %v2918 = vpop.f32.mrf.mxu0
        %v2919 = vadd.f32 %v2610, %v2918
        %v2920 = vpop.f32.mrf.mxu0
        %2921 = vmatprep.mubr.f32.mxu0 0.0
        %2922 = vmatmul.mubr.f32.gmra.mxu0 %v2574
        %v2923 = vpop.f32.mrf.mxu0
        %v2924 = vadd.f32 %v2610, %v2923
        %v2925 = vpop.f32.mrf.mxu0
        %2926 = vmatprep.mubr.f32.mxu0 0.0
        %2927 = vmatmul.mubr.f32.gmra.mxu0 %v2575
        %v2928 = vpop.f32.mrf.mxu0
        %v2929 = vadd.f32 %v2610, %v2928
        %v2930 = vpop.f32.mrf.mxu0
        %2931 = vmatprep.mubr.f32.mxu0 0.0
        %2932 = vmatmul.mubr.f32.gmra.mxu0 %v2576
        %v2933 = vpop.f32.mrf.mxu0
        %v2934 = vadd.f32 %v2610, %v2933
        %v2935 = vpop.f32.mrf.mxu0
        %2936 = vmatprep.mubr.f32.mxu0 0.0
        %2937 = vmatmul.mubr.f32.gmra.mxu0 %v2577
        %v2938 = vpop.f32.mrf.mxu0
        %v2939 = vadd.f32 %v2610, %v2938
        %v2940 = vpop.f32.mrf.mxu0
        %2941 = vmatprep.mubr.f32.mxu0 0.0
        %2942 = vmatmul.mubr.f32.gmra.mxu0 %v2578
        %v2943 = vpop.f32.mrf.mxu0
        %v2944 = vadd.f32 %v2610, %v2943
        %v2945 = vpop.f32.mrf.mxu0
        %2946 = vmatprep.mubr.f32.mxu0 0.0
        %2947 = vmatmul.mubr.f32.gmra.mxu0 %v2579
        %v2948 = vpop.f32.mrf.mxu0
        %v2949 = vadd.f32 %v2610, %v2948
        %v2950 = vpop.f32.mrf.mxu0
        %2951 = vmatprep.mubr.f32.mxu0 0.0
        %2952 = vmatmul.mubr.f32.gmra.mxu0 %v2580
        %v2953 = vpop.f32.mrf.mxu0
        %v2954 = vadd.f32 %v2610, %v2953
        %v2955 = vpop.f32.mrf.mxu0
        %2956 = vmatprep.mubr.f32.mxu0 0.0
        %2957 = vmatmul.mubr.f32.gmra.mxu0 %v2581
        %v2958 = vpop.f32.mrf.mxu0
        %v2959 = vadd.f32 %v2610, %v2958
        %v2960 = vpop.f32.mrf.mxu0
        %2961 = vmatprep.mubr.f32.mxu0 0.0
        %2962 = vmatmul.mubr.f32.gmra.mxu0 %v2582
        %v2963 = vpop.f32.mrf.mxu0
        %v2964 = vadd.f32 %v2610, %v2963
        %v2965 = vpop.f32.mrf.mxu0
        %2966 = vmatprep.mubr.f32.mxu0 0.0
        %2967 = vmatmul.mubr.f32.gmra.mxu0 %v2583
        %v2968 = vpop.f32.mrf.mxu0
        %v2969 = vadd.f32 %v2610, %v2968
        %v2970 = vpop.f32.mrf.mxu0
        %2971 = vmatprep.mubr.f32.mxu0 0.0
        %2972 = vmatmul.mubr.f32.gmra.mxu0 %v2584
        %v2973 = vpop.f32.mrf.mxu0
        %v2974 = vadd.f32 %v2610, %v2973
        %v2975 = vpop.f32.mrf.mxu0
        %2976 = vmatprep.mubr.f32.mxu0 0.0
        %2977 = vmatmul.mubr.f32.gmra.mxu0 %v2585
        %v2978 = vpop.f32.mrf.mxu0
        %v2979 = vadd.f32 %v2610, %v2978
        %v2980 = vpop.f32.mrf.mxu0
        %2981 = vmatprep.mubr.f32.mxu0 0.0
        %2982 = vmatmul.mubr.f32.gmra.mxu0 %v2586
        %v2983 = vpop.f32.mrf.mxu0
        %v2984 = vadd.f32 %v2610, %v2983
        %v2985 = vpop.f32.mrf.mxu0
        %2986 = vmatprep.mubr.f32.mxu0 0.0
        %2987 = vmatmul.mubr.f32.gmra.mxu0 %v2587
        %v2988 = vpop.f32.mrf.mxu0
        %v2989 = vadd.f32 %v2610, %v2988
        %v2990 = vpop.f32.mrf.mxu0
        %2991 = vmatprep.mubr.f32.mxu0 0.0
        %2992 = vmatmul.mubr.f32.gmra.mxu0 %v2588
        %v2993 = vpop.f32.mrf.mxu0
        %v2994 = vadd.f32 %v2610, %v2993
        %v2995 = vpop.f32.mrf.mxu0
        %2996 = vdwg.mxu0
        %2997 = vst [vmem:[%s372] sm:$0xff] %v2679
        %2998 = vst [vmem:[%s372 + $0x8] sm:$0xff] %v2684
        %2999 = vst [vmem:[%s372 + $0x10] sm:$0xff] %v2689
        %3000 = vst [vmem:[%s372 + $0x18] sm:$0xff] %v2694
        %3001 = vst [vmem:[%s372 + $0x20] sm:$0xff] %v2699
        %3002 = vst [vmem:[%s372 + $0x28] sm:$0xff] %v2704
        %3003 = vst [vmem:[%s372 + $0x30] sm:$0xff] %v2709
        %3004 = vst [vmem:[%s372 + $0x38] sm:$0xff] %v2714
        %3005 = vst [vmem:[%s372 + $0x40] sm:$0xff] %v2719
        %3006 = vst [vmem:[%s372 + $0x48] sm:$0xff] %v2724
        %3007 = vst [vmem:[%s372 + $0x50] sm:$0xff] %v2729
        %3008 = vst [vmem:[%s372 + $0x58] sm:$0xff] %v2734
        %3009 = vst [vmem:[%s372 + $0x60] sm:$0xff] %v2739
        %3010 = vst [vmem:[%s372 + $0x68] sm:$0xff] %v2744
        %3011 = vst [vmem:[%s372 + $0x70] sm:$0xff] %v2749
        %3012 = vst [vmem:[%s372 + $0x78] sm:$0xff] %v2754
        %3013 = vst [vmem:[%s372 + $0x80] sm:$0xff] %v2759
        %3014 = vst [vmem:[%s372 + $0x88] sm:$0xff] %v2764
        %3015 = vst [vmem:[%s372 + $0x90] sm:$0xff] %v2769
        %3016 = vst [vmem:[%s372 + $0x98] sm:$0xff] %v2774
        %3017 = vst [vmem:[%s372 + $0xa0] sm:$0xff] %v2779
        %3018 = vst [vmem:[%s372 + $0xa8] sm:$0xff] %v2784
        %3019 = vst [vmem:[%s372 + $0xb0] sm:$0xff] %v2789
        %3020 = vst [vmem:[%s372 + $0xb8] sm:$0xff] %v2794
        %3021 = vst [vmem:[%s372 + $0xc0] sm:$0xff] %v2799
        %3022 = vst [vmem:[%s372 + $0xc8] sm:$0xff] %v2804
        %3023 = vst [vmem:[%s372 + $0xd0] sm:$0xff] %v2809
        %3024 = vst [vmem:[%s372 + $0xd8] sm:$0xff] %v2814
        %3025 = vst [vmem:[%s372 + $0xe0] sm:$0xff] %v2819
        %3026 = vst [vmem:[%s372 + $0xe8] sm:$0xff] %v2824
        %3027 = vst [vmem:[%s372 + $0xf0] sm:$0xff] %v2829
        %3028 = vst [vmem:[%s372 + $0xf8] sm:$0xff] %v2834
        %3029 = vst [vmem:[%s372 + $0x100] sm:$0xff] %v2839
        %3030 = vst [vmem:[%s372 + $0x108] sm:$0xff] %v2844
        %3031 = vst [vmem:[%s372 + $0x110] sm:$0xff] %v2849
        %3032 = vst [vmem:[%s372 + $0x118] sm:$0xff] %v2854
        %3033 = vst [vmem:[%s372 + $0x120] sm:$0xff] %v2859
        %3034 = vst [vmem:[%s372 + $0x128] sm:$0xff] %v2864
        %3035 = vst [vmem:[%s372 + $0x130] sm:$0xff] %v2869
        %3036 = vst [vmem:[%s372 + $0x138] sm:$0xff] %v2874
        %3037 = vst [vmem:[%s372 + $0x140] sm:$0xff] %v2879
        %3038 = vst [vmem:[%s372 + $0x148] sm:$0xff] %v2884
        %3039 = vst [vmem:[%s372 + $0x150] sm:$0xff] %v2889
        %3040 = vst [vmem:[%s372 + $0x158] sm:$0xff] %v2894
        %3041 = vst [vmem:[%s372 + $0x160] sm:$0xff] %v2899
        %3042 = vst [vmem:[%s372 + $0x168] sm:$0xff] %v2904
        %3043 = vst [vmem:[%s372 + $0x170] sm:$0xff] %v2909
        %3044 = vst [vmem:[%s372 + $0x178] sm:$0xff] %v2914
        %3045 = vst [vmem:[%s372 + $0x180] sm:$0xff] %v2919
        %3046 = vst [vmem:[%s372 + $0x188] sm:$0xff] %v2924
        %3047 = vst [vmem:[%s372 + $0x190] sm:$0xff] %v2929
        %3048 = vst [vmem:[%s372 + $0x198] sm:$0xff] %v2934
        %3049 = vst [vmem:[%s372 + $0x1a0] sm:$0xff] %v2939
        %3050 = vst [vmem:[%s372 + $0x1a8] sm:$0xff] %v2944
        %3051 = vst [vmem:[%s372 + $0x1b0] sm:$0xff] %v2949
        %3052 = vst [vmem:[%s372 + $0x1b8] sm:$0xff] %v2954
        %3053 = vst [vmem:[%s372 + $0x1c0] sm:$0xff] %v2959
        %3054 = vst [vmem:[%s372 + $0x1c8] sm:$0xff] %v2964
        %3055 = vst [vmem:[%s372 + $0x1d0] sm:$0xff] %v2969
        %3056 = vst [vmem:[%s372 + $0x1d8] sm:$0xff] %v2974
        %3057 = vst [vmem:[%s372 + $0x1e0] sm:$0xff] %v2979
        %3058 = vst [vmem:[%s372 + $0x1e8] sm:$0xff] %v2984
        %3059 = vst [vmem:[%s372 + $0x1f0] sm:$0xff] %v2989
        %3060 = vst [vmem:[%s372 + $0x1f8] sm:$0xff] %v2994
        %vm3061 = vcmp.lt.s32.totalorder %v646, 640
        %vm3062 = vcmp.lt.s32.totalorder %v647, 640
        %vm3063 = vcmp.lt.s32.totalorder %v648, 640
        %vm3064 = vcmp.lt.s32.totalorder %v649, 640
        %vm3065 = vcmp.lt.s32.totalorder %v650, 640
        %vm3066 = vcmp.lt.s32.totalorder %v651, 640
        %vm3067 = vcmp.lt.s32.totalorder %v652, 640
        %vm3068 = vcmp.lt.s32.totalorder %v653, 640
        %vm3069 = vcmp.lt.s32.totalorder %v654, 640
        %vm3070 = vcmp.lt.s32.totalorder %v655, 640
        %vm3071 = vcmp.lt.s32.totalorder %v656, 640
        %vm3072 = vcmp.lt.s32.totalorder %v657, 640
        %vm3073 = vcmp.lt.s32.totalorder %v658, 640
        %vm3074 = vcmp.lt.s32.totalorder %v659, 640
        %vm3075 = vcmp.lt.s32.totalorder %v660, 640
        %vm3076 = vcmp.lt.s32.totalorder %v661, 640
        %vm3077 = vcmp.lt.s32.totalorder %v662, 640
        %vm3078 = vcmp.lt.s32.totalorder %v663, 640
        %vm3079 = vcmp.lt.s32.totalorder %v664, 640
        %vm3080 = vcmp.lt.s32.totalorder %v665, 640
        %vm3081 = vcmp.lt.s32.totalorder %v666, 640
        %vm3082 = vcmp.lt.s32.totalorder %v667, 640
        %vm3083 = vcmp.lt.s32.totalorder %v668, 640
        %vm3084 = vcmp.lt.s32.totalorder %v669, 640
        %vm3085 = vcmp.lt.s32.totalorder %v670, 640
        %vm3086 = vcmp.lt.s32.totalorder %v671, 640
        %vm3087 = vcmp.lt.s32.totalorder %v672, 640
        %vm3088 = vcmp.lt.s32.totalorder %v673, 640
        %vm3089 = vcmp.lt.s32.totalorder %v674, 640
        %vm3090 = vcmp.lt.s32.totalorder %v675, 640
        %vm3091 = vcmp.lt.s32.totalorder %v676, 640
        %vm3092 = vcmp.lt.s32.totalorder %v677, 640
        %vm3093 = vcmp.lt.s32.totalorder %v678, 640
        %vm3094 = vcmp.lt.s32.totalorder %v679, 640
        %vm3095 = vcmp.lt.s32.totalorder %v680, 640
        %vm3096 = vcmp.lt.s32.totalorder %v681, 640
        %vm3097 = vcmp.lt.s32.totalorder %v682, 640
        %vm3098 = vcmp.lt.s32.totalorder %v683, 640
        %vm3099 = vcmp.lt.s32.totalorder %v684, 640
        %vm3100 = vcmp.lt.s32.totalorder %v685, 640
        %vm3101 = vcmp.lt.s32.totalorder %v686, 640
        %vm3102 = vcmp.lt.s32.totalorder %v687, 640
        %vm3103 = vcmp.lt.s32.totalorder %v688, 640
        %vm3104 = vcmp.lt.s32.totalorder %v689, 640
        %vm3105 = vcmp.lt.s32.totalorder %v690, 640
        %vm3106 = vcmp.lt.s32.totalorder %v691, 640
        %vm3107 = vcmp.lt.s32.totalorder %v692, 640
        %vm3108 = vcmp.lt.s32.totalorder %v693, 640
        %vm3109 = vcmp.lt.s32.totalorder %v694, 640
        %vm3110 = vcmp.lt.s32.totalorder %v695, 640
        %vm3111 = vcmp.lt.s32.totalorder %v696, 640
        %vm3112 = vcmp.lt.s32.totalorder %v697, 640
        %vm3113 = vcmp.lt.s32.totalorder %v698, 640
        %vm3114 = vcmp.lt.s32.totalorder %v699, 640
        %vm3115 = vcmp.lt.s32.totalorder %v700, 640
        %vm3116 = vcmp.lt.s32.totalorder %v701, 640
        %vm3117 = vcmp.lt.s32.totalorder %v702, 640
        %vm3118 = vcmp.lt.s32.totalorder %v703, 640
        %vm3119 = vcmp.lt.s32.totalorder %v704, 640
        %vm3120 = vcmp.lt.s32.totalorder %v705, 640
        %vm3121 = vcmp.lt.s32.totalorder %v706, 640
        %vm3122 = vcmp.lt.s32.totalorder %v707, 640
        %vm3123 = vcmp.lt.s32.totalorder %v708, 640
        %vm3124 = vcmp.lt.s32.totalorder %v709, 640
        %v3125 = vsel %vm3061, 1, 0
        %v3126 = vsel %vm3062, 1, 0
        %v3127 = vsel %vm3063, 1, 0
        %v3128 = vsel %vm3064, 1, 0
        %v3129 = vsel %vm3065, 1, 0
        %v3130 = vsel %vm3066, 1, 0
        %v3131 = vsel %vm3067, 1, 0
        %v3132 = vsel %vm3068, 1, 0
        %v3133 = vsel %vm3069, 1, 0
        %v3134 = vsel %vm3070, 1, 0
        %v3135 = vsel %vm3071, 1, 0
        %v3136 = vsel %vm3072, 1, 0
        %v3137 = vsel %vm3073, 1, 0
        %v3138 = vsel %vm3074, 1, 0
        %v3139 = vsel %vm3075, 1, 0
        %v3140 = vsel %vm3076, 1, 0
        %v3141 = vsel %vm3077, 1, 0
        %v3142 = vsel %vm3078, 1, 0
        %v3143 = vsel %vm3079, 1, 0
        %v3144 = vsel %vm3080, 1, 0
        %v3145 = vsel %vm3081, 1, 0
        %v3146 = vsel %vm3082, 1, 0
        %v3147 = vsel %vm3083, 1, 0
        %v3148 = vsel %vm3084, 1, 0
        %v3149 = vsel %vm3085, 1, 0
        %v3150 = vsel %vm3086, 1, 0
        %v3151 = vsel %vm3087, 1, 0
        %v3152 = vsel %vm3088, 1, 0
        %v3153 = vsel %vm3089, 1, 0
        %v3154 = vsel %vm3090, 1, 0
        %v3155 = vsel %vm3091, 1, 0
        %v3156 = vsel %vm3092, 1, 0
        %v3157 = vsel %vm3093, 1, 0
        %v3158 = vsel %vm3094, 1, 0
        %v3159 = vsel %vm3095, 1, 0
        %v3160 = vsel %vm3096, 1, 0
        %v3161 = vsel %vm3097, 1, 0
        %v3162 = vsel %vm3098, 1, 0
        %v3163 = vsel %vm3099, 1, 0
        %v3164 = vsel %vm3100, 1, 0
        %v3165 = vsel %vm3101, 1, 0
        %v3166 = vsel %vm3102, 1, 0
        %v3167 = vsel %vm3103, 1, 0
        %v3168 = vsel %vm3104, 1, 0
        %v3169 = vsel %vm3105, 1, 0
        %v3170 = vsel %vm3106, 1, 0
        %v3171 = vsel %vm3107, 1, 0
        %v3172 = vsel %vm3108, 1, 0
        %v3173 = vsel %vm3109, 1, 0
        %v3174 = vsel %vm3110, 1, 0
        %v3175 = vsel %vm3111, 1, 0
        %v3176 = vsel %vm3112, 1, 0
        %v3177 = vsel %vm3113, 1, 0
        %v3178 = vsel %vm3114, 1, 0
        %v3179 = vsel %vm3115, 1, 0
        %v3180 = vsel %vm3116, 1, 0
        %v3181 = vsel %vm3117, 1, 0
        %v3182 = vsel %vm3118, 1, 0
        %v3183 = vsel %vm3119, 1, 0
        %v3184 = vsel %vm3120, 1, 0
        %v3185 = vsel %vm3121, 1, 0
        %v3186 = vsel %vm3122, 1, 0
        %v3187 = vsel %vm3123, 1, 0
        %v3188 = vsel %vm3124, 1, 0
        %vm3189 = vcmp.eq.s32.totalorder %v3125, 1
        %vm3190 = vcmp.eq.s32.totalorder %v3126, 1
        %vm3191 = vcmp.eq.s32.totalorder %v3127, 1
        %vm3192 = vcmp.eq.s32.totalorder %v3128, 1
        %vm3193 = vcmp.eq.s32.totalorder %v3129, 1
        %vm3194 = vcmp.eq.s32.totalorder %v3130, 1
        %vm3195 = vcmp.eq.s32.totalorder %v3131, 1
        %vm3196 = vcmp.eq.s32.totalorder %v3132, 1
        %vm3197 = vcmp.eq.s32.totalorder %v3133, 1
        %vm3198 = vcmp.eq.s32.totalorder %v3134, 1
        %vm3199 = vcmp.eq.s32.totalorder %v3135, 1
        %vm3200 = vcmp.eq.s32.totalorder %v3136, 1
        %vm3201 = vcmp.eq.s32.totalorder %v3137, 1
        %vm3202 = vcmp.eq.s32.totalorder %v3138, 1
        %vm3203 = vcmp.eq.s32.totalorder %v3139, 1
        %vm3204 = vcmp.eq.s32.totalorder %v3140, 1
        %vm3205 = vcmp.eq.s32.totalorder %v3141, 1
        %vm3206 = vcmp.eq.s32.totalorder %v3142, 1
        %vm3207 = vcmp.eq.s32.totalorder %v3143, 1
        %vm3208 = vcmp.eq.s32.totalorder %v3144, 1
        %vm3209 = vcmp.eq.s32.totalorder %v3145, 1
        %vm3210 = vcmp.eq.s32.totalorder %v3146, 1
        %vm3211 = vcmp.eq.s32.totalorder %v3147, 1
        %vm3212 = vcmp.eq.s32.totalorder %v3148, 1
        %vm3213 = vcmp.eq.s32.totalorder %v3149, 1
        %vm3214 = vcmp.eq.s32.totalorder %v3150, 1
        %vm3215 = vcmp.eq.s32.totalorder %v3151, 1
        %vm3216 = vcmp.eq.s32.totalorder %v3152, 1
        %vm3217 = vcmp.eq.s32.totalorder %v3153, 1
        %vm3218 = vcmp.eq.s32.totalorder %v3154, 1
        %vm3219 = vcmp.eq.s32.totalorder %v3155, 1
        %vm3220 = vcmp.eq.s32.totalorder %v3156, 1
        %vm3221 = vcmp.eq.s32.totalorder %v3157, 1
        %vm3222 = vcmp.eq.s32.totalorder %v3158, 1
        %vm3223 = vcmp.eq.s32.totalorder %v3159, 1
        %vm3224 = vcmp.eq.s32.totalorder %v3160, 1
        %vm3225 = vcmp.eq.s32.totalorder %v3161, 1
        %vm3226 = vcmp.eq.s32.totalorder %v3162, 1
        %vm3227 = vcmp.eq.s32.totalorder %v3163, 1
        %vm3228 = vcmp.eq.s32.totalorder %v3164, 1
        %vm3229 = vcmp.eq.s32.totalorder %v3165, 1
        %vm3230 = vcmp.eq.s32.totalorder %v3166, 1
        %vm3231 = vcmp.eq.s32.totalorder %v3167, 1
        %vm3232 = vcmp.eq.s32.totalorder %v3168, 1
        %vm3233 = vcmp.eq.s32.totalorder %v3169, 1
        %vm3234 = vcmp.eq.s32.totalorder %v3170, 1
        %vm3235 = vcmp.eq.s32.totalorder %v3171, 1
        %vm3236 = vcmp.eq.s32.totalorder %v3172, 1
        %vm3237 = vcmp.eq.s32.totalorder %v3173, 1
        %vm3238 = vcmp.eq.s32.totalorder %v3174, 1
        %vm3239 = vcmp.eq.s32.totalorder %v3175, 1
        %vm3240 = vcmp.eq.s32.totalorder %v3176, 1
        %vm3241 = vcmp.eq.s32.totalorder %v3177, 1
        %vm3242 = vcmp.eq.s32.totalorder %v3178, 1
        %vm3243 = vcmp.eq.s32.totalorder %v3179, 1
        %vm3244 = vcmp.eq.s32.totalorder %v3180, 1
        %vm3245 = vcmp.eq.s32.totalorder %v3181, 1
        %vm3246 = vcmp.eq.s32.totalorder %v3182, 1
        %vm3247 = vcmp.eq.s32.totalorder %v3183, 1
        %vm3248 = vcmp.eq.s32.totalorder %v3184, 1
        %vm3249 = vcmp.eq.s32.totalorder %v3185, 1
        %vm3250 = vcmp.eq.s32.totalorder %v3186, 1
        %vm3251 = vcmp.eq.s32.totalorder %v3187, 1
        %vm3252 = vcmp.eq.s32.totalorder %v3188, 1
        %v3253 = vsel %vm3189, %v2679, 0.0
        %v3254 = vsel %vm3190, %v2684, 0.0
        %v3255 = vsel %vm3191, %v2689, 0.0
        %v3256 = vsel %vm3192, %v2694, 0.0
        %v3257 = vsel %vm3193, %v2699, 0.0
        %v3258 = vsel %vm3194, %v2704, 0.0
        %v3259 = vsel %vm3195, %v2709, 0.0
        %v3260 = vsel %vm3196, %v2714, 0.0
        %v3261 = vsel %vm3197, %v2719, 0.0
        %v3262 = vsel %vm3198, %v2724, 0.0
        %v3263 = vsel %vm3199, %v2729, 0.0
        %v3264 = vsel %vm3200, %v2734, 0.0
        %v3265 = vsel %vm3201, %v2739, 0.0
        %v3266 = vsel %vm3202, %v2744, 0.0
        %v3267 = vsel %vm3203, %v2749, 0.0
        %v3268 = vsel %vm3204, %v2754, 0.0
        %v3269 = vsel %vm3205, %v2759, 0.0
        %v3270 = vsel %vm3206, %v2764, 0.0
        %v3271 = vsel %vm3207, %v2769, 0.0
        %v3272 = vsel %vm3208, %v2774, 0.0
        %v3273 = vsel %vm3209, %v2779, 0.0
        %v3274 = vsel %vm3210, %v2784, 0.0
        %v3275 = vsel %vm3211, %v2789, 0.0
        %v3276 = vsel %vm3212, %v2794, 0.0
        %v3277 = vsel %vm3213, %v2799, 0.0
        %v3278 = vsel %vm3214, %v2804, 0.0
        %v3279 = vsel %vm3215, %v2809, 0.0
        %v3280 = vsel %vm3216, %v2814, 0.0
        %v3281 = vsel %vm3217, %v2819, 0.0
        %v3282 = vsel %vm3218, %v2824, 0.0
        %v3283 = vsel %vm3219, %v2829, 0.0
        %v3284 = vsel %vm3220, %v2834, 0.0
        %v3285 = vsel %vm3221, %v2839, 0.0
        %v3286 = vsel %vm3222, %v2844, 0.0
        %v3287 = vsel %vm3223, %v2849, 0.0
        %v3288 = vsel %vm3224, %v2854, 0.0
        %v3289 = vsel %vm3225, %v2859, 0.0
        %v3290 = vsel %vm3226, %v2864, 0.0
        %v3291 = vsel %vm3227, %v2869, 0.0
        %v3292 = vsel %vm3228, %v2874, 0.0
        %v3293 = vsel %vm3229, %v2879, 0.0
        %v3294 = vsel %vm3230, %v2884, 0.0
        %v3295 = vsel %vm3231, %v2889, 0.0
        %v3296 = vsel %vm3232, %v2894, 0.0
        %v3297 = vsel %vm3233, %v2899, 0.0
        %v3298 = vsel %vm3234, %v2904, 0.0
        %v3299 = vsel %vm3235, %v2909, 0.0
        %v3300 = vsel %vm3236, %v2914, 0.0
        %v3301 = vsel %vm3237, %v2919, 0.0
        %v3302 = vsel %vm3238, %v2924, 0.0
        %v3303 = vsel %vm3239, %v2929, 0.0
        %v3304 = vsel %vm3240, %v2934, 0.0
        %v3305 = vsel %vm3241, %v2939, 0.0
        %v3306 = vsel %vm3242, %v2944, 0.0
        %v3307 = vsel %vm3243, %v2949, 0.0
        %v3308 = vsel %vm3244, %v2954, 0.0
        %v3309 = vsel %vm3245, %v2959, 0.0
        %v3310 = vsel %vm3246, %v2964, 0.0
        %v3311 = vsel %vm3247, %v2969, 0.0
        %v3312 = vsel %vm3248, %v2974, 0.0
        %v3313 = vsel %vm3249, %v2979, 0.0
        %v3314 = vsel %vm3250, %v2984, 0.0
        %v3315 = vsel %vm3251, %v2989, 0.0
        %v3316 = vsel %vm3252, %v2994, 0.0
        %v3317 = vadd.f32 %v3253, %v3254
        %v3318 = vadd.f32 %v3317, %v3255
        %v3319 = vadd.f32 %v3318, %v3256
        %v3320 = vadd.f32 %v3319, %v3257
        %v3321 = vadd.f32 %v3320, %v3258
        %v3322 = vadd.f32 %v3321, %v3259
        %v3323 = vadd.f32 %v3322, %v3260
        %v3324 = vadd.f32 %v3323, %v3261
        %v3325 = vadd.f32 %v3324, %v3262
        %v3326 = vadd.f32 %v3325, %v3263
        %v3327 = vadd.f32 %v3326, %v3264
        %v3328 = vadd.f32 %v3327, %v3265
        %v3329 = vadd.f32 %v3328, %v3266
        %v3330 = vadd.f32 %v3329, %v3267
        %v3331 = vadd.f32 %v3330, %v3268
        %v3332 = vadd.f32 %v3331, %v3269
        %v3333 = vadd.f32 %v3332, %v3270
        %v3334 = vadd.f32 %v3333, %v3271
        %v3335 = vadd.f32 %v3334, %v3272
        %v3336 = vadd.f32 %v3335, %v3273
        %v3337 = vadd.f32 %v3336, %v3274
        %v3338 = vadd.f32 %v3337, %v3275
        %v3339 = vadd.f32 %v3338, %v3276
        %v3340 = vadd.f32 %v3339, %v3277
        %v3341 = vadd.f32 %v3340, %v3278
        %v3342 = vadd.f32 %v3341, %v3279
        %v3343 = vadd.f32 %v3342, %v3280
        %v3344 = vadd.f32 %v3343, %v3281
        %v3345 = vadd.f32 %v3344, %v3282
        %v3346 = vadd.f32 %v3345, %v3283
        %v3347 = vadd.f32 %v3346, %v3284
        %v3348 = vadd.f32 %v3347, %v3285
        %v3349 = vadd.f32 %v3348, %v3286
        %v3350 = vadd.f32 %v3349, %v3287
        %v3351 = vadd.f32 %v3350, %v3288
        %v3352 = vadd.f32 %v3351, %v3289
        %v3353 = vadd.f32 %v3352, %v3290
        %v3354 = vadd.f32 %v3353, %v3291
        %v3355 = vadd.f32 %v3354, %v3292
        %v3356 = vadd.f32 %v3355, %v3293
        %v3357 = vadd.f32 %v3356, %v3294
        %v3358 = vadd.f32 %v3357, %v3295
        %v3359 = vadd.f32 %v3358, %v3296
        %v3360 = vadd.f32 %v3359, %v3297
        %v3361 = vadd.f32 %v3360, %v3298
        %v3362 = vadd.f32 %v3361, %v3299
        %v3363 = vadd.f32 %v3362, %v3300
        %v3364 = vadd.f32 %v3363, %v3301
        %v3365 = vadd.f32 %v3364, %v3302
        %v3366 = vadd.f32 %v3365, %v3303
        %v3367 = vadd.f32 %v3366, %v3304
        %v3368 = vadd.f32 %v3367, %v3305
        %v3369 = vadd.f32 %v3368, %v3306
        %v3370 = vadd.f32 %v3369, %v3307
        %v3371 = vadd.f32 %v3370, %v3308
        %v3372 = vadd.f32 %v3371, %v3309
        %v3373 = vadd.f32 %v3372, %v3310
        %v3374 = vadd.f32 %v3373, %v3311
        %v3375 = vadd.f32 %v3374, %v3312
        %v3376 = vadd.f32 %v3375, %v3313
        %v3377 = vadd.f32 %v3376, %v3314
        %v3378 = vadd.f32 %v3377, %v3315
        %v3379 = vadd.f32 %v3378, %v3316
        %v3380 = vrot.slane %v3379, 4
        %v3381 = vadd.f32 %v3379, %v3380
        %v3382 = vrot.slane %v3381, 2
        %v3383 = vadd.f32 %v3381, %v3382
        %v3384 = vrot.slane %v3383, 1
        %v3385 = vadd.f32 %v3383, %v3384
        %v3386 = vmul.f32 %v3253, %v3253
        %v3387 = vmul.f32 %v3254, %v3254
        %v3388 = vmul.f32 %v3255, %v3255
        %v3389 = vmul.f32 %v3256, %v3256
        %v3390 = vmul.f32 %v3257, %v3257
        %v3391 = vmul.f32 %v3258, %v3258
        %v3392 = vmul.f32 %v3259, %v3259
        %v3393 = vmul.f32 %v3260, %v3260
        %v3394 = vmul.f32 %v3261, %v3261
        %v3395 = vmul.f32 %v3262, %v3262
        %v3396 = vmul.f32 %v3263, %v3263
        %v3397 = vmul.f32 %v3264, %v3264
        %v3398 = vmul.f32 %v3265, %v3265
        %v3399 = vmul.f32 %v3266, %v3266
        %v3400 = vmul.f32 %v3267, %v3267
        %v3401 = vmul.f32 %v3268, %v3268
        %v3402 = vmul.f32 %v3269, %v3269
        %v3403 = vmul.f32 %v3270, %v3270
        %v3404 = vmul.f32 %v3271, %v3271
        %v3405 = vmul.f32 %v3272, %v3272
        %v3406 = vmul.f32 %v3273, %v3273
        %v3407 = vmul.f32 %v3274, %v3274
        %v3408 = vmul.f32 %v3275, %v3275
        %v3409 = vmul.f32 %v3276, %v3276
        %v3410 = vmul.f32 %v3277, %v3277
        %v3411 = vmul.f32 %v3278, %v3278
        %v3412 = vmul.f32 %v3279, %v3279
        %v3413 = vmul.f32 %v3280, %v3280
        %v3414 = vmul.f32 %v3281, %v3281
        %v3415 = vmul.f32 %v3282, %v3282
        %v3416 = vmul.f32 %v3283, %v3283
        %v3417 = vmul.f32 %v3284, %v3284
        %v3418 = vmul.f32 %v3285, %v3285
        %v3419 = vmul.f32 %v3286, %v3286
        %v3420 = vmul.f32 %v3287, %v3287
        %v3421 = vmul.f32 %v3288, %v3288
        %v3422 = vmul.f32 %v3289, %v3289
        %v3423 = vmul.f32 %v3290, %v3290
        %v3424 = vmul.f32 %v3291, %v3291
        %v3425 = vmul.f32 %v3292, %v3292
        %v3426 = vmul.f32 %v3293, %v3293
        %v3427 = vmul.f32 %v3294, %v3294
        %v3428 = vmul.f32 %v3295, %v3295
        %v3429 = vmul.f32 %v3296, %v3296
        %v3430 = vmul.f32 %v3297, %v3297
        %v3431 = vmul.f32 %v3298, %v3298
        %v3432 = vmul.f32 %v3299, %v3299
        %v3433 = vmul.f32 %v3300, %v3300
        %v3434 = vmul.f32 %v3301, %v3301
        %v3435 = vmul.f32 %v3302, %v3302
        %v3436 = vmul.f32 %v3303, %v3303
        %v3437 = vmul.f32 %v3304, %v3304
        %v3438 = vmul.f32 %v3305, %v3305
        %v3439 = vmul.f32 %v3306, %v3306
        %v3440 = vmul.f32 %v3307, %v3307
        %v3441 = vmul.f32 %v3308, %v3308
        %v3442 = vmul.f32 %v3309, %v3309
        %v3443 = vmul.f32 %v3310, %v3310
        %v3444 = vmul.f32 %v3311, %v3311
        %v3445 = vmul.f32 %v3312, %v3312
        %v3446 = vmul.f32 %v3313, %v3313
        %v3447 = vmul.f32 %v3314, %v3314
        %v3448 = vmul.f32 %v3315, %v3315
        %v3449 = vmul.f32 %v3316, %v3316
        %v3450 = vadd.f32 %v3386, %v3387
        %v3451 = vadd.f32 %v3450, %v3388
        %v3452 = vadd.f32 %v3451, %v3389
        %v3453 = vadd.f32 %v3452, %v3390
        %v3454 = vadd.f32 %v3453, %v3391
        %v3455 = vadd.f32 %v3454, %v3392
        %v3456 = vadd.f32 %v3455, %v3393
        %v3457 = vadd.f32 %v3456, %v3394
        %v3458 = vadd.f32 %v3457, %v3395
        %v3459 = vadd.f32 %v3458, %v3396
        %v3460 = vadd.f32 %v3459, %v3397
        %v3461 = vadd.f32 %v3460, %v3398
        %v3462 = vadd.f32 %v3461, %v3399
        %v3463 = vadd.f32 %v3462, %v3400
        %v3464 = vadd.f32 %v3463, %v3401
        %v3465 = vadd.f32 %v3464, %v3402
        %v3466 = vadd.f32 %v3465, %v3403
        %v3467 = vadd.f32 %v3466, %v3404
        %v3468 = vadd.f32 %v3467, %v3405
        %v3469 = vadd.f32 %v3468, %v3406
        %v3470 = vadd.f32 %v3469, %v3407
        %v3471 = vadd.f32 %v3470, %v3408
        %v3472 = vadd.f32 %v3471, %v3409
        %v3473 = vadd.f32 %v3472, %v3410
        %v3474 = vadd.f32 %v3473, %v3411
        %v3475 = vadd.f32 %v3474, %v3412
        %v3476 = vadd.f32 %v3475, %v3413
        %v3477 = vadd.f32 %v3476, %v3414
        %v3478 = vadd.f32 %v3477, %v3415
        %v3479 = vadd.f32 %v3478, %v3416
        %v3480 = vadd.f32 %v3479, %v3417
        %v3481 = vadd.f32 %v3480, %v3418
        %v3482 = vadd.f32 %v3481, %v3419
        %v3483 = vadd.f32 %v3482, %v3420
        %v3484 = vadd.f32 %v3483, %v3421
        %v3485 = vadd.f32 %v3484, %v3422
        %v3486 = vadd.f32 %v3485, %v3423
        %v3487 = vadd.f32 %v3486, %v3424
        %v3488 = vadd.f32 %v3487, %v3425
        %v3489 = vadd.f32 %v3488, %v3426
        %v3490 = vadd.f32 %v3489, %v3427
        %v3491 = vadd.f32 %v3490, %v3428
        %v3492 = vadd.f32 %v3491, %v3429
        %v3493 = vadd.f32 %v3492, %v3430
        %v3494 = vadd.f32 %v3493, %v3431
        %v3495 = vadd.f32 %v3494, %v3432
        %v3496 = vadd.f32 %v3495, %v3433
        %v3497 = vadd.f32 %v3496, %v3434
        %v3498 = vadd.f32 %v3497, %v3435
        %v3499 = vadd.f32 %v3498, %v3436
        %v3500 = vadd.f32 %v3499, %v3437
        %v3501 = vadd.f32 %v3500, %v3438
        %v3502 = vadd.f32 %v3501, %v3439
        %v3503 = vadd.f32 %v3502, %v3440
        %v3504 = vadd.f32 %v3503, %v3441
        %v3505 = vadd.f32 %v3504, %v3442
        %v3506 = vadd.f32 %v3505, %v3443
        %v3507 = vadd.f32 %v3506, %v3444
        %v3508 = vadd.f32 %v3507, %v3445
        %v3509 = vadd.f32 %v3508, %v3446
        %v3510 = vadd.f32 %v3509, %v3447
        %v3511 = vadd.f32 %v3510, %v3448
        %v3512 = vadd.f32 %v3511, %v3449
        %v3513 = vrot.slane %v3512, 4
        %v3514 = vadd.f32 %v3512, %v3513
        %v3515 = vrot.slane %v3514, 2
        %v3516 = vadd.f32 %v3514, %v3515
        %v3517 = vrot.slane %v3516, 1
        %v3518 = vadd.f32 %v3516, %v3517
        %3519 = vst [vmem:[%s376] sm:$0x1] %v3385
        %3520 = vst [vmem:[%s379] sm:$0x1] %v3518
      $region52: #{mpnn_conv_forward.7} parent=43 // pred_fallthru
        _
      %s3521 = smul.u32 64, %s25
      %p3522 = scmp.lt.s32.totalorder %s3521, 127
      %s3523 = scalar_select %p3522, %s3521, 127
      %s3524 = smul.addr %s3523, 8
      %s3525 = scalar_lea.vmem %s6, %s3524
      %p3526 = scmp.lt.s32.totalorder %s25, 1
      %s3527 = scalar_select %p3526, %s25, 1
      %s3528 = scalar_lea.vmem %s7, %s3527
      %p3529 = scmp.lt.s32.totalorder %s25, 1
      %s3530 = scalar_select %p3529, %s25, 1
      %s3531 = scalar_lea.vmem %s8, %s3530
      // Predicated region
      $region53: #{mpnn_conv_forward.7} parent=43 // pred_check
        %p3532 = pneg %p192
      $region54: #{mpnn_conv_forward.7} parent=43 // pred_check_branch
        %3534 = sbr.rel (%p3532) target = $region56
      $region55: #{mpnn_conv_forward.7} parent=43 // pred_region
        %s3535 = smul.u32 64, %s25
      $region56: #{mpnn_conv_forward.7} parent=43 // pred_fallthru
        _
      // Predicated region
      $region57: #{mpnn_conv_forward.7} parent=43 // pred_check
        %p3536 = pneg %p218
      $region58: #{mpnn_conv_forward.7} parent=43 // pred_check_branch
        %3538 = sbr.rel (%p3536) target = $region60
      $region59: #{mpnn_conv_forward.7} parent=43 // pred_region
        _
      $region60: #{mpnn_conv_forward.7} parent=43 // pred_fallthru
        _
      // Predicated region
      $region61: #{mpnn_conv_forward.7} parent=43 // pred_check
        %p3539 = pneg %p244
      $region62: #{mpnn_conv_forward.7} parent=43 // pred_check_branch
        %3541 = sbr.rel (%p3539) target = $region64
      $region63: #{mpnn_conv_forward.7} parent=43 // pred_region
        _
      $region64: #{mpnn_conv_forward.7} parent=43 // pred_fallthru
        _
    $region44: #{mpnn_conv_forward.7} parent=5 // pred_fallthru
      _
    %p3542 = scmp.le.s32.totalorder 2, %s16
    // Predicated region
    $region65: #{mpnn_conv_forward.7} parent=5 // pred_check
      %p3543 = pneg %p3542
    $region66: #{mpnn_conv_forward.7} parent=5 // pred_check_branch
      %3545 = sbr.rel (%p3543) target = $region68
    $region67: #{mpnn_conv_forward.7} parent=5 // pred_region
      %s3546 = ssub.s32 %s16, 2
      // Predicated region
      $region69: #{mpnn_conv_forward.7} parent=67 // pred_check
        %p3547 = pneg %p198
      $region70: #{mpnn_conv_forward.7} parent=67 // pred_check_branch
        %3549 = sbr.rel (%p3547) target = $region72
      $region71: #{mpnn_conv_forward.7} parent=67 // pred_region
        %s3550 = smul.u32 64, %s27
        %p3551 = scmp.lt.s32.totalorder %s3550, 127
        %s3552 = scalar_select %p3551, %s3550, 127
        %s3553 = smul.addr %s3552, 8
        %s3554 = scalar_lea.vmem %s6, %s3553
      $region72: #{mpnn_conv_forward.7} parent=67 // pred_fallthru
        _
      // Predicated region
      $region73: #{mpnn_conv_forward.7} parent=67 // pred_check
        %p3555 = pneg %p224
      $region74: #{mpnn_conv_forward.7} parent=67 // pred_check_branch
        %3557 = sbr.rel (%p3555) target = $region76
      $region75: #{mpnn_conv_forward.7} parent=67 // pred_region
        %p3558 = scmp.lt.s32.totalorder %s27, 1
        %s3559 = scalar_select %p3558, %s27, 1
        %s3560 = scalar_lea.vmem %s7, %s3559
      $region76: #{mpnn_conv_forward.7} parent=67 // pred_fallthru
        _
      // Predicated region
      $region77: #{mpnn_conv_forward.7} parent=67 // pred_check
        %p3561 = pneg %p250
      $region78: #{mpnn_conv_forward.7} parent=67 // pred_check_branch
        %3563 = sbr.rel (%p3561) target = $region80
      $region79: #{mpnn_conv_forward.7} parent=67 // pred_region
        %p3564 = scmp.lt.s32.totalorder %s27, 1
        %s3565 = scalar_select %p3564, %s27, 1
        %s3566 = scalar_lea.vmem %s8, %s3565
      $region80: #{mpnn_conv_forward.7} parent=67 // pred_fallthru
        _
    $region68: #{mpnn_conv_forward.7} parent=5 // pred_fallthru
      _
  $region6: #{mpnn_conv_forward.7} parent=0 // loop_footer
    %s20 = sadd.s32 1, %s16
  $region7: #{mpnn_conv_forward.7} parent=0 // loop_footer_branch
    %15 = sbr.rel target = $region3
  $region8: #{mpnn_conv_forward.7} parent=0 // loop_exit
    _

</llo_original>
